<compile_context>
chip_gen: v6e
topology: v6e:2x2x1
jax: 0.10.0
libtpu: 0.0.40
codegen_flags: <defaults>
</compile_context>

<pallas_src>
import functools

import jax
import jax.numpy as jnp
from jax.experimental import pallas as pl
from jax.experimental.pallas import tpu as pltpu

# ----------------------------------------------------------------------------
# Static geometry implied by the reference model (fc1 in=3136 => 28x28 input).
# ----------------------------------------------------------------------------
H1 = 28                  # conv1 spatial size
C1 = 32                  # conv1 output channels (n_gab + n_imap)
HP = H1 // 2             # 14, pooled conv1 spatial size
C2 = 64                  # conv2 output channels
HQ = HP // 2             # 7, pooled conv2 spatial size
NTAP = 9                 # 3x3 taps
NPIX1 = H1 * H1          # 784 conv1 output pixels (phase-ordered rows)
NPIX2 = HQ * HQ          # 49 pooled conv2 pixels
K2 = NTAP * C1           # 288 fused conv2 contraction depth
SLOT = 64                # per-image row slot in the gapped scratch (49 + 15 zeros)
HDR = 16                 # zero header rows (>= 8, multiple of 16)
TB_MAX = 8               # images per conv grid step


# ----------------------------------------------------------------------------
# Pallas kernels
# ----------------------------------------------------------------------------
def _conv_block_kernel(p1_ref, w1_ref, w2_ref, b2_ref, mask_ref, o_ref,
                       pad_ref, lhs_ref, *, tb):
    """Fused conv1+ReLU+pool+conv2+bias+ReLU+pool for TB images.

    p1_ref  : (TB*784, 9)    bf16  phase-ordered 3x3 patches (image-major rows)
    w1_ref  : (9, 32)        bf16  conv1 filter bank (tap-major)
    w2_ref  : (288, 64)      bf16  conv2 weights, rows = tap*32 + cin
    b2_ref  : (1, 64)        f32   conv2 bias
    mask_ref: (TB*64, 2)     bf16  W-edge masks per slot row (left / right)
    o_ref   : (TB, 49, 64)   bf16  pooled conv2 activations, rows = qh*7 + qw
    pad_ref : (2*HDR + 4*TB*64, 32) bf16 VMEM scratch: pooled1, zero-gap slots
    lhs_ref : (4*TB*64, 288) bf16 VMEM scratch: fused-K conv2 im2col LHS
    """
    grp = tb * SLOT                                    # rows per source-phase group

    # ---- conv1: ONE MXU matmul over all TB images, then ReLU ---------------
    a1 = jnp.dot(p1_ref[...], w1_ref[...],
                 preferred_element_type=jnp.float32)   # (TB*784, 32)
    a1 = jnp.maximum(a1, 0.0)

    # ---- 2x2 max-pool #1 (contiguous 196-row phase blocks per image), then
    #      scatter each image's 4 source-phase 7x7 blocks into its 64-row slot
    #      of the zero-gapped scratch.  Zeroing the scratch each step keeps
    #      the gap rows valid under any grid->core partitioning (cheap).
    pad_ref[...] = jnp.zeros_like(pad_ref)
    for i in range(tb):
        base = i * NPIX1
        blk = [a1[base + k * (4 * NPIX2): base + (k + 1) * (4 * NPIX2)]
               for k in range(4)]
        pooled_i = jnp.maximum(jnp.maximum(blk[0], blk[1]),
                               jnp.maximum(blk[2], blk[3]))        # (196, 32)
        pooled_i = pooled_i.astype(jnp.bfloat16)
        for k in range(4):                       # source pool-phase blocks
            dst = HDR + k * grp + i * SLOT
            pad_ref[dst:dst + NPIX2, :] = pooled_i[k * NPIX2:(k + 1) * NPIX2, :]

    mask_l = mask_ref[:, 0:1]                                      # (TB*64, 1)
    mask_r = mask_ref[:, 1:2]

    # ---- conv2 fused-K im2col: 36 contiguous slices of the gapped scratch
    #      (one per (output pool phase, tap), each covering all TB images).
    for o_idx, (i2o, j2o) in enumerate([(0, 0), (0, 1), (1, 0), (1, 1)]):
        for dy in range(3):
            for dx in range(3):
                u = i2o + dy - 1
                v = j2o + dx - 1
                p, q = u % 2, v % 2                  # source phase block
                a, b = (u - p) // 2, (v - q) // 2    # block-local shift
                src = HDR + (2 * p + q) * grp + a * HQ + b
                piece = pad_ref[src:src + grp, :]            # (TB*64, 32)
                if b == -1:
                    piece = piece * mask_l           # tap crossed left edge
                elif b == 1:
                    piece = piece * mask_r           # tap crossed right edge
                t = dy * 3 + dx
                lhs_ref[o_idx * grp:(o_idx + 1) * grp,
                        t * C1:(t + 1) * C1] = piece

    # ---- conv2: ONE bf16 matmul with K=288 ----------------------------------
    acc = jnp.dot(lhs_ref[...], w2_ref[...],
                  preferred_element_type=jnp.float32)          # (4*TB*64, 64)

    # ---- 2x2 max-pool #2 (4 contiguous, aligned phase blocks), bias, ReLU ---
    m = jnp.maximum(jnp.maximum(acc[0:grp], acc[grp:2 * grp]),
                    jnp.maximum(acc[2 * grp:3 * grp], acc[3 * grp:4 * grp]))
    m = jnp.maximum(m + b2_ref[...], 0.0)                      # (TB*64, 64)

    # ---- drop the 15 junk rows per slot and store per image -----------------
    for i in range(tb):
        o_ref[i, :, :] = m[i * SLOT:i * SLOT + NPIX2, :].astype(o_ref.dtype)


def _fc_kernel(x_ref, w1_ref, b1_ref, w2_ref, b2_ref, o_ref):
    """Fused fc1 + ReLU + fc2 for one row tile (bf16 matmuls, f32 accum)."""
    h = jnp.dot(x_ref[...], w1_ref[...], preferred_element_type=jnp.float32)
    h = jnp.maximum(h + b1_ref[...], 0.0)
    # TODO(synk): nn.Dropout(0.25) is treated as identity (eval mode); the
    # training-mode stochastic mask/scale is not implemented.
    out = jnp.dot(h.astype(jnp.bfloat16), w2_ref[...],
                  preferred_element_type=jnp.float32)
    o_ref[...] = (out + b2_ref[...]).astype(o_ref.dtype)


# ----------------------------------------------------------------------------
# pallas_call wrappers
# ----------------------------------------------------------------------------
def _edge_masks(tb):
    """Per-slot-row left/right edge masks (zeros on the 15 junk rows)."""
    slot = jnp.arange(tb * SLOT, dtype=jnp.int32) % SLOT
    wo = slot % HQ
    valid = slot < NPIX2
    left = (wo != 0) & valid
    right = (wo != HQ - 1) & valid
    return jnp.stack([left, right], axis=1).astype(jnp.bfloat16)   # (TB*64, 2)


def conv_block(p1, w1, w2, b2, *, tb):
    """p1: (Bp*784, 9) bf16, Bp a multiple of tb.  Returns (Bp, 49, 64) bf16."""
    bp = p1.shape[0] // NPIX1
    grp = tb * SLOT
    padrows = 2 * HDR + 4 * grp
    mask = _edge_masks(tb)
    kernel = functools.partial(_conv_block_kernel, tb=tb)
    return pl.pallas_call(
        kernel,
        out_shape=jax.ShapeDtypeStruct((bp, NPIX2, C2), jnp.bfloat16),
        grid=(bp // tb,),
        in_specs=[
            pl.BlockSpec((tb * NPIX1, NTAP), lambda i: (i, 0)),
            pl.BlockSpec((NTAP, C1), lambda i: (0, 0)),
            pl.BlockSpec((K2, C2), lambda i: (0, 0)),
            pl.BlockSpec((1, C2), lambda i: (0, 0)),
            pl.BlockSpec((grp, 2), lambda i: (0, 0)),
        ],
        out_specs=pl.BlockSpec((tb, NPIX2, C2), lambda i: (i, 0, 0)),
        scratch_shapes=[
            pltpu.VMEM((padrows, C1), jnp.bfloat16),
            pltpu.VMEM((4 * grp, K2), jnp.bfloat16),
        ],
        compiler_params=pltpu.CompilerParams(
            dimension_semantics=("parallel",),
            # ~<8 MiB actually needed; 32 MiB is safe on v5e/v6e (128 MiB) and
            # v7x (64 MiB physical per TC).
            vmem_limit_bytes=32 * 1024 * 1024,
        ),
    )(p1, w1, w2, b2, mask)


def fc_block(x, w1, b1, w2, b2, *, tm=512):
    """x: (M, 3136) bf16.  Returns (M, 128) f32 (first 10 lanes are logits)."""
    M, K = x.shape
    N1 = w1.shape[1]
    N2 = w2.shape[1]
    tm_eff = M if M <= tm else tm            # single full block for small M
    grid = pl.cdiv(M, tm_eff)                # partial tail block, no host pad
    return pl.pallas_call(
        _fc_kernel,
        out_shape=jax.ShapeDtypeStruct((M, N2), jnp.float32),
        grid=(grid,),
        in_specs=[
            pl.BlockSpec((tm_eff, K), lambda i: (i, 0)),
            pl.BlockSpec((K, N1), lambda i: (0, 0)),
            pl.BlockSpec((1, N1), lambda i: (0, 0)),
            pl.BlockSpec((N1, N2), lambda i: (0, 0)),
            pl.BlockSpec((1, N2), lambda i: (0, 0)),
        ],
        out_specs=pl.BlockSpec((tm_eff, N2), lambda i: (i, 0)),
        compiler_params=pltpu.CompilerParams(
            dimension_semantics=("parallel",),
            vmem_limit_bytes=32 * 1024 * 1024,
        ),
    )(x, w1, b1, w2, b2)


# ----------------------------------------------------------------------------
# Host-side glue (cheap XLA layout work on tiny tensors)
# ----------------------------------------------------------------------------
def _conv1_patches(x_bhw):
    """Phase-ordered 3x3/pad-1 patches of the 28x28 images -> (B*784, 9) bf16.

    Per image, rows are ordered (h%2, w%2 | (h//2)%2, (w//2)%2 | h//4, w//4)
    so both 2x2 max-pools in the fused kernel reduce over contiguous blocks.
    """
    B = x_bhw.shape[0]
    xp = jnp.pad(x_bhw, ((0, 0), (1, 1), (1, 1)))                       # (B,30,30)
    taps = jnp.stack([xp[:, dy:dy + H1, dx:dx + H1]
                      for dy in range(3) for dx in range(3)], axis=-1)   # (B,28,28,9)
    phases = [taps[:, (2 * i2 + i1)::4, (2 * j2 + j1)::4, :]
              for i1 in (0, 1) for j1 in (0, 1)
              for i2 in (0, 1) for j2 in (0, 1)]                         # 16 x (B,7,7,9)
    p1 = jnp.stack(phases, axis=1).reshape(B * NPIX1, NTAP)
    return p1.astype(jnp.bfloat16)


def gabor_bank(theta, sigma, gamma, lambd, psi, n_imap):
    """Replicates define_custom_filter -> (n_gab + n_imap, 3, 3) f32."""
    coords = jnp.arange(3, dtype=jnp.float32) - 1.0
    X, Y = jnp.meshgrid(coords, coords, indexing="ij")   # X[x,y]=x-1, Y[x,y]=y-1
    ct = jnp.cos(theta)[:, None, None]
    st = jnp.sin(theta)[:, None, None]
    xt = X[None] * ct + Y[None] * st
    yt = -X[None] * st + Y[None] * ct
    sig = sigma[:, None, None]
    gam = gamma[:, None, None]
    lam = lambd[:, None, None]
    ps = psi[:, None, None]
    kern = jnp.exp(-0.5 * (xt ** 2 / sig ** 2 + (yt * gam) ** 2 / sig ** 2)) * jnp.cos(
        2.0 * jnp.pi * xt / lam + ps)
    imap = jnp.zeros((3, 3), jnp.float32).at[1, 1].set(1.0)
    imaps = jnp.tile(imap[None], (n_imap, 1, 1))
    return jnp.concatenate([kern, imaps], axis=0)


def prepare_params(raw, n_imap):
    """All weight layout / dtype work hoisted out of forward()."""
    bank = gabor_bank(raw["theta"], raw["sigma"], raw["gamma"],
                      raw["lambd"], raw["psi"], n_imap)                 # (32,3,3)
    w1 = bank.reshape(C1, NTAP).T.astype(jnp.bfloat16)                  # (9,32)
    # conv2 (cout, cin, ky, kx) -> fused-K (tap*32 + cin, cout) = (288, 64)
    w2 = (jnp.transpose(raw["conv2_w"], (2, 3, 1, 0))
          .reshape(K2, C2).astype(jnp.bfloat16))
    b2 = raw["conv2_b"].reshape(1, C2).astype(jnp.float32)
    # Fold torch's NCHW flatten into fc1's column order (our features are HWC).
    fc1_w = (raw["fc1_w"].reshape(128, C2, HQ, HQ)
             .transpose(2, 3, 1, 0).reshape(NPIX2 * C2, 128)
             .astype(jnp.bfloat16))                                     # (3136,128)
    fc1_b = raw["fc1_b"].reshape(1, 128).astype(jnp.float32)
    # Zero-pad fc2 to 128 output lanes (lane-dense stores); host slices [:10].
    fc2_w = jnp.zeros((128, 128), jnp.bfloat16)
    fc2_w = fc2_w.at[:, :10].set(raw["fc2_w"].T.astype(jnp.bfloat16))
    fc2_b = jnp.zeros((1, 128), jnp.float32)
    fc2_b = fc2_b.at[:, :10].set(raw["fc2_b"].astype(jnp.float32))
    return dict(w1=w1, w2=w2, b2=b2, fc1_w=fc1_w, fc1_b=fc1_b,
                fc2_w=fc2_w, fc2_b=fc2_b)


@jax.jit
def forward(params, x_nchw):
    B = x_nchw.shape[0]
    tb = min(TB_MAX, B)
    bp = ((B + tb - 1) // tb) * tb
    x = x_nchw.reshape(B, H1, H1)              # single input channel
    if bp != B:                                # pad a handful of images at most
        x = jnp.pad(x, ((0, bp - B), (0, 0), (0, 0)))
    p1 = _conv1_patches(x)                                            # (bp*784, 9)
    feats = conv_block(p1, params["w1"], params["w2"], params["b2"], tb=tb)
    feats = feats.reshape(bp, NPIX2 * C2)      # (bp, 3136) bf16, (h, w, c) order
    logits = fc_block(feats, params["fc1_w"], params["fc1_b"],
                      params["fc2_w"], params["fc2_b"])               # (bp, 128)
    return logits[:B, :10]


# ----------------------------------------------------------------------------
# main
# ----------------------------------------------------------------------------
if __name__ == "__main__":
    ksize, n_gab, n_imap = 3, 16, 16          # n_gab + n_imap must equal 32
    assert n_gab + n_imap == C1
    B = 2                                     # fc1 in=3136 forces 28x28 input

    key = jax.random.PRNGKey(0)
    keys = jax.random.split(key, 10)
    raw = dict(
        theta=jax.random.uniform(keys[0], (n_gab,), jnp.float32, minval=0.0, maxval=180.0),
        sigma=jax.random.uniform(keys[1], (n_gab,), jnp.float32, minval=0.0, maxval=360.0),
        gamma=jax.random.uniform(keys[2], (n_gab,), jnp.float32, minval=0.0, maxval=1.0),
        lambd=jax.random.uniform(keys[3], (n_gab,), jnp.float32, minval=2.0, maxval=10.0),
        psi=jnp.zeros((n_gab,), jnp.float32),
        conv2_w=0.05 * jax.random.normal(keys[4], (64, 32, 3, 3), jnp.float32),
        conv2_b=0.05 * jax.random.normal(keys[5], (64,), jnp.float32),
        fc1_w=0.02 * jax.random.normal(keys[6], (128, 3136), jnp.float32),
        fc1_b=0.02 * jax.random.normal(keys[7], (128,), jnp.float32),
        fc2_w=0.05 * jax.random.normal(keys[8], (10, 128), jnp.float32),
        fc2_b=jnp.zeros((10,), jnp.float32),
    )
    params = prepare_params(raw, n_imap)
    x = jax.random.normal(keys[9], (B, 1, 28, 28), jnp.float32)

    out = jax.block_until_ready(forward(params, x))
    assert out.shape == (B, 10) and out.dtype == jnp.float32
    print("KERNEL_OK")
</pallas_src>

<mosaic_0001>
module attributes {stable_mosaic.version = 11 : i64} {
  func.func @_conv_block_kernel(%arg0: i32, %arg1: memref<1568x9xbf16, #tpu.memory_space<vmem>>, %arg2: memref<9x32xbf16, #tpu.memory_space<vmem>>, %arg3: memref<288x64xbf16, #tpu.memory_space<vmem>>, %arg4: memref<1x64xf32, #tpu.memory_space<vmem>>, %arg5: memref<128x2xbf16, #tpu.memory_space<vmem>>, %arg6: memref<2x49x64xbf16, #tpu.memory_space<vmem>>, %arg7: memref<544x32xbf16, #tpu.memory_space<vmem>>, %arg8: memref<512x288xbf16, #tpu.memory_space<vmem>>) attributes {dimension_semantics = [#tpu.dimension_semantics<parallel>], iteration_bounds = array<i64: 1>, scalar_prefetch = 0 : i64, scratch_operands = 2 : i64, tpu.core_type = #tpu.core_type<tc>, window_params = [{transform_indices = @transform_0, window_bounds = array<i64: 1568, 9>}, {pipeline_mode = #tpu.pipeline_mode<synchronous>, transform_indices = @transform_1, window_bounds = array<i64: 9, 32>}, {pipeline_mode = #tpu.pipeline_mode<synchronous>, transform_indices = @transform_2, window_bounds = array<i64: 288, 64>}, {pipeline_mode = #tpu.pipeline_mode<synchronous>, transform_indices = @transform_3, window_bounds = array<i64: 1, 64>}, {pipeline_mode = #tpu.pipeline_mode<synchronous>, transform_indices = @transform_4, window_bounds = array<i64: 128, 2>}, {transform_indices = @transform_5, window_bounds = array<i64: 2, 49, 64>}]} {
    %c0 = arith.constant 0 : index
    %c0_0 = arith.constant 0 : index
    %0 = vector.load %arg1[%c0, %c0_0] : memref<1568x9xbf16, #tpu.memory_space<vmem>>, vector<1568x9xbf16>
    %c0_1 = arith.constant 0 : index
    %c0_2 = arith.constant 0 : index
    %1 = vector.load %arg2[%c0_1, %c0_2] : memref<9x32xbf16, #tpu.memory_space<vmem>>, vector<9x32xbf16>
    %cst = arith.constant dense<0.000000e+00> : vector<1568x32xf32>
    %2 = tpu.matmul %0, %1, %cst {dimension_numbers = #tpu.dot_dimension_numbers<[1], [0], [0], [1], [0, 0, 1, 1], [], []>} : vector<1568x9xbf16>, vector<9x32xbf16>, vector<1568x32xf32> -> vector<1568x32xf32>
    %cst_3 = arith.constant 0.000000e+00 : f32
    %3 = vector.broadcast %cst_3 : f32 to vector<1568x32xf32>
    %4 = arith.maximumf %2, %3 : vector<1568x32xf32>
    %cst_4 = arith.constant 0.000000e+00 : bf16
    %5 = vector.broadcast %cst_4 : bf16 to vector<544x32xbf16>
    %c0_5 = arith.constant 0 : index
    %c0_6 = arith.constant 0 : index
    %6 = vector.load %arg7[%c0_5, %c0_6] : memref<544x32xbf16, #tpu.memory_space<vmem>>, vector<544x32xbf16>
    tpu.vector_store %arg7[%c0_5, %c0_6], %5 {strides = array<i32>} : memref<544x32xbf16, #tpu.memory_space<vmem>>, vector<544x32xbf16>,
    %7 = vector.extract_strided_slice %4 {offsets = [0, 0], sizes = [196, 32], strides = [1, 1]} : vector<1568x32xf32> to vector<196x32xf32>
    %8 = vector.extract_strided_slice %4 {offsets = [196, 0], sizes = [196, 32], strides = [1, 1]} : vector<1568x32xf32> to vector<196x32xf32>
    %9 = vector.extract_strided_slice %4 {offsets = [392, 0], sizes = [196, 32], strides = [1, 1]} : vector<1568x32xf32> to vector<196x32xf32>
    %10 = vector.extract_strided_slice %4 {offsets = [588, 0], sizes = [196, 32], strides = [1, 1]} : vector<1568x32xf32> to vector<196x32xf32>
    %11 = arith.maximumf %7, %8 : vector<196x32xf32>
    %12 = arith.maximumf %9, %10 : vector<196x32xf32>
    %13 = arith.maximumf %11, %12 : vector<196x32xf32>
    %14 = arith.truncf %13 : vector<196x32xf32> to vector<196x32xbf16>
    %15 = vector.extract_strided_slice %14 {offsets = [0, 0], sizes = [49, 32], strides = [1, 1]} : vector<196x32xbf16> to vector<49x32xbf16>
    %c16 = arith.constant 16 : index
    %c0_7 = arith.constant 0 : index
    %16 = vector.load %arg7[%c16, %c0_7] : memref<544x32xbf16, #tpu.memory_space<vmem>>, vector<49x32xbf16>
    tpu.vector_store %arg7[%c16, %c0_7], %15 {strides = array<i32>} : memref<544x32xbf16, #tpu.memory_space<vmem>>, vector<49x32xbf16>,
    %17 = vector.extract_strided_slice %14 {offsets = [49, 0], sizes = [49, 32], strides = [1, 1]} : vector<196x32xbf16> to vector<49x32xbf16>
    %c144 = arith.constant 144 : index
    %c0_8 = arith.constant 0 : index
    %18 = vector.load %arg7[%c144, %c0_8] : memref<544x32xbf16, #tpu.memory_space<vmem>>, vector<49x32xbf16>
    tpu.vector_store %arg7[%c144, %c0_8], %17 {strides = array<i32>} : memref<544x32xbf16, #tpu.memory_space<vmem>>, vector<49x32xbf16>,
    %19 = vector.extract_strided_slice %14 {offsets = [98, 0], sizes = [49, 32], strides = [1, 1]} : vector<196x32xbf16> to vector<49x32xbf16>
    %c272 = arith.constant 272 : index
    %c0_9 = arith.constant 0 : index
    %20 = vector.load %arg7[%c272, %c0_9] : memref<544x32xbf16, #tpu.memory_space<vmem>>, vector<49x32xbf16>
    tpu.vector_store %arg7[%c272, %c0_9], %19 {strides = array<i32>} : memref<544x32xbf16, #tpu.memory_space<vmem>>, vector<49x32xbf16>,
    %21 = vector.extract_strided_slice %14 {offsets = [147, 0], sizes = [49, 32], strides = [1, 1]} : vector<196x32xbf16> to vector<49x32xbf16>
    %c400 = arith.constant 400 : index
    %c0_10 = arith.constant 0 : index
    %22 = vector.load %arg7[%c400, %c0_10] : memref<544x32xbf16, #tpu.memory_space<vmem>>, vector<49x32xbf16>
    tpu.vector_store %arg7[%c400, %c0_10], %21 {strides = array<i32>} : memref<544x32xbf16, #tpu.memory_space<vmem>>, vector<49x32xbf16>,
    %23 = vector.extract_strided_slice %4 {offsets = [784, 0], sizes = [196, 32], strides = [1, 1]} : vector<1568x32xf32> to vector<196x32xf32>
    %24 = vector.extract_strided_slice %4 {offsets = [980, 0], sizes = [196, 32], strides = [1, 1]} : vector<1568x32xf32> to vector<196x32xf32>
    %25 = vector.extract_strided_slice %4 {offsets = [1176, 0], sizes = [196, 32], strides = [1, 1]} : vector<1568x32xf32> to vector<196x32xf32>
    %26 = vector.extract_strided_slice %4 {offsets = [1372, 0], sizes = [196, 32], strides = [1, 1]} : vector<1568x32xf32> to vector<196x32xf32>
    %27 = arith.maximumf %23, %24 : vector<196x32xf32>
    %28 = arith.maximumf %25, %26 : vector<196x32xf32>
    %29 = arith.maximumf %27, %28 : vector<196x32xf32>
    %30 = arith.truncf %29 : vector<196x32xf32> to vector<196x32xbf16>
    %31 = vector.extract_strided_slice %30 {offsets = [0, 0], sizes = [49, 32], strides = [1, 1]} : vector<196x32xbf16> to vector<49x32xbf16>
    %c80 = arith.constant 80 : index
    %c0_11 = arith.constant 0 : index
    %32 = vector.load %arg7[%c80, %c0_11] : memref<544x32xbf16, #tpu.memory_space<vmem>>, vector<49x32xbf16>
    tpu.vector_store %arg7[%c80, %c0_11], %31 {strides = array<i32>} : memref<544x32xbf16, #tpu.memory_space<vmem>>, vector<49x32xbf16>,
    %33 = vector.extract_strided_slice %30 {offsets = [49, 0], sizes = [49, 32], strides = [1, 1]} : vector<196x32xbf16> to vector<49x32xbf16>
    %c208 = arith.constant 208 : index
    %c0_12 = arith.constant 0 : index
    %34 = vector.load %arg7[%c208, %c0_12] : memref<544x32xbf16, #tpu.memory_space<vmem>>, vector<49x32xbf16>
    tpu.vector_store %arg7[%c208, %c0_12], %33 {strides = array<i32>} : memref<544x32xbf16, #tpu.memory_space<vmem>>, vector<49x32xbf16>,
    %35 = vector.extract_strided_slice %30 {offsets = [98, 0], sizes = [49, 32], strides = [1, 1]} : vector<196x32xbf16> to vector<49x32xbf16>
    %c336 = arith.constant 336 : index
    %c0_13 = arith.constant 0 : index
    %36 = vector.load %arg7[%c336, %c0_13] : memref<544x32xbf16, #tpu.memory_space<vmem>>, vector<49x32xbf16>
    tpu.vector_store %arg7[%c336, %c0_13], %35 {strides = array<i32>} : memref<544x32xbf16, #tpu.memory_space<vmem>>, vector<49x32xbf16>,
    %37 = vector.extract_strided_slice %30 {offsets = [147, 0], sizes = [49, 32], strides = [1, 1]} : vector<196x32xbf16> to vector<49x32xbf16>
    %c464 = arith.constant 464 : index
    %c0_14 = arith.constant 0 : index
    %38 = vector.load %arg7[%c464, %c0_14] : memref<544x32xbf16, #tpu.memory_space<vmem>>, vector<49x32xbf16>
    tpu.vector_store %arg7[%c464, %c0_14], %37 {strides = array<i32>} : memref<544x32xbf16, #tpu.memory_space<vmem>>, vector<49x32xbf16>,
    %c0_15 = arith.constant 0 : index
    %c0_16 = arith.constant 0 : index
    %39 = vector.load %arg5[%c0_15, %c0_16] : memref<128x2xbf16, #tpu.memory_space<vmem>>, vector<128x1xbf16>
    %c0_17 = arith.constant 0 : index
    %c1 = arith.constant 1 : index
    %40 = vector.load %arg5[%c0_17, %c1] : memref<128x2xbf16, #tpu.memory_space<vmem>>, vector<128x1xbf16>
    %c392 = arith.constant 392 : index
    %c0_18 = arith.constant 0 : index
    %41 = vector.load %arg7[%c392, %c0_18] : memref<544x32xbf16, #tpu.memory_space<vmem>>, vector<128x32xbf16>
    %42 = vector.broadcast %39 : vector<128x1xbf16> to vector<128x32xbf16>
    %43 = arith.mulf %41, %42 : vector<128x32xbf16>
    %c0_19 = arith.constant 0 : index
    %c0_20 = arith.constant 0 : index
    %44 = vector.load %arg8[%c0_19, %c0_20] : memref<512x288xbf16, #tpu.memory_space<vmem>>, vector<128x32xbf16>
    tpu.vector_store %arg8[%c0_19, %c0_20], %43 {strides = array<i32>} : memref<512x288xbf16, #tpu.memory_space<vmem>>, vector<128x32xbf16>,
    %c265 = arith.constant 265 : index
    %c0_21 = arith.constant 0 : index
    %45 = vector.load %arg7[%c265, %c0_21] : memref<544x32xbf16, #tpu.memory_space<vmem>>, vector<128x32xbf16>
    %c0_22 = arith.constant 0 : index
    %c32 = arith.constant 32 : index
    %46 = vector.load %arg8[%c0_22, %c32] : memref<512x288xbf16, #tpu.memory_space<vmem>>, vector<128x32xbf16>
    tpu.vector_store %arg8[%c0_22, %c32], %45 {strides = array<i32>} : memref<512x288xbf16, #tpu.memory_space<vmem>>, vector<128x32xbf16>,
    %c393 = arith.constant 393 : index
    %c0_23 = arith.constant 0 : index
    %47 = vector.load %arg7[%c393, %c0_23] : memref<544x32xbf16, #tpu.memory_space<vmem>>, vector<128x32xbf16>
    %c0_24 = arith.constant 0 : index
    %c64 = arith.constant 64 : index
    %48 = vector.load %arg8[%c0_24, %c64] : memref<512x288xbf16, #tpu.memory_space<vmem>>, vector<128x32xbf16>
    tpu.vector_store %arg8[%c0_24, %c64], %47 {strides = array<i32>} : memref<512x288xbf16, #tpu.memory_space<vmem>>, vector<128x32xbf16>,
    %c143 = arith.constant 143 : index
    %c0_25 = arith.constant 0 : index
    %49 = vector.load %arg7[%c143, %c0_25] : memref<544x32xbf16, #tpu.memory_space<vmem>>, vector<128x32xbf16>
    %50 = vector.broadcast %39 : vector<128x1xbf16> to vector<128x32xbf16>
    %51 = arith.mulf %49, %50 : vector<128x32xbf16>
    %c0_26 = arith.constant 0 : index
    %c96 = arith.constant 96 : index
    %52 = vector.load %arg8[%c0_26, %c96] : memref<512x288xbf16, #tpu.memory_space<vmem>>, vector<128x32xbf16>
    tpu.vector_store %arg8[%c0_26, %c96], %51 {strides = array<i32>} : memref<512x288xbf16, #tpu.memory_space<vmem>>, vector<128x32xbf16>,
    %c16_27 = arith.constant 16 : index
    %c0_28 = arith.constant 0 : index
    %53 = vector.load %arg7[%c16_27, %c0_28] : memref<544x32xbf16, #tpu.memory_space<vmem>>, vector<128x32xbf16>
    %c0_29 = arith.constant 0 : index
    %c128 = arith.constant 128 : index
    %54 = vector.load %arg8[%c0_29, %c128] : memref<512x288xbf16, #tpu.memory_space<vmem>>, vector<128x32xbf16>
    tpu.vector_store %arg8[%c0_29, %c128], %53 {strides = array<i32>} : memref<512x288xbf16, #tpu.memory_space<vmem>>, vector<128x32xbf16>,
    %c144_30 = arith.constant 144 : index
    %c0_31 = arith.constant 0 : index
    %55 = vector.load %arg7[%c144_30, %c0_31] : memref<544x32xbf16, #tpu.memory_space<vmem>>, vector<128x32xbf16>
    %c0_32 = arith.constant 0 : index
    %c160 = arith.constant 160 : index
    %56 = vector.load %arg8[%c0_32, %c160] : memref<512x288xbf16, #tpu.memory_space<vmem>>, vector<128x32xbf16>
    tpu.vector_store %arg8[%c0_32, %c160], %55 {strides = array<i32>} : memref<512x288xbf16, #tpu.memory_space<vmem>>, vector<128x32xbf16>,
    %c399 = arith.constant 399 : index
    %c0_33 = arith.constant 0 : index
    %57 = vector.load %arg7[%c399, %c0_33] : memref<544x32xbf16, #tpu.memory_space<vmem>>, vector<128x32xbf16>
    %58 = vector.broadcast %39 : vector<128x1xbf16> to vector<128x32xbf16>
    %59 = arith.mulf %57, %58 : vector<128x32xbf16>
    %c0_34 = arith.constant 0 : index
    %c192 = arith.constant 192 : index
    %60 = vector.load %arg8[%c0_34, %c192] : memref<512x288xbf16, #tpu.memory_space<vmem>>, vector<128x32xbf16>
    tpu.vector_store %arg8[%c0_34, %c192], %59 {strides = array<i32>} : memref<512x288xbf16, #tpu.memory_space<vmem>>, vector<128x32xbf16>,
    %c272_35 = arith.constant 272 : index
    %c0_36 = arith.constant 0 : index
    %61 = vector.load %arg7[%c272_35, %c0_36] : memref<544x32xbf16, #tpu.memory_space<vmem>>, vector<128x32xbf16>
    %c0_37 = arith.constant 0 : index
    %c224 = arith.constant 224 : index
    %62 = vector.load %arg8[%c0_37, %c224] : memref<512x288xbf16, #tpu.memory_space<vmem>>, vector<128x32xbf16>
    tpu.vector_store %arg8[%c0_37, %c224], %61 {strides = array<i32>} : memref<512x288xbf16, #tpu.memory_space<vmem>>, vector<128x32xbf16>,
    %c400_38 = arith.constant 400 : index
    %c0_39 = arith.constant 0 : index
    %63 = vector.load %arg7[%c400_38, %c0_39] : memref<544x32xbf16, #tpu.memory_space<vmem>>, vector<128x32xbf16>
    %c0_40 = arith.constant 0 : index
    %c256 = arith.constant 256 : index
    %64 = vector.load %arg8[%c0_40, %c256] : memref<512x288xbf16, #tpu.memory_space<vmem>>, vector<128x32xbf16>
    tpu.vector_store %arg8[%c0_40, %c256], %63 {strides = array<i32>} : memref<512x288xbf16, #tpu.memory_space<vmem>>, vector<128x32xbf16>,
    %c265_41 = arith.constant 265 : index
    %c0_42 = arith.constant 0 : index
    %65 = vector.load %arg7[%c265_41, %c0_42] : memref<544x32xbf16, #tpu.memory_space<vmem>>, vector<128x32xbf16>
    %c128_43 = arith.constant 128 : index
    %c0_44 = arith.constant 0 : index
    %66 = vector.load %arg8[%c128_43, %c0_44] : memref<512x288xbf16, #tpu.memory_space<vmem>>, vector<128x32xbf16>
    tpu.vector_store %arg8[%c128_43, %c0_44], %65 {strides = array<i32>} : memref<512x288xbf16, #tpu.memory_space<vmem>>, vector<128x32xbf16>,
    %c393_45 = arith.constant 393 : index
    %c0_46 = arith.constant 0 : index
    %67 = vector.load %arg7[%c393_45, %c0_46] : memref<544x32xbf16, #tpu.memory_space<vmem>>, vector<128x32xbf16>
    %c128_47 = arith.constant 128 : index
    %c32_48 = arith.constant 32 : index
    %68 = vector.load %arg8[%c128_47, %c32_48] : memref<512x288xbf16, #tpu.memory_space<vmem>>, vector<128x32xbf16>
    tpu.vector_store %arg8[%c128_47, %c32_48], %67 {strides = array<i32>} : memref<512x288xbf16, #tpu.memory_space<vmem>>, vector<128x32xbf16>,
    %c266 = arith.constant 266 : index
    %c0_49 = arith.constant 0 : index
    %69 = vector.load %arg7[%c266, %c0_49] : memref<544x32xbf16, #tpu.memory_space<vmem>>, vector<128x32xbf16>
    %70 = vector.broadcast %40 : vector<128x1xbf16> to vector<128x32xbf16>
    %71 = arith.mulf %69, %70 : vector<128x32xbf16>
    %c128_50 = arith.constant 128 : index
    %c64_51 = arith.constant 64 : index
    %72 = vector.load %arg8[%c128_50, %c64_51] : memref<512x288xbf16, #tpu.memory_space<vmem>>, vector<128x32xbf16>
    tpu.vector_store %arg8[%c128_50, %c64_51], %71 {strides = array<i32>} : memref<512x288xbf16, #tpu.memory_space<vmem>>, vector<128x32xbf16>,
    %c16_52 = arith.constant 16 : index
    %c0_53 = arith.constant 0 : index
    %73 = vector.load %arg7[%c16_52, %c0_53] : memref<544x32xbf16, #tpu.memory_space<vmem>>, vector<128x32xbf16>
    %c128_54 = arith.constant 128 : index
    %c96_55 = arith.constant 96 : index
    %74 = vector.load %arg8[%c128_54, %c96_55] : memref<512x288xbf16, #tpu.memory_space<vmem>>, vector<128x32xbf16>
    tpu.vector_store %arg8[%c128_54, %c96_55], %73 {strides = array<i32>} : memref<512x288xbf16, #tpu.memory_space<vmem>>, vector<128x32xbf16>,
    %c144_56 = arith.constant 144 : index
    %c0_57 = arith.constant 0 : index
    %75 = vector.load %arg7[%c144_56, %c0_57] : memref<544x32xbf16, #tpu.memory_space<vmem>>, vector<128x32xbf16>
    %c128_58 = arith.constant 128 : index
    %c128_59 = arith.constant 128 : index
    %76 = vector.load %arg8[%c128_58, %c128_59] : memref<512x288xbf16, #tpu.memory_space<vmem>>, vector<128x32xbf16>
    tpu.vector_store %arg8[%c128_58, %c128_59], %75 {strides = array<i32>} : memref<512x288xbf16, #tpu.memory_space<vmem>>, vector<128x32xbf16>,
    %c17 = arith.constant 17 : index
    %c0_60 = arith.constant 0 : index
    %77 = vector.load %arg7[%c17, %c0_60] : memref<544x32xbf16, #tpu.memory_space<vmem>>, vector<128x32xbf16>
    %78 = vector.broadcast %40 : vector<128x1xbf16> to vector<128x32xbf16>
    %79 = arith.mulf %77, %78 : vector<128x32xbf16>
    %c128_61 = arith.constant 128 : index
    %c160_62 = arith.constant 160 : index
    %80 = vector.load %arg8[%c128_61, %c160_62] : memref<512x288xbf16, #tpu.memory_space<vmem>>, vector<128x32xbf16>
    tpu.vector_store %arg8[%c128_61, %c160_62], %79 {strides = array<i32>} : memref<512x288xbf16, #tpu.memory_space<vmem>>, vector<128x32xbf16>,
    %c272_63 = arith.constant 272 : index
    %c0_64 = arith.constant 0 : index
    %81 = vector.load %arg7[%c272_63, %c0_64] : memref<544x32xbf16, #tpu.memory_space<vmem>>, vector<128x32xbf16>
    %c128_65 = arith.constant 128 : index
    %c192_66 = arith.constant 192 : index
    %82 = vector.load %arg8[%c128_65, %c192_66] : memref<512x288xbf16, #tpu.memory_space<vmem>>, vector<128x32xbf16>
    tpu.vector_store %arg8[%c128_65, %c192_66], %81 {strides = array<i32>} : memref<512x288xbf16, #tpu.memory_space<vmem>>, vector<128x32xbf16>,
    %c400_67 = arith.constant 400 : index
    %c0_68 = arith.constant 0 : index
    %83 = vector.load %arg7[%c400_67, %c0_68] : memref<544x32xbf16, #tpu.memory_space<vmem>>, vector<128x32xbf16>
    %c128_69 = arith.constant 128 : index
    %c224_70 = arith.constant 224 : index
    %84 = vector.load %arg8[%c128_69, %c224_70] : memref<512x288xbf16, #tpu.memory_space<vmem>>, vector<128x32xbf16>
    tpu.vector_store %arg8[%c128_69, %c224_70], %83 {strides = array<i32>} : memref<512x288xbf16, #tpu.memory_space<vmem>>, vector<128x32xbf16>,
    %c273 = arith.constant 273 : index
    %c0_71 = arith.constant 0 : index
    %85 = vector.load %arg7[%c273, %c0_71] : memref<544x32xbf16, #tpu.memory_space<vmem>>, vector<128x32xbf16>
    %86 = vector.broadcast %40 : vector<128x1xbf16> to vector<128x32xbf16>
    %87 = arith.mulf %85, %86 : vector<128x32xbf16>
    %c128_72 = arith.constant 128 : index
    %c256_73 = arith.constant 256 : index
    %88 = vector.load %arg8[%c128_72, %c256_73] : memref<512x288xbf16, #tpu.memory_space<vmem>>, vector<128x32xbf16>
    tpu.vector_store %arg8[%c128_72, %c256_73], %87 {strides = array<i32>} : memref<512x288xbf16, #tpu.memory_space<vmem>>, vector<128x32xbf16>,
    %c143_74 = arith.constant 143 : index
    %c0_75 = arith.constant 0 : index
    %89 = vector.load %arg7[%c143_74, %c0_75] : memref<544x32xbf16, #tpu.memory_space<vmem>>, vector<128x32xbf16>
    %90 = vector.broadcast %39 : vector<128x1xbf16> to vector<128x32xbf16>
    %91 = arith.mulf %89, %90 : vector<128x32xbf16>
    %c256_76 = arith.constant 256 : index
    %c0_77 = arith.constant 0 : index
    %92 = vector.load %arg8[%c256_76, %c0_77] : memref<512x288xbf16, #tpu.memory_space<vmem>>, vector<128x32xbf16>
    tpu.vector_store %arg8[%c256_76, %c0_77], %91 {strides = array<i32>} : memref<512x288xbf16, #tpu.memory_space<vmem>>, vector<128x32xbf16>,
    %c16_78 = arith.constant 16 : index
    %c0_79 = arith.constant 0 : index
    %93 = vector.load %arg7[%c16_78, %c0_79] : memref<544x32xbf16, #tpu.memory_space<vmem>>, vector<128x32xbf16>
    %c256_80 = arith.constant 256 : index
    %c32_81 = arith.constant 32 : index
    %94 = vector.load %arg8[%c256_80, %c32_81] : memref<512x288xbf16, #tpu.memory_space<vmem>>, vector<128x32xbf16>
    tpu.vector_store %arg8[%c256_80, %c32_81], %93 {strides = array<i32>} : memref<512x288xbf16, #tpu.memory_space<vmem>>, vector<128x32xbf16>,
    %c144_82 = arith.constant 144 : index
    %c0_83 = arith.constant 0 : index
    %95 = vector.load %arg7[%c144_82, %c0_83] : memref<544x32xbf16, #tpu.memory_space<vmem>>, vector<128x32xbf16>
    %c256_84 = arith.constant 256 : index
    %c64_85 = arith.constant 64 : index
    %96 = vector.load %arg8[%c256_84, %c64_85] : memref<512x288xbf16, #tpu.memory_space<vmem>>, vector<128x32xbf16>
    tpu.vector_store %arg8[%c256_84, %c64_85], %95 {strides = array<i32>} : memref<512x288xbf16, #tpu.memory_space<vmem>>, vector<128x32xbf16>,
    %c399_86 = arith.constant 399 : index
    %c0_87 = arith.constant 0 : index
    %97 = vector.load %arg7[%c399_86, %c0_87] : memref<544x32xbf16, #tpu.memory_space<vmem>>, vector<128x32xbf16>
    %98 = vector.broadcast %39 : vector<128x1xbf16> to vector<128x32xbf16>
    %99 = arith.mulf %97, %98 : vector<128x32xbf16>
    %c256_88 = arith.constant 256 : index
    %c96_89 = arith.constant 96 : index
    %100 = vector.load %arg8[%c256_88, %c96_89] : memref<512x288xbf16, #tpu.memory_space<vmem>>, vector<128x32xbf16>
    tpu.vector_store %arg8[%c256_88, %c96_89], %99 {strides = array<i32>} : memref<512x288xbf16, #tpu.memory_space<vmem>>, vector<128x32xbf16>,
    %c272_90 = arith.constant 272 : index
    %c0_91 = arith.constant 0 : index
    %101 = vector.load %arg7[%c272_90, %c0_91] : memref<544x32xbf16, #tpu.memory_space<vmem>>, vector<128x32xbf16>
    %c256_92 = arith.constant 256 : index
    %c128_93 = arith.constant 128 : index
    %102 = vector.load %arg8[%c256_92, %c128_93] : memref<512x288xbf16, #tpu.memory_space<vmem>>, vector<128x32xbf16>
    tpu.vector_store %arg8[%c256_92, %c128_93], %101 {strides = array<i32>} : memref<512x288xbf16, #tpu.memory_space<vmem>>, vector<128x32xbf16>,
    %c400_94 = arith.constant 400 : index
    %c0_95 = arith.constant 0 : index
    %103 = vector.load %arg7[%c400_94, %c0_95] : memref<544x32xbf16, #tpu.memory_space<vmem>>, vector<128x32xbf16>
    %c256_96 = arith.constant 256 : index
    %c160_97 = arith.constant 160 : index
    %104 = vector.load %arg8[%c256_96, %c160_97] : memref<512x288xbf16, #tpu.memory_space<vmem>>, vector<128x32xbf16>
    tpu.vector_store %arg8[%c256_96, %c160_97], %103 {strides = array<i32>} : memref<512x288xbf16, #tpu.memory_space<vmem>>, vector<128x32xbf16>,
    %c150 = arith.constant 150 : index
    %c0_98 = arith.constant 0 : index
    %105 = vector.load %arg7[%c150, %c0_98] : memref<544x32xbf16, #tpu.memory_space<vmem>>, vector<128x32xbf16>
    %106 = vector.broadcast %39 : vector<128x1xbf16> to vector<128x32xbf16>
    %107 = arith.mulf %105, %106 : vector<128x32xbf16>
    %c256_99 = arith.constant 256 : index
    %c192_100 = arith.constant 192 : index
    %108 = vector.load %arg8[%c256_99, %c192_100] : memref<512x288xbf16, #tpu.memory_space<vmem>>, vector<128x32xbf16>
    tpu.vector_store %arg8[%c256_99, %c192_100], %107 {strides = array<i32>} : memref<512x288xbf16, #tpu.memory_space<vmem>>, vector<128x32xbf16>,
    %c23 = arith.constant 23 : index
    %c0_101 = arith.constant 0 : index
    %109 = vector.load %arg7[%c23, %c0_101] : memref<544x32xbf16, #tpu.memory_space<vmem>>, vector<128x32xbf16>
    %c256_102 = arith.constant 256 : index
    %c224_103 = arith.constant 224 : index
    %110 = vector.load %arg8[%c256_102, %c224_103] : memref<512x288xbf16, #tpu.memory_space<vmem>>, vector<128x32xbf16>
    tpu.vector_store %arg8[%c256_102, %c224_103], %109 {strides = array<i32>} : memref<512x288xbf16, #tpu.memory_space<vmem>>, vector<128x32xbf16>,
    %c151 = arith.constant 151 : index
    %c0_104 = arith.constant 0 : index
    %111 = vector.load %arg7[%c151, %c0_104] : memref<544x32xbf16, #tpu.memory_space<vmem>>, vector<128x32xbf16>
    %c256_105 = arith.constant 256 : index
    %c256_106 = arith.constant 256 : index
    %112 = vector.load %arg8[%c256_105, %c256_106] : memref<512x288xbf16, #tpu.memory_space<vmem>>, vector<128x32xbf16>
    tpu.vector_store %arg8[%c256_105, %c256_106], %111 {strides = array<i32>} : memref<512x288xbf16, #tpu.memory_space<vmem>>, vector<128x32xbf16>,
    %c16_107 = arith.constant 16 : index
    %c0_108 = arith.constant 0 : index
    %113 = vector.load %arg7[%c16_107, %c0_108] : memref<544x32xbf16, #tpu.memory_space<vmem>>, vector<128x32xbf16>
    %c384 = arith.constant 384 : index
    %c0_109 = arith.constant 0 : index
    %114 = vector.load %arg8[%c384, %c0_109] : memref<512x288xbf16, #tpu.memory_space<vmem>>, vector<128x32xbf16>
    tpu.vector_store %arg8[%c384, %c0_109], %113 {strides = array<i32>} : memref<512x288xbf16, #tpu.memory_space<vmem>>, vector<128x32xbf16>,
    %c144_110 = arith.constant 144 : index
    %c0_111 = arith.constant 0 : index
    %115 = vector.load %arg7[%c144_110, %c0_111] : memref<544x32xbf16, #tpu.memory_space<vmem>>, vector<128x32xbf16>
    %c384_112 = arith.constant 384 : index
    %c32_113 = arith.constant 32 : index
    %116 = vector.load %arg8[%c384_112, %c32_113] : memref<512x288xbf16, #tpu.memory_space<vmem>>, vector<128x32xbf16>
    tpu.vector_store %arg8[%c384_112, %c32_113], %115 {strides = array<i32>} : memref<512x288xbf16, #tpu.memory_space<vmem>>, vector<128x32xbf16>,
    %c17_114 = arith.constant 17 : index
    %c0_115 = arith.constant 0 : index
    %117 = vector.load %arg7[%c17_114, %c0_115] : memref<544x32xbf16, #tpu.memory_space<vmem>>, vector<128x32xbf16>
    %118 = vector.broadcast %40 : vector<128x1xbf16> to vector<128x32xbf16>
    %119 = arith.mulf %117, %118 : vector<128x32xbf16>
    %c384_116 = arith.constant 384 : index
    %c64_117 = arith.constant 64 : index
    %120 = vector.load %arg8[%c384_116, %c64_117] : memref<512x288xbf16, #tpu.memory_space<vmem>>, vector<128x32xbf16>
    tpu.vector_store %arg8[%c384_116, %c64_117], %119 {strides = array<i32>} : memref<512x288xbf16, #tpu.memory_space<vmem>>, vector<128x32xbf16>,
    %c272_118 = arith.constant 272 : index
    %c0_119 = arith.constant 0 : index
    %121 = vector.load %arg7[%c272_118, %c0_119] : memref<544x32xbf16, #tpu.memory_space<vmem>>, vector<128x32xbf16>
    %c384_120 = arith.constant 384 : index
    %c96_121 = arith.constant 96 : index
    %122 = vector.load %arg8[%c384_120, %c96_121] : memref<512x288xbf16, #tpu.memory_space<vmem>>, vector<128x32xbf16>
    tpu.vector_store %arg8[%c384_120, %c96_121], %121 {strides = array<i32>} : memref<512x288xbf16, #tpu.memory_space<vmem>>, vector<128x32xbf16>,
    %c400_122 = arith.constant 400 : index
    %c0_123 = arith.constant 0 : index
    %123 = vector.load %arg7[%c400_122, %c0_123] : memref<544x32xbf16, #tpu.memory_space<vmem>>, vector<128x32xbf16>
    %c384_124 = arith.constant 384 : index
    %c128_125 = arith.constant 128 : index
    %124 = vector.load %arg8[%c384_124, %c128_125] : memref<512x288xbf16, #tpu.memory_space<vmem>>, vector<128x32xbf16>
    tpu.vector_store %arg8[%c384_124, %c128_125], %123 {strides = array<i32>} : memref<512x288xbf16, #tpu.memory_space<vmem>>, vector<128x32xbf16>,
    %c273_126 = arith.constant 273 : index
    %c0_127 = arith.constant 0 : index
    %125 = vector.load %arg7[%c273_126, %c0_127] : memref<544x32xbf16, #tpu.memory_space<vmem>>, vector<128x32xbf16>
    %126 = vector.broadcast %40 : vector<128x1xbf16> to vector<128x32xbf16>
    %127 = arith.mulf %125, %126 : vector<128x32xbf16>
    %c384_128 = arith.constant 384 : index
    %c160_129 = arith.constant 160 : index
    %128 = vector.load %arg8[%c384_128, %c160_129] : memref<512x288xbf16, #tpu.memory_space<vmem>>, vector<128x32xbf16>
    tpu.vector_store %arg8[%c384_128, %c160_129], %127 {strides = array<i32>} : memref<512x288xbf16, #tpu.memory_space<vmem>>, vector<128x32xbf16>,
    %c23_130 = arith.constant 23 : index
    %c0_131 = arith.constant 0 : index
    %129 = vector.load %arg7[%c23_130, %c0_131] : memref<544x32xbf16, #tpu.memory_space<vmem>>, vector<128x32xbf16>
    %c384_132 = arith.constant 384 : index
    %c192_133 = arith.constant 192 : index
    %130 = vector.load %arg8[%c384_132, %c192_133] : memref<512x288xbf16, #tpu.memory_space<vmem>>, vector<128x32xbf16>
    tpu.vector_store %arg8[%c384_132, %c192_133], %129 {strides = array<i32>} : memref<512x288xbf16, #tpu.memory_space<vmem>>, vector<128x32xbf16>,
    %c151_134 = arith.constant 151 : index
    %c0_135 = arith.constant 0 : index
    %131 = vector.load %arg7[%c151_134, %c0_135] : memref<544x32xbf16, #tpu.memory_space<vmem>>, vector<128x32xbf16>
    %c384_136 = arith.constant 384 : index
    %c224_137 = arith.constant 224 : index
    %132 = vector.load %arg8[%c384_136, %c224_137] : memref<512x288xbf16, #tpu.memory_space<vmem>>, vector<128x32xbf16>
    tpu.vector_store %arg8[%c384_136, %c224_137], %131 {strides = array<i32>} : memref<512x288xbf16, #tpu.memory_space<vmem>>, vector<128x32xbf16>,
    %c24 = arith.constant 24 : index
    %c0_138 = arith.constant 0 : index
    %133 = vector.load %arg7[%c24, %c0_138] : memref<544x32xbf16, #tpu.memory_space<vmem>>, vector<128x32xbf16>
    %134 = vector.broadcast %40 : vector<128x1xbf16> to vector<128x32xbf16>
    %135 = arith.mulf %133, %134 : vector<128x32xbf16>
    %c384_139 = arith.constant 384 : index
    %c256_140 = arith.constant 256 : index
    %136 = vector.load %arg8[%c384_139, %c256_140] : memref<512x288xbf16, #tpu.memory_space<vmem>>, vector<128x32xbf16>
    tpu.vector_store %arg8[%c384_139, %c256_140], %135 {strides = array<i32>} : memref<512x288xbf16, #tpu.memory_space<vmem>>, vector<128x32xbf16>,
    %c0_141 = arith.constant 0 : index
    %c0_142 = arith.constant 0 : index
    %137 = vector.load %arg8[%c0_141, %c0_142] : memref<512x288xbf16, #tpu.memory_space<vmem>>, vector<512x288xbf16>
    %c0_143 = arith.constant 0 : index
    %c0_144 = arith.constant 0 : index
    %138 = vector.load %arg3[%c0_143, %c0_144] : memref<288x64xbf16, #tpu.memory_space<vmem>>, vector<288x64xbf16>
    %cst_145 = arith.constant dense<0.000000e+00> : vector<512x64xf32>
    %139 = tpu.matmul %137, %138, %cst_145 {dimension_numbers = #tpu.dot_dimension_numbers<[1], [0], [0], [1], [0, 0, 1, 1], [], []>} : vector<512x288xbf16>, vector<288x64xbf16>, vector<512x64xf32> -> vector<512x64xf32>
    %140 = vector.extract_strided_slice %139 {offsets = [0, 0], sizes = [128, 64], strides = [1, 1]} : vector<512x64xf32> to vector<128x64xf32>
    %141 = vector.extract_strided_slice %139 {offsets = [128, 0], sizes = [128, 64], strides = [1, 1]} : vector<512x64xf32> to vector<128x64xf32>
    %142 = arith.maximumf %140, %141 : vector<128x64xf32>
    %143 = vector.extract_strided_slice %139 {offsets = [256, 0], sizes = [128, 64], strides = [1, 1]} : vector<512x64xf32> to vector<128x64xf32>
    %144 = vector.extract_strided_slice %139 {offsets = [384, 0], sizes = [128, 64], strides = [1, 1]} : vector<512x64xf32> to vector<128x64xf32>
    %145 = arith.maximumf %143, %144 : vector<128x64xf32>
    %146 = arith.maximumf %142, %145 : vector<128x64xf32>
    %c0_146 = arith.constant 0 : index
    %c0_147 = arith.constant 0 : index
    %147 = vector.load %arg4[%c0_146, %c0_147] : memref<1x64xf32, #tpu.memory_space<vmem>>, vector<1x64xf32>
    %148 = vector.broadcast %147 : vector<1x64xf32> to vector<128x64xf32>
    %149 = arith.addf %146, %148 : vector<128x64xf32>
    %cst_148 = arith.constant 0.000000e+00 : f32
    %150 = vector.broadcast %cst_148 : f32 to vector<128x64xf32>
    %151 = arith.maximumf %149, %150 : vector<128x64xf32>
    %152 = vector.extract_strided_slice %151 {offsets = [0, 0], sizes = [49, 64], strides = [1, 1]} : vector<128x64xf32> to vector<49x64xf32>
    %153 = arith.truncf %152 : vector<49x64xf32> to vector<49x64xbf16>
    %c0_149 = arith.constant 0 : index
    %c0_150 = arith.constant 0 : index
    %c0_151 = arith.constant 0 : index
    %154 = vector.load %arg6[%c0_149, %c0_150, %c0_151] : memref<2x49x64xbf16, #tpu.memory_space<vmem>>, vector<1x49x64xbf16>
    %155 = vector.shape_cast %154 : vector<1x49x64xbf16> to vector<49x64xbf16>
    %156 = vector.shape_cast %153 : vector<49x64xbf16> to vector<1x49x64xbf16>
    tpu.vector_store %arg6[%c0_149, %c0_150, %c0_151], %156 {strides = array<i32>} : memref<2x49x64xbf16, #tpu.memory_space<vmem>>, vector<1x49x64xbf16>,
    %157 = vector.extract_strided_slice %151 {offsets = [64, 0], sizes = [49, 64], strides = [1, 1]} : vector<128x64xf32> to vector<49x64xf32>
    %158 = arith.truncf %157 : vector<49x64xf32> to vector<49x64xbf16>
    %c1_152 = arith.constant 1 : index
    %c0_153 = arith.constant 0 : index
    %c0_154 = arith.constant 0 : index
    %159 = vector.load %arg6[%c1_152, %c0_153, %c0_154] : memref<2x49x64xbf16, #tpu.memory_space<vmem>>, vector<1x49x64xbf16>
    %160 = vector.shape_cast %159 : vector<1x49x64xbf16> to vector<49x64xbf16>
    %161 = vector.shape_cast %158 : vector<49x64xbf16> to vector<1x49x64xbf16>
    tpu.vector_store %arg6[%c1_152, %c0_153, %c0_154], %161 {strides = array<i32>} : memref<2x49x64xbf16, #tpu.memory_space<vmem>>, vector<1x49x64xbf16>,
    return
  }
  func.func @transform_0(%arg0: i32) -> (i32, i32) {
    %c0_i32 = arith.constant 0 : i32
    %c0_i32_0 = arith.constant 0 : i32
    return %arg0, %c0_i32 : i32, i32
  }
  func.func @transform_1(%arg0: i32) -> (i32, i32) {
    %c0_i32 = arith.constant 0 : i32
    %c0_i32_0 = arith.constant 0 : i32
    %c0_i32_1 = arith.constant 0 : i32
    return %c0_i32, %c0_i32_0 : i32, i32
  }
  func.func @transform_2(%arg0: i32) -> (i32, i32) {
    %c0_i32 = arith.constant 0 : i32
    %c0_i32_0 = arith.constant 0 : i32
    %c0_i32_1 = arith.constant 0 : i32
    return %c0_i32, %c0_i32_0 : i32, i32
  }
  func.func @transform_3(%arg0: i32) -> (i32, i32) {
    %c0_i32 = arith.constant 0 : i32
    %c0_i32_0 = arith.constant 0 : i32
    %c0_i32_1 = arith.constant 0 : i32
    return %c0_i32, %c0_i32_0 : i32, i32
  }
  func.func @transform_4(%arg0: i32) -> (i32, i32) {
    %c0_i32 = arith.constant 0 : i32
    %c0_i32_0 = arith.constant 0 : i32
    %c0_i32_1 = arith.constant 0 : i32
    return %c0_i32, %c0_i32_0 : i32, i32
  }
  func.func @transform_5(%arg0: i32) -> (i32, i32, i32) {
    %c0_i32 = arith.constant 0 : i32
    %c0_i32_0 = arith.constant 0 : i32
    %c0_i32_1 = arith.constant 0 : i32
    return %arg0, %c0_i32, %c0_i32_0 : i32, i32, i32
  }
}

module attributes {stable_mosaic.version = 11 : i64} {
  func.func @_fc_kernel(%arg0: i32, %arg1: memref<2x3136xbf16, #tpu.memory_space<vmem>>, %arg2: memref<3136x128xbf16, #tpu.memory_space<vmem>>, %arg3: memref<1x128xf32, #tpu.memory_space<vmem>>, %arg4: memref<128x128xbf16, #tpu.memory_space<vmem>>, %arg5: memref<1x128xf32, #tpu.memory_space<vmem>>, %arg6: memref<2x128xf32, #tpu.memory_space<vmem>>) attributes {dimension_semantics = [#tpu.dimension_semantics<parallel>], iteration_bounds = array<i64: 1>, scalar_prefetch = 0 : i64, scratch_operands = 0 : i64, tpu.core_type = #tpu.core_type<tc>, window_params = [{transform_indices = @transform_0, window_bounds = array<i64: 2, 3136>}, {pipeline_mode = #tpu.pipeline_mode<synchronous>, transform_indices = @transform_1, window_bounds = array<i64: 3136, 128>}, {pipeline_mode = #tpu.pipeline_mode<synchronous>, transform_indices = @transform_2, window_bounds = array<i64: 1, 128>}, {pipeline_mode = #tpu.pipeline_mode<synchronous>, transform_indices = @transform_3, window_bounds = array<i64: 128, 128>}, {pipeline_mode = #tpu.pipeline_mode<synchronous>, transform_indices = @transform_4, window_bounds = array<i64: 1, 128>}, {transform_indices = @transform_5, window_bounds = array<i64: 2, 128>}]} {
    %c0 = arith.constant 0 : index
    %c0_0 = arith.constant 0 : index
    %0 = vector.load %arg1[%c0, %c0_0] : memref<2x3136xbf16, #tpu.memory_space<vmem>>, vector<2x3136xbf16>
    %c0_1 = arith.constant 0 : index
    %c0_2 = arith.constant 0 : index
    %1 = vector.load %arg2[%c0_1, %c0_2] : memref<3136x128xbf16, #tpu.memory_space<vmem>>, vector<3136x128xbf16>
    %cst = arith.constant dense<0.000000e+00> : vector<2x128xf32>
    %2 = tpu.matmul %0, %1, %cst {dimension_numbers = #tpu.dot_dimension_numbers<[1], [0], [0], [1], [0, 0, 1, 1], [], []>} : vector<2x3136xbf16>, vector<3136x128xbf16>, vector<2x128xf32> -> vector<2x128xf32>
    %c0_3 = arith.constant 0 : index
    %c0_4 = arith.constant 0 : index
    %3 = vector.load %arg3[%c0_3, %c0_4] : memref<1x128xf32, #tpu.memory_space<vmem>>, vector<1x128xf32>
    %4 = vector.broadcast %3 : vector<1x128xf32> to vector<2x128xf32>
    %5 = arith.addf %2, %4 : vector<2x128xf32>
    %cst_5 = arith.constant 0.000000e+00 : f32
    %6 = vector.broadcast %cst_5 : f32 to vector<2x128xf32>
    %7 = arith.maximumf %5, %6 : vector<2x128xf32>
    %8 = arith.truncf %7 : vector<2x128xf32> to vector<2x128xbf16>
    %c0_6 = arith.constant 0 : index
    %c0_7 = arith.constant 0 : index
    %9 = vector.load %arg4[%c0_6, %c0_7] : memref<128x128xbf16, #tpu.memory_space<vmem>>, vector<128x128xbf16>
    %cst_8 = arith.constant dense<0.000000e+00> : vector<2x128xf32>
    %10 = tpu.matmul %8, %9, %cst_8 {dimension_numbers = #tpu.dot_dimension_numbers<[1], [0], [0], [1], [0, 0, 1, 1], [], []>} : vector<2x128xbf16>, vector<128x128xbf16>, vector<2x128xf32> -> vector<2x128xf32>
    %c0_9 = arith.constant 0 : index
    %c0_10 = arith.constant 0 : index
    %11 = vector.load %arg5[%c0_9, %c0_10] : memref<1x128xf32, #tpu.memory_space<vmem>>, vector<1x128xf32>
    %12 = vector.broadcast %11 : vector<1x128xf32> to vector<2x128xf32>
    %13 = arith.addf %10, %12 : vector<2x128xf32>
    %c0_11 = arith.constant 0 : index
    %c0_12 = arith.constant 0 : index
    %14 = vector.load %arg6[%c0_11, %c0_12] : memref<2x128xf32, #tpu.memory_space<vmem>>, vector<2x128xf32>
    tpu.vector_store %arg6[%c0_11, %c0_12], %13 {strides = array<i32>} : memref<2x128xf32, #tpu.memory_space<vmem>>, vector<2x128xf32>,
    return
  }
  func.func @transform_0(%arg0: i32) -> (i32, i32) {
    %c0_i32 = arith.constant 0 : i32
    %c0_i32_0 = arith.constant 0 : i32
    return %arg0, %c0_i32 : i32, i32
  }
  func.func @transform_1(%arg0: i32) -> (i32, i32) {
    %c0_i32 = arith.constant 0 : i32
    %c0_i32_0 = arith.constant 0 : i32
    %c0_i32_1 = arith.constant 0 : i32
    return %c0_i32, %c0_i32_0 : i32, i32
  }
  func.func @transform_2(%arg0: i32) -> (i32, i32) {
    %c0_i32 = arith.constant 0 : i32
    %c0_i32_0 = arith.constant 0 : i32
    %c0_i32_1 = arith.constant 0 : i32
    return %c0_i32, %c0_i32_0 : i32, i32
  }
  func.func @transform_3(%arg0: i32) -> (i32, i32) {
    %c0_i32 = arith.constant 0 : i32
    %c0_i32_0 = arith.constant 0 : i32
    %c0_i32_1 = arith.constant 0 : i32
    return %c0_i32, %c0_i32_0 : i32, i32
  }
  func.func @transform_4(%arg0: i32) -> (i32, i32) {
    %c0_i32 = arith.constant 0 : i32
    %c0_i32_0 = arith.constant 0 : i32
    %c0_i32_1 = arith.constant 0 : i32
    return %c0_i32, %c0_i32_0 : i32, i32
  }
  func.func @transform_5(%arg0: i32) -> (i32, i32) {
    %c0_i32 = arith.constant 0 : i32
    %c0_i32_0 = arith.constant 0 : i32
    return %arg0, %c0_i32 : i32, i32
  }
}

</mosaic_0001>

<llo_original>
// kernel: forward.3
$region0: #{forward.3}
  #allocation0 [shape = 'u32[]', space=smem, size = 0x4, offset = 0x4, fixed_abs, tag = 'smem constant byte address 0x4 - core index']
  #allocation1 [shape = 'u32[144,128]{1,0:T(1,128)}', space=vmem, size = 0x12000, scoped, tag = 'internal scratch']
  %s0 = inlined_call_operand.vmem [shape: bf16[2,3136], index: 0, kind: input, shape index: {}]
  %s1 = inlined_call_operand.vmem [shape: bf16[3136,128], index: 1, kind: input, shape index: {}]
  %s2 = inlined_call_operand.vmem [shape: f32[1,128], index: 2, kind: input, shape index: {}]
  %s3 = inlined_call_operand.vmem [shape: bf16[128,128], index: 3, kind: input, shape index: {}]
  %s4 = inlined_call_operand.vmem [shape: f32[1,128], index: 4, kind: input, shape index: {}]
  %s5 = inlined_call_operand.hbm [shape: f32[2,128], index: 5, kind: output, shape index: {}]
  %s6 = sld [smem:[#allocation0]]
  $region30: #{forward.3} parent=0
    _
  %s8 = ssub.s32 1, %s6
  %s9 = scalar_select 0, %s8, %s6
  $region1: #{forward.3} parent=0
    #allocation2 [shape = 'u8[1024]{0}', space=vmem, size = 0x400, scoped, tag = 'output window, operand 0, single buffered']
    #allocation3 [shape = 's32[1]{0}', space=sflag, size = 0x4, scoped, tag = 'scoped memory for forward.3']
    %10 = vsyncpa [#allocation3], 0
    // Predicated region
    $region2: #{forward.3} parent=1 // pred_check
      _
    $region3: #{forward.3} parent=1 // pred_check_branch
      %12 = sbr.rel (0) target = $region5
    $region4: #{forward.3} parent=1 // pred_region
      _
    $region5: #{forward.3} parent=1 // pred_fallthru
      _
    // Predicated region
    $region6: #{forward.3} parent=1 // pred_check
      _
    $region7: #{forward.3} parent=1 // pred_check_branch
      %14 = sbr.rel (0) target = $region9
    $region8: #{forward.3} parent=1 // pred_region
      _
    $region9: #{forward.3} parent=1 // pred_fallthru
      _
    // Predicated region
    $region10: #{forward.3} parent=1 // pred_check
      _
    $region11: #{forward.3} parent=1 // pred_check_branch
      %16 = sbr.rel (0) target = $region13
    $region12: #{forward.3} parent=1 // pred_region
      _
    $region13: #{forward.3} parent=1 // pred_fallthru
      _
    // Predicated region
    $region14: #{forward.3} parent=1 // pred_check
      _
    $region15: #{forward.3} parent=1 // pred_check_branch
      %18 = sbr.rel (0) target = $region17
    $region16: #{forward.3} parent=1 // pred_region
      _
    $region17: #{forward.3} parent=1 // pred_fallthru
      _
    // Predicated region
    $region18: #{forward.3} parent=1 // pred_check
      _
    $region19: #{forward.3} parent=1 // pred_check_branch
      %20 = sbr.rel (0) target = $region21
    $region20: #{forward.3} parent=1 // pred_region
      _
    $region21: #{forward.3} parent=1 // pred_fallthru
      _
    %v22 = vld [vmem:[%s0] sm:$0xff]
    %v23 = vld [vmem:[%s0 + $0x8] sm:$0xff]
    %v24 = vld [vmem:[%s0 + $0x10] sm:$0xff]
    %v25 = vld [vmem:[%s0 + $0x18] sm:$0x1]
    %v26 = vld [vmem:[%s1] sm:$0xf]
    %v27 = vld [vmem:[%s1 + $0x4] sm:$0xf]
    %v28 = vld [vmem:[%s1 + $0x8] sm:$0xf]
    %v29 = vld [vmem:[%s1 + $0xc] sm:$0xf]
    %v30 = vld [vmem:[%s1 + $0x10] sm:$0xf]
    %v31 = vld [vmem:[%s1 + $0x14] sm:$0xf]
    %v32 = vld [vmem:[%s1 + $0x18] sm:$0xf]
    %v33 = vld [vmem:[%s1 + $0x1c] sm:$0xf]
    %v34 = vld [vmem:[%s1 + $0x20] sm:$0xf]
    %v35 = vld [vmem:[%s1 + $0x24] sm:$0xf]
    %v36 = vld [vmem:[%s1 + $0x28] sm:$0xf]
    %v37 = vld [vmem:[%s1 + $0x2c] sm:$0xf]
    %v38 = vld [vmem:[%s1 + $0x30] sm:$0xf]
    %v39 = vld [vmem:[%s1 + $0x34] sm:$0xf]
    %v40 = vld [vmem:[%s1 + $0x38] sm:$0xf]
    %v41 = vld [vmem:[%s1 + $0x3c] sm:$0xf]
    %v42 = vld [vmem:[%s1 + $0x40] sm:$0xf]
    %v43 = vld [vmem:[%s1 + $0x44] sm:$0xf]
    %v44 = vld [vmem:[%s1 + $0x48] sm:$0xf]
    %v45 = vld [vmem:[%s1 + $0x4c] sm:$0xf]
    %v46 = vld [vmem:[%s1 + $0x50] sm:$0xf]
    %v47 = vld [vmem:[%s1 + $0x54] sm:$0xf]
    %v48 = vld [vmem:[%s1 + $0x58] sm:$0xf]
    %v49 = vld [vmem:[%s1 + $0x5c] sm:$0xf]
    %v50 = vld [vmem:[%s1 + $0x60] sm:$0xf]
    %v51 = vld [vmem:[%s1 + $0x64] sm:$0xf]
    %v52 = vld [vmem:[%s1 + $0x68] sm:$0xf]
    %v53 = vld [vmem:[%s1 + $0x6c] sm:$0xf]
    %v54 = vld [vmem:[%s1 + $0x70] sm:$0xf]
    %v55 = vld [vmem:[%s1 + $0x74] sm:$0xf]
    %v56 = vld [vmem:[%s1 + $0x78] sm:$0xf]
    %v57 = vld [vmem:[%s1 + $0x7c] sm:$0xf]
    %v58 = vld [vmem:[%s1 + $0x80] sm:$0xf]
    %v59 = vld [vmem:[%s1 + $0x84] sm:$0xf]
    %v60 = vld [vmem:[%s1 + $0x88] sm:$0xf]
    %v61 = vld [vmem:[%s1 + $0x8c] sm:$0xf]
    %v62 = vld [vmem:[%s1 + $0x90] sm:$0xf]
    %v63 = vld [vmem:[%s1 + $0x94] sm:$0xf]
    %v64 = vld [vmem:[%s1 + $0x98] sm:$0xf]
    %v65 = vld [vmem:[%s1 + $0x9c] sm:$0xf]
    %v66 = vld [vmem:[%s1 + $0xa0] sm:$0xf]
    %v67 = vld [vmem:[%s1 + $0xa4] sm:$0xf]
    %v68 = vld [vmem:[%s1 + $0xa8] sm:$0xf]
    %v69 = vld [vmem:[%s1 + $0xac] sm:$0xf]
    %v70 = vld [vmem:[%s1 + $0xb0] sm:$0xf]
    %v71 = vld [vmem:[%s1 + $0xb4] sm:$0xf]
    %v72 = vld [vmem:[%s1 + $0xb8] sm:$0xf]
    %v73 = vld [vmem:[%s1 + $0xbc] sm:$0xf]
    %v74 = vld [vmem:[%s1 + $0xc0] sm:$0xf]
    %v75 = vld [vmem:[%s1 + $0xc4] sm:$0xf]
    %v76 = vld [vmem:[%s1 + $0xc8] sm:$0xf]
    %v77 = vld [vmem:[%s1 + $0xcc] sm:$0xf]
    %v78 = vld [vmem:[%s1 + $0xd0] sm:$0xf]
    %v79 = vld [vmem:[%s1 + $0xd4] sm:$0xf]
    %v80 = vld [vmem:[%s1 + $0xd8] sm:$0xf]
    %v81 = vld [vmem:[%s1 + $0xdc] sm:$0xf]
    %v82 = vld [vmem:[%s1 + $0xe0] sm:$0xf]
    %v83 = vld [vmem:[%s1 + $0xe4] sm:$0xf]
    %v84 = vld [vmem:[%s1 + $0xe8] sm:$0xf]
    %v85 = vld [vmem:[%s1 + $0xec] sm:$0xf]
    %v86 = vld [vmem:[%s1 + $0xf0] sm:$0xf]
    %v87 = vld [vmem:[%s1 + $0xf4] sm:$0xf]
    %v88 = vld [vmem:[%s1 + $0xf8] sm:$0xf]
    %v89 = vld [vmem:[%s1 + $0xfc] sm:$0xf]
    %v90 = vld [vmem:[%s1 + $0x100] sm:$0xf]
    %v91 = vld [vmem:[%s1 + $0x104] sm:$0xf]
    %v92 = vld [vmem:[%s1 + $0x108] sm:$0xf]
    %v93 = vld [vmem:[%s1 + $0x10c] sm:$0xf]
    %v94 = vld [vmem:[%s1 + $0x110] sm:$0xf]
    %v95 = vld [vmem:[%s1 + $0x114] sm:$0xf]
    %v96 = vld [vmem:[%s1 + $0x118] sm:$0xf]
    %v97 = vld [vmem:[%s1 + $0x11c] sm:$0xf]
    %v98 = vld [vmem:[%s1 + $0x120] sm:$0xf]
    %v99 = vld [vmem:[%s1 + $0x124] sm:$0xf]
    %v100 = vld [vmem:[%s1 + $0x128] sm:$0xf]
    %v101 = vld [vmem:[%s1 + $0x12c] sm:$0xf]
    %v102 = vld [vmem:[%s1 + $0x130] sm:$0xf]
    %v103 = vld [vmem:[%s1 + $0x134] sm:$0xf]
    %v104 = vld [vmem:[%s1 + $0x138] sm:$0xf]
    %v105 = vld [vmem:[%s1 + $0x13c] sm:$0xf]
    %v106 = vld [vmem:[%s1 + $0x140] sm:$0xf]
    %v107 = vld [vmem:[%s1 + $0x144] sm:$0xf]
    %v108 = vld [vmem:[%s1 + $0x148] sm:$0xf]
    %v109 = vld [vmem:[%s1 + $0x14c] sm:$0xf]
    %v110 = vld [vmem:[%s1 + $0x150] sm:$0xf]
    %v111 = vld [vmem:[%s1 + $0x154] sm:$0xf]
    %v112 = vld [vmem:[%s1 + $0x158] sm:$0xf]
    %v113 = vld [vmem:[%s1 + $0x15c] sm:$0xf]
    %v114 = vld [vmem:[%s1 + $0x160] sm:$0xf]
    %v115 = vld [vmem:[%s1 + $0x164] sm:$0xf]
    %v116 = vld [vmem:[%s1 + $0x168] sm:$0xf]
    %v117 = vld [vmem:[%s1 + $0x16c] sm:$0xf]
    %v118 = vld [vmem:[%s1 + $0x170] sm:$0xf]
    %v119 = vld [vmem:[%s1 + $0x174] sm:$0xf]
    %v120 = vld [vmem:[%s1 + $0x178] sm:$0xf]
    %v121 = vld [vmem:[%s1 + $0x17c] sm:$0xf]
    %v122 = vld [vmem:[%s1 + $0x180] sm:$0xf]
    %v123 = vld [vmem:[%s1 + $0x184] sm:$0xf]
    %v124 = vld [vmem:[%s1 + $0x188] sm:$0xf]
    %v125 = vld [vmem:[%s1 + $0x18c] sm:$0xf]
    %v126 = vld [vmem:[%s1 + $0x190] sm:$0xf]
    %v127 = vld [vmem:[%s1 + $0x194] sm:$0xf]
    %v128 = vld [vmem:[%s1 + $0x198] sm:$0xf]
    %v129 = vld [vmem:[%s1 + $0x19c] sm:$0xf]
    %v130 = vld [vmem:[%s1 + $0x1a0] sm:$0xf]
    %v131 = vld [vmem:[%s1 + $0x1a4] sm:$0xf]
    %v132 = vld [vmem:[%s1 + $0x1a8] sm:$0xf]
    %v133 = vld [vmem:[%s1 + $0x1ac] sm:$0xf]
    %v134 = vld [vmem:[%s1 + $0x1b0] sm:$0xf]
    %v135 = vld [vmem:[%s1 + $0x1b4] sm:$0xf]
    %v136 = vld [vmem:[%s1 + $0x1b8] sm:$0xf]
    %v137 = vld [vmem:[%s1 + $0x1bc] sm:$0xf]
    %v138 = vld [vmem:[%s1 + $0x1c0] sm:$0xf]
    %v139 = vld [vmem:[%s1 + $0x1c4] sm:$0xf]
    %v140 = vld [vmem:[%s1 + $0x1c8] sm:$0xf]
    %v141 = vld [vmem:[%s1 + $0x1cc] sm:$0xf]
    %v142 = vld [vmem:[%s1 + $0x1d0] sm:$0xf]
    %v143 = vld [vmem:[%s1 + $0x1d4] sm:$0xf]
    %v144 = vld [vmem:[%s1 + $0x1d8] sm:$0xf]
    %v145 = vld [vmem:[%s1 + $0x1dc] sm:$0xf]
    %v146 = vld [vmem:[%s1 + $0x1e0] sm:$0xf]
    %v147 = vld [vmem:[%s1 + $0x1e4] sm:$0xf]
    %v148 = vld [vmem:[%s1 + $0x1e8] sm:$0xf]
    %v149 = vld [vmem:[%s1 + $0x1ec] sm:$0xf]
    %v150 = vld [vmem:[%s1 + $0x1f0] sm:$0xf]
    %v151 = vld [vmem:[%s1 + $0x1f4] sm:$0xf]
    %v152 = vld [vmem:[%s1 + $0x1f8] sm:$0xf]
    %v153 = vld [vmem:[%s1 + $0x1fc] sm:$0xf]
    %v154 = vld [vmem:[%s1 + $0x200] sm:$0xf]
    %v155 = vld [vmem:[%s1 + $0x204] sm:$0xf]
    %v156 = vld [vmem:[%s1 + $0x208] sm:$0xf]
    %v157 = vld [vmem:[%s1 + $0x20c] sm:$0xf]
    %v158 = vld [vmem:[%s1 + $0x210] sm:$0xf]
    %v159 = vld [vmem:[%s1 + $0x214] sm:$0xf]
    %v160 = vld [vmem:[%s1 + $0x218] sm:$0xf]
    %v161 = vld [vmem:[%s1 + $0x21c] sm:$0xf]
    %v162 = vld [vmem:[%s1 + $0x220] sm:$0xf]
    %v163 = vld [vmem:[%s1 + $0x224] sm:$0xf]
    %v164 = vld [vmem:[%s1 + $0x228] sm:$0xf]
    %v165 = vld [vmem:[%s1 + $0x22c] sm:$0xf]
    %v166 = vld [vmem:[%s1 + $0x230] sm:$0xf]
    %v167 = vld [vmem:[%s1 + $0x234] sm:$0xf]
    %v168 = vld [vmem:[%s1 + $0x238] sm:$0xf]
    %v169 = vld [vmem:[%s1 + $0x23c] sm:$0xf]
    %v170 = vld [vmem:[%s1 + $0x240] sm:$0xf]
    %v171 = vld [vmem:[%s1 + $0x244] sm:$0xf]
    %v172 = vld [vmem:[%s1 + $0x248] sm:$0xf]
    %v173 = vld [vmem:[%s1 + $0x24c] sm:$0xf]
    %v174 = vld [vmem:[%s1 + $0x250] sm:$0xf]
    %v175 = vld [vmem:[%s1 + $0x254] sm:$0xf]
    %v176 = vld [vmem:[%s1 + $0x258] sm:$0xf]
    %v177 = vld [vmem:[%s1 + $0x25c] sm:$0xf]
    %v178 = vld [vmem:[%s1 + $0x260] sm:$0xf]
    %v179 = vld [vmem:[%s1 + $0x264] sm:$0xf]
    %v180 = vld [vmem:[%s1 + $0x268] sm:$0xf]
    %v181 = vld [vmem:[%s1 + $0x26c] sm:$0xf]
    %v182 = vld [vmem:[%s1 + $0x270] sm:$0xf]
    %v183 = vld [vmem:[%s1 + $0x274] sm:$0xf]
    %v184 = vld [vmem:[%s1 + $0x278] sm:$0xf]
    %v185 = vld [vmem:[%s1 + $0x27c] sm:$0xf]
    %v186 = vld [vmem:[%s1 + $0x280] sm:$0xf]
    %v187 = vld [vmem:[%s1 + $0x284] sm:$0xf]
    %v188 = vld [vmem:[%s1 + $0x288] sm:$0xf]
    %v189 = vld [vmem:[%s1 + $0x28c] sm:$0xf]
    %v190 = vld [vmem:[%s1 + $0x290] sm:$0xf]
    %v191 = vld [vmem:[%s1 + $0x294] sm:$0xf]
    %v192 = vld [vmem:[%s1 + $0x298] sm:$0xf]
    %v193 = vld [vmem:[%s1 + $0x29c] sm:$0xf]
    %v194 = vld [vmem:[%s1 + $0x2a0] sm:$0xf]
    %v195 = vld [vmem:[%s1 + $0x2a4] sm:$0xf]
    %v196 = vld [vmem:[%s1 + $0x2a8] sm:$0xf]
    %v197 = vld [vmem:[%s1 + $0x2ac] sm:$0xf]
    %v198 = vld [vmem:[%s1 + $0x2b0] sm:$0xf]
    %v199 = vld [vmem:[%s1 + $0x2b4] sm:$0xf]
    %v200 = vld [vmem:[%s1 + $0x2b8] sm:$0xf]
    %v201 = vld [vmem:[%s1 + $0x2bc] sm:$0xf]
    %v202 = vld [vmem:[%s1 + $0x2c0] sm:$0xf]
    %v203 = vld [vmem:[%s1 + $0x2c4] sm:$0xf]
    %v204 = vld [vmem:[%s1 + $0x2c8] sm:$0xf]
    %v205 = vld [vmem:[%s1 + $0x2cc] sm:$0xf]
    %v206 = vld [vmem:[%s1 + $0x2d0] sm:$0xf]
    %v207 = vld [vmem:[%s1 + $0x2d4] sm:$0xf]
    %v208 = vld [vmem:[%s1 + $0x2d8] sm:$0xf]
    %v209 = vld [vmem:[%s1 + $0x2dc] sm:$0xf]
    %v210 = vld [vmem:[%s1 + $0x2e0] sm:$0xf]
    %v211 = vld [vmem:[%s1 + $0x2e4] sm:$0xf]
    %v212 = vld [vmem:[%s1 + $0x2e8] sm:$0xf]
    %v213 = vld [vmem:[%s1 + $0x2ec] sm:$0xf]
    %v214 = vld [vmem:[%s1 + $0x2f0] sm:$0xf]
    %v215 = vld [vmem:[%s1 + $0x2f4] sm:$0xf]
    %v216 = vld [vmem:[%s1 + $0x2f8] sm:$0xf]
    %v217 = vld [vmem:[%s1 + $0x2fc] sm:$0xf]
    %v218 = vld [vmem:[%s1 + $0x300] sm:$0xf]
    %v219 = vld [vmem:[%s1 + $0x304] sm:$0xf]
    %v220 = vld [vmem:[%s1 + $0x308] sm:$0xf]
    %v221 = vld [vmem:[%s1 + $0x30c] sm:$0xf]
    %v222 = vld [vmem:[%s1 + $0x310] sm:$0xf]
    %v223 = vld [vmem:[%s1 + $0x314] sm:$0xf]
    %v224 = vld [vmem:[%s1 + $0x318] sm:$0xf]
    %v225 = vld [vmem:[%s1 + $0x31c] sm:$0xf]
    %v226 = vld [vmem:[%s1 + $0x320] sm:$0xf]
    %v227 = vld [vmem:[%s1 + $0x324] sm:$0xf]
    %v228 = vld [vmem:[%s1 + $0x328] sm:$0xf]
    %v229 = vld [vmem:[%s1 + $0x32c] sm:$0xf]
    %v230 = vld [vmem:[%s1 + $0x330] sm:$0xf]
    %v231 = vld [vmem:[%s1 + $0x334] sm:$0xf]
    %v232 = vld [vmem:[%s1 + $0x338] sm:$0xf]
    %v233 = vld [vmem:[%s1 + $0x33c] sm:$0xf]
    %v234 = vld [vmem:[%s1 + $0x340] sm:$0xf]
    %v235 = vld [vmem:[%s1 + $0x344] sm:$0xf]
    %v236 = vld [vmem:[%s1 + $0x348] sm:$0xf]
    %v237 = vld [vmem:[%s1 + $0x34c] sm:$0xf]
    %v238 = vld [vmem:[%s1 + $0x350] sm:$0xf]
    %v239 = vld [vmem:[%s1 + $0x354] sm:$0xf]
    %v240 = vld [vmem:[%s1 + $0x358] sm:$0xf]
    %v241 = vld [vmem:[%s1 + $0x35c] sm:$0xf]
    %v242 = vld [vmem:[%s1 + $0x360] sm:$0xf]
    %v243 = vld [vmem:[%s1 + $0x364] sm:$0xf]
    %v244 = vld [vmem:[%s1 + $0x368] sm:$0xf]
    %v245 = vld [vmem:[%s1 + $0x36c] sm:$0xf]
    %v246 = vld [vmem:[%s1 + $0x370] sm:$0xf]
    %v247 = vld [vmem:[%s1 + $0x374] sm:$0xf]
    %v248 = vld [vmem:[%s1 + $0x378] sm:$0xf]
    %v249 = vld [vmem:[%s1 + $0x37c] sm:$0xf]
    %v250 = vld [vmem:[%s1 + $0x380] sm:$0xf]
    %v251 = vld [vmem:[%s1 + $0x384] sm:$0xf]
    %v252 = vld [vmem:[%s1 + $0x388] sm:$0xf]
    %v253 = vld [vmem:[%s1 + $0x38c] sm:$0xf]
    %v254 = vld [vmem:[%s1 + $0x390] sm:$0xf]
    %v255 = vld [vmem:[%s1 + $0x394] sm:$0xf]
    %v256 = vld [vmem:[%s1 + $0x398] sm:$0xf]
    %v257 = vld [vmem:[%s1 + $0x39c] sm:$0xf]
    %v258 = vld [vmem:[%s1 + $0x3a0] sm:$0xf]
    %v259 = vld [vmem:[%s1 + $0x3a4] sm:$0xf]
    %v260 = vld [vmem:[%s1 + $0x3a8] sm:$0xf]
    %v261 = vld [vmem:[%s1 + $0x3ac] sm:$0xf]
    %v262 = vld [vmem:[%s1 + $0x3b0] sm:$0xf]
    %v263 = vld [vmem:[%s1 + $0x3b4] sm:$0xf]
    %v264 = vld [vmem:[%s1 + $0x3b8] sm:$0xf]
    %v265 = vld [vmem:[%s1 + $0x3bc] sm:$0xf]
    %v266 = vld [vmem:[%s1 + $0x3c0] sm:$0xf]
    %v267 = vld [vmem:[%s1 + $0x3c4] sm:$0xf]
    %v268 = vld [vmem:[%s1 + $0x3c8] sm:$0xf]
    %v269 = vld [vmem:[%s1 + $0x3cc] sm:$0xf]
    %v270 = vld [vmem:[%s1 + $0x3d0] sm:$0xf]
    %v271 = vld [vmem:[%s1 + $0x3d4] sm:$0xf]
    %v272 = vld [vmem:[%s1 + $0x3d8] sm:$0xf]
    %v273 = vld [vmem:[%s1 + $0x3dc] sm:$0xf]
    %v274 = vld [vmem:[%s1 + $0x3e0] sm:$0xf]
    %v275 = vld [vmem:[%s1 + $0x3e4] sm:$0xf]
    %v276 = vld [vmem:[%s1 + $0x3e8] sm:$0xf]
    %v277 = vld [vmem:[%s1 + $0x3ec] sm:$0xf]
    %v278 = vld [vmem:[%s1 + $0x3f0] sm:$0xf]
    %v279 = vld [vmem:[%s1 + $0x3f4] sm:$0xf]
    %v280 = vld [vmem:[%s1 + $0x3f8] sm:$0xf]
    %v281 = vld [vmem:[%s1 + $0x3fc] sm:$0xf]
    %v282 = vld [vmem:[%s1 + $0x400] sm:$0xf]
    %v283 = vld [vmem:[%s1 + $0x404] sm:$0xf]
    %v284 = vld [vmem:[%s1 + $0x408] sm:$0xf]
    %v285 = vld [vmem:[%s1 + $0x40c] sm:$0xf]
    %v286 = vld [vmem:[%s1 + $0x410] sm:$0xf]
    %v287 = vld [vmem:[%s1 + $0x414] sm:$0xf]
    %v288 = vld [vmem:[%s1 + $0x418] sm:$0xf]
    %v289 = vld [vmem:[%s1 + $0x41c] sm:$0xf]
    %v290 = vld [vmem:[%s1 + $0x420] sm:$0xf]
    %v291 = vld [vmem:[%s1 + $0x424] sm:$0xf]
    %v292 = vld [vmem:[%s1 + $0x428] sm:$0xf]
    %v293 = vld [vmem:[%s1 + $0x42c] sm:$0xf]
    %v294 = vld [vmem:[%s1 + $0x430] sm:$0xf]
    %v295 = vld [vmem:[%s1 + $0x434] sm:$0xf]
    %v296 = vld [vmem:[%s1 + $0x438] sm:$0xf]
    %v297 = vld [vmem:[%s1 + $0x43c] sm:$0xf]
    %v298 = vld [vmem:[%s1 + $0x440] sm:$0xf]
    %v299 = vld [vmem:[%s1 + $0x444] sm:$0xf]
    %v300 = vld [vmem:[%s1 + $0x448] sm:$0xf]
    %v301 = vld [vmem:[%s1 + $0x44c] sm:$0xf]
    %v302 = vld [vmem:[%s1 + $0x450] sm:$0xf]
    %v303 = vld [vmem:[%s1 + $0x454] sm:$0xf]
    %v304 = vld [vmem:[%s1 + $0x458] sm:$0xf]
    %v305 = vld [vmem:[%s1 + $0x45c] sm:$0xf]
    %v306 = vld [vmem:[%s1 + $0x460] sm:$0xf]
    %v307 = vld [vmem:[%s1 + $0x464] sm:$0xf]
    %v308 = vld [vmem:[%s1 + $0x468] sm:$0xf]
    %v309 = vld [vmem:[%s1 + $0x46c] sm:$0xf]
    %v310 = vld [vmem:[%s1 + $0x470] sm:$0xf]
    %v311 = vld [vmem:[%s1 + $0x474] sm:$0xf]
    %v312 = vld [vmem:[%s1 + $0x478] sm:$0xf]
    %v313 = vld [vmem:[%s1 + $0x47c] sm:$0xf]
    %v314 = vld [vmem:[%s1 + $0x480] sm:$0xf]
    %v315 = vld [vmem:[%s1 + $0x484] sm:$0xf]
    %v316 = vld [vmem:[%s1 + $0x488] sm:$0xf]
    %v317 = vld [vmem:[%s1 + $0x48c] sm:$0xf]
    %v318 = vld [vmem:[%s1 + $0x490] sm:$0xf]
    %v319 = vld [vmem:[%s1 + $0x494] sm:$0xf]
    %v320 = vld [vmem:[%s1 + $0x498] sm:$0xf]
    %v321 = vld [vmem:[%s1 + $0x49c] sm:$0xf]
    %v322 = vld [vmem:[%s1 + $0x4a0] sm:$0xf]
    %v323 = vld [vmem:[%s1 + $0x4a4] sm:$0xf]
    %v324 = vld [vmem:[%s1 + $0x4a8] sm:$0xf]
    %v325 = vld [vmem:[%s1 + $0x4ac] sm:$0xf]
    %v326 = vld [vmem:[%s1 + $0x4b0] sm:$0xf]
    %v327 = vld [vmem:[%s1 + $0x4b4] sm:$0xf]
    %v328 = vld [vmem:[%s1 + $0x4b8] sm:$0xf]
    %v329 = vld [vmem:[%s1 + $0x4bc] sm:$0xf]
    %v330 = vld [vmem:[%s1 + $0x4c0] sm:$0xf]
    %v331 = vld [vmem:[%s1 + $0x4c4] sm:$0xf]
    %v332 = vld [vmem:[%s1 + $0x4c8] sm:$0xf]
    %v333 = vld [vmem:[%s1 + $0x4cc] sm:$0xf]
    %v334 = vld [vmem:[%s1 + $0x4d0] sm:$0xf]
    %v335 = vld [vmem:[%s1 + $0x4d4] sm:$0xf]
    %v336 = vld [vmem:[%s1 + $0x4d8] sm:$0xf]
    %v337 = vld [vmem:[%s1 + $0x4dc] sm:$0xf]
    %v338 = vld [vmem:[%s1 + $0x4e0] sm:$0xf]
    %v339 = vld [vmem:[%s1 + $0x4e4] sm:$0xf]
    %v340 = vld [vmem:[%s1 + $0x4e8] sm:$0xf]
    %v341 = vld [vmem:[%s1 + $0x4ec] sm:$0xf]
    %v342 = vld [vmem:[%s1 + $0x4f0] sm:$0xf]
    %v343 = vld [vmem:[%s1 + $0x4f4] sm:$0xf]
    %v344 = vld [vmem:[%s1 + $0x4f8] sm:$0xf]
    %v345 = vld [vmem:[%s1 + $0x4fc] sm:$0xf]
    %v346 = vld [vmem:[%s1 + $0x500] sm:$0xf]
    %v347 = vld [vmem:[%s1 + $0x504] sm:$0xf]
    %v348 = vld [vmem:[%s1 + $0x508] sm:$0xf]
    %v349 = vld [vmem:[%s1 + $0x50c] sm:$0xf]
    %v350 = vld [vmem:[%s1 + $0x510] sm:$0xf]
    %v351 = vld [vmem:[%s1 + $0x514] sm:$0xf]
    %v352 = vld [vmem:[%s1 + $0x518] sm:$0xf]
    %v353 = vld [vmem:[%s1 + $0x51c] sm:$0xf]
    %v354 = vld [vmem:[%s1 + $0x520] sm:$0xf]
    %v355 = vld [vmem:[%s1 + $0x524] sm:$0xf]
    %v356 = vld [vmem:[%s1 + $0x528] sm:$0xf]
    %v357 = vld [vmem:[%s1 + $0x52c] sm:$0xf]
    %v358 = vld [vmem:[%s1 + $0x530] sm:$0xf]
    %v359 = vld [vmem:[%s1 + $0x534] sm:$0xf]
    %v360 = vld [vmem:[%s1 + $0x538] sm:$0xf]
    %v361 = vld [vmem:[%s1 + $0x53c] sm:$0xf]
    %v362 = vld [vmem:[%s1 + $0x540] sm:$0xf]
    %v363 = vld [vmem:[%s1 + $0x544] sm:$0xf]
    %v364 = vld [vmem:[%s1 + $0x548] sm:$0xf]
    %v365 = vld [vmem:[%s1 + $0x54c] sm:$0xf]
    %v366 = vld [vmem:[%s1 + $0x550] sm:$0xf]
    %v367 = vld [vmem:[%s1 + $0x554] sm:$0xf]
    %v368 = vld [vmem:[%s1 + $0x558] sm:$0xf]
    %v369 = vld [vmem:[%s1 + $0x55c] sm:$0xf]
    %v370 = vld [vmem:[%s1 + $0x560] sm:$0xf]
    %v371 = vld [vmem:[%s1 + $0x564] sm:$0xf]
    %v372 = vld [vmem:[%s1 + $0x568] sm:$0xf]
    %v373 = vld [vmem:[%s1 + $0x56c] sm:$0xf]
    %v374 = vld [vmem:[%s1 + $0x570] sm:$0xf]
    %v375 = vld [vmem:[%s1 + $0x574] sm:$0xf]
    %v376 = vld [vmem:[%s1 + $0x578] sm:$0xf]
    %v377 = vld [vmem:[%s1 + $0x57c] sm:$0xf]
    %v378 = vld [vmem:[%s1 + $0x580] sm:$0xf]
    %v379 = vld [vmem:[%s1 + $0x584] sm:$0xf]
    %v380 = vld [vmem:[%s1 + $0x588] sm:$0xf]
    %v381 = vld [vmem:[%s1 + $0x58c] sm:$0xf]
    %v382 = vld [vmem:[%s1 + $0x590] sm:$0xf]
    %v383 = vld [vmem:[%s1 + $0x594] sm:$0xf]
    %v384 = vld [vmem:[%s1 + $0x598] sm:$0xf]
    %v385 = vld [vmem:[%s1 + $0x59c] sm:$0xf]
    %v386 = vld [vmem:[%s1 + $0x5a0] sm:$0xf]
    %v387 = vld [vmem:[%s1 + $0x5a4] sm:$0xf]
    %v388 = vld [vmem:[%s1 + $0x5a8] sm:$0xf]
    %v389 = vld [vmem:[%s1 + $0x5ac] sm:$0xf]
    %v390 = vld [vmem:[%s1 + $0x5b0] sm:$0xf]
    %v391 = vld [vmem:[%s1 + $0x5b4] sm:$0xf]
    %v392 = vld [vmem:[%s1 + $0x5b8] sm:$0xf]
    %v393 = vld [vmem:[%s1 + $0x5bc] sm:$0xf]
    %v394 = vld [vmem:[%s1 + $0x5c0] sm:$0xf]
    %v395 = vld [vmem:[%s1 + $0x5c4] sm:$0xf]
    %v396 = vld [vmem:[%s1 + $0x5c8] sm:$0xf]
    %v397 = vld [vmem:[%s1 + $0x5cc] sm:$0xf]
    %v398 = vld [vmem:[%s1 + $0x5d0] sm:$0xf]
    %v399 = vld [vmem:[%s1 + $0x5d4] sm:$0xf]
    %v400 = vld [vmem:[%s1 + $0x5d8] sm:$0xf]
    %v401 = vld [vmem:[%s1 + $0x5dc] sm:$0xf]
    %v402 = vld [vmem:[%s1 + $0x5e0] sm:$0xf]
    %v403 = vld [vmem:[%s1 + $0x5e4] sm:$0xf]
    %v404 = vld [vmem:[%s1 + $0x5e8] sm:$0xf]
    %v405 = vld [vmem:[%s1 + $0x5ec] sm:$0xf]
    %v406 = vld [vmem:[%s1 + $0x5f0] sm:$0xf]
    %v407 = vld [vmem:[%s1 + $0x5f4] sm:$0xf]
    %v408 = vld [vmem:[%s1 + $0x5f8] sm:$0xf]
    %v409 = vld [vmem:[%s1 + $0x5fc] sm:$0xf]
    %v410 = vld [vmem:[%s1 + $0x600] sm:$0xf]
    %v411 = vld [vmem:[%s1 + $0x604] sm:$0xf]
    %v412 = vld [vmem:[%s1 + $0x608] sm:$0xf]
    %v413 = vld [vmem:[%s1 + $0x60c] sm:$0xf]
    %v414 = vld [vmem:[%s1 + $0x610] sm:$0xf]
    %v415 = vld [vmem:[%s1 + $0x614] sm:$0xf]
    %v416 = vld [vmem:[%s1 + $0x618] sm:$0xf]
    %v417 = vld [vmem:[%s1 + $0x61c] sm:$0xf]
    %v418 = vld [vmem:[%s2] sm:$0x1]
    %v420 = vlaneseq
    %v421 = vshrl.u32 %v420, 7
    %v422 = vsub.s32 0, %v421
    %v423 = vrot.slane %v418, %v422
    %v429 = vcombine.high %v22, %v22
    %v431 = vunpack.c.l.s4 1966171168
    %v432 = vunpack.c.0.s8 %v431
    %v433 = vlaneseq
    %v434 = vshrl.u32 %v433, 7
    %v435 = vsub.s32 %v432, %v434
    %v436 = vrot.slane %v22, %v435
    %v438 = vunpack.c.l.s4 1966171168
    %v439 = vunpack.c.0.s8 %v438
    %v440 = vlaneseq
    %v441 = vshrl.u32 %v440, 7
    %v442 = vsub.s32 %v439, %v441
    %v443 = vrot.slane %v429, %v442
    %v444 = vcombine.high %v436, %v436
    %v445 = vcombine.high %v443, %v443
    %v447 = vunpack.c.l.s4 1966171168
    %v448 = vunpack.c.0.s8 %v447
    %v449 = vlaneseq
    %v450 = vshrl.u32 %v449, 7
    %v451 = vsub.s32 %v448, %v450
    %v452 = vrot.slane %v436, %v451
    %v454 = vunpack.c.l.s4 1966171168
    %v455 = vunpack.c.0.s8 %v454
    %v456 = vlaneseq
    %v457 = vshrl.u32 %v456, 7
    %v458 = vsub.s32 %v455, %v457
    %v459 = vrot.slane %v443, %v458
    %v461 = vunpack.c.l.s4 1966171168
    %v462 = vunpack.c.0.s8 %v461
    %v463 = vlaneseq
    %v464 = vshrl.u32 %v463, 7
    %v465 = vsub.s32 %v462, %v464
    %v466 = vrot.slane %v444, %v465
    %v468 = vunpack.c.l.s4 1966171168
    %v469 = vunpack.c.0.s8 %v468
    %v470 = vlaneseq
    %v471 = vshrl.u32 %v470, 7
    %v472 = vsub.s32 %v469, %v471
    %v473 = vrot.slane %v445, %v472
    %v474 = vcombine.high %v452, %v452
    %v475 = vcombine.high %v459, %v459
    %v476 = vcombine.high %v466, %v466
    %v477 = vcombine.high %v473, %v473
    %v478 = vcombine.high %v23, %v23
    %v480 = vunpack.c.l.s4 1966171168
    %v481 = vunpack.c.0.s8 %v480
    %v482 = vlaneseq
    %v483 = vshrl.u32 %v482, 7
    %v484 = vsub.s32 %v481, %v483
    %v485 = vrot.slane %v23, %v484
    %v487 = vunpack.c.l.s4 1966171168
    %v488 = vunpack.c.0.s8 %v487
    %v489 = vlaneseq
    %v490 = vshrl.u32 %v489, 7
    %v491 = vsub.s32 %v488, %v490
    %v492 = vrot.slane %v478, %v491
    %v493 = vcombine.high %v485, %v485
    %v494 = vcombine.high %v492, %v492
    %v496 = vunpack.c.l.s4 1966171168
    %v497 = vunpack.c.0.s8 %v496
    %v498 = vlaneseq
    %v499 = vshrl.u32 %v498, 7
    %v500 = vsub.s32 %v497, %v499
    %v501 = vrot.slane %v485, %v500
    %v503 = vunpack.c.l.s4 1966171168
    %v504 = vunpack.c.0.s8 %v503
    %v505 = vlaneseq
    %v506 = vshrl.u32 %v505, 7
    %v507 = vsub.s32 %v504, %v506
    %v508 = vrot.slane %v492, %v507
    %v510 = vunpack.c.l.s4 1966171168
    %v511 = vunpack.c.0.s8 %v510
    %v512 = vlaneseq
    %v513 = vshrl.u32 %v512, 7
    %v514 = vsub.s32 %v511, %v513
    %v515 = vrot.slane %v493, %v514
    %v517 = vunpack.c.l.s4 1966171168
    %v518 = vunpack.c.0.s8 %v517
    %v519 = vlaneseq
    %v520 = vshrl.u32 %v519, 7
    %v521 = vsub.s32 %v518, %v520
    %v522 = vrot.slane %v494, %v521
    %v523 = vcombine.high %v501, %v501
    %v524 = vcombine.high %v508, %v508
    %v525 = vcombine.high %v515, %v515
    %v526 = vcombine.high %v522, %v522
    %v527 = vcombine.high %v24, %v24
    %v529 = vunpack.c.l.s4 1966171168
    %v530 = vunpack.c.0.s8 %v529
    %v531 = vlaneseq
    %v532 = vshrl.u32 %v531, 7
    %v533 = vsub.s32 %v530, %v532
    %v534 = vrot.slane %v24, %v533
    %v536 = vunpack.c.l.s4 1966171168
    %v537 = vunpack.c.0.s8 %v536
    %v538 = vlaneseq
    %v539 = vshrl.u32 %v538, 7
    %v540 = vsub.s32 %v537, %v539
    %v541 = vrot.slane %v527, %v540
    %v542 = vcombine.high %v534, %v534
    %v543 = vcombine.high %v541, %v541
    %v545 = vunpack.c.l.s4 1966171168
    %v546 = vunpack.c.0.s8 %v545
    %v547 = vlaneseq
    %v548 = vshrl.u32 %v547, 7
    %v549 = vsub.s32 %v546, %v548
    %v550 = vrot.slane %v534, %v549
    %v552 = vunpack.c.l.s4 1966171168
    %v553 = vunpack.c.0.s8 %v552
    %v554 = vlaneseq
    %v555 = vshrl.u32 %v554, 7
    %v556 = vsub.s32 %v553, %v555
    %v557 = vrot.slane %v541, %v556
    %v559 = vunpack.c.l.s4 1966171168
    %v560 = vunpack.c.0.s8 %v559
    %v561 = vlaneseq
    %v562 = vshrl.u32 %v561, 7
    %v563 = vsub.s32 %v560, %v562
    %v564 = vrot.slane %v542, %v563
    %v566 = vunpack.c.l.s4 1966171168
    %v567 = vunpack.c.0.s8 %v566
    %v568 = vlaneseq
    %v569 = vshrl.u32 %v568, 7
    %v570 = vsub.s32 %v567, %v569
    %v571 = vrot.slane %v543, %v570
    %v572 = vcombine.high %v550, %v550
    %v573 = vcombine.high %v557, %v557
    %v574 = vcombine.high %v564, %v564
    %v575 = vcombine.high %v571, %v571
    %v577 = vunpack.c.l.s4 1966171168
    %v578 = vunpack.c.0.s8 %v577
    %v579 = vlaneseq
    %v580 = vshrl.u32 %v579, 7
    %v581 = vsub.s32 %v578, %v580
    %v582 = vrot.slane %v25, %v581
    %v584 = vunpack.c.l.s4 1966171168
    %v585 = vunpack.c.0.s8 %v584
    %v586 = vlaneseq
    %v587 = vshrl.u32 %v586, 7
    %v588 = vsub.s32 %v585, %v587
    %v589 = vrot.slane %v582, %v588
    %v1006 = vunpack.c.l.b16 %v26
    %v1007 = vunpack.c.l.b16 %v27
    %v1008 = vunpack.c.l.b16 %v28
    %v1009 = vunpack.c.l.b16 %v29
    %v1010 = vunpack.c.l.b16 %v30
    %v1011 = vunpack.c.l.b16 %v31
    %v1012 = vunpack.c.l.b16 %v32
    %v1013 = vunpack.c.l.b16 %v33
    %v1014 = vunpack.c.l.b16 %v34
    %v1015 = vunpack.c.l.b16 %v35
    %v1016 = vunpack.c.l.b16 %v36
    %v1017 = vunpack.c.l.b16 %v37
    %v1018 = vunpack.c.l.b16 %v38
    %v1019 = vunpack.c.l.b16 %v39
    %v1020 = vunpack.c.l.b16 %v40
    %v1021 = vunpack.c.l.b16 %v41
    %v1022 = vunpack.c.l.b16 %v42
    %v1023 = vunpack.c.l.b16 %v43
    %v1024 = vunpack.c.l.b16 %v44
    %v1025 = vunpack.c.l.b16 %v45
    %v1026 = vunpack.c.l.b16 %v46
    %v1027 = vunpack.c.l.b16 %v47
    %v1028 = vunpack.c.l.b16 %v48
    %v1029 = vunpack.c.l.b16 %v49
    %v1030 = vunpack.c.l.b16 %v50
    %v1031 = vunpack.c.l.b16 %v51
    %v1032 = vunpack.c.l.b16 %v52
    %v1033 = vunpack.c.l.b16 %v53
    %v1034 = vunpack.c.l.b16 %v54
    %v1035 = vunpack.c.l.b16 %v55
    %v1036 = vunpack.c.l.b16 %v56
    %v1037 = vunpack.c.l.b16 %v57
    %v1038 = vunpack.c.l.b16 %v58
    %v1039 = vunpack.c.l.b16 %v59
    %v1040 = vunpack.c.l.b16 %v60
    %v1041 = vunpack.c.l.b16 %v61
    %v1042 = vunpack.c.l.b16 %v62
    %v1043 = vunpack.c.l.b16 %v63
    %v1044 = vunpack.c.l.b16 %v64
    %v1045 = vunpack.c.l.b16 %v65
    %v1046 = vunpack.c.l.b16 %v66
    %v1047 = vunpack.c.l.b16 %v67
    %v1048 = vunpack.c.l.b16 %v68
    %v1049 = vunpack.c.l.b16 %v69
    %v1050 = vunpack.c.l.b16 %v70
    %v1051 = vunpack.c.l.b16 %v71
    %v1052 = vunpack.c.l.b16 %v72
    %v1053 = vunpack.c.l.b16 %v73
    %v1054 = vunpack.c.l.b16 %v74
    %v1055 = vunpack.c.l.b16 %v75
    %v1056 = vunpack.c.l.b16 %v76
    %v1057 = vunpack.c.l.b16 %v77
    %v1058 = vunpack.c.l.b16 %v78
    %v1059 = vunpack.c.l.b16 %v79
    %v1060 = vunpack.c.l.b16 %v80
    %v1061 = vunpack.c.l.b16 %v81
    %v1062 = vunpack.c.l.b16 %v82
    %v1063 = vunpack.c.l.b16 %v83
    %v1064 = vunpack.c.l.b16 %v84
    %v1065 = vunpack.c.l.b16 %v85
    %v1066 = vunpack.c.l.b16 %v86
    %v1067 = vunpack.c.l.b16 %v87
    %v1068 = vunpack.c.l.b16 %v88
    %v1069 = vunpack.c.l.b16 %v89
    %v1070 = vunpack.c.l.b16 %v90
    %v1071 = vunpack.c.l.b16 %v91
    %v1072 = vunpack.c.l.b16 %v92
    %v1073 = vunpack.c.l.b16 %v93
    %v1074 = vunpack.c.l.b16 %v94
    %v1075 = vunpack.c.l.b16 %v95
    %v1076 = vunpack.c.l.b16 %v96
    %v1077 = vunpack.c.l.b16 %v97
    %v1078 = vunpack.c.l.b16 %v98
    %v1079 = vunpack.c.l.b16 %v99
    %v1080 = vunpack.c.l.b16 %v100
    %v1081 = vunpack.c.l.b16 %v101
    %v1082 = vunpack.c.l.b16 %v102
    %v1083 = vunpack.c.l.b16 %v103
    %v1084 = vunpack.c.l.b16 %v104
    %v1085 = vunpack.c.l.b16 %v105
    %v1086 = vunpack.c.l.b16 %v106
    %v1087 = vunpack.c.l.b16 %v107
    %v1088 = vunpack.c.l.b16 %v108
    %v1089 = vunpack.c.l.b16 %v109
    %v1090 = vunpack.c.l.b16 %v110
    %v1091 = vunpack.c.l.b16 %v111
    %v1092 = vunpack.c.l.b16 %v112
    %v1093 = vunpack.c.l.b16 %v113
    %v1094 = vunpack.c.l.b16 %v114
    %v1095 = vunpack.c.l.b16 %v115
    %v1096 = vunpack.c.l.b16 %v116
    %v1097 = vunpack.c.l.b16 %v117
    %v1098 = vunpack.c.l.b16 %v118
    %v1099 = vunpack.c.l.b16 %v119
    %v1100 = vunpack.c.l.b16 %v120
    %v1101 = vunpack.c.l.b16 %v121
    %v1102 = vunpack.c.l.b16 %v122
    %v1103 = vunpack.c.l.b16 %v123
    %v1104 = vunpack.c.l.b16 %v124
    %v1105 = vunpack.c.l.b16 %v125
    %v1106 = vunpack.c.l.b16 %v126
    %v1107 = vunpack.c.l.b16 %v127
    %v1108 = vunpack.c.l.b16 %v128
    %v1109 = vunpack.c.l.b16 %v129
    %v1110 = vunpack.c.l.b16 %v130
    %v1111 = vunpack.c.l.b16 %v131
    %v1112 = vunpack.c.l.b16 %v132
    %v1113 = vunpack.c.l.b16 %v133
    %v1114 = vunpack.c.l.b16 %v134
    %v1115 = vunpack.c.l.b16 %v135
    %v1116 = vunpack.c.l.b16 %v136
    %v1117 = vunpack.c.l.b16 %v137
    %v1118 = vunpack.c.l.b16 %v138
    %v1119 = vunpack.c.l.b16 %v139
    %v1120 = vunpack.c.l.b16 %v140
    %v1121 = vunpack.c.l.b16 %v141
    %v1122 = vunpack.c.l.b16 %v142
    %v1123 = vunpack.c.l.b16 %v143
    %v1124 = vunpack.c.l.b16 %v144
    %v1125 = vunpack.c.l.b16 %v145
    %v1126 = vunpack.c.l.b16 %v146
    %v1127 = vunpack.c.l.b16 %v147
    %v1128 = vunpack.c.l.b16 %v148
    %v1129 = vunpack.c.l.b16 %v149
    %v1130 = vunpack.c.l.b16 %v150
    %v1131 = vunpack.c.l.b16 %v151
    %v1132 = vunpack.c.l.b16 %v152
    %v1133 = vunpack.c.l.b16 %v153
    %v1134 = vunpack.c.l.b16 %v154
    %v1135 = vunpack.c.l.b16 %v155
    %v1136 = vunpack.c.l.b16 %v156
    %v1137 = vunpack.c.l.b16 %v157
    %v1138 = vunpack.c.l.b16 %v158
    %v1139 = vunpack.c.l.b16 %v159
    %v1140 = vunpack.c.l.b16 %v160
    %v1141 = vunpack.c.l.b16 %v161
    %v1142 = vunpack.c.l.b16 %v162
    %v1143 = vunpack.c.l.b16 %v163
    %v1144 = vunpack.c.l.b16 %v164
    %v1145 = vunpack.c.l.b16 %v165
    %v1146 = vunpack.c.l.b16 %v166
    %v1147 = vunpack.c.l.b16 %v167
    %v1148 = vunpack.c.l.b16 %v168
    %v1149 = vunpack.c.l.b16 %v169
    %v1150 = vunpack.c.l.b16 %v170
    %v1151 = vunpack.c.l.b16 %v171
    %v1152 = vunpack.c.l.b16 %v172
    %v1153 = vunpack.c.l.b16 %v173
    %v1154 = vunpack.c.l.b16 %v174
    %v1155 = vunpack.c.l.b16 %v175
    %v1156 = vunpack.c.l.b16 %v176
    %v1157 = vunpack.c.l.b16 %v177
    %v1158 = vunpack.c.l.b16 %v178
    %v1159 = vunpack.c.l.b16 %v179
    %v1160 = vunpack.c.l.b16 %v180
    %v1161 = vunpack.c.l.b16 %v181
    %v1162 = vunpack.c.l.b16 %v182
    %v1163 = vunpack.c.l.b16 %v183
    %v1164 = vunpack.c.l.b16 %v184
    %v1165 = vunpack.c.l.b16 %v185
    %v1166 = vunpack.c.l.b16 %v186
    %v1167 = vunpack.c.l.b16 %v187
    %v1168 = vunpack.c.l.b16 %v188
    %v1169 = vunpack.c.l.b16 %v189
    %v1170 = vunpack.c.l.b16 %v190
    %v1171 = vunpack.c.l.b16 %v191
    %v1172 = vunpack.c.l.b16 %v192
    %v1173 = vunpack.c.l.b16 %v193
    %v1174 = vunpack.c.l.b16 %v194
    %v1175 = vunpack.c.l.b16 %v195
    %v1176 = vunpack.c.l.b16 %v196
    %v1177 = vunpack.c.l.b16 %v197
    %v1178 = vunpack.c.l.b16 %v198
    %v1179 = vunpack.c.l.b16 %v199
    %v1180 = vunpack.c.l.b16 %v200
    %v1181 = vunpack.c.l.b16 %v201
    %v1182 = vunpack.c.l.b16 %v202
    %v1183 = vunpack.c.l.b16 %v203
    %v1184 = vunpack.c.l.b16 %v204
    %v1185 = vunpack.c.l.b16 %v205
    %v1186 = vunpack.c.l.b16 %v206
    %v1187 = vunpack.c.l.b16 %v207
    %v1188 = vunpack.c.l.b16 %v208
    %v1189 = vunpack.c.l.b16 %v209
    %v1190 = vunpack.c.l.b16 %v210
    %v1191 = vunpack.c.l.b16 %v211
    %v1192 = vunpack.c.l.b16 %v212
    %v1193 = vunpack.c.l.b16 %v213
    %v1194 = vunpack.c.l.b16 %v214
    %v1195 = vunpack.c.l.b16 %v215
    %v1196 = vunpack.c.l.b16 %v216
    %v1197 = vunpack.c.l.b16 %v217
    %v1198 = vunpack.c.l.b16 %v218
    %v1199 = vunpack.c.l.b16 %v219
    %v1200 = vunpack.c.l.b16 %v220
    %v1201 = vunpack.c.l.b16 %v221
    %v1202 = vunpack.c.l.b16 %v222
    %v1203 = vunpack.c.l.b16 %v223
    %v1204 = vunpack.c.l.b16 %v224
    %v1205 = vunpack.c.l.b16 %v225
    %v1206 = vunpack.c.l.b16 %v226
    %v1207 = vunpack.c.l.b16 %v227
    %v1208 = vunpack.c.l.b16 %v228
    %v1209 = vunpack.c.l.b16 %v229
    %v1210 = vunpack.c.l.b16 %v230
    %v1211 = vunpack.c.l.b16 %v231
    %v1212 = vunpack.c.l.b16 %v232
    %v1213 = vunpack.c.l.b16 %v233
    %v1214 = vunpack.c.l.b16 %v234
    %v1215 = vunpack.c.l.b16 %v235
    %v1216 = vunpack.c.l.b16 %v236
    %v1217 = vunpack.c.l.b16 %v237
    %v1218 = vunpack.c.l.b16 %v238
    %v1219 = vunpack.c.l.b16 %v239
    %v1220 = vunpack.c.l.b16 %v240
    %v1221 = vunpack.c.l.b16 %v241
    %v1222 = vunpack.c.l.b16 %v242
    %v1223 = vunpack.c.l.b16 %v243
    %v1224 = vunpack.c.l.b16 %v244
    %v1225 = vunpack.c.l.b16 %v245
    %v1226 = vunpack.c.l.b16 %v246
    %v1227 = vunpack.c.l.b16 %v247
    %v1228 = vunpack.c.l.b16 %v248
    %v1229 = vunpack.c.l.b16 %v249
    %v1230 = vunpack.c.l.b16 %v250
    %v1231 = vunpack.c.l.b16 %v251
    %v1232 = vunpack.c.l.b16 %v252
    %v1233 = vunpack.c.l.b16 %v253
    %v1234 = vunpack.c.l.b16 %v254
    %v1235 = vunpack.c.l.b16 %v255
    %v1236 = vunpack.c.l.b16 %v256
    %v1237 = vunpack.c.l.b16 %v257
    %v1238 = vunpack.c.l.b16 %v258
    %v1239 = vunpack.c.l.b16 %v259
    %v1240 = vunpack.c.l.b16 %v260
    %v1241 = vunpack.c.l.b16 %v261
    %v1242 = vunpack.c.l.b16 %v262
    %v1243 = vunpack.c.l.b16 %v263
    %v1244 = vunpack.c.l.b16 %v264
    %v1245 = vunpack.c.l.b16 %v265
    %v1246 = vunpack.c.l.b16 %v266
    %v1247 = vunpack.c.l.b16 %v267
    %v1248 = vunpack.c.l.b16 %v268
    %v1249 = vunpack.c.l.b16 %v269
    %v1250 = vunpack.c.l.b16 %v270
    %v1251 = vunpack.c.l.b16 %v271
    %v1252 = vunpack.c.l.b16 %v272
    %v1253 = vunpack.c.l.b16 %v273
    %v1254 = vunpack.c.l.b16 %v274
    %v1255 = vunpack.c.l.b16 %v275
    %v1256 = vunpack.c.l.b16 %v276
    %v1257 = vunpack.c.l.b16 %v277
    %v1258 = vunpack.c.l.b16 %v278
    %v1259 = vunpack.c.l.b16 %v279
    %v1260 = vunpack.c.l.b16 %v280
    %v1261 = vunpack.c.l.b16 %v281
    %v1262 = vunpack.c.l.b16 %v282
    %v1263 = vunpack.c.l.b16 %v283
    %v1264 = vunpack.c.l.b16 %v284
    %v1265 = vunpack.c.l.b16 %v285
    %v1266 = vunpack.c.l.b16 %v286
    %v1267 = vunpack.c.l.b16 %v287
    %v1268 = vunpack.c.l.b16 %v288
    %v1269 = vunpack.c.l.b16 %v289
    %v1270 = vunpack.c.l.b16 %v290
    %v1271 = vunpack.c.l.b16 %v291
    %v1272 = vunpack.c.l.b16 %v292
    %v1273 = vunpack.c.l.b16 %v293
    %v1274 = vunpack.c.l.b16 %v294
    %v1275 = vunpack.c.l.b16 %v295
    %v1276 = vunpack.c.l.b16 %v296
    %v1277 = vunpack.c.l.b16 %v297
    %v1278 = vunpack.c.l.b16 %v298
    %v1279 = vunpack.c.l.b16 %v299
    %v1280 = vunpack.c.l.b16 %v300
    %v1281 = vunpack.c.l.b16 %v301
    %v1282 = vunpack.c.l.b16 %v302
    %v1283 = vunpack.c.l.b16 %v303
    %v1284 = vunpack.c.l.b16 %v304
    %v1285 = vunpack.c.l.b16 %v305
    %v1286 = vunpack.c.l.b16 %v306
    %v1287 = vunpack.c.l.b16 %v307
    %v1288 = vunpack.c.l.b16 %v308
    %v1289 = vunpack.c.l.b16 %v309
    %v1290 = vunpack.c.l.b16 %v310
    %v1291 = vunpack.c.l.b16 %v311
    %v1292 = vunpack.c.l.b16 %v312
    %v1293 = vunpack.c.l.b16 %v313
    %v1294 = vunpack.c.l.b16 %v314
    %v1295 = vunpack.c.l.b16 %v315
    %v1296 = vunpack.c.l.b16 %v316
    %v1297 = vunpack.c.l.b16 %v317
    %v1298 = vunpack.c.l.b16 %v318
    %v1299 = vunpack.c.l.b16 %v319
    %v1300 = vunpack.c.l.b16 %v320
    %v1301 = vunpack.c.l.b16 %v321
    %v1302 = vunpack.c.l.b16 %v322
    %v1303 = vunpack.c.l.b16 %v323
    %v1304 = vunpack.c.l.b16 %v324
    %v1305 = vunpack.c.l.b16 %v325
    %v1306 = vunpack.c.l.b16 %v326
    %v1307 = vunpack.c.l.b16 %v327
    %v1308 = vunpack.c.l.b16 %v328
    %v1309 = vunpack.c.l.b16 %v329
    %v1310 = vunpack.c.l.b16 %v330
    %v1311 = vunpack.c.l.b16 %v331
    %v1312 = vunpack.c.l.b16 %v332
    %v1313 = vunpack.c.l.b16 %v333
    %v1314 = vunpack.c.l.b16 %v334
    %v1315 = vunpack.c.l.b16 %v335
    %v1316 = vunpack.c.l.b16 %v336
    %v1317 = vunpack.c.l.b16 %v337
    %v1318 = vunpack.c.l.b16 %v338
    %v1319 = vunpack.c.l.b16 %v339
    %v1320 = vunpack.c.l.b16 %v340
    %v1321 = vunpack.c.l.b16 %v341
    %v1322 = vunpack.c.l.b16 %v342
    %v1323 = vunpack.c.l.b16 %v343
    %v1324 = vunpack.c.l.b16 %v344
    %v1325 = vunpack.c.l.b16 %v345
    %v1326 = vunpack.c.l.b16 %v346
    %v1327 = vunpack.c.l.b16 %v347
    %v1328 = vunpack.c.l.b16 %v348
    %v1329 = vunpack.c.l.b16 %v349
    %v1330 = vunpack.c.l.b16 %v350
    %v1331 = vunpack.c.l.b16 %v351
    %v1332 = vunpack.c.l.b16 %v352
    %v1333 = vunpack.c.l.b16 %v353
    %v1334 = vunpack.c.l.b16 %v354
    %v1335 = vunpack.c.l.b16 %v355
    %v1336 = vunpack.c.l.b16 %v356
    %v1337 = vunpack.c.l.b16 %v357
    %v1338 = vunpack.c.l.b16 %v358
    %v1339 = vunpack.c.l.b16 %v359
    %v1340 = vunpack.c.l.b16 %v360
    %v1341 = vunpack.c.l.b16 %v361
    %v1342 = vunpack.c.l.b16 %v362
    %v1343 = vunpack.c.l.b16 %v363
    %v1344 = vunpack.c.l.b16 %v364
    %v1345 = vunpack.c.l.b16 %v365
    %v1346 = vunpack.c.l.b16 %v366
    %v1347 = vunpack.c.l.b16 %v367
    %v1348 = vunpack.c.l.b16 %v368
    %v1349 = vunpack.c.l.b16 %v369
    %v1350 = vunpack.c.l.b16 %v370
    %v1351 = vunpack.c.l.b16 %v371
    %v1352 = vunpack.c.l.b16 %v372
    %v1353 = vunpack.c.l.b16 %v373
    %v1354 = vunpack.c.l.b16 %v374
    %v1355 = vunpack.c.l.b16 %v375
    %v1356 = vunpack.c.l.b16 %v376
    %v1357 = vunpack.c.l.b16 %v377
    %v1358 = vunpack.c.l.b16 %v378
    %v1359 = vunpack.c.l.b16 %v379
    %v1360 = vunpack.c.l.b16 %v380
    %v1361 = vunpack.c.l.b16 %v381
    %v1362 = vunpack.c.l.b16 %v382
    %v1363 = vunpack.c.l.b16 %v383
    %v1364 = vunpack.c.l.b16 %v384
    %v1365 = vunpack.c.l.b16 %v385
    %v1366 = vunpack.c.l.b16 %v386
    %v1367 = vunpack.c.l.b16 %v387
    %v1368 = vunpack.c.l.b16 %v388
    %v1369 = vunpack.c.l.b16 %v389
    %v1370 = vunpack.c.l.b16 %v390
    %v1371 = vunpack.c.l.b16 %v391
    %v1372 = vunpack.c.l.b16 %v392
    %v1373 = vunpack.c.l.b16 %v393
    %v1374 = vunpack.c.l.b16 %v394
    %v1375 = vunpack.c.l.b16 %v395
    %v1376 = vunpack.c.l.b16 %v396
    %v1377 = vunpack.c.l.b16 %v397
    %v1378 = vunpack.c.l.b16 %v398
    %v1379 = vunpack.c.l.b16 %v399
    %v1380 = vunpack.c.l.b16 %v400
    %v1381 = vunpack.c.l.b16 %v401
    %v1382 = vunpack.c.l.b16 %v402
    %v1383 = vunpack.c.l.b16 %v403
    %v1384 = vunpack.c.l.b16 %v404
    %v1385 = vunpack.c.l.b16 %v405
    %v1386 = vunpack.c.l.b16 %v406
    %v1387 = vunpack.c.l.b16 %v407
    %v1388 = vunpack.c.l.b16 %v408
    %v1389 = vunpack.c.l.b16 %v409
    %v1390 = vunpack.c.l.b16 %v410
    %v1391 = vunpack.c.l.b16 %v411
    %v1392 = vunpack.c.l.b16 %v412
    %v1393 = vunpack.c.l.b16 %v413
    %v1394 = vunpack.c.l.b16 %v414
    %v1395 = vunpack.c.l.b16 %v415
    %v1396 = vunpack.c.l.b16 %v416
    %v1397 = vunpack.c.l.b16 %v417
    %v1398 = vpack.c.b16 %v1007, %v1006
    %v1399 = vpack.c.b16 %v1009, %v1008
    %v1400 = vpack.c.b16 %v1011, %v1010
    %v1401 = vpack.c.b16 %v1013, %v1012
    %v1402 = vpack.c.b16 %v1015, %v1014
    %v1403 = vpack.c.b16 %v1017, %v1016
    %v1404 = vpack.c.b16 %v1019, %v1018
    %v1405 = vpack.c.b16 %v1021, %v1020
    %v1406 = vpack.c.b16 %v1023, %v1022
    %v1407 = vpack.c.b16 %v1025, %v1024
    %v1408 = vpack.c.b16 %v1027, %v1026
    %v1409 = vpack.c.b16 %v1029, %v1028
    %v1410 = vpack.c.b16 %v1031, %v1030
    %v1411 = vpack.c.b16 %v1033, %v1032
    %v1412 = vpack.c.b16 %v1035, %v1034
    %v1413 = vpack.c.b16 %v1037, %v1036
    %v1414 = vpack.c.b16 %v1039, %v1038
    %v1415 = vpack.c.b16 %v1041, %v1040
    %v1416 = vpack.c.b16 %v1043, %v1042
    %v1417 = vpack.c.b16 %v1045, %v1044
    %v1418 = vpack.c.b16 %v1047, %v1046
    %v1419 = vpack.c.b16 %v1049, %v1048
    %v1420 = vpack.c.b16 %v1051, %v1050
    %v1421 = vpack.c.b16 %v1053, %v1052
    %v1422 = vpack.c.b16 %v1055, %v1054
    %v1423 = vpack.c.b16 %v1057, %v1056
    %v1424 = vpack.c.b16 %v1059, %v1058
    %v1425 = vpack.c.b16 %v1061, %v1060
    %v1426 = vpack.c.b16 %v1063, %v1062
    %v1427 = vpack.c.b16 %v1065, %v1064
    %v1428 = vpack.c.b16 %v1067, %v1066
    %v1429 = vpack.c.b16 %v1069, %v1068
    %v1430 = vpack.c.b16 %v1071, %v1070
    %v1431 = vpack.c.b16 %v1073, %v1072
    %v1432 = vpack.c.b16 %v1075, %v1074
    %v1433 = vpack.c.b16 %v1077, %v1076
    %v1434 = vpack.c.b16 %v1079, %v1078
    %v1435 = vpack.c.b16 %v1081, %v1080
    %v1436 = vpack.c.b16 %v1083, %v1082
    %v1437 = vpack.c.b16 %v1085, %v1084
    %v1438 = vpack.c.b16 %v1087, %v1086
    %v1439 = vpack.c.b16 %v1089, %v1088
    %v1440 = vpack.c.b16 %v1091, %v1090
    %v1441 = vpack.c.b16 %v1093, %v1092
    %v1442 = vpack.c.b16 %v1095, %v1094
    %v1443 = vpack.c.b16 %v1097, %v1096
    %v1444 = vpack.c.b16 %v1099, %v1098
    %v1445 = vpack.c.b16 %v1101, %v1100
    %v1446 = vpack.c.b16 %v1103, %v1102
    %v1447 = vpack.c.b16 %v1105, %v1104
    %v1448 = vpack.c.b16 %v1107, %v1106
    %v1449 = vpack.c.b16 %v1109, %v1108
    %v1450 = vpack.c.b16 %v1111, %v1110
    %v1451 = vpack.c.b16 %v1113, %v1112
    %v1452 = vpack.c.b16 %v1115, %v1114
    %v1453 = vpack.c.b16 %v1117, %v1116
    %v1454 = vpack.c.b16 %v1119, %v1118
    %v1455 = vpack.c.b16 %v1121, %v1120
    %v1456 = vpack.c.b16 %v1123, %v1122
    %v1457 = vpack.c.b16 %v1125, %v1124
    %v1458 = vpack.c.b16 %v1127, %v1126
    %v1459 = vpack.c.b16 %v1129, %v1128
    %v1460 = vpack.c.b16 %v1131, %v1130
    %v1461 = vpack.c.b16 %v1133, %v1132
    %v1462 = vpack.c.b16 %v1135, %v1134
    %v1463 = vpack.c.b16 %v1137, %v1136
    %v1464 = vpack.c.b16 %v1139, %v1138
    %v1465 = vpack.c.b16 %v1141, %v1140
    %v1466 = vpack.c.b16 %v1143, %v1142
    %v1467 = vpack.c.b16 %v1145, %v1144
    %v1468 = vpack.c.b16 %v1147, %v1146
    %v1469 = vpack.c.b16 %v1149, %v1148
    %v1470 = vpack.c.b16 %v1151, %v1150
    %v1471 = vpack.c.b16 %v1153, %v1152
    %v1472 = vpack.c.b16 %v1155, %v1154
    %v1473 = vpack.c.b16 %v1157, %v1156
    %v1474 = vpack.c.b16 %v1159, %v1158
    %v1475 = vpack.c.b16 %v1161, %v1160
    %v1476 = vpack.c.b16 %v1163, %v1162
    %v1477 = vpack.c.b16 %v1165, %v1164
    %v1478 = vpack.c.b16 %v1167, %v1166
    %v1479 = vpack.c.b16 %v1169, %v1168
    %v1480 = vpack.c.b16 %v1171, %v1170
    %v1481 = vpack.c.b16 %v1173, %v1172
    %v1482 = vpack.c.b16 %v1175, %v1174
    %v1483 = vpack.c.b16 %v1177, %v1176
    %v1484 = vpack.c.b16 %v1179, %v1178
    %v1485 = vpack.c.b16 %v1181, %v1180
    %v1486 = vpack.c.b16 %v1183, %v1182
    %v1487 = vpack.c.b16 %v1185, %v1184
    %v1488 = vpack.c.b16 %v1187, %v1186
    %v1489 = vpack.c.b16 %v1189, %v1188
    %v1490 = vpack.c.b16 %v1191, %v1190
    %v1491 = vpack.c.b16 %v1193, %v1192
    %v1492 = vpack.c.b16 %v1195, %v1194
    %v1493 = vpack.c.b16 %v1197, %v1196
    %v1494 = vpack.c.b16 %v1199, %v1198
    %v1495 = vpack.c.b16 %v1201, %v1200
    %v1496 = vpack.c.b16 %v1203, %v1202
    %v1497 = vpack.c.b16 %v1205, %v1204
    %v1498 = vpack.c.b16 %v1207, %v1206
    %v1499 = vpack.c.b16 %v1209, %v1208
    %v1500 = vpack.c.b16 %v1211, %v1210
    %v1501 = vpack.c.b16 %v1213, %v1212
    %v1502 = vpack.c.b16 %v1215, %v1214
    %v1503 = vpack.c.b16 %v1217, %v1216
    %v1504 = vpack.c.b16 %v1219, %v1218
    %v1505 = vpack.c.b16 %v1221, %v1220
    %v1506 = vpack.c.b16 %v1223, %v1222
    %v1507 = vpack.c.b16 %v1225, %v1224
    %v1508 = vpack.c.b16 %v1227, %v1226
    %v1509 = vpack.c.b16 %v1229, %v1228
    %v1510 = vpack.c.b16 %v1231, %v1230
    %v1511 = vpack.c.b16 %v1233, %v1232
    %v1512 = vpack.c.b16 %v1235, %v1234
    %v1513 = vpack.c.b16 %v1237, %v1236
    %v1514 = vpack.c.b16 %v1239, %v1238
    %v1515 = vpack.c.b16 %v1241, %v1240
    %v1516 = vpack.c.b16 %v1243, %v1242
    %v1517 = vpack.c.b16 %v1245, %v1244
    %v1518 = vpack.c.b16 %v1247, %v1246
    %v1519 = vpack.c.b16 %v1249, %v1248
    %v1520 = vpack.c.b16 %v1251, %v1250
    %v1521 = vpack.c.b16 %v1253, %v1252
    %v1522 = vpack.c.b16 %v1255, %v1254
    %v1523 = vpack.c.b16 %v1257, %v1256
    %v1524 = vpack.c.b16 %v1259, %v1258
    %v1525 = vpack.c.b16 %v1261, %v1260
    %v1526 = vpack.c.b16 %v1263, %v1262
    %v1527 = vpack.c.b16 %v1265, %v1264
    %v1528 = vpack.c.b16 %v1267, %v1266
    %v1529 = vpack.c.b16 %v1269, %v1268
    %v1530 = vpack.c.b16 %v1271, %v1270
    %v1531 = vpack.c.b16 %v1273, %v1272
    %v1532 = vpack.c.b16 %v1275, %v1274
    %v1533 = vpack.c.b16 %v1277, %v1276
    %v1534 = vpack.c.b16 %v1279, %v1278
    %v1535 = vpack.c.b16 %v1281, %v1280
    %v1536 = vpack.c.b16 %v1283, %v1282
    %v1537 = vpack.c.b16 %v1285, %v1284
    %v1538 = vpack.c.b16 %v1287, %v1286
    %v1539 = vpack.c.b16 %v1289, %v1288
    %v1540 = vpack.c.b16 %v1291, %v1290
    %v1541 = vpack.c.b16 %v1293, %v1292
    %v1542 = vpack.c.b16 %v1295, %v1294
    %v1543 = vpack.c.b16 %v1297, %v1296
    %v1544 = vpack.c.b16 %v1299, %v1298
    %v1545 = vpack.c.b16 %v1301, %v1300
    %v1546 = vpack.c.b16 %v1303, %v1302
    %v1547 = vpack.c.b16 %v1305, %v1304
    %v1548 = vpack.c.b16 %v1307, %v1306
    %v1549 = vpack.c.b16 %v1309, %v1308
    %v1550 = vpack.c.b16 %v1311, %v1310
    %v1551 = vpack.c.b16 %v1313, %v1312
    %v1552 = vpack.c.b16 %v1315, %v1314
    %v1553 = vpack.c.b16 %v1317, %v1316
    %v1554 = vpack.c.b16 %v1319, %v1318
    %v1555 = vpack.c.b16 %v1321, %v1320
    %v1556 = vpack.c.b16 %v1323, %v1322
    %v1557 = vpack.c.b16 %v1325, %v1324
    %v1558 = vpack.c.b16 %v1327, %v1326
    %v1559 = vpack.c.b16 %v1329, %v1328
    %v1560 = vpack.c.b16 %v1331, %v1330
    %v1561 = vpack.c.b16 %v1333, %v1332
    %v1562 = vpack.c.b16 %v1335, %v1334
    %v1563 = vpack.c.b16 %v1337, %v1336
    %v1564 = vpack.c.b16 %v1339, %v1338
    %v1565 = vpack.c.b16 %v1341, %v1340
    %v1566 = vpack.c.b16 %v1343, %v1342
    %v1567 = vpack.c.b16 %v1345, %v1344
    %v1568 = vpack.c.b16 %v1347, %v1346
    %v1569 = vpack.c.b16 %v1349, %v1348
    %v1570 = vpack.c.b16 %v1351, %v1350
    %v1571 = vpack.c.b16 %v1353, %v1352
    %v1572 = vpack.c.b16 %v1355, %v1354
    %v1573 = vpack.c.b16 %v1357, %v1356
    %v1574 = vpack.c.b16 %v1359, %v1358
    %v1575 = vpack.c.b16 %v1361, %v1360
    %v1576 = vpack.c.b16 %v1363, %v1362
    %v1577 = vpack.c.b16 %v1365, %v1364
    %v1578 = vpack.c.b16 %v1367, %v1366
    %v1579 = vpack.c.b16 %v1369, %v1368
    %v1580 = vpack.c.b16 %v1371, %v1370
    %v1581 = vpack.c.b16 %v1373, %v1372
    %v1582 = vpack.c.b16 %v1375, %v1374
    %v1583 = vpack.c.b16 %v1377, %v1376
    %v1584 = vpack.c.b16 %v1379, %v1378
    %v1585 = vpack.c.b16 %v1381, %v1380
    %v1586 = vpack.c.b16 %v1383, %v1382
    %v1587 = vpack.c.b16 %v1385, %v1384
    %v1588 = vpack.c.b16 %v1387, %v1386
    %v1589 = vpack.c.b16 %v1389, %v1388
    %v1590 = vpack.c.b16 %v1391, %v1390
    %v1591 = vpack.c.b16 %v1393, %v1392
    %v1592 = vpack.c.b16 %v1395, %v1394
    %v1593 = vpack.c.b16 %v1397, %v1396
    %vm1790 = vcmask 523264
    %v1792 = vsel %vm1790, %v589, 0
    %1794 = vmatprep.subr.bf16.mxu0 0
    %1795 = vmatpush1.bf16.msra.mxu0 %v1405
    %1796 = vmatprep.subr.bf16.mxu0 0
    %1797 = vmatpush1.bf16.msra.mxu0 %v1404
    %1798 = vmatprep.subr.bf16.mxu0 0
    %1799 = vmatpush1.bf16.msra.mxu0 %v1403
    %1800 = vmatprep.subr.bf16.mxu0 0
    %1801 = vmatpush1.bf16.msra.mxu0 %v1402
    %1802 = vmatprep.subr.bf16.mxu0 0
    %1803 = vmatpush1.bf16.msra.mxu0 %v1401
    %1804 = vmatprep.subr.bf16.mxu0 0
    %1805 = vmatpush1.bf16.msra.mxu0 %v1400
    %1806 = vmatprep.subr.bf16.mxu0 0
    %1807 = vmatpush1.bf16.msra.mxu0 %v1399
    %1808 = vmatprep.subr.bf16.mxu0 0
    %1809 = vmatpush1.bf16.msra.mxu0 %v1398
    %1810 = vmatprep.subr.bf16.mxu0 0
    %1811 = vmatpush2.bf16.msra.mxu0 %v1413
    %1812 = vmatprep.subr.bf16.mxu0 0
    %1813 = vmatpush2.bf16.msra.mxu0 %v1412
    %1814 = vmatprep.subr.bf16.mxu0 0
    %1815 = vmatpush2.bf16.msra.mxu0 %v1411
    %1816 = vmatprep.subr.bf16.mxu0 0
    %1817 = vmatpush2.bf16.msra.mxu0 %v1410
    %1818 = vmatprep.subr.bf16.mxu0 0
    %1819 = vmatpush2.bf16.msra.mxu0 %v1409
    %1820 = vmatprep.subr.bf16.mxu0 0
    %1821 = vmatpush2.bf16.msra.mxu0 %v1408
    %1822 = vmatprep.subr.bf16.mxu0 0
    %1823 = vmatpush2.bf16.msra.mxu0 %v1407
    %1824 = vmatprep.subr.bf16.mxu0 0
    %1825 = vmatpush2.bf16.msra.mxu0 %v1406
    %1826 = vmatprep.mubr.bf16.mxu0 %v466
    %1827 = vmatmul.mubr.bf16.gmra.mxu0 %v452
    %v1828 = vpop.f32.mrf.mxu0
    %v1829 = vadd.f32 %v423, %v1828
    %v1830 = vpop.f32.mrf.mxu0
    %v1831 = vpop.f32.mrf.mxu0
    %v1832 = vpop.f32.mrf.mxu0
    %1833 = vdwg.mxu0
    %1834 = vmatprep.subr.bf16.mxu0 0
    %1835 = vmatpush1.bf16.msra.mxu0 %v1421
    %1836 = vmatprep.subr.bf16.mxu0 0
    %1837 = vmatpush1.bf16.msra.mxu0 %v1420
    %1838 = vmatprep.subr.bf16.mxu0 0
    %1839 = vmatpush1.bf16.msra.mxu0 %v1419
    %1840 = vmatprep.subr.bf16.mxu0 0
    %1841 = vmatpush1.bf16.msra.mxu0 %v1418
    %1842 = vmatprep.subr.bf16.mxu0 0
    %1843 = vmatpush1.bf16.msra.mxu0 %v1417
    %1844 = vmatprep.subr.bf16.mxu0 0
    %1845 = vmatpush1.bf16.msra.mxu0 %v1416
    %1846 = vmatprep.subr.bf16.mxu0 0
    %1847 = vmatpush1.bf16.msra.mxu0 %v1415
    %1848 = vmatprep.subr.bf16.mxu0 0
    %1849 = vmatpush1.bf16.msra.mxu0 %v1414
    %1850 = vmatprep.subr.bf16.mxu0 0
    %1851 = vmatpush2.bf16.msra.mxu0 %v1429
    %1852 = vmatprep.subr.bf16.mxu0 0
    %1853 = vmatpush2.bf16.msra.mxu0 %v1428
    %1854 = vmatprep.subr.bf16.mxu0 0
    %1855 = vmatpush2.bf16.msra.mxu0 %v1427
    %1856 = vmatprep.subr.bf16.mxu0 0
    %1857 = vmatpush2.bf16.msra.mxu0 %v1426
    %1858 = vmatprep.subr.bf16.mxu0 0
    %1859 = vmatpush2.bf16.msra.mxu0 %v1425
    %1860 = vmatprep.subr.bf16.mxu0 0
    %1861 = vmatpush2.bf16.msra.mxu0 %v1424
    %1862 = vmatprep.subr.bf16.mxu0 0
    %1863 = vmatpush2.bf16.msra.mxu0 %v1423
    %1864 = vmatprep.subr.bf16.mxu0 0
    %1865 = vmatpush2.bf16.msra.mxu0 %v1422
    %1866 = vmatprep.mubr.bf16.mxu0 %v476
    %1867 = vmatmul.mubr.bf16.gmra.mxu0 %v474
    %v1868 = vpop.f32.mrf.mxu0
    %v1869 = vadd.f32 %v1829, %v1868
    %v1870 = vpop.f32.mrf.mxu0
    %v1871 = vpop.f32.mrf.mxu0
    %v1872 = vpop.f32.mrf.mxu0
    %1873 = vdwg.mxu0
    %1874 = vmatprep.subr.bf16.mxu0 0
    %1875 = vmatpush1.bf16.msra.mxu0 %v1437
    %1876 = vmatprep.subr.bf16.mxu0 0
    %1877 = vmatpush1.bf16.msra.mxu0 %v1436
    %1878 = vmatprep.subr.bf16.mxu0 0
    %1879 = vmatpush1.bf16.msra.mxu0 %v1435
    %1880 = vmatprep.subr.bf16.mxu0 0
    %1881 = vmatpush1.bf16.msra.mxu0 %v1434
    %1882 = vmatprep.subr.bf16.mxu0 0
    %1883 = vmatpush1.bf16.msra.mxu0 %v1433
    %1884 = vmatprep.subr.bf16.mxu0 0
    %1885 = vmatpush1.bf16.msra.mxu0 %v1432
    %1886 = vmatprep.subr.bf16.mxu0 0
    %1887 = vmatpush1.bf16.msra.mxu0 %v1431
    %1888 = vmatprep.subr.bf16.mxu0 0
    %1889 = vmatpush1.bf16.msra.mxu0 %v1430
    %1890 = vmatprep.subr.bf16.mxu0 0
    %1891 = vmatpush2.bf16.msra.mxu0 %v1445
    %1892 = vmatprep.subr.bf16.mxu0 0
    %1893 = vmatpush2.bf16.msra.mxu0 %v1444
    %1894 = vmatprep.subr.bf16.mxu0 0
    %1895 = vmatpush2.bf16.msra.mxu0 %v1443
    %1896 = vmatprep.subr.bf16.mxu0 0
    %1897 = vmatpush2.bf16.msra.mxu0 %v1442
    %1898 = vmatprep.subr.bf16.mxu0 0
    %1899 = vmatpush2.bf16.msra.mxu0 %v1441
    %1900 = vmatprep.subr.bf16.mxu0 0
    %1901 = vmatpush2.bf16.msra.mxu0 %v1440
    %1902 = vmatprep.subr.bf16.mxu0 0
    %1903 = vmatpush2.bf16.msra.mxu0 %v1439
    %1904 = vmatprep.subr.bf16.mxu0 0
    %1905 = vmatpush2.bf16.msra.mxu0 %v1438
    %1906 = vmatprep.mubr.bf16.mxu0 %v473
    %1907 = vmatmul.mubr.bf16.gmra.mxu0 %v459
    %v1908 = vpop.f32.mrf.mxu0
    %v1909 = vadd.f32 %v1869, %v1908
    %v1910 = vpop.f32.mrf.mxu0
    %v1911 = vpop.f32.mrf.mxu0
    %v1912 = vpop.f32.mrf.mxu0
    %1913 = vdwg.mxu0
    %1914 = vmatprep.subr.bf16.mxu0 0
    %1915 = vmatpush1.bf16.msra.mxu0 %v1453
    %1916 = vmatprep.subr.bf16.mxu0 0
    %1917 = vmatpush1.bf16.msra.mxu0 %v1452
    %1918 = vmatprep.subr.bf16.mxu0 0
    %1919 = vmatpush1.bf16.msra.mxu0 %v1451
    %1920 = vmatprep.subr.bf16.mxu0 0
    %1921 = vmatpush1.bf16.msra.mxu0 %v1450
    %1922 = vmatprep.subr.bf16.mxu0 0
    %1923 = vmatpush1.bf16.msra.mxu0 %v1449
    %1924 = vmatprep.subr.bf16.mxu0 0
    %1925 = vmatpush1.bf16.msra.mxu0 %v1448
    %1926 = vmatprep.subr.bf16.mxu0 0
    %1927 = vmatpush1.bf16.msra.mxu0 %v1447
    %1928 = vmatprep.subr.bf16.mxu0 0
    %1929 = vmatpush1.bf16.msra.mxu0 %v1446
    %1930 = vmatprep.subr.bf16.mxu0 0
    %1931 = vmatpush2.bf16.msra.mxu0 %v1461
    %1932 = vmatprep.subr.bf16.mxu0 0
    %1933 = vmatpush2.bf16.msra.mxu0 %v1460
    %1934 = vmatprep.subr.bf16.mxu0 0
    %1935 = vmatpush2.bf16.msra.mxu0 %v1459
    %1936 = vmatprep.subr.bf16.mxu0 0
    %1937 = vmatpush2.bf16.msra.mxu0 %v1458
    %1938 = vmatprep.subr.bf16.mxu0 0
    %1939 = vmatpush2.bf16.msra.mxu0 %v1457
    %1940 = vmatprep.subr.bf16.mxu0 0
    %1941 = vmatpush2.bf16.msra.mxu0 %v1456
    %1942 = vmatprep.subr.bf16.mxu0 0
    %1943 = vmatpush2.bf16.msra.mxu0 %v1455
    %1944 = vmatprep.subr.bf16.mxu0 0
    %1945 = vmatpush2.bf16.msra.mxu0 %v1454
    %1946 = vmatprep.mubr.bf16.mxu0 %v477
    %1947 = vmatmul.mubr.bf16.gmra.mxu0 %v475
    %v1948 = vpop.f32.mrf.mxu0
    %v1949 = vadd.f32 %v1909, %v1948
    %v1950 = vpop.f32.mrf.mxu0
    %v1951 = vpop.f32.mrf.mxu0
    %v1952 = vpop.f32.mrf.mxu0
    %1953 = vdwg.mxu0
    %1954 = vmatprep.subr.bf16.mxu0 0
    %1955 = vmatpush1.bf16.msra.mxu0 %v1469
    %1956 = vmatprep.subr.bf16.mxu0 0
    %1957 = vmatpush1.bf16.msra.mxu0 %v1468
    %1958 = vmatprep.subr.bf16.mxu0 0
    %1959 = vmatpush1.bf16.msra.mxu0 %v1467
    %1960 = vmatprep.subr.bf16.mxu0 0
    %1961 = vmatpush1.bf16.msra.mxu0 %v1466
    %1962 = vmatprep.subr.bf16.mxu0 0
    %1963 = vmatpush1.bf16.msra.mxu0 %v1465
    %1964 = vmatprep.subr.bf16.mxu0 0
    %1965 = vmatpush1.bf16.msra.mxu0 %v1464
    %1966 = vmatprep.subr.bf16.mxu0 0
    %1967 = vmatpush1.bf16.msra.mxu0 %v1463
    %1968 = vmatprep.subr.bf16.mxu0 0
    %1969 = vmatpush1.bf16.msra.mxu0 %v1462
    %1970 = vmatprep.subr.bf16.mxu0 0
    %1971 = vmatpush2.bf16.msra.mxu0 %v1477
    %1972 = vmatprep.subr.bf16.mxu0 0
    %1973 = vmatpush2.bf16.msra.mxu0 %v1476
    %1974 = vmatprep.subr.bf16.mxu0 0
    %1975 = vmatpush2.bf16.msra.mxu0 %v1475
    %1976 = vmatprep.subr.bf16.mxu0 0
    %1977 = vmatpush2.bf16.msra.mxu0 %v1474
    %1978 = vmatprep.subr.bf16.mxu0 0
    %1979 = vmatpush2.bf16.msra.mxu0 %v1473
    %1980 = vmatprep.subr.bf16.mxu0 0
    %1981 = vmatpush2.bf16.msra.mxu0 %v1472
    %1982 = vmatprep.subr.bf16.mxu0 0
    %1983 = vmatpush2.bf16.msra.mxu0 %v1471
    %1984 = vmatprep.subr.bf16.mxu0 0
    %1985 = vmatpush2.bf16.msra.mxu0 %v1470
    %1986 = vmatprep.mubr.bf16.mxu0 %v515
    %1987 = vmatmul.mubr.bf16.gmra.mxu0 %v501
    %v1988 = vpop.f32.mrf.mxu0
    %v1989 = vadd.f32 %v1949, %v1988
    %v1990 = vpop.f32.mrf.mxu0
    %v1991 = vpop.f32.mrf.mxu0
    %v1992 = vpop.f32.mrf.mxu0
    %1993 = vdwg.mxu0
    %1994 = vmatprep.subr.bf16.mxu0 0
    %1995 = vmatpush1.bf16.msra.mxu0 %v1485
    %1996 = vmatprep.subr.bf16.mxu0 0
    %1997 = vmatpush1.bf16.msra.mxu0 %v1484
    %1998 = vmatprep.subr.bf16.mxu0 0
    %1999 = vmatpush1.bf16.msra.mxu0 %v1483
    %2000 = vmatprep.subr.bf16.mxu0 0
    %2001 = vmatpush1.bf16.msra.mxu0 %v1482
    %2002 = vmatprep.subr.bf16.mxu0 0
    %2003 = vmatpush1.bf16.msra.mxu0 %v1481
    %2004 = vmatprep.subr.bf16.mxu0 0
    %2005 = vmatpush1.bf16.msra.mxu0 %v1480
    %2006 = vmatprep.subr.bf16.mxu0 0
    %2007 = vmatpush1.bf16.msra.mxu0 %v1479
    %2008 = vmatprep.subr.bf16.mxu0 0
    %2009 = vmatpush1.bf16.msra.mxu0 %v1478
    %2010 = vmatprep.subr.bf16.mxu0 0
    %2011 = vmatpush2.bf16.msra.mxu0 %v1493
    %2012 = vmatprep.subr.bf16.mxu0 0
    %2013 = vmatpush2.bf16.msra.mxu0 %v1492
    %2014 = vmatprep.subr.bf16.mxu0 0
    %2015 = vmatpush2.bf16.msra.mxu0 %v1491
    %2016 = vmatprep.subr.bf16.mxu0 0
    %2017 = vmatpush2.bf16.msra.mxu0 %v1490
    %2018 = vmatprep.subr.bf16.mxu0 0
    %2019 = vmatpush2.bf16.msra.mxu0 %v1489
    %2020 = vmatprep.subr.bf16.mxu0 0
    %2021 = vmatpush2.bf16.msra.mxu0 %v1488
    %2022 = vmatprep.subr.bf16.mxu0 0
    %2023 = vmatpush2.bf16.msra.mxu0 %v1487
    %2024 = vmatprep.subr.bf16.mxu0 0
    %2025 = vmatpush2.bf16.msra.mxu0 %v1486
    %2026 = vmatprep.mubr.bf16.mxu0 %v525
    %2027 = vmatmul.mubr.bf16.gmra.mxu0 %v523
    %v2028 = vpop.f32.mrf.mxu0
    %v2029 = vadd.f32 %v1989, %v2028
    %v2030 = vpop.f32.mrf.mxu0
    %v2031 = vpop.f32.mrf.mxu0
    %v2032 = vpop.f32.mrf.mxu0
    %2033 = vdwg.mxu0
    %2034 = vmatprep.subr.bf16.mxu0 0
    %2035 = vmatpush1.bf16.msra.mxu0 %v1501
    %2036 = vmatprep.subr.bf16.mxu0 0
    %2037 = vmatpush1.bf16.msra.mxu0 %v1500
    %2038 = vmatprep.subr.bf16.mxu0 0
    %2039 = vmatpush1.bf16.msra.mxu0 %v1499
    %2040 = vmatprep.subr.bf16.mxu0 0
    %2041 = vmatpush1.bf16.msra.mxu0 %v1498
    %2042 = vmatprep.subr.bf16.mxu0 0
    %2043 = vmatpush1.bf16.msra.mxu0 %v1497
    %2044 = vmatprep.subr.bf16.mxu0 0
    %2045 = vmatpush1.bf16.msra.mxu0 %v1496
    %2046 = vmatprep.subr.bf16.mxu0 0
    %2047 = vmatpush1.bf16.msra.mxu0 %v1495
    %2048 = vmatprep.subr.bf16.mxu0 0
    %2049 = vmatpush1.bf16.msra.mxu0 %v1494
    %2050 = vmatprep.subr.bf16.mxu0 0
    %2051 = vmatpush2.bf16.msra.mxu0 %v1509
    %2052 = vmatprep.subr.bf16.mxu0 0
    %2053 = vmatpush2.bf16.msra.mxu0 %v1508
    %2054 = vmatprep.subr.bf16.mxu0 0
    %2055 = vmatpush2.bf16.msra.mxu0 %v1507
    %2056 = vmatprep.subr.bf16.mxu0 0
    %2057 = vmatpush2.bf16.msra.mxu0 %v1506
    %2058 = vmatprep.subr.bf16.mxu0 0
    %2059 = vmatpush2.bf16.msra.mxu0 %v1505
    %2060 = vmatprep.subr.bf16.mxu0 0
    %2061 = vmatpush2.bf16.msra.mxu0 %v1504
    %2062 = vmatprep.subr.bf16.mxu0 0
    %2063 = vmatpush2.bf16.msra.mxu0 %v1503
    %2064 = vmatprep.subr.bf16.mxu0 0
    %2065 = vmatpush2.bf16.msra.mxu0 %v1502
    %2066 = vmatprep.mubr.bf16.mxu0 %v522
    %2067 = vmatmul.mubr.bf16.gmra.mxu0 %v508
    %v2068 = vpop.f32.mrf.mxu0
    %v2069 = vadd.f32 %v2029, %v2068
    %v2070 = vpop.f32.mrf.mxu0
    %v2071 = vpop.f32.mrf.mxu0
    %v2072 = vpop.f32.mrf.mxu0
    %2073 = vdwg.mxu0
    %2074 = vmatprep.subr.bf16.mxu0 0
    %2075 = vmatpush1.bf16.msra.mxu0 %v1517
    %2076 = vmatprep.subr.bf16.mxu0 0
    %2077 = vmatpush1.bf16.msra.mxu0 %v1516
    %2078 = vmatprep.subr.bf16.mxu0 0
    %2079 = vmatpush1.bf16.msra.mxu0 %v1515
    %2080 = vmatprep.subr.bf16.mxu0 0
    %2081 = vmatpush1.bf16.msra.mxu0 %v1514
    %2082 = vmatprep.subr.bf16.mxu0 0
    %2083 = vmatpush1.bf16.msra.mxu0 %v1513
    %2084 = vmatprep.subr.bf16.mxu0 0
    %2085 = vmatpush1.bf16.msra.mxu0 %v1512
    %2086 = vmatprep.subr.bf16.mxu0 0
    %2087 = vmatpush1.bf16.msra.mxu0 %v1511
    %2088 = vmatprep.subr.bf16.mxu0 0
    %2089 = vmatpush1.bf16.msra.mxu0 %v1510
    %2090 = vmatprep.subr.bf16.mxu0 0
    %2091 = vmatpush2.bf16.msra.mxu0 %v1525
    %2092 = vmatprep.subr.bf16.mxu0 0
    %2093 = vmatpush2.bf16.msra.mxu0 %v1524
    %2094 = vmatprep.subr.bf16.mxu0 0
    %2095 = vmatpush2.bf16.msra.mxu0 %v1523
    %2096 = vmatprep.subr.bf16.mxu0 0
    %2097 = vmatpush2.bf16.msra.mxu0 %v1522
    %2098 = vmatprep.subr.bf16.mxu0 0
    %2099 = vmatpush2.bf16.msra.mxu0 %v1521
    %2100 = vmatprep.subr.bf16.mxu0 0
    %2101 = vmatpush2.bf16.msra.mxu0 %v1520
    %2102 = vmatprep.subr.bf16.mxu0 0
    %2103 = vmatpush2.bf16.msra.mxu0 %v1519
    %2104 = vmatprep.subr.bf16.mxu0 0
    %2105 = vmatpush2.bf16.msra.mxu0 %v1518
    %2106 = vmatprep.mubr.bf16.mxu0 %v526
    %2107 = vmatmul.mubr.bf16.gmra.mxu0 %v524
    %v2108 = vpop.f32.mrf.mxu0
    %v2109 = vadd.f32 %v2069, %v2108
    %v2110 = vpop.f32.mrf.mxu0
    %v2111 = vpop.f32.mrf.mxu0
    %v2112 = vpop.f32.mrf.mxu0
    %2113 = vdwg.mxu0
    %2114 = vmatprep.subr.bf16.mxu0 0
    %2115 = vmatpush1.bf16.msra.mxu0 %v1533
    %2116 = vmatprep.subr.bf16.mxu0 0
    %2117 = vmatpush1.bf16.msra.mxu0 %v1532
    %2118 = vmatprep.subr.bf16.mxu0 0
    %2119 = vmatpush1.bf16.msra.mxu0 %v1531
    %2120 = vmatprep.subr.bf16.mxu0 0
    %2121 = vmatpush1.bf16.msra.mxu0 %v1530
    %2122 = vmatprep.subr.bf16.mxu0 0
    %2123 = vmatpush1.bf16.msra.mxu0 %v1529
    %2124 = vmatprep.subr.bf16.mxu0 0
    %2125 = vmatpush1.bf16.msra.mxu0 %v1528
    %2126 = vmatprep.subr.bf16.mxu0 0
    %2127 = vmatpush1.bf16.msra.mxu0 %v1527
    %2128 = vmatprep.subr.bf16.mxu0 0
    %2129 = vmatpush1.bf16.msra.mxu0 %v1526
    %2130 = vmatprep.subr.bf16.mxu0 0
    %2131 = vmatpush2.bf16.msra.mxu0 %v1541
    %2132 = vmatprep.subr.bf16.mxu0 0
    %2133 = vmatpush2.bf16.msra.mxu0 %v1540
    %2134 = vmatprep.subr.bf16.mxu0 0
    %2135 = vmatpush2.bf16.msra.mxu0 %v1539
    %2136 = vmatprep.subr.bf16.mxu0 0
    %2137 = vmatpush2.bf16.msra.mxu0 %v1538
    %2138 = vmatprep.subr.bf16.mxu0 0
    %2139 = vmatpush2.bf16.msra.mxu0 %v1537
    %2140 = vmatprep.subr.bf16.mxu0 0
    %2141 = vmatpush2.bf16.msra.mxu0 %v1536
    %2142 = vmatprep.subr.bf16.mxu0 0
    %2143 = vmatpush2.bf16.msra.mxu0 %v1535
    %2144 = vmatprep.subr.bf16.mxu0 0
    %2145 = vmatpush2.bf16.msra.mxu0 %v1534
    %2146 = vmatprep.mubr.bf16.mxu0 %v564
    %2147 = vmatmul.mubr.bf16.gmra.mxu0 %v550
    %v2148 = vpop.f32.mrf.mxu0
    %v2149 = vadd.f32 %v2109, %v2148
    %v2150 = vpop.f32.mrf.mxu0
    %v2151 = vpop.f32.mrf.mxu0
    %v2152 = vpop.f32.mrf.mxu0
    %2153 = vdwg.mxu0
    %2154 = vmatprep.subr.bf16.mxu0 0
    %2155 = vmatpush1.bf16.msra.mxu0 %v1549
    %2156 = vmatprep.subr.bf16.mxu0 0
    %2157 = vmatpush1.bf16.msra.mxu0 %v1548
    %2158 = vmatprep.subr.bf16.mxu0 0
    %2159 = vmatpush1.bf16.msra.mxu0 %v1547
    %2160 = vmatprep.subr.bf16.mxu0 0
    %2161 = vmatpush1.bf16.msra.mxu0 %v1546
    %2162 = vmatprep.subr.bf16.mxu0 0
    %2163 = vmatpush1.bf16.msra.mxu0 %v1545
    %2164 = vmatprep.subr.bf16.mxu0 0
    %2165 = vmatpush1.bf16.msra.mxu0 %v1544
    %2166 = vmatprep.subr.bf16.mxu0 0
    %2167 = vmatpush1.bf16.msra.mxu0 %v1543
    %2168 = vmatprep.subr.bf16.mxu0 0
    %2169 = vmatpush1.bf16.msra.mxu0 %v1542
    %2170 = vmatprep.subr.bf16.mxu0 0
    %2171 = vmatpush2.bf16.msra.mxu0 %v1557
    %2172 = vmatprep.subr.bf16.mxu0 0
    %2173 = vmatpush2.bf16.msra.mxu0 %v1556
    %2174 = vmatprep.subr.bf16.mxu0 0
    %2175 = vmatpush2.bf16.msra.mxu0 %v1555
    %2176 = vmatprep.subr.bf16.mxu0 0
    %2177 = vmatpush2.bf16.msra.mxu0 %v1554
    %2178 = vmatprep.subr.bf16.mxu0 0
    %2179 = vmatpush2.bf16.msra.mxu0 %v1553
    %2180 = vmatprep.subr.bf16.mxu0 0
    %2181 = vmatpush2.bf16.msra.mxu0 %v1552
    %2182 = vmatprep.subr.bf16.mxu0 0
    %2183 = vmatpush2.bf16.msra.mxu0 %v1551
    %2184 = vmatprep.subr.bf16.mxu0 0
    %2185 = vmatpush2.bf16.msra.mxu0 %v1550
    %2186 = vmatprep.mubr.bf16.mxu0 %v574
    %2187 = vmatmul.mubr.bf16.gmra.mxu0 %v572
    %v2188 = vpop.f32.mrf.mxu0
    %v2189 = vadd.f32 %v2149, %v2188
    %v2190 = vpop.f32.mrf.mxu0
    %v2191 = vpop.f32.mrf.mxu0
    %v2192 = vpop.f32.mrf.mxu0
    %2193 = vdwg.mxu0
    %2194 = vmatprep.subr.bf16.mxu0 0
    %2195 = vmatpush1.bf16.msra.mxu0 %v1565
    %2196 = vmatprep.subr.bf16.mxu0 0
    %2197 = vmatpush1.bf16.msra.mxu0 %v1564
    %2198 = vmatprep.subr.bf16.mxu0 0
    %2199 = vmatpush1.bf16.msra.mxu0 %v1563
    %2200 = vmatprep.subr.bf16.mxu0 0
    %2201 = vmatpush1.bf16.msra.mxu0 %v1562
    %2202 = vmatprep.subr.bf16.mxu0 0
    %2203 = vmatpush1.bf16.msra.mxu0 %v1561
    %2204 = vmatprep.subr.bf16.mxu0 0
    %2205 = vmatpush1.bf16.msra.mxu0 %v1560
    %2206 = vmatprep.subr.bf16.mxu0 0
    %2207 = vmatpush1.bf16.msra.mxu0 %v1559
    %2208 = vmatprep.subr.bf16.mxu0 0
    %2209 = vmatpush1.bf16.msra.mxu0 %v1558
    %2210 = vmatprep.subr.bf16.mxu0 0
    %2211 = vmatpush2.bf16.msra.mxu0 %v1573
    %2212 = vmatprep.subr.bf16.mxu0 0
    %2213 = vmatpush2.bf16.msra.mxu0 %v1572
    %2214 = vmatprep.subr.bf16.mxu0 0
    %2215 = vmatpush2.bf16.msra.mxu0 %v1571
    %2216 = vmatprep.subr.bf16.mxu0 0
    %2217 = vmatpush2.bf16.msra.mxu0 %v1570
    %2218 = vmatprep.subr.bf16.mxu0 0
    %2219 = vmatpush2.bf16.msra.mxu0 %v1569
    %2220 = vmatprep.subr.bf16.mxu0 0
    %2221 = vmatpush2.bf16.msra.mxu0 %v1568
    %2222 = vmatprep.subr.bf16.mxu0 0
    %2223 = vmatpush2.bf16.msra.mxu0 %v1567
    %2224 = vmatprep.subr.bf16.mxu0 0
    %2225 = vmatpush2.bf16.msra.mxu0 %v1566
    %2226 = vmatprep.mubr.bf16.mxu0 %v571
    %2227 = vmatmul.mubr.bf16.gmra.mxu0 %v557
    %v2228 = vpop.f32.mrf.mxu0
    %v2229 = vadd.f32 %v2189, %v2228
    %v2230 = vpop.f32.mrf.mxu0
    %v2231 = vpop.f32.mrf.mxu0
    %v2232 = vpop.f32.mrf.mxu0
    %2233 = vdwg.mxu0
    %2234 = vmatprep.subr.bf16.mxu0 0
    %2235 = vmatpush1.bf16.msra.mxu0 %v1581
    %2236 = vmatprep.subr.bf16.mxu0 0
    %2237 = vmatpush1.bf16.msra.mxu0 %v1580
    %2238 = vmatprep.subr.bf16.mxu0 0
    %2239 = vmatpush1.bf16.msra.mxu0 %v1579
    %2240 = vmatprep.subr.bf16.mxu0 0
    %2241 = vmatpush1.bf16.msra.mxu0 %v1578
    %2242 = vmatprep.subr.bf16.mxu0 0
    %2243 = vmatpush1.bf16.msra.mxu0 %v1577
    %2244 = vmatprep.subr.bf16.mxu0 0
    %2245 = vmatpush1.bf16.msra.mxu0 %v1576
    %2246 = vmatprep.subr.bf16.mxu0 0
    %2247 = vmatpush1.bf16.msra.mxu0 %v1575
    %2248 = vmatprep.subr.bf16.mxu0 0
    %2249 = vmatpush1.bf16.msra.mxu0 %v1574
    %2250 = vmatprep.subr.bf16.mxu0 0
    %2251 = vmatpush2.bf16.msra.mxu0 %v1589
    %2252 = vmatprep.subr.bf16.mxu0 0
    %2253 = vmatpush2.bf16.msra.mxu0 %v1588
    %2254 = vmatprep.subr.bf16.mxu0 0
    %2255 = vmatpush2.bf16.msra.mxu0 %v1587
    %2256 = vmatprep.subr.bf16.mxu0 0
    %2257 = vmatpush2.bf16.msra.mxu0 %v1586
    %2258 = vmatprep.subr.bf16.mxu0 0
    %2259 = vmatpush2.bf16.msra.mxu0 %v1585
    %2260 = vmatprep.subr.bf16.mxu0 0
    %2261 = vmatpush2.bf16.msra.mxu0 %v1584
    %2262 = vmatprep.subr.bf16.mxu0 0
    %2263 = vmatpush2.bf16.msra.mxu0 %v1583
    %2264 = vmatprep.subr.bf16.mxu0 0
    %2265 = vmatpush2.bf16.msra.mxu0 %v1582
    %2266 = vmatprep.mubr.bf16.mxu0 %v575
    %2267 = vmatmul.mubr.bf16.gmra.mxu0 %v573
    %v2268 = vpop.f32.mrf.mxu0
    %v2269 = vadd.f32 %v2229, %v2268
    %v2270 = vpop.f32.mrf.mxu0
    %v2271 = vpop.f32.mrf.mxu0
    %v2272 = vpop.f32.mrf.mxu0
    %2273 = vdwg.mxu0
    %2274 = vmatprep.subr.bf16.mxu0 0
    %2275 = vmatpush1.bf16.msra.mxu0 0
    %2276 = vmatprep.subr.bf16.mxu0 0
    %2277 = vmatpush1.bf16.msra.mxu0 0
    %2278 = vmatprep.subr.bf16.mxu0 0
    %2279 = vmatpush1.bf16.msra.mxu0 0
    %2280 = vmatprep.subr.bf16.mxu0 0
    %2281 = vmatpush1.bf16.msra.mxu0 0
    %2282 = vmatprep.subr.bf16.mxu0 0
    %2283 = vmatpush1.bf16.msra.mxu0 %v1593
    %2284 = vmatprep.subr.bf16.mxu0 0
    %2285 = vmatpush1.bf16.msra.mxu0 %v1592
    %2286 = vmatprep.subr.bf16.mxu0 0
    %2287 = vmatpush1.bf16.msra.mxu0 %v1591
    %2288 = vmatprep.subr.bf16.mxu0 0
    %2289 = vmatpush1.bf16.msra.mxu0 %v1590
    %2290 = vmatprep.subr.bf16.mxu0 0
    %2291 = vmatpush2.bf16.msra.mxu0 0
    %2292 = vmatprep.subr.bf16.mxu0 0
    %2293 = vmatpush2.bf16.msra.mxu0 0
    %2294 = vmatprep.subr.bf16.mxu0 0
    %2295 = vmatpush2.bf16.msra.mxu0 0
    %2296 = vmatprep.subr.bf16.mxu0 0
    %2297 = vmatpush2.bf16.msra.mxu0 0
    %2298 = vmatprep.subr.bf16.mxu0 0
    %2299 = vmatpush2.bf16.msra.mxu0 0
    %2300 = vmatprep.subr.bf16.mxu0 0
    %2301 = vmatpush2.bf16.msra.mxu0 0
    %2302 = vmatprep.subr.bf16.mxu0 0
    %2303 = vmatpush2.bf16.msra.mxu0 0
    %2304 = vmatprep.subr.bf16.mxu0 0
    %2305 = vmatpush2.bf16.msra.mxu0 0
    %2306 = vmatprep.mubr.bf16.mxu0 0
    %2307 = vmatmul.mubr.bf16.gmra.mxu0 %v1792
    %v2308 = vpop.f32.mrf.mxu0
    %v2309 = vadd.f32 %v2269, %v2308
    %v2310 = vpop.f32.mrf.mxu0
    %v2311 = vpop.f32.mrf.mxu0
    %v2312 = vpop.f32.mrf.mxu0
    %2313 = vdwg.mxu0
    %v2314 = vmax.f32 %v2309, 0.0
    %v2315 = vpack.c.bf16 %v2314, %v2314
    %v2316 = vld [vmem:[%s3] sm:$0xf]
    %v2317 = vld [vmem:[%s3 + $0x4] sm:$0xf]
    %v2318 = vld [vmem:[%s3 + $0x8] sm:$0xf]
    %v2319 = vld [vmem:[%s3 + $0xc] sm:$0xf]
    %v2320 = vld [vmem:[%s3 + $0x10] sm:$0xf]
    %v2321 = vld [vmem:[%s3 + $0x14] sm:$0xf]
    %v2322 = vld [vmem:[%s3 + $0x18] sm:$0xf]
    %v2323 = vld [vmem:[%s3 + $0x1c] sm:$0xf]
    %v2324 = vld [vmem:[%s3 + $0x20] sm:$0xf]
    %v2325 = vld [vmem:[%s3 + $0x24] sm:$0xf]
    %v2326 = vld [vmem:[%s3 + $0x28] sm:$0xf]
    %v2327 = vld [vmem:[%s3 + $0x2c] sm:$0xf]
    %v2328 = vld [vmem:[%s3 + $0x30] sm:$0xf]
    %v2329 = vld [vmem:[%s3 + $0x34] sm:$0xf]
    %v2330 = vld [vmem:[%s3 + $0x38] sm:$0xf]
    %v2331 = vld [vmem:[%s3 + $0x3c] sm:$0xf]
    %v2332 = vld [vmem:[%s4] sm:$0x1]
    %v2334 = vlaneseq
    %v2335 = vshrl.u32 %v2334, 7
    %v2336 = vsub.s32 0, %v2335
    %v2337 = vrot.slane %v2332, %v2336
    %v2355 = vunpack.c.l.b16 %v2316
    %v2356 = vunpack.c.l.b16 %v2317
    %v2357 = vunpack.c.l.b16 %v2318
    %v2358 = vunpack.c.l.b16 %v2319
    %v2359 = vunpack.c.l.b16 %v2320
    %v2360 = vunpack.c.l.b16 %v2321
    %v2361 = vunpack.c.l.b16 %v2322
    %v2362 = vunpack.c.l.b16 %v2323
    %v2363 = vunpack.c.l.b16 %v2324
    %v2364 = vunpack.c.l.b16 %v2325
    %v2365 = vunpack.c.l.b16 %v2326
    %v2366 = vunpack.c.l.b16 %v2327
    %v2367 = vunpack.c.l.b16 %v2328
    %v2368 = vunpack.c.l.b16 %v2329
    %v2369 = vunpack.c.l.b16 %v2330
    %v2370 = vunpack.c.l.b16 %v2331
    %v2371 = vpack.c.b16 %v2356, %v2355
    %v2372 = vpack.c.b16 %v2358, %v2357
    %v2373 = vpack.c.b16 %v2360, %v2359
    %v2374 = vpack.c.b16 %v2362, %v2361
    %v2375 = vpack.c.b16 %v2364, %v2363
    %v2376 = vpack.c.b16 %v2366, %v2365
    %v2377 = vpack.c.b16 %v2368, %v2367
    %v2378 = vpack.c.b16 %v2370, %v2369
    %2387 = vmatprep.subr.bf16.mxu0 0
    %2388 = vmatpush1.bf16.msra.mxu0 %v2378
    %2389 = vmatprep.subr.bf16.mxu0 0
    %2390 = vmatpush1.bf16.msra.mxu0 %v2377
    %2391 = vmatprep.subr.bf16.mxu0 0
    %2392 = vmatpush1.bf16.msra.mxu0 %v2376
    %2393 = vmatprep.subr.bf16.mxu0 0
    %2394 = vmatpush1.bf16.msra.mxu0 %v2375
    %2395 = vmatprep.subr.bf16.mxu0 0
    %2396 = vmatpush1.bf16.msra.mxu0 %v2374
    %2397 = vmatprep.subr.bf16.mxu0 0
    %2398 = vmatpush1.bf16.msra.mxu0 %v2373
    %2399 = vmatprep.subr.bf16.mxu0 0
    %2400 = vmatpush1.bf16.msra.mxu0 %v2372
    %2401 = vmatprep.subr.bf16.mxu0 0
    %2402 = vmatpush1.bf16.msra.mxu0 %v2371
    %2403 = vmatprep.subr.bf16.mxu0 0
    %2404 = vmatpush2.bf16.msra.mxu0 0
    %2405 = vmatprep.subr.bf16.mxu0 0
    %2406 = vmatpush2.bf16.msra.mxu0 0
    %2407 = vmatprep.subr.bf16.mxu0 0
    %2408 = vmatpush2.bf16.msra.mxu0 0
    %2409 = vmatprep.subr.bf16.mxu0 0
    %2410 = vmatpush2.bf16.msra.mxu0 0
    %2411 = vmatprep.subr.bf16.mxu0 0
    %2412 = vmatpush2.bf16.msra.mxu0 0
    %2413 = vmatprep.subr.bf16.mxu0 0
    %2414 = vmatpush2.bf16.msra.mxu0 0
    %2415 = vmatprep.subr.bf16.mxu0 0
    %2416 = vmatpush2.bf16.msra.mxu0 0
    %2417 = vmatprep.subr.bf16.mxu0 0
    %2418 = vmatpush2.bf16.msra.mxu0 0
    %2419 = vmatprep.mubr.bf16.mxu0 0
    %2420 = vmatmul.mubr.bf16.gmra.mxu0 %v2315
    %v2421 = vpop.f32.mrf.mxu0
    %v2422 = vadd.f32 %v2337, %v2421
    %v2423 = vpop.f32.mrf.mxu0
    %v2424 = vpop.f32.mrf.mxu0
    %v2425 = vpop.f32.mrf.mxu0
    %2426 = vdwg.mxu0
    %2427 = vst [vmem:[#allocation2] sm:$0x3] %v2422
    // Predicated region
    $region22: #{forward.3} parent=1 // pred_check
      _
    $region23: #{forward.3} parent=1 // pred_check_branch
      %2429 = sbr.rel (0) target = $region25
    $region24: #{forward.3} parent=1 // pred_region
      %s2431 = ssub.s32 32, 32
      %2432 = vsyncadd [#allocation3], %s2431
      %s2434 = sshll.u32 [#allocation2], 4
      %s2435 = int_to_ptr.vmem [resolvable:$true] %s2434
      %2437 = dma.vmem_to_hbm [thread:$0]  %s2435, 32, %s5, [#allocation3]
    $region25: #{forward.3} parent=1 // pred_fallthru
      _
    // Predicated region
    $region26: #{forward.3} parent=1 // pred_check
      _
    $region27: #{forward.3} parent=1 // pred_check_branch
      %2439 = sbr.rel (0) target = $region29
    $region28: #{forward.3} parent=1 // pred_region
      %2440 = dma.done [#allocation3], 32
    $region29: #{forward.3} parent=1 // pred_fallthru
      _
    %2441 = vsyncpa [#allocation3], 1

// kernel: forward.2
$region0: #{forward.2}
  #allocation0 [shape = 'u32[]', space=smem, size = 0x4, offset = 0x4, fixed_abs, tag = 'smem constant byte address 0x4 - core index']
  #allocation1 [shape = 'u32[144,128]{1,0:T(1,128)}', space=vmem, size = 0x12000, scoped, tag = 'internal scratch']
  #allocation2 [shape = 'bf16[544,32]{1,0:T(8,128)(2,1)}', space=vmem, size = 0x22000, scoped, tag = 'scratch operand']
  #allocation3 [shape = 'bf16[512,288]{1,0:T(8,128)(2,1)}', space=vmem, size = 0x60000, scoped, tag = 'scratch operand']
  %s0 = inlined_call_operand.vmem [shape: bf16[1568,9], index: 0, kind: input, shape index: {}]
  %s1 = inlined_call_operand.vmem [shape: bf16[9,32], index: 1, kind: input, shape index: {}]
  %s2 = inlined_call_operand.vmem [shape: bf16[288,64], index: 2, kind: input, shape index: {}]
  %s3 = inlined_call_operand.vmem [shape: f32[1,64], index: 3, kind: input, shape index: {}]
  %s4 = inlined_call_operand.vmem [shape: bf16[128,2], index: 4, kind: input, shape index: {}]
  %s5 = inlined_call_operand.vmem [shape: bf16[2,49,64], index: 5, kind: output, shape index: {}]
  %s6 = sld [smem:[#allocation0]]
  $region30: #{forward.2} parent=0
    _
  %s8 = ssub.s32 1, %s6
  %s9 = scalar_select 0, %s8, %s6
  // Predicated region
  $region2: #{forward.2} parent=0 // pred_check
    _
  $region3: #{forward.2} parent=0 // pred_check_branch
    %11 = sbr.rel (0) target = $region5
  $region4: #{forward.2} parent=0 // pred_region
    _
  $region5: #{forward.2} parent=0 // pred_fallthru
    _
  // Predicated region
  $region6: #{forward.2} parent=0 // pred_check
    _
  $region7: #{forward.2} parent=0 // pred_check_branch
    %13 = sbr.rel (0) target = $region9
  $region8: #{forward.2} parent=0 // pred_region
    _
  $region9: #{forward.2} parent=0 // pred_fallthru
    _
  // Predicated region
  $region10: #{forward.2} parent=0 // pred_check
    _
  $region11: #{forward.2} parent=0 // pred_check_branch
    %15 = sbr.rel (0) target = $region13
  $region12: #{forward.2} parent=0 // pred_region
    _
  $region13: #{forward.2} parent=0 // pred_fallthru
    _
  // Predicated region
  $region14: #{forward.2} parent=0 // pred_check
    _
  $region15: #{forward.2} parent=0 // pred_check_branch
    %17 = sbr.rel (0) target = $region17
  $region16: #{forward.2} parent=0 // pred_region
    _
  $region17: #{forward.2} parent=0 // pred_fallthru
    _
  // Predicated region
  $region18: #{forward.2} parent=0 // pred_check
    _
  $region19: #{forward.2} parent=0 // pred_check_branch
    %19 = sbr.rel (0) target = $region21
  $region20: #{forward.2} parent=0 // pred_region
    _
  $region21: #{forward.2} parent=0 // pred_fallthru
    _
  %v21 = vld [vmem:[%s0] sm:$0xf]
  %v22 = vld [vmem:[%s0 + $0x4] sm:$0xf]
  %v23 = vld [vmem:[%s0 + $0x8] sm:$0xf]
  %v24 = vld [vmem:[%s0 + $0xc] sm:$0xf]
  %v25 = vld [vmem:[%s0 + $0x10] sm:$0xf]
  %v26 = vld [vmem:[%s0 + $0x14] sm:$0xf]
  %v27 = vld [vmem:[%s0 + $0x18] sm:$0xf]
  %v28 = vld [vmem:[%s0 + $0x1c] sm:$0xf]
  %v29 = vld [vmem:[%s0 + $0x20] sm:$0xf]
  %v30 = vld [vmem:[%s0 + $0x24] sm:$0xf]
  %v31 = vld [vmem:[%s0 + $0x28] sm:$0xf]
  %v32 = vld [vmem:[%s0 + $0x2c] sm:$0xf]
  %v33 = vld [vmem:[%s0 + $0x30] sm:$0xf]
  %v34 = vld [vmem:[%s0 + $0x34] sm:$0xf]
  %v35 = vld [vmem:[%s0 + $0x38] sm:$0xf]
  %v36 = vld [vmem:[%s0 + $0x3c] sm:$0xf]
  %v37 = vld [vmem:[%s0 + $0x40] sm:$0xf]
  %v38 = vld [vmem:[%s0 + $0x44] sm:$0xf]
  %v39 = vld [vmem:[%s0 + $0x48] sm:$0xf]
  %v40 = vld [vmem:[%s0 + $0x4c] sm:$0xf]
  %v41 = vld [vmem:[%s0 + $0x50] sm:$0xf]
  %v42 = vld [vmem:[%s0 + $0x54] sm:$0xf]
  %v43 = vld [vmem:[%s0 + $0x58] sm:$0xf]
  %v44 = vld [vmem:[%s0 + $0x5c] sm:$0xf]
  %v45 = vld [vmem:[%s0 + $0x60] sm:$0xf]
  %v46 = vld [vmem:[%s0 + $0x64] sm:$0xf]
  %v47 = vld [vmem:[%s0 + $0x68] sm:$0xf]
  %v48 = vld [vmem:[%s0 + $0x6c] sm:$0xf]
  %v49 = vld [vmem:[%s0 + $0x70] sm:$0xf]
  %v50 = vld [vmem:[%s0 + $0x74] sm:$0xf]
  %v51 = vld [vmem:[%s0 + $0x78] sm:$0xf]
  %v52 = vld [vmem:[%s0 + $0x7c] sm:$0xf]
  %v53 = vld [vmem:[%s0 + $0x80] sm:$0xf]
  %v54 = vld [vmem:[%s0 + $0x84] sm:$0xf]
  %v55 = vld [vmem:[%s0 + $0x88] sm:$0xf]
  %v56 = vld [vmem:[%s0 + $0x8c] sm:$0xf]
  %v57 = vld [vmem:[%s0 + $0x90] sm:$0xf]
  %v58 = vld [vmem:[%s0 + $0x94] sm:$0xf]
  %v59 = vld [vmem:[%s0 + $0x98] sm:$0xf]
  %v60 = vld [vmem:[%s0 + $0x9c] sm:$0xf]
  %v61 = vld [vmem:[%s0 + $0xa0] sm:$0xf]
  %v62 = vld [vmem:[%s0 + $0xa4] sm:$0xf]
  %v63 = vld [vmem:[%s0 + $0xa8] sm:$0xf]
  %v64 = vld [vmem:[%s0 + $0xac] sm:$0xf]
  %v65 = vld [vmem:[%s0 + $0xb0] sm:$0xf]
  %v66 = vld [vmem:[%s0 + $0xb4] sm:$0xf]
  %v67 = vld [vmem:[%s0 + $0xb8] sm:$0xf]
  %v68 = vld [vmem:[%s0 + $0xbc] sm:$0xf]
  %v69 = vld [vmem:[%s0 + $0xc0] sm:$0xf]
  %v70 = vld [vmem:[%s0 + $0xc4] sm:$0xf]
  %v71 = vld [vmem:[%s0 + $0xc8] sm:$0xf]
  %v72 = vld [vmem:[%s0 + $0xcc] sm:$0xf]
  %v73 = vld [vmem:[%s0 + $0xd0] sm:$0xf]
  %v74 = vld [vmem:[%s0 + $0xd4] sm:$0xf]
  %v75 = vld [vmem:[%s0 + $0xd8] sm:$0xf]
  %v76 = vld [vmem:[%s0 + $0xdc] sm:$0xf]
  %v77 = vld [vmem:[%s0 + $0xe0] sm:$0xf]
  %v78 = vld [vmem:[%s0 + $0xe4] sm:$0xf]
  %v79 = vld [vmem:[%s0 + $0xe8] sm:$0xf]
  %v80 = vld [vmem:[%s0 + $0xec] sm:$0xf]
  %v81 = vld [vmem:[%s0 + $0xf0] sm:$0xf]
  %v82 = vld [vmem:[%s0 + $0xf4] sm:$0xf]
  %v83 = vld [vmem:[%s0 + $0xf8] sm:$0xf]
  %v84 = vld [vmem:[%s0 + $0xfc] sm:$0xf]
  %v85 = vld [vmem:[%s0 + $0x100] sm:$0xf]
  %v86 = vld [vmem:[%s0 + $0x104] sm:$0xf]
  %v87 = vld [vmem:[%s0 + $0x108] sm:$0xf]
  %v88 = vld [vmem:[%s0 + $0x10c] sm:$0xf]
  %v89 = vld [vmem:[%s0 + $0x110] sm:$0xf]
  %v90 = vld [vmem:[%s0 + $0x114] sm:$0xf]
  %v91 = vld [vmem:[%s0 + $0x118] sm:$0xf]
  %v92 = vld [vmem:[%s0 + $0x11c] sm:$0xf]
  %v93 = vld [vmem:[%s0 + $0x120] sm:$0xf]
  %v94 = vld [vmem:[%s0 + $0x124] sm:$0xf]
  %v95 = vld [vmem:[%s0 + $0x128] sm:$0xf]
  %v96 = vld [vmem:[%s0 + $0x12c] sm:$0xf]
  %v97 = vld [vmem:[%s0 + $0x130] sm:$0xf]
  %v98 = vld [vmem:[%s0 + $0x134] sm:$0xf]
  %v99 = vld [vmem:[%s0 + $0x138] sm:$0xf]
  %v100 = vld [vmem:[%s0 + $0x13c] sm:$0xf]
  %v101 = vld [vmem:[%s0 + $0x140] sm:$0xf]
  %v102 = vld [vmem:[%s0 + $0x144] sm:$0xf]
  %v103 = vld [vmem:[%s0 + $0x148] sm:$0xf]
  %v104 = vld [vmem:[%s0 + $0x14c] sm:$0xf]
  %v105 = vld [vmem:[%s0 + $0x150] sm:$0xf]
  %v106 = vld [vmem:[%s0 + $0x154] sm:$0xf]
  %v107 = vld [vmem:[%s0 + $0x158] sm:$0xf]
  %v108 = vld [vmem:[%s0 + $0x15c] sm:$0xf]
  %v109 = vld [vmem:[%s0 + $0x160] sm:$0xf]
  %v110 = vld [vmem:[%s0 + $0x164] sm:$0xf]
  %v111 = vld [vmem:[%s0 + $0x168] sm:$0xf]
  %v112 = vld [vmem:[%s0 + $0x16c] sm:$0xf]
  %v113 = vld [vmem:[%s0 + $0x170] sm:$0xf]
  %v114 = vld [vmem:[%s0 + $0x174] sm:$0xf]
  %v115 = vld [vmem:[%s0 + $0x178] sm:$0xf]
  %v116 = vld [vmem:[%s0 + $0x17c] sm:$0xf]
  %v117 = vld [vmem:[%s0 + $0x180] sm:$0xf]
  %v118 = vld [vmem:[%s0 + $0x184] sm:$0xf]
  %v119 = vld [vmem:[%s0 + $0x188] sm:$0xf]
  %v120 = vld [vmem:[%s0 + $0x18c] sm:$0xf]
  %v121 = vld [vmem:[%s0 + $0x190] sm:$0xf]
  %v122 = vld [vmem:[%s0 + $0x194] sm:$0xf]
  %v123 = vld [vmem:[%s0 + $0x198] sm:$0xf]
  %v124 = vld [vmem:[%s0 + $0x19c] sm:$0xf]
  %v125 = vld [vmem:[%s0 + $0x1a0] sm:$0xf]
  %v126 = vld [vmem:[%s0 + $0x1a4] sm:$0xf]
  %v127 = vld [vmem:[%s0 + $0x1a8] sm:$0xf]
  %v128 = vld [vmem:[%s0 + $0x1ac] sm:$0xf]
  %v129 = vld [vmem:[%s0 + $0x1b0] sm:$0xf]
  %v130 = vld [vmem:[%s0 + $0x1b4] sm:$0xf]
  %v131 = vld [vmem:[%s0 + $0x1b8] sm:$0xf]
  %v132 = vld [vmem:[%s0 + $0x1bc] sm:$0xf]
  %v133 = vld [vmem:[%s0 + $0x1c0] sm:$0xf]
  %v134 = vld [vmem:[%s0 + $0x1c4] sm:$0xf]
  %v135 = vld [vmem:[%s0 + $0x1c8] sm:$0xf]
  %v136 = vld [vmem:[%s0 + $0x1cc] sm:$0xf]
  %v137 = vld [vmem:[%s0 + $0x1d0] sm:$0xf]
  %v138 = vld [vmem:[%s0 + $0x1d4] sm:$0xf]
  %v139 = vld [vmem:[%s0 + $0x1d8] sm:$0xf]
  %v140 = vld [vmem:[%s0 + $0x1dc] sm:$0xf]
  %v141 = vld [vmem:[%s0 + $0x1e0] sm:$0xf]
  %v142 = vld [vmem:[%s0 + $0x1e4] sm:$0xf]
  %v143 = vld [vmem:[%s0 + $0x1e8] sm:$0xf]
  %v144 = vld [vmem:[%s0 + $0x1ec] sm:$0xf]
  %v145 = vld [vmem:[%s0 + $0x1f0] sm:$0xf]
  %v146 = vld [vmem:[%s0 + $0x1f4] sm:$0xf]
  %v147 = vld [vmem:[%s0 + $0x1f8] sm:$0xf]
  %v148 = vld [vmem:[%s0 + $0x1fc] sm:$0xf]
  %v149 = vld [vmem:[%s0 + $0x200] sm:$0xf]
  %v150 = vld [vmem:[%s0 + $0x204] sm:$0xf]
  %v151 = vld [vmem:[%s0 + $0x208] sm:$0xf]
  %v152 = vld [vmem:[%s0 + $0x20c] sm:$0xf]
  %v153 = vld [vmem:[%s0 + $0x210] sm:$0xf]
  %v154 = vld [vmem:[%s0 + $0x214] sm:$0xf]
  %v155 = vld [vmem:[%s0 + $0x218] sm:$0xf]
  %v156 = vld [vmem:[%s0 + $0x21c] sm:$0xf]
  %v157 = vld [vmem:[%s0 + $0x220] sm:$0xf]
  %v158 = vld [vmem:[%s0 + $0x224] sm:$0xf]
  %v159 = vld [vmem:[%s0 + $0x228] sm:$0xf]
  %v160 = vld [vmem:[%s0 + $0x22c] sm:$0xf]
  %v161 = vld [vmem:[%s0 + $0x230] sm:$0xf]
  %v162 = vld [vmem:[%s0 + $0x234] sm:$0xf]
  %v163 = vld [vmem:[%s0 + $0x238] sm:$0xf]
  %v164 = vld [vmem:[%s0 + $0x23c] sm:$0xf]
  %v165 = vld [vmem:[%s0 + $0x240] sm:$0xf]
  %v166 = vld [vmem:[%s0 + $0x244] sm:$0xf]
  %v167 = vld [vmem:[%s0 + $0x248] sm:$0xf]
  %v168 = vld [vmem:[%s0 + $0x24c] sm:$0xf]
  %v169 = vld [vmem:[%s0 + $0x250] sm:$0xf]
  %v170 = vld [vmem:[%s0 + $0x254] sm:$0xf]
  %v171 = vld [vmem:[%s0 + $0x258] sm:$0xf]
  %v172 = vld [vmem:[%s0 + $0x25c] sm:$0xf]
  %v173 = vld [vmem:[%s0 + $0x260] sm:$0xf]
  %v174 = vld [vmem:[%s0 + $0x264] sm:$0xf]
  %v175 = vld [vmem:[%s0 + $0x268] sm:$0xf]
  %v176 = vld [vmem:[%s0 + $0x26c] sm:$0xf]
  %v177 = vld [vmem:[%s0 + $0x270] sm:$0xf]
  %v178 = vld [vmem:[%s0 + $0x274] sm:$0xf]
  %v179 = vld [vmem:[%s0 + $0x278] sm:$0xf]
  %v180 = vld [vmem:[%s0 + $0x27c] sm:$0xf]
  %v181 = vld [vmem:[%s0 + $0x280] sm:$0xf]
  %v182 = vld [vmem:[%s0 + $0x284] sm:$0xf]
  %v183 = vld [vmem:[%s0 + $0x288] sm:$0xf]
  %v184 = vld [vmem:[%s0 + $0x28c] sm:$0xf]
  %v185 = vld [vmem:[%s0 + $0x290] sm:$0xf]
  %v186 = vld [vmem:[%s0 + $0x294] sm:$0xf]
  %v187 = vld [vmem:[%s0 + $0x298] sm:$0xf]
  %v188 = vld [vmem:[%s0 + $0x29c] sm:$0xf]
  %v189 = vld [vmem:[%s0 + $0x2a0] sm:$0xf]
  %v190 = vld [vmem:[%s0 + $0x2a4] sm:$0xf]
  %v191 = vld [vmem:[%s0 + $0x2a8] sm:$0xf]
  %v192 = vld [vmem:[%s0 + $0x2ac] sm:$0xf]
  %v193 = vld [vmem:[%s0 + $0x2b0] sm:$0xf]
  %v194 = vld [vmem:[%s0 + $0x2b4] sm:$0xf]
  %v195 = vld [vmem:[%s0 + $0x2b8] sm:$0xf]
  %v196 = vld [vmem:[%s0 + $0x2bc] sm:$0xf]
  %v197 = vld [vmem:[%s0 + $0x2c0] sm:$0xf]
  %v198 = vld [vmem:[%s0 + $0x2c4] sm:$0xf]
  %v199 = vld [vmem:[%s0 + $0x2c8] sm:$0xf]
  %v200 = vld [vmem:[%s0 + $0x2cc] sm:$0xf]
  %v201 = vld [vmem:[%s0 + $0x2d0] sm:$0xf]
  %v202 = vld [vmem:[%s0 + $0x2d4] sm:$0xf]
  %v203 = vld [vmem:[%s0 + $0x2d8] sm:$0xf]
  %v204 = vld [vmem:[%s0 + $0x2dc] sm:$0xf]
  %v205 = vld [vmem:[%s0 + $0x2e0] sm:$0xf]
  %v206 = vld [vmem:[%s0 + $0x2e4] sm:$0xf]
  %v207 = vld [vmem:[%s0 + $0x2e8] sm:$0xf]
  %v208 = vld [vmem:[%s0 + $0x2ec] sm:$0xf]
  %v209 = vld [vmem:[%s0 + $0x2f0] sm:$0xf]
  %v210 = vld [vmem:[%s0 + $0x2f4] sm:$0xf]
  %v211 = vld [vmem:[%s0 + $0x2f8] sm:$0xf]
  %v212 = vld [vmem:[%s0 + $0x2fc] sm:$0xf]
  %v213 = vld [vmem:[%s0 + $0x300] sm:$0xf]
  %v214 = vld [vmem:[%s0 + $0x304] sm:$0xf]
  %v215 = vld [vmem:[%s0 + $0x308] sm:$0xf]
  %v216 = vld [vmem:[%s0 + $0x30c] sm:$0xf]
  %v217 = vld [vmem:[%s1] sm:$0xf]
  %v218 = vld [vmem:[%s1 + $0x4] sm:$0x1]
  %v415 = vunpack.c.l.b16 %v21
  %v416 = vunpack.c.l.b16 %v22
  %v417 = vunpack.c.l.b16 %v23
  %v418 = vunpack.c.l.b16 %v24
  %v419 = vunpack.c.l.b16 %v25
  %v420 = vunpack.c.l.b16 %v26
  %v421 = vunpack.c.l.b16 %v27
  %v422 = vunpack.c.l.b16 %v28
  %v423 = vunpack.c.l.b16 %v29
  %v424 = vunpack.c.l.b16 %v30
  %v425 = vunpack.c.l.b16 %v31
  %v426 = vunpack.c.l.b16 %v32
  %v427 = vunpack.c.l.b16 %v33
  %v428 = vunpack.c.l.b16 %v34
  %v429 = vunpack.c.l.b16 %v35
  %v430 = vunpack.c.l.b16 %v36
  %v431 = vunpack.c.l.b16 %v37
  %v432 = vunpack.c.l.b16 %v38
  %v433 = vunpack.c.l.b16 %v39
  %v434 = vunpack.c.l.b16 %v40
  %v435 = vunpack.c.l.b16 %v41
  %v436 = vunpack.c.l.b16 %v42
  %v437 = vunpack.c.l.b16 %v43
  %v438 = vunpack.c.l.b16 %v44
  %v439 = vunpack.c.l.b16 %v45
  %v440 = vunpack.c.l.b16 %v46
  %v441 = vunpack.c.l.b16 %v47
  %v442 = vunpack.c.l.b16 %v48
  %v443 = vunpack.c.l.b16 %v49
  %v444 = vunpack.c.l.b16 %v50
  %v445 = vunpack.c.l.b16 %v51
  %v446 = vunpack.c.l.b16 %v52
  %v447 = vunpack.c.l.b16 %v53
  %v448 = vunpack.c.l.b16 %v54
  %v449 = vunpack.c.l.b16 %v55
  %v450 = vunpack.c.l.b16 %v56
  %v451 = vunpack.c.l.b16 %v57
  %v452 = vunpack.c.l.b16 %v58
  %v453 = vunpack.c.l.b16 %v59
  %v454 = vunpack.c.l.b16 %v60
  %v455 = vunpack.c.l.b16 %v61
  %v456 = vunpack.c.l.b16 %v62
  %v457 = vunpack.c.l.b16 %v63
  %v458 = vunpack.c.l.b16 %v64
  %v459 = vunpack.c.l.b16 %v65
  %v460 = vunpack.c.l.b16 %v66
  %v461 = vunpack.c.l.b16 %v67
  %v462 = vunpack.c.l.b16 %v68
  %v463 = vunpack.c.l.b16 %v69
  %v464 = vunpack.c.l.b16 %v70
  %v465 = vunpack.c.l.b16 %v71
  %v466 = vunpack.c.l.b16 %v72
  %v467 = vunpack.c.l.b16 %v73
  %v468 = vunpack.c.l.b16 %v74
  %v469 = vunpack.c.l.b16 %v75
  %v470 = vunpack.c.l.b16 %v76
  %v471 = vunpack.c.l.b16 %v77
  %v472 = vunpack.c.l.b16 %v78
  %v473 = vunpack.c.l.b16 %v79
  %v474 = vunpack.c.l.b16 %v80
  %v475 = vunpack.c.l.b16 %v81
  %v476 = vunpack.c.l.b16 %v82
  %v477 = vunpack.c.l.b16 %v83
  %v478 = vunpack.c.l.b16 %v84
  %v479 = vunpack.c.l.b16 %v85
  %v480 = vunpack.c.l.b16 %v86
  %v481 = vunpack.c.l.b16 %v87
  %v482 = vunpack.c.l.b16 %v88
  %v483 = vunpack.c.l.b16 %v89
  %v484 = vunpack.c.l.b16 %v90
  %v485 = vunpack.c.l.b16 %v91
  %v486 = vunpack.c.l.b16 %v92
  %v487 = vunpack.c.l.b16 %v93
  %v488 = vunpack.c.l.b16 %v94
  %v489 = vunpack.c.l.b16 %v95
  %v490 = vunpack.c.l.b16 %v96
  %v491 = vunpack.c.l.b16 %v97
  %v492 = vunpack.c.l.b16 %v98
  %v493 = vunpack.c.l.b16 %v99
  %v494 = vunpack.c.l.b16 %v100
  %v495 = vunpack.c.l.b16 %v101
  %v496 = vunpack.c.l.b16 %v102
  %v497 = vunpack.c.l.b16 %v103
  %v498 = vunpack.c.l.b16 %v104
  %v499 = vunpack.c.l.b16 %v105
  %v500 = vunpack.c.l.b16 %v106
  %v501 = vunpack.c.l.b16 %v107
  %v502 = vunpack.c.l.b16 %v108
  %v503 = vunpack.c.l.b16 %v109
  %v504 = vunpack.c.l.b16 %v110
  %v505 = vunpack.c.l.b16 %v111
  %v506 = vunpack.c.l.b16 %v112
  %v507 = vunpack.c.l.b16 %v113
  %v508 = vunpack.c.l.b16 %v114
  %v509 = vunpack.c.l.b16 %v115
  %v510 = vunpack.c.l.b16 %v116
  %v511 = vunpack.c.l.b16 %v117
  %v512 = vunpack.c.l.b16 %v118
  %v513 = vunpack.c.l.b16 %v119
  %v514 = vunpack.c.l.b16 %v120
  %v515 = vunpack.c.l.b16 %v121
  %v516 = vunpack.c.l.b16 %v122
  %v517 = vunpack.c.l.b16 %v123
  %v518 = vunpack.c.l.b16 %v124
  %v519 = vunpack.c.l.b16 %v125
  %v520 = vunpack.c.l.b16 %v126
  %v521 = vunpack.c.l.b16 %v127
  %v522 = vunpack.c.l.b16 %v128
  %v523 = vunpack.c.l.b16 %v129
  %v524 = vunpack.c.l.b16 %v130
  %v525 = vunpack.c.l.b16 %v131
  %v526 = vunpack.c.l.b16 %v132
  %v527 = vunpack.c.l.b16 %v133
  %v528 = vunpack.c.l.b16 %v134
  %v529 = vunpack.c.l.b16 %v135
  %v530 = vunpack.c.l.b16 %v136
  %v531 = vunpack.c.l.b16 %v137
  %v532 = vunpack.c.l.b16 %v138
  %v533 = vunpack.c.l.b16 %v139
  %v534 = vunpack.c.l.b16 %v140
  %v535 = vunpack.c.l.b16 %v141
  %v536 = vunpack.c.l.b16 %v142
  %v537 = vunpack.c.l.b16 %v143
  %v538 = vunpack.c.l.b16 %v144
  %v539 = vunpack.c.l.b16 %v145
  %v540 = vunpack.c.l.b16 %v146
  %v541 = vunpack.c.l.b16 %v147
  %v542 = vunpack.c.l.b16 %v148
  %v543 = vunpack.c.l.b16 %v149
  %v544 = vunpack.c.l.b16 %v150
  %v545 = vunpack.c.l.b16 %v151
  %v546 = vunpack.c.l.b16 %v152
  %v547 = vunpack.c.l.b16 %v153
  %v548 = vunpack.c.l.b16 %v154
  %v549 = vunpack.c.l.b16 %v155
  %v550 = vunpack.c.l.b16 %v156
  %v551 = vunpack.c.l.b16 %v157
  %v552 = vunpack.c.l.b16 %v158
  %v553 = vunpack.c.l.b16 %v159
  %v554 = vunpack.c.l.b16 %v160
  %v555 = vunpack.c.l.b16 %v161
  %v556 = vunpack.c.l.b16 %v162
  %v557 = vunpack.c.l.b16 %v163
  %v558 = vunpack.c.l.b16 %v164
  %v559 = vunpack.c.l.b16 %v165
  %v560 = vunpack.c.l.b16 %v166
  %v561 = vunpack.c.l.b16 %v167
  %v562 = vunpack.c.l.b16 %v168
  %v563 = vunpack.c.l.b16 %v169
  %v564 = vunpack.c.l.b16 %v170
  %v565 = vunpack.c.l.b16 %v171
  %v566 = vunpack.c.l.b16 %v172
  %v567 = vunpack.c.l.b16 %v173
  %v568 = vunpack.c.l.b16 %v174
  %v569 = vunpack.c.l.b16 %v175
  %v570 = vunpack.c.l.b16 %v176
  %v571 = vunpack.c.l.b16 %v177
  %v572 = vunpack.c.l.b16 %v178
  %v573 = vunpack.c.l.b16 %v179
  %v574 = vunpack.c.l.b16 %v180
  %v575 = vunpack.c.l.b16 %v181
  %v576 = vunpack.c.l.b16 %v182
  %v577 = vunpack.c.l.b16 %v183
  %v578 = vunpack.c.l.b16 %v184
  %v579 = vunpack.c.l.b16 %v185
  %v580 = vunpack.c.l.b16 %v186
  %v581 = vunpack.c.l.b16 %v187
  %v582 = vunpack.c.l.b16 %v188
  %v583 = vunpack.c.l.b16 %v189
  %v584 = vunpack.c.l.b16 %v190
  %v585 = vunpack.c.l.b16 %v191
  %v586 = vunpack.c.l.b16 %v192
  %v587 = vunpack.c.l.b16 %v193
  %v588 = vunpack.c.l.b16 %v194
  %v589 = vunpack.c.l.b16 %v195
  %v590 = vunpack.c.l.b16 %v196
  %v591 = vunpack.c.l.b16 %v197
  %v592 = vunpack.c.l.b16 %v198
  %v593 = vunpack.c.l.b16 %v199
  %v594 = vunpack.c.l.b16 %v200
  %v595 = vunpack.c.l.b16 %v201
  %v596 = vunpack.c.l.b16 %v202
  %v597 = vunpack.c.l.b16 %v203
  %v598 = vunpack.c.l.b16 %v204
  %v599 = vunpack.c.l.b16 %v205
  %v600 = vunpack.c.l.b16 %v206
  %v601 = vunpack.c.l.b16 %v207
  %v602 = vunpack.c.l.b16 %v208
  %v603 = vunpack.c.l.b16 %v209
  %v604 = vunpack.c.l.b16 %v210
  %v605 = vunpack.c.l.b16 %v211
  %v606 = vunpack.c.l.b16 %v212
  %v607 = vunpack.c.l.b16 %v213
  %v608 = vunpack.c.l.b16 %v214
  %v609 = vunpack.c.l.b16 %v215
  %v610 = vunpack.c.l.b16 %v216
  %v611 = vpack.c.b16 %v416, %v415
  %v612 = vpack.c.b16 %v418, %v417
  %v613 = vpack.c.b16 %v420, %v419
  %v614 = vpack.c.b16 %v422, %v421
  %v615 = vpack.c.b16 %v424, %v423
  %v616 = vpack.c.b16 %v426, %v425
  %v617 = vpack.c.b16 %v428, %v427
  %v618 = vpack.c.b16 %v430, %v429
  %v619 = vpack.c.b16 %v432, %v431
  %v620 = vpack.c.b16 %v434, %v433
  %v621 = vpack.c.b16 %v436, %v435
  %v622 = vpack.c.b16 %v438, %v437
  %v623 = vpack.c.b16 %v440, %v439
  %v624 = vpack.c.b16 %v442, %v441
  %v625 = vpack.c.b16 %v444, %v443
  %v626 = vpack.c.b16 %v446, %v445
  %v627 = vpack.c.b16 %v448, %v447
  %v628 = vpack.c.b16 %v450, %v449
  %v629 = vpack.c.b16 %v452, %v451
  %v630 = vpack.c.b16 %v454, %v453
  %v631 = vpack.c.b16 %v456, %v455
  %v632 = vpack.c.b16 %v458, %v457
  %v633 = vpack.c.b16 %v460, %v459
  %v634 = vpack.c.b16 %v462, %v461
  %v635 = vpack.c.b16 %v464, %v463
  %v636 = vpack.c.b16 %v466, %v465
  %v637 = vpack.c.b16 %v468, %v467
  %v638 = vpack.c.b16 %v470, %v469
  %v639 = vpack.c.b16 %v472, %v471
  %v640 = vpack.c.b16 %v474, %v473
  %v641 = vpack.c.b16 %v476, %v475
  %v642 = vpack.c.b16 %v478, %v477
  %v643 = vpack.c.b16 %v480, %v479
  %v644 = vpack.c.b16 %v482, %v481
  %v645 = vpack.c.b16 %v484, %v483
  %v646 = vpack.c.b16 %v486, %v485
  %v647 = vpack.c.b16 %v488, %v487
  %v648 = vpack.c.b16 %v490, %v489
  %v649 = vpack.c.b16 %v492, %v491
  %v650 = vpack.c.b16 %v494, %v493
  %v651 = vpack.c.b16 %v496, %v495
  %v652 = vpack.c.b16 %v498, %v497
  %v653 = vpack.c.b16 %v500, %v499
  %v654 = vpack.c.b16 %v502, %v501
  %v655 = vpack.c.b16 %v504, %v503
  %v656 = vpack.c.b16 %v506, %v505
  %v657 = vpack.c.b16 %v508, %v507
  %v658 = vpack.c.b16 %v510, %v509
  %v659 = vpack.c.b16 %v512, %v511
  %v660 = vpack.c.b16 %v514, %v513
  %v661 = vpack.c.b16 %v516, %v515
  %v662 = vpack.c.b16 %v518, %v517
  %v663 = vpack.c.b16 %v520, %v519
  %v664 = vpack.c.b16 %v522, %v521
  %v665 = vpack.c.b16 %v524, %v523
  %v666 = vpack.c.b16 %v526, %v525
  %v667 = vpack.c.b16 %v528, %v527
  %v668 = vpack.c.b16 %v530, %v529
  %v669 = vpack.c.b16 %v532, %v531
  %v670 = vpack.c.b16 %v534, %v533
  %v671 = vpack.c.b16 %v536, %v535
  %v672 = vpack.c.b16 %v538, %v537
  %v673 = vpack.c.b16 %v540, %v539
  %v674 = vpack.c.b16 %v542, %v541
  %v675 = vpack.c.b16 %v544, %v543
  %v676 = vpack.c.b16 %v546, %v545
  %v677 = vpack.c.b16 %v548, %v547
  %v678 = vpack.c.b16 %v550, %v549
  %v679 = vpack.c.b16 %v552, %v551
  %v680 = vpack.c.b16 %v554, %v553
  %v681 = vpack.c.b16 %v556, %v555
  %v682 = vpack.c.b16 %v558, %v557
  %v683 = vpack.c.b16 %v560, %v559
  %v684 = vpack.c.b16 %v562, %v561
  %v685 = vpack.c.b16 %v564, %v563
  %v686 = vpack.c.b16 %v566, %v565
  %v687 = vpack.c.b16 %v568, %v567
  %v688 = vpack.c.b16 %v570, %v569
  %v689 = vpack.c.b16 %v572, %v571
  %v690 = vpack.c.b16 %v574, %v573
  %v691 = vpack.c.b16 %v576, %v575
  %v692 = vpack.c.b16 %v578, %v577
  %v693 = vpack.c.b16 %v580, %v579
  %v694 = vpack.c.b16 %v582, %v581
  %v695 = vpack.c.b16 %v584, %v583
  %v696 = vpack.c.b16 %v586, %v585
  %v697 = vpack.c.b16 %v588, %v587
  %v698 = vpack.c.b16 %v590, %v589
  %v699 = vpack.c.b16 %v592, %v591
  %v700 = vpack.c.b16 %v594, %v593
  %v701 = vpack.c.b16 %v596, %v595
  %v702 = vpack.c.b16 %v598, %v597
  %v703 = vpack.c.b16 %v600, %v599
  %v704 = vpack.c.b16 %v602, %v601
  %v705 = vpack.c.b16 %v604, %v603
  %v706 = vpack.c.b16 %v606, %v605
  %v707 = vpack.c.b16 %v608, %v607
  %v708 = vpack.c.b16 %v610, %v609
  %v711 = vunpack.c.l.b16 %v217
  %v712 = vunpack.c.l.b16 %v218
  %v713 = vpack.c.b16 %v712, %v711
  %vm714 = vcmask 72704
  %v716 = vsel %vm714, %v611, 0
  %v719 = vsel %vm714, %v612, 0
  %v722 = vsel %vm714, %v613, 0
  %v725 = vsel %vm714, %v614, 0
  %v728 = vsel %vm714, %v615, 0
  %v731 = vsel %vm714, %v616, 0
  %v734 = vsel %vm714, %v617, 0
  %v737 = vsel %vm714, %v618, 0
  %v740 = vsel %vm714, %v619, 0
  %v743 = vsel %vm714, %v620, 0
  %v746 = vsel %vm714, %v621, 0
  %v749 = vsel %vm714, %v622, 0
  %v752 = vsel %vm714, %v623, 0
  %v755 = vsel %vm714, %v624, 0
  %v758 = vsel %vm714, %v625, 0
  %v761 = vsel %vm714, %v626, 0
  %v764 = vsel %vm714, %v627, 0
  %v767 = vsel %vm714, %v628, 0
  %v770 = vsel %vm714, %v629, 0
  %v773 = vsel %vm714, %v630, 0
  %v776 = vsel %vm714, %v631, 0
  %v779 = vsel %vm714, %v632, 0
  %v782 = vsel %vm714, %v633, 0
  %v785 = vsel %vm714, %v634, 0
  %v788 = vsel %vm714, %v635, 0
  %v791 = vsel %vm714, %v636, 0
  %v794 = vsel %vm714, %v637, 0
  %v797 = vsel %vm714, %v638, 0
  %v800 = vsel %vm714, %v639, 0
  %v803 = vsel %vm714, %v640, 0
  %v806 = vsel %vm714, %v641, 0
  %v809 = vsel %vm714, %v642, 0
  %v812 = vsel %vm714, %v643, 0
  %v815 = vsel %vm714, %v644, 0
  %v818 = vsel %vm714, %v645, 0
  %v821 = vsel %vm714, %v646, 0
  %v824 = vsel %vm714, %v647, 0
  %v827 = vsel %vm714, %v648, 0
  %v830 = vsel %vm714, %v649, 0
  %v833 = vsel %vm714, %v650, 0
  %v836 = vsel %vm714, %v651, 0
  %v839 = vsel %vm714, %v652, 0
  %v842 = vsel %vm714, %v653, 0
  %v845 = vsel %vm714, %v654, 0
  %v848 = vsel %vm714, %v655, 0
  %v851 = vsel %vm714, %v656, 0
  %v854 = vsel %vm714, %v657, 0
  %v857 = vsel %vm714, %v658, 0
  %v860 = vsel %vm714, %v659, 0
  %v863 = vsel %vm714, %v660, 0
  %v866 = vsel %vm714, %v661, 0
  %v869 = vsel %vm714, %v662, 0
  %v872 = vsel %vm714, %v663, 0
  %v875 = vsel %vm714, %v664, 0
  %v878 = vsel %vm714, %v665, 0
  %v881 = vsel %vm714, %v666, 0
  %v884 = vsel %vm714, %v667, 0
  %v887 = vsel %vm714, %v668, 0
  %v890 = vsel %vm714, %v669, 0
  %v893 = vsel %vm714, %v670, 0
  %v896 = vsel %vm714, %v671, 0
  %v899 = vsel %vm714, %v672, 0
  %v902 = vsel %vm714, %v673, 0
  %v905 = vsel %vm714, %v674, 0
  %v908 = vsel %vm714, %v675, 0
  %v911 = vsel %vm714, %v676, 0
  %v914 = vsel %vm714, %v677, 0
  %v917 = vsel %vm714, %v678, 0
  %v920 = vsel %vm714, %v679, 0
  %v923 = vsel %vm714, %v680, 0
  %v926 = vsel %vm714, %v681, 0
  %v929 = vsel %vm714, %v682, 0
  %v932 = vsel %vm714, %v683, 0
  %v935 = vsel %vm714, %v684, 0
  %v938 = vsel %vm714, %v685, 0
  %v941 = vsel %vm714, %v686, 0
  %v944 = vsel %vm714, %v687, 0
  %v947 = vsel %vm714, %v688, 0
  %v950 = vsel %vm714, %v689, 0
  %v953 = vsel %vm714, %v690, 0
  %v956 = vsel %vm714, %v691, 0
  %v959 = vsel %vm714, %v692, 0
  %v962 = vsel %vm714, %v693, 0
  %v965 = vsel %vm714, %v694, 0
  %v968 = vsel %vm714, %v695, 0
  %v971 = vsel %vm714, %v696, 0
  %v974 = vsel %vm714, %v697, 0
  %v977 = vsel %vm714, %v698, 0
  %v980 = vsel %vm714, %v699, 0
  %v983 = vsel %vm714, %v700, 0
  %v986 = vsel %vm714, %v701, 0
  %v989 = vsel %vm714, %v702, 0
  %v992 = vsel %vm714, %v703, 0
  %v995 = vsel %vm714, %v704, 0
  %v998 = vsel %vm714, %v705, 0
  %v1001 = vsel %vm714, %v706, 0
  %v1004 = vsel %vm714, %v707, 0
  %v1007 = vsel %vm714, %v708, 0
  %vm1009 = vcmask 1043456
  %vm1010 = vcmask 1044480
  %v1011 = vsel %vm1009, 4294967295, 65535
  %v1012 = vsel %vm1010, %v1011, 0
  %v1014 = vand.u32 %v713, %v1012
  %1016 = vmatprep.subr.bf16.mxu0 0
  %1017 = vmatpush1.bf16.msra.mxu0 0
  %1018 = vmatprep.subr.bf16.mxu0 0
  %1019 = vmatpush1.bf16.msra.mxu0 0
  %1020 = vmatprep.subr.bf16.mxu0 0
  %1021 = vmatpush1.bf16.msra.mxu0 0
  %1022 = vmatprep.subr.bf16.mxu0 0
  %1023 = vmatpush1.bf16.msra.mxu0 0
  %1024 = vmatprep.subr.bf16.mxu0 0
  %1025 = vmatpush1.bf16.msra.mxu0 0
  %1026 = vmatprep.subr.bf16.mxu0 0
  %1027 = vmatpush1.bf16.msra.mxu0 0
  %1028 = vmatprep.subr.bf16.mxu0 0
  %1029 = vmatpush1.bf16.msra.mxu0 0
  %1030 = vmatprep.subr.bf16.mxu0 0
  %1031 = vmatpush1.bf16.msra.mxu0 %v1014
  %1032 = vmatprep.subr.bf16.mxu0 0
  %1033 = vmatpush2.bf16.msra.mxu0 0
  %1034 = vmatprep.subr.bf16.mxu0 0
  %1035 = vmatpush2.bf16.msra.mxu0 0
  %1036 = vmatprep.subr.bf16.mxu0 0
  %1037 = vmatpush2.bf16.msra.mxu0 0
  %1038 = vmatprep.subr.bf16.mxu0 0
  %1039 = vmatpush2.bf16.msra.mxu0 0
  %1040 = vmatprep.subr.bf16.mxu0 0
  %1041 = vmatpush2.bf16.msra.mxu0 0
  %1042 = vmatprep.subr.bf16.mxu0 0
  %1043 = vmatpush2.bf16.msra.mxu0 0
  %1044 = vmatprep.subr.bf16.mxu0 0
  %1045 = vmatpush2.bf16.msra.mxu0 0
  %1046 = vmatprep.subr.bf16.mxu0 0
  %1047 = vmatpush2.bf16.msra.mxu0 0
  %1048 = vmatprep.mubr.bf16.mxu0 0
  %1049 = vmatmul.mubr.bf16.gmra.mxu0 %v716
  %v1050 = vpop.f32.mrf.mxu0
  %v1051 = vadd.f32 0.0, %v1050
  %v1052 = vpop.f32.mrf.mxu0
  %v1053 = vpop.f32.mrf.mxu0
  %v1054 = vadd.f32 0.0, %v1053
  %v1055 = vpop.f32.mrf.mxu0
  %1056 = vmatprep.mubr.bf16.mxu0 0
  %1057 = vmatmul.mubr.bf16.gmra.mxu0 %v719
  %v1058 = vpop.f32.mrf.mxu0
  %v1059 = vadd.f32 0.0, %v1058
  %v1060 = vpop.f32.mrf.mxu0
  %v1061 = vpop.f32.mrf.mxu0
  %v1062 = vadd.f32 0.0, %v1061
  %v1063 = vpop.f32.mrf.mxu0
  %1064 = vmatprep.mubr.bf16.mxu0 0
  %1065 = vmatmul.mubr.bf16.gmra.mxu0 %v722
  %v1066 = vpop.f32.mrf.mxu0
  %v1067 = vadd.f32 0.0, %v1066
  %v1068 = vpop.f32.mrf.mxu0
  %v1069 = vpop.f32.mrf.mxu0
  %v1070 = vadd.f32 0.0, %v1069
  %v1071 = vpop.f32.mrf.mxu0
  %1072 = vmatprep.mubr.bf16.mxu0 0
  %1073 = vmatmul.mubr.bf16.gmra.mxu0 %v725
  %v1074 = vpop.f32.mrf.mxu0
  %v1075 = vadd.f32 0.0, %v1074
  %v1076 = vpop.f32.mrf.mxu0
  %v1077 = vpop.f32.mrf.mxu0
  %v1078 = vadd.f32 0.0, %v1077
  %v1079 = vpop.f32.mrf.mxu0
  %1080 = vmatprep.mubr.bf16.mxu0 0
  %1081 = vmatmul.mubr.bf16.gmra.mxu0 %v728
  %v1082 = vpop.f32.mrf.mxu0
  %v1083 = vadd.f32 0.0, %v1082
  %v1084 = vpop.f32.mrf.mxu0
  %v1085 = vpop.f32.mrf.mxu0
  %v1086 = vadd.f32 0.0, %v1085
  %v1087 = vpop.f32.mrf.mxu0
  %1088 = vmatprep.mubr.bf16.mxu0 0
  %1089 = vmatmul.mubr.bf16.gmra.mxu0 %v731
  %v1090 = vpop.f32.mrf.mxu0
  %v1091 = vadd.f32 0.0, %v1090
  %v1092 = vpop.f32.mrf.mxu0
  %v1093 = vpop.f32.mrf.mxu0
  %v1094 = vadd.f32 0.0, %v1093
  %v1095 = vpop.f32.mrf.mxu0
  %1096 = vmatprep.mubr.bf16.mxu0 0
  %1097 = vmatmul.mubr.bf16.gmra.mxu0 %v734
  %v1098 = vpop.f32.mrf.mxu0
  %v1099 = vadd.f32 0.0, %v1098
  %v1100 = vpop.f32.mrf.mxu0
  %v1101 = vpop.f32.mrf.mxu0
  %v1102 = vadd.f32 0.0, %v1101
  %v1103 = vpop.f32.mrf.mxu0
  %1104 = vmatprep.mubr.bf16.mxu0 0
  %1105 = vmatmul.mubr.bf16.gmra.mxu0 %v737
  %v1106 = vpop.f32.mrf.mxu0
  %v1107 = vadd.f32 0.0, %v1106
  %v1108 = vpop.f32.mrf.mxu0
  %v1109 = vpop.f32.mrf.mxu0
  %v1110 = vadd.f32 0.0, %v1109
  %v1111 = vpop.f32.mrf.mxu0
  %1112 = vmatprep.mubr.bf16.mxu0 0
  %1113 = vmatmul.mubr.bf16.gmra.mxu0 %v740
  %v1114 = vpop.f32.mrf.mxu0
  %v1115 = vadd.f32 0.0, %v1114
  %v1116 = vpop.f32.mrf.mxu0
  %v1117 = vpop.f32.mrf.mxu0
  %v1118 = vadd.f32 0.0, %v1117
  %v1119 = vpop.f32.mrf.mxu0
  %1120 = vmatprep.mubr.bf16.mxu0 0
  %1121 = vmatmul.mubr.bf16.gmra.mxu0 %v743
  %v1122 = vpop.f32.mrf.mxu0
  %v1123 = vadd.f32 0.0, %v1122
  %v1124 = vpop.f32.mrf.mxu0
  %v1125 = vpop.f32.mrf.mxu0
  %v1126 = vadd.f32 0.0, %v1125
  %v1127 = vpop.f32.mrf.mxu0
  %1128 = vmatprep.mubr.bf16.mxu0 0
  %1129 = vmatmul.mubr.bf16.gmra.mxu0 %v746
  %v1130 = vpop.f32.mrf.mxu0
  %v1131 = vadd.f32 0.0, %v1130
  %v1132 = vpop.f32.mrf.mxu0
  %v1133 = vpop.f32.mrf.mxu0
  %v1134 = vadd.f32 0.0, %v1133
  %v1135 = vpop.f32.mrf.mxu0
  %1136 = vmatprep.mubr.bf16.mxu0 0
  %1137 = vmatmul.mubr.bf16.gmra.mxu0 %v749
  %v1138 = vpop.f32.mrf.mxu0
  %v1139 = vadd.f32 0.0, %v1138
  %v1140 = vpop.f32.mrf.mxu0
  %v1141 = vpop.f32.mrf.mxu0
  %v1142 = vadd.f32 0.0, %v1141
  %v1143 = vpop.f32.mrf.mxu0
  %1144 = vmatprep.mubr.bf16.mxu0 0
  %1145 = vmatmul.mubr.bf16.gmra.mxu0 %v752
  %v1146 = vpop.f32.mrf.mxu0
  %v1147 = vadd.f32 0.0, %v1146
  %v1148 = vpop.f32.mrf.mxu0
  %v1149 = vpop.f32.mrf.mxu0
  %v1150 = vadd.f32 0.0, %v1149
  %v1151 = vpop.f32.mrf.mxu0
  %1152 = vmatprep.mubr.bf16.mxu0 0
  %1153 = vmatmul.mubr.bf16.gmra.mxu0 %v755
  %v1154 = vpop.f32.mrf.mxu0
  %v1155 = vadd.f32 0.0, %v1154
  %v1156 = vpop.f32.mrf.mxu0
  %v1157 = vpop.f32.mrf.mxu0
  %v1158 = vadd.f32 0.0, %v1157
  %v1159 = vpop.f32.mrf.mxu0
  %1160 = vmatprep.mubr.bf16.mxu0 0
  %1161 = vmatmul.mubr.bf16.gmra.mxu0 %v758
  %v1162 = vpop.f32.mrf.mxu0
  %v1163 = vadd.f32 0.0, %v1162
  %v1164 = vpop.f32.mrf.mxu0
  %v1165 = vpop.f32.mrf.mxu0
  %v1166 = vadd.f32 0.0, %v1165
  %v1167 = vpop.f32.mrf.mxu0
  %1168 = vmatprep.mubr.bf16.mxu0 0
  %1169 = vmatmul.mubr.bf16.gmra.mxu0 %v761
  %v1170 = vpop.f32.mrf.mxu0
  %v1171 = vadd.f32 0.0, %v1170
  %v1172 = vpop.f32.mrf.mxu0
  %v1173 = vpop.f32.mrf.mxu0
  %v1174 = vadd.f32 0.0, %v1173
  %v1175 = vpop.f32.mrf.mxu0
  %1176 = vmatprep.mubr.bf16.mxu0 0
  %1177 = vmatmul.mubr.bf16.gmra.mxu0 %v764
  %v1178 = vpop.f32.mrf.mxu0
  %v1179 = vadd.f32 0.0, %v1178
  %v1180 = vpop.f32.mrf.mxu0
  %v1181 = vpop.f32.mrf.mxu0
  %v1182 = vadd.f32 0.0, %v1181
  %v1183 = vpop.f32.mrf.mxu0
  %1184 = vmatprep.mubr.bf16.mxu0 0
  %1185 = vmatmul.mubr.bf16.gmra.mxu0 %v767
  %v1186 = vpop.f32.mrf.mxu0
  %v1187 = vadd.f32 0.0, %v1186
  %v1188 = vpop.f32.mrf.mxu0
  %v1189 = vpop.f32.mrf.mxu0
  %v1190 = vadd.f32 0.0, %v1189
  %v1191 = vpop.f32.mrf.mxu0
  %1192 = vmatprep.mubr.bf16.mxu0 0
  %1193 = vmatmul.mubr.bf16.gmra.mxu0 %v770
  %v1194 = vpop.f32.mrf.mxu0
  %v1195 = vadd.f32 0.0, %v1194
  %v1196 = vpop.f32.mrf.mxu0
  %v1197 = vpop.f32.mrf.mxu0
  %v1198 = vadd.f32 0.0, %v1197
  %v1199 = vpop.f32.mrf.mxu0
  %1200 = vmatprep.mubr.bf16.mxu0 0
  %1201 = vmatmul.mubr.bf16.gmra.mxu0 %v773
  %v1202 = vpop.f32.mrf.mxu0
  %v1203 = vadd.f32 0.0, %v1202
  %v1204 = vpop.f32.mrf.mxu0
  %v1205 = vpop.f32.mrf.mxu0
  %v1206 = vadd.f32 0.0, %v1205
  %v1207 = vpop.f32.mrf.mxu0
  %1208 = vmatprep.mubr.bf16.mxu0 0
  %1209 = vmatmul.mubr.bf16.gmra.mxu0 %v776
  %v1210 = vpop.f32.mrf.mxu0
  %v1211 = vadd.f32 0.0, %v1210
  %v1212 = vpop.f32.mrf.mxu0
  %v1213 = vpop.f32.mrf.mxu0
  %v1214 = vadd.f32 0.0, %v1213
  %v1215 = vpop.f32.mrf.mxu0
  %1216 = vmatprep.mubr.bf16.mxu0 0
  %1217 = vmatmul.mubr.bf16.gmra.mxu0 %v779
  %v1218 = vpop.f32.mrf.mxu0
  %v1219 = vadd.f32 0.0, %v1218
  %v1220 = vpop.f32.mrf.mxu0
  %v1221 = vpop.f32.mrf.mxu0
  %v1222 = vadd.f32 0.0, %v1221
  %v1223 = vpop.f32.mrf.mxu0
  %1224 = vmatprep.mubr.bf16.mxu0 0
  %1225 = vmatmul.mubr.bf16.gmra.mxu0 %v782
  %v1226 = vpop.f32.mrf.mxu0
  %v1227 = vadd.f32 0.0, %v1226
  %v1228 = vpop.f32.mrf.mxu0
  %v1229 = vpop.f32.mrf.mxu0
  %v1230 = vadd.f32 0.0, %v1229
  %v1231 = vpop.f32.mrf.mxu0
  %1232 = vmatprep.mubr.bf16.mxu0 0
  %1233 = vmatmul.mubr.bf16.gmra.mxu0 %v785
  %v1234 = vpop.f32.mrf.mxu0
  %v1235 = vadd.f32 0.0, %v1234
  %v1236 = vpop.f32.mrf.mxu0
  %v1237 = vpop.f32.mrf.mxu0
  %v1238 = vadd.f32 0.0, %v1237
  %v1239 = vpop.f32.mrf.mxu0
  %1240 = vmatprep.mubr.bf16.mxu0 0
  %1241 = vmatmul.mubr.bf16.gmra.mxu0 %v788
  %v1242 = vpop.f32.mrf.mxu0
  %v1243 = vadd.f32 0.0, %v1242
  %v1244 = vpop.f32.mrf.mxu0
  %v1245 = vpop.f32.mrf.mxu0
  %v1246 = vadd.f32 0.0, %v1245
  %v1247 = vpop.f32.mrf.mxu0
  %1248 = vmatprep.mubr.bf16.mxu0 0
  %1249 = vmatmul.mubr.bf16.gmra.mxu0 %v791
  %v1250 = vpop.f32.mrf.mxu0
  %v1251 = vadd.f32 0.0, %v1250
  %v1252 = vpop.f32.mrf.mxu0
  %v1253 = vpop.f32.mrf.mxu0
  %v1254 = vadd.f32 0.0, %v1253
  %v1255 = vpop.f32.mrf.mxu0
  %1256 = vmatprep.mubr.bf16.mxu0 0
  %1257 = vmatmul.mubr.bf16.gmra.mxu0 %v794
  %v1258 = vpop.f32.mrf.mxu0
  %v1259 = vadd.f32 0.0, %v1258
  %v1260 = vpop.f32.mrf.mxu0
  %v1261 = vpop.f32.mrf.mxu0
  %v1262 = vadd.f32 0.0, %v1261
  %v1263 = vpop.f32.mrf.mxu0
  %1264 = vmatprep.mubr.bf16.mxu0 0
  %1265 = vmatmul.mubr.bf16.gmra.mxu0 %v797
  %v1266 = vpop.f32.mrf.mxu0
  %v1267 = vadd.f32 0.0, %v1266
  %v1268 = vpop.f32.mrf.mxu0
  %v1269 = vpop.f32.mrf.mxu0
  %v1270 = vadd.f32 0.0, %v1269
  %v1271 = vpop.f32.mrf.mxu0
  %1272 = vmatprep.mubr.bf16.mxu0 0
  %1273 = vmatmul.mubr.bf16.gmra.mxu0 %v800
  %v1274 = vpop.f32.mrf.mxu0
  %v1275 = vadd.f32 0.0, %v1274
  %v1276 = vpop.f32.mrf.mxu0
  %v1277 = vpop.f32.mrf.mxu0
  %v1278 = vadd.f32 0.0, %v1277
  %v1279 = vpop.f32.mrf.mxu0
  %1280 = vmatprep.mubr.bf16.mxu0 0
  %1281 = vmatmul.mubr.bf16.gmra.mxu0 %v803
  %v1282 = vpop.f32.mrf.mxu0
  %v1283 = vadd.f32 0.0, %v1282
  %v1284 = vpop.f32.mrf.mxu0
  %v1285 = vpop.f32.mrf.mxu0
  %v1286 = vadd.f32 0.0, %v1285
  %v1287 = vpop.f32.mrf.mxu0
  %1288 = vmatprep.mubr.bf16.mxu0 0
  %1289 = vmatmul.mubr.bf16.gmra.mxu0 %v806
  %v1290 = vpop.f32.mrf.mxu0
  %v1291 = vadd.f32 0.0, %v1290
  %v1292 = vpop.f32.mrf.mxu0
  %v1293 = vpop.f32.mrf.mxu0
  %v1294 = vadd.f32 0.0, %v1293
  %v1295 = vpop.f32.mrf.mxu0
  %1296 = vmatprep.mubr.bf16.mxu0 0
  %1297 = vmatmul.mubr.bf16.gmra.mxu0 %v809
  %v1298 = vpop.f32.mrf.mxu0
  %v1299 = vadd.f32 0.0, %v1298
  %v1300 = vpop.f32.mrf.mxu0
  %v1301 = vpop.f32.mrf.mxu0
  %v1302 = vadd.f32 0.0, %v1301
  %v1303 = vpop.f32.mrf.mxu0
  %1304 = vmatprep.mubr.bf16.mxu0 0
  %1305 = vmatmul.mubr.bf16.gmra.mxu0 %v812
  %v1306 = vpop.f32.mrf.mxu0
  %v1307 = vadd.f32 0.0, %v1306
  %v1308 = vpop.f32.mrf.mxu0
  %v1309 = vpop.f32.mrf.mxu0
  %v1310 = vadd.f32 0.0, %v1309
  %v1311 = vpop.f32.mrf.mxu0
  %1312 = vmatprep.mubr.bf16.mxu0 0
  %1313 = vmatmul.mubr.bf16.gmra.mxu0 %v815
  %v1314 = vpop.f32.mrf.mxu0
  %v1315 = vadd.f32 0.0, %v1314
  %v1316 = vpop.f32.mrf.mxu0
  %v1317 = vpop.f32.mrf.mxu0
  %v1318 = vadd.f32 0.0, %v1317
  %v1319 = vpop.f32.mrf.mxu0
  %1320 = vmatprep.mubr.bf16.mxu0 0
  %1321 = vmatmul.mubr.bf16.gmra.mxu0 %v818
  %v1322 = vpop.f32.mrf.mxu0
  %v1323 = vadd.f32 0.0, %v1322
  %v1324 = vpop.f32.mrf.mxu0
  %v1325 = vpop.f32.mrf.mxu0
  %v1326 = vadd.f32 0.0, %v1325
  %v1327 = vpop.f32.mrf.mxu0
  %1328 = vmatprep.mubr.bf16.mxu0 0
  %1329 = vmatmul.mubr.bf16.gmra.mxu0 %v821
  %v1330 = vpop.f32.mrf.mxu0
  %v1331 = vadd.f32 0.0, %v1330
  %v1332 = vpop.f32.mrf.mxu0
  %v1333 = vpop.f32.mrf.mxu0
  %v1334 = vadd.f32 0.0, %v1333
  %v1335 = vpop.f32.mrf.mxu0
  %1336 = vmatprep.mubr.bf16.mxu0 0
  %1337 = vmatmul.mubr.bf16.gmra.mxu0 %v824
  %v1338 = vpop.f32.mrf.mxu0
  %v1339 = vadd.f32 0.0, %v1338
  %v1340 = vpop.f32.mrf.mxu0
  %v1341 = vpop.f32.mrf.mxu0
  %v1342 = vadd.f32 0.0, %v1341
  %v1343 = vpop.f32.mrf.mxu0
  %1344 = vmatprep.mubr.bf16.mxu0 0
  %1345 = vmatmul.mubr.bf16.gmra.mxu0 %v827
  %v1346 = vpop.f32.mrf.mxu0
  %v1347 = vadd.f32 0.0, %v1346
  %v1348 = vpop.f32.mrf.mxu0
  %v1349 = vpop.f32.mrf.mxu0
  %v1350 = vadd.f32 0.0, %v1349
  %v1351 = vpop.f32.mrf.mxu0
  %1352 = vmatprep.mubr.bf16.mxu0 0
  %1353 = vmatmul.mubr.bf16.gmra.mxu0 %v830
  %v1354 = vpop.f32.mrf.mxu0
  %v1355 = vadd.f32 0.0, %v1354
  %v1356 = vpop.f32.mrf.mxu0
  %v1357 = vpop.f32.mrf.mxu0
  %v1358 = vadd.f32 0.0, %v1357
  %v1359 = vpop.f32.mrf.mxu0
  %1360 = vmatprep.mubr.bf16.mxu0 0
  %1361 = vmatmul.mubr.bf16.gmra.mxu0 %v833
  %v1362 = vpop.f32.mrf.mxu0
  %v1363 = vadd.f32 0.0, %v1362
  %v1364 = vpop.f32.mrf.mxu0
  %v1365 = vpop.f32.mrf.mxu0
  %v1366 = vadd.f32 0.0, %v1365
  %v1367 = vpop.f32.mrf.mxu0
  %1368 = vmatprep.mubr.bf16.mxu0 0
  %1369 = vmatmul.mubr.bf16.gmra.mxu0 %v836
  %v1370 = vpop.f32.mrf.mxu0
  %v1371 = vadd.f32 0.0, %v1370
  %v1372 = vpop.f32.mrf.mxu0
  %v1373 = vpop.f32.mrf.mxu0
  %v1374 = vadd.f32 0.0, %v1373
  %v1375 = vpop.f32.mrf.mxu0
  %1376 = vmatprep.mubr.bf16.mxu0 0
  %1377 = vmatmul.mubr.bf16.gmra.mxu0 %v839
  %v1378 = vpop.f32.mrf.mxu0
  %v1379 = vadd.f32 0.0, %v1378
  %v1380 = vpop.f32.mrf.mxu0
  %v1381 = vpop.f32.mrf.mxu0
  %v1382 = vadd.f32 0.0, %v1381
  %v1383 = vpop.f32.mrf.mxu0
  %1384 = vmatprep.mubr.bf16.mxu0 0
  %1385 = vmatmul.mubr.bf16.gmra.mxu0 %v842
  %v1386 = vpop.f32.mrf.mxu0
  %v1387 = vadd.f32 0.0, %v1386
  %v1388 = vpop.f32.mrf.mxu0
  %v1389 = vpop.f32.mrf.mxu0
  %v1390 = vadd.f32 0.0, %v1389
  %v1391 = vpop.f32.mrf.mxu0
  %1392 = vmatprep.mubr.bf16.mxu0 0
  %1393 = vmatmul.mubr.bf16.gmra.mxu0 %v845
  %v1394 = vpop.f32.mrf.mxu0
  %v1395 = vadd.f32 0.0, %v1394
  %v1396 = vpop.f32.mrf.mxu0
  %v1397 = vpop.f32.mrf.mxu0
  %v1398 = vadd.f32 0.0, %v1397
  %v1399 = vpop.f32.mrf.mxu0
  %1400 = vmatprep.mubr.bf16.mxu0 0
  %1401 = vmatmul.mubr.bf16.gmra.mxu0 %v848
  %v1402 = vpop.f32.mrf.mxu0
  %v1403 = vadd.f32 0.0, %v1402
  %v1404 = vpop.f32.mrf.mxu0
  %v1405 = vpop.f32.mrf.mxu0
  %v1406 = vadd.f32 0.0, %v1405
  %v1407 = vpop.f32.mrf.mxu0
  %1408 = vmatprep.mubr.bf16.mxu0 0
  %1409 = vmatmul.mubr.bf16.gmra.mxu0 %v851
  %v1410 = vpop.f32.mrf.mxu0
  %v1411 = vadd.f32 0.0, %v1410
  %v1412 = vpop.f32.mrf.mxu0
  %v1413 = vpop.f32.mrf.mxu0
  %v1414 = vadd.f32 0.0, %v1413
  %v1415 = vpop.f32.mrf.mxu0
  %1416 = vmatprep.mubr.bf16.mxu0 0
  %1417 = vmatmul.mubr.bf16.gmra.mxu0 %v854
  %v1418 = vpop.f32.mrf.mxu0
  %v1419 = vadd.f32 0.0, %v1418
  %v1420 = vpop.f32.mrf.mxu0
  %v1421 = vpop.f32.mrf.mxu0
  %v1422 = vadd.f32 0.0, %v1421
  %v1423 = vpop.f32.mrf.mxu0
  %1424 = vmatprep.mubr.bf16.mxu0 0
  %1425 = vmatmul.mubr.bf16.gmra.mxu0 %v857
  %v1426 = vpop.f32.mrf.mxu0
  %v1427 = vadd.f32 0.0, %v1426
  %v1428 = vpop.f32.mrf.mxu0
  %v1429 = vpop.f32.mrf.mxu0
  %v1430 = vadd.f32 0.0, %v1429
  %v1431 = vpop.f32.mrf.mxu0
  %1432 = vmatprep.mubr.bf16.mxu0 0
  %1433 = vmatmul.mubr.bf16.gmra.mxu0 %v860
  %v1434 = vpop.f32.mrf.mxu0
  %v1435 = vadd.f32 0.0, %v1434
  %v1436 = vpop.f32.mrf.mxu0
  %v1437 = vpop.f32.mrf.mxu0
  %v1438 = vadd.f32 0.0, %v1437
  %v1439 = vpop.f32.mrf.mxu0
  %1440 = vmatprep.mubr.bf16.mxu0 0
  %1441 = vmatmul.mubr.bf16.gmra.mxu0 %v863
  %v1442 = vpop.f32.mrf.mxu0
  %v1443 = vadd.f32 0.0, %v1442
  %v1444 = vpop.f32.mrf.mxu0
  %v1445 = vpop.f32.mrf.mxu0
  %v1446 = vadd.f32 0.0, %v1445
  %v1447 = vpop.f32.mrf.mxu0
  %1448 = vmatprep.mubr.bf16.mxu0 0
  %1449 = vmatmul.mubr.bf16.gmra.mxu0 %v866
  %v1450 = vpop.f32.mrf.mxu0
  %v1451 = vadd.f32 0.0, %v1450
  %v1452 = vpop.f32.mrf.mxu0
  %v1453 = vpop.f32.mrf.mxu0
  %v1454 = vadd.f32 0.0, %v1453
  %v1455 = vpop.f32.mrf.mxu0
  %1456 = vmatprep.mubr.bf16.mxu0 0
  %1457 = vmatmul.mubr.bf16.gmra.mxu0 %v869
  %v1458 = vpop.f32.mrf.mxu0
  %v1459 = vadd.f32 0.0, %v1458
  %v1460 = vpop.f32.mrf.mxu0
  %v1461 = vpop.f32.mrf.mxu0
  %v1462 = vadd.f32 0.0, %v1461
  %v1463 = vpop.f32.mrf.mxu0
  %1464 = vmatprep.mubr.bf16.mxu0 0
  %1465 = vmatmul.mubr.bf16.gmra.mxu0 %v872
  %v1466 = vpop.f32.mrf.mxu0
  %v1467 = vadd.f32 0.0, %v1466
  %v1468 = vpop.f32.mrf.mxu0
  %v1469 = vpop.f32.mrf.mxu0
  %v1470 = vadd.f32 0.0, %v1469
  %v1471 = vpop.f32.mrf.mxu0
  %1472 = vmatprep.mubr.bf16.mxu0 0
  %1473 = vmatmul.mubr.bf16.gmra.mxu0 %v875
  %v1474 = vpop.f32.mrf.mxu0
  %v1475 = vadd.f32 0.0, %v1474
  %v1476 = vpop.f32.mrf.mxu0
  %v1477 = vpop.f32.mrf.mxu0
  %v1478 = vadd.f32 0.0, %v1477
  %v1479 = vpop.f32.mrf.mxu0
  %1480 = vmatprep.mubr.bf16.mxu0 0
  %1481 = vmatmul.mubr.bf16.gmra.mxu0 %v878
  %v1482 = vpop.f32.mrf.mxu0
  %v1483 = vadd.f32 0.0, %v1482
  %v1484 = vpop.f32.mrf.mxu0
  %v1485 = vpop.f32.mrf.mxu0
  %v1486 = vadd.f32 0.0, %v1485
  %v1487 = vpop.f32.mrf.mxu0
  %1488 = vmatprep.mubr.bf16.mxu0 0
  %1489 = vmatmul.mubr.bf16.gmra.mxu0 %v881
  %v1490 = vpop.f32.mrf.mxu0
  %v1491 = vadd.f32 0.0, %v1490
  %v1492 = vpop.f32.mrf.mxu0
  %v1493 = vpop.f32.mrf.mxu0
  %v1494 = vadd.f32 0.0, %v1493
  %v1495 = vpop.f32.mrf.mxu0
  %1496 = vmatprep.mubr.bf16.mxu0 0
  %1497 = vmatmul.mubr.bf16.gmra.mxu0 %v884
  %v1498 = vpop.f32.mrf.mxu0
  %v1499 = vadd.f32 0.0, %v1498
  %v1500 = vpop.f32.mrf.mxu0
  %v1501 = vpop.f32.mrf.mxu0
  %v1502 = vadd.f32 0.0, %v1501
  %v1503 = vpop.f32.mrf.mxu0
  %1504 = vmatprep.mubr.bf16.mxu0 0
  %1505 = vmatmul.mubr.bf16.gmra.mxu0 %v887
  %v1506 = vpop.f32.mrf.mxu0
  %v1507 = vadd.f32 0.0, %v1506
  %v1508 = vpop.f32.mrf.mxu0
  %v1509 = vpop.f32.mrf.mxu0
  %v1510 = vadd.f32 0.0, %v1509
  %v1511 = vpop.f32.mrf.mxu0
  %1512 = vmatprep.mubr.bf16.mxu0 0
  %1513 = vmatmul.mubr.bf16.gmra.mxu0 %v890
  %v1514 = vpop.f32.mrf.mxu0
  %v1515 = vadd.f32 0.0, %v1514
  %v1516 = vpop.f32.mrf.mxu0
  %v1517 = vpop.f32.mrf.mxu0
  %v1518 = vadd.f32 0.0, %v1517
  %v1519 = vpop.f32.mrf.mxu0
  %1520 = vmatprep.mubr.bf16.mxu0 0
  %1521 = vmatmul.mubr.bf16.gmra.mxu0 %v893
  %v1522 = vpop.f32.mrf.mxu0
  %v1523 = vadd.f32 0.0, %v1522
  %v1524 = vpop.f32.mrf.mxu0
  %v1525 = vpop.f32.mrf.mxu0
  %v1526 = vadd.f32 0.0, %v1525
  %v1527 = vpop.f32.mrf.mxu0
  %1528 = vmatprep.mubr.bf16.mxu0 0
  %1529 = vmatmul.mubr.bf16.gmra.mxu0 %v896
  %v1530 = vpop.f32.mrf.mxu0
  %v1531 = vadd.f32 0.0, %v1530
  %v1532 = vpop.f32.mrf.mxu0
  %v1533 = vpop.f32.mrf.mxu0
  %v1534 = vadd.f32 0.0, %v1533
  %v1535 = vpop.f32.mrf.mxu0
  %1536 = vmatprep.mubr.bf16.mxu0 0
  %1537 = vmatmul.mubr.bf16.gmra.mxu0 %v899
  %v1538 = vpop.f32.mrf.mxu0
  %v1539 = vadd.f32 0.0, %v1538
  %v1540 = vpop.f32.mrf.mxu0
  %v1541 = vpop.f32.mrf.mxu0
  %v1542 = vadd.f32 0.0, %v1541
  %v1543 = vpop.f32.mrf.mxu0
  %1544 = vmatprep.mubr.bf16.mxu0 0
  %1545 = vmatmul.mubr.bf16.gmra.mxu0 %v902
  %v1546 = vpop.f32.mrf.mxu0
  %v1547 = vadd.f32 0.0, %v1546
  %v1548 = vpop.f32.mrf.mxu0
  %v1549 = vpop.f32.mrf.mxu0
  %v1550 = vadd.f32 0.0, %v1549
  %v1551 = vpop.f32.mrf.mxu0
  %1552 = vmatprep.mubr.bf16.mxu0 0
  %1553 = vmatmul.mubr.bf16.gmra.mxu0 %v905
  %v1554 = vpop.f32.mrf.mxu0
  %v1555 = vadd.f32 0.0, %v1554
  %v1556 = vpop.f32.mrf.mxu0
  %v1557 = vpop.f32.mrf.mxu0
  %v1558 = vadd.f32 0.0, %v1557
  %v1559 = vpop.f32.mrf.mxu0
  %1560 = vmatprep.mubr.bf16.mxu0 0
  %1561 = vmatmul.mubr.bf16.gmra.mxu0 %v908
  %v1562 = vpop.f32.mrf.mxu0
  %v1563 = vadd.f32 0.0, %v1562
  %v1564 = vpop.f32.mrf.mxu0
  %v1565 = vpop.f32.mrf.mxu0
  %v1566 = vadd.f32 0.0, %v1565
  %v1567 = vpop.f32.mrf.mxu0
  %1568 = vmatprep.mubr.bf16.mxu0 0
  %1569 = vmatmul.mubr.bf16.gmra.mxu0 %v911
  %v1570 = vpop.f32.mrf.mxu0
  %v1571 = vadd.f32 0.0, %v1570
  %v1572 = vpop.f32.mrf.mxu0
  %v1573 = vpop.f32.mrf.mxu0
  %v1574 = vadd.f32 0.0, %v1573
  %v1575 = vpop.f32.mrf.mxu0
  %1576 = vmatprep.mubr.bf16.mxu0 0
  %1577 = vmatmul.mubr.bf16.gmra.mxu0 %v914
  %v1578 = vpop.f32.mrf.mxu0
  %v1579 = vadd.f32 0.0, %v1578
  %v1580 = vpop.f32.mrf.mxu0
  %v1581 = vpop.f32.mrf.mxu0
  %v1582 = vadd.f32 0.0, %v1581
  %v1583 = vpop.f32.mrf.mxu0
  %1584 = vmatprep.mubr.bf16.mxu0 0
  %1585 = vmatmul.mubr.bf16.gmra.mxu0 %v917
  %v1586 = vpop.f32.mrf.mxu0
  %v1587 = vadd.f32 0.0, %v1586
  %v1588 = vpop.f32.mrf.mxu0
  %v1589 = vpop.f32.mrf.mxu0
  %v1590 = vadd.f32 0.0, %v1589
  %v1591 = vpop.f32.mrf.mxu0
  %1592 = vmatprep.mubr.bf16.mxu0 0
  %1593 = vmatmul.mubr.bf16.gmra.mxu0 %v920
  %v1594 = vpop.f32.mrf.mxu0
  %v1595 = vadd.f32 0.0, %v1594
  %v1596 = vpop.f32.mrf.mxu0
  %v1597 = vpop.f32.mrf.mxu0
  %v1598 = vadd.f32 0.0, %v1597
  %v1599 = vpop.f32.mrf.mxu0
  %1600 = vmatprep.mubr.bf16.mxu0 0
  %1601 = vmatmul.mubr.bf16.gmra.mxu0 %v923
  %v1602 = vpop.f32.mrf.mxu0
  %v1603 = vadd.f32 0.0, %v1602
  %v1604 = vpop.f32.mrf.mxu0
  %v1605 = vpop.f32.mrf.mxu0
  %v1606 = vadd.f32 0.0, %v1605
  %v1607 = vpop.f32.mrf.mxu0
  %1608 = vmatprep.mubr.bf16.mxu0 0
  %1609 = vmatmul.mubr.bf16.gmra.mxu0 %v926
  %v1610 = vpop.f32.mrf.mxu0
  %v1611 = vadd.f32 0.0, %v1610
  %v1612 = vpop.f32.mrf.mxu0
  %v1613 = vpop.f32.mrf.mxu0
  %v1614 = vadd.f32 0.0, %v1613
  %v1615 = vpop.f32.mrf.mxu0
  %1616 = vmatprep.mubr.bf16.mxu0 0
  %1617 = vmatmul.mubr.bf16.gmra.mxu0 %v929
  %v1618 = vpop.f32.mrf.mxu0
  %v1619 = vadd.f32 0.0, %v1618
  %v1620 = vpop.f32.mrf.mxu0
  %v1621 = vpop.f32.mrf.mxu0
  %v1622 = vadd.f32 0.0, %v1621
  %v1623 = vpop.f32.mrf.mxu0
  %1624 = vmatprep.mubr.bf16.mxu0 0
  %1625 = vmatmul.mubr.bf16.gmra.mxu0 %v932
  %v1626 = vpop.f32.mrf.mxu0
  %v1627 = vadd.f32 0.0, %v1626
  %v1628 = vpop.f32.mrf.mxu0
  %v1629 = vpop.f32.mrf.mxu0
  %v1630 = vadd.f32 0.0, %v1629
  %v1631 = vpop.f32.mrf.mxu0
  %1632 = vmatprep.mubr.bf16.mxu0 0
  %1633 = vmatmul.mubr.bf16.gmra.mxu0 %v935
  %v1634 = vpop.f32.mrf.mxu0
  %v1635 = vadd.f32 0.0, %v1634
  %v1636 = vpop.f32.mrf.mxu0
  %v1637 = vpop.f32.mrf.mxu0
  %v1638 = vadd.f32 0.0, %v1637
  %v1639 = vpop.f32.mrf.mxu0
  %1640 = vmatprep.mubr.bf16.mxu0 0
  %1641 = vmatmul.mubr.bf16.gmra.mxu0 %v938
  %v1642 = vpop.f32.mrf.mxu0
  %v1643 = vadd.f32 0.0, %v1642
  %v1644 = vpop.f32.mrf.mxu0
  %v1645 = vpop.f32.mrf.mxu0
  %v1646 = vadd.f32 0.0, %v1645
  %v1647 = vpop.f32.mrf.mxu0
  %1648 = vmatprep.mubr.bf16.mxu0 0
  %1649 = vmatmul.mubr.bf16.gmra.mxu0 %v941
  %v1650 = vpop.f32.mrf.mxu0
  %v1651 = vadd.f32 0.0, %v1650
  %v1652 = vpop.f32.mrf.mxu0
  %v1653 = vpop.f32.mrf.mxu0
  %v1654 = vadd.f32 0.0, %v1653
  %v1655 = vpop.f32.mrf.mxu0
  %1656 = vmatprep.mubr.bf16.mxu0 0
  %1657 = vmatmul.mubr.bf16.gmra.mxu0 %v944
  %v1658 = vpop.f32.mrf.mxu0
  %v1659 = vadd.f32 0.0, %v1658
  %v1660 = vpop.f32.mrf.mxu0
  %v1661 = vpop.f32.mrf.mxu0
  %v1662 = vadd.f32 0.0, %v1661
  %v1663 = vpop.f32.mrf.mxu0
  %1664 = vmatprep.mubr.bf16.mxu0 0
  %1665 = vmatmul.mubr.bf16.gmra.mxu0 %v947
  %v1666 = vpop.f32.mrf.mxu0
  %v1667 = vadd.f32 0.0, %v1666
  %v1668 = vpop.f32.mrf.mxu0
  %v1669 = vpop.f32.mrf.mxu0
  %v1670 = vadd.f32 0.0, %v1669
  %v1671 = vpop.f32.mrf.mxu0
  %1672 = vmatprep.mubr.bf16.mxu0 0
  %1673 = vmatmul.mubr.bf16.gmra.mxu0 %v950
  %v1674 = vpop.f32.mrf.mxu0
  %v1675 = vadd.f32 0.0, %v1674
  %v1676 = vpop.f32.mrf.mxu0
  %v1677 = vpop.f32.mrf.mxu0
  %v1678 = vadd.f32 0.0, %v1677
  %v1679 = vpop.f32.mrf.mxu0
  %1680 = vmatprep.mubr.bf16.mxu0 0
  %1681 = vmatmul.mubr.bf16.gmra.mxu0 %v953
  %v1682 = vpop.f32.mrf.mxu0
  %v1683 = vadd.f32 0.0, %v1682
  %v1684 = vpop.f32.mrf.mxu0
  %v1685 = vpop.f32.mrf.mxu0
  %v1686 = vadd.f32 0.0, %v1685
  %v1687 = vpop.f32.mrf.mxu0
  %1688 = vmatprep.mubr.bf16.mxu0 0
  %1689 = vmatmul.mubr.bf16.gmra.mxu0 %v956
  %v1690 = vpop.f32.mrf.mxu0
  %v1691 = vadd.f32 0.0, %v1690
  %v1692 = vpop.f32.mrf.mxu0
  %v1693 = vpop.f32.mrf.mxu0
  %v1694 = vadd.f32 0.0, %v1693
  %v1695 = vpop.f32.mrf.mxu0
  %1696 = vmatprep.mubr.bf16.mxu0 0
  %1697 = vmatmul.mubr.bf16.gmra.mxu0 %v959
  %v1698 = vpop.f32.mrf.mxu0
  %v1699 = vadd.f32 0.0, %v1698
  %v1700 = vpop.f32.mrf.mxu0
  %v1701 = vpop.f32.mrf.mxu0
  %v1702 = vadd.f32 0.0, %v1701
  %v1703 = vpop.f32.mrf.mxu0
  %1704 = vmatprep.mubr.bf16.mxu0 0
  %1705 = vmatmul.mubr.bf16.gmra.mxu0 %v962
  %v1706 = vpop.f32.mrf.mxu0
  %v1707 = vadd.f32 0.0, %v1706
  %v1708 = vpop.f32.mrf.mxu0
  %v1709 = vpop.f32.mrf.mxu0
  %v1710 = vadd.f32 0.0, %v1709
  %v1711 = vpop.f32.mrf.mxu0
  %1712 = vmatprep.mubr.bf16.mxu0 0
  %1713 = vmatmul.mubr.bf16.gmra.mxu0 %v965
  %v1714 = vpop.f32.mrf.mxu0
  %v1715 = vadd.f32 0.0, %v1714
  %v1716 = vpop.f32.mrf.mxu0
  %v1717 = vpop.f32.mrf.mxu0
  %v1718 = vadd.f32 0.0, %v1717
  %v1719 = vpop.f32.mrf.mxu0
  %1720 = vmatprep.mubr.bf16.mxu0 0
  %1721 = vmatmul.mubr.bf16.gmra.mxu0 %v968
  %v1722 = vpop.f32.mrf.mxu0
  %v1723 = vadd.f32 0.0, %v1722
  %v1724 = vpop.f32.mrf.mxu0
  %v1725 = vpop.f32.mrf.mxu0
  %v1726 = vadd.f32 0.0, %v1725
  %v1727 = vpop.f32.mrf.mxu0
  %1728 = vmatprep.mubr.bf16.mxu0 0
  %1729 = vmatmul.mubr.bf16.gmra.mxu0 %v971
  %v1730 = vpop.f32.mrf.mxu0
  %v1731 = vadd.f32 0.0, %v1730
  %v1732 = vpop.f32.mrf.mxu0
  %v1733 = vpop.f32.mrf.mxu0
  %v1734 = vadd.f32 0.0, %v1733
  %v1735 = vpop.f32.mrf.mxu0
  %1736 = vmatprep.mubr.bf16.mxu0 0
  %1737 = vmatmul.mubr.bf16.gmra.mxu0 %v974
  %v1738 = vpop.f32.mrf.mxu0
  %v1739 = vadd.f32 0.0, %v1738
  %v1740 = vpop.f32.mrf.mxu0
  %v1741 = vpop.f32.mrf.mxu0
  %v1742 = vadd.f32 0.0, %v1741
  %v1743 = vpop.f32.mrf.mxu0
  %1744 = vmatprep.mubr.bf16.mxu0 0
  %1745 = vmatmul.mubr.bf16.gmra.mxu0 %v977
  %v1746 = vpop.f32.mrf.mxu0
  %v1747 = vadd.f32 0.0, %v1746
  %v1748 = vpop.f32.mrf.mxu0
  %v1749 = vpop.f32.mrf.mxu0
  %v1750 = vadd.f32 0.0, %v1749
  %v1751 = vpop.f32.mrf.mxu0
  %1752 = vmatprep.mubr.bf16.mxu0 0
  %1753 = vmatmul.mubr.bf16.gmra.mxu0 %v980
  %v1754 = vpop.f32.mrf.mxu0
  %v1755 = vadd.f32 0.0, %v1754
  %v1756 = vpop.f32.mrf.mxu0
  %v1757 = vpop.f32.mrf.mxu0
  %v1758 = vadd.f32 0.0, %v1757
  %v1759 = vpop.f32.mrf.mxu0
  %1760 = vmatprep.mubr.bf16.mxu0 0
  %1761 = vmatmul.mubr.bf16.gmra.mxu0 %v983
  %v1762 = vpop.f32.mrf.mxu0
  %v1763 = vadd.f32 0.0, %v1762
  %v1764 = vpop.f32.mrf.mxu0
  %v1765 = vpop.f32.mrf.mxu0
  %v1766 = vadd.f32 0.0, %v1765
  %v1767 = vpop.f32.mrf.mxu0
  %1768 = vmatprep.mubr.bf16.mxu0 0
  %1769 = vmatmul.mubr.bf16.gmra.mxu0 %v986
  %v1770 = vpop.f32.mrf.mxu0
  %v1771 = vadd.f32 0.0, %v1770
  %v1772 = vpop.f32.mrf.mxu0
  %v1773 = vpop.f32.mrf.mxu0
  %v1774 = vadd.f32 0.0, %v1773
  %v1775 = vpop.f32.mrf.mxu0
  %1776 = vmatprep.mubr.bf16.mxu0 0
  %1777 = vmatmul.mubr.bf16.gmra.mxu0 %v989
  %v1778 = vpop.f32.mrf.mxu0
  %v1779 = vadd.f32 0.0, %v1778
  %v1780 = vpop.f32.mrf.mxu0
  %v1781 = vpop.f32.mrf.mxu0
  %v1782 = vadd.f32 0.0, %v1781
  %v1783 = vpop.f32.mrf.mxu0
  %1784 = vmatprep.mubr.bf16.mxu0 0
  %1785 = vmatmul.mubr.bf16.gmra.mxu0 %v992
  %v1786 = vpop.f32.mrf.mxu0
  %v1787 = vadd.f32 0.0, %v1786
  %v1788 = vpop.f32.mrf.mxu0
  %v1789 = vpop.f32.mrf.mxu0
  %v1790 = vadd.f32 0.0, %v1789
  %v1791 = vpop.f32.mrf.mxu0
  %1792 = vmatprep.mubr.bf16.mxu0 0
  %1793 = vmatmul.mubr.bf16.gmra.mxu0 %v995
  %v1794 = vpop.f32.mrf.mxu0
  %v1795 = vadd.f32 0.0, %v1794
  %v1796 = vpop.f32.mrf.mxu0
  %v1797 = vpop.f32.mrf.mxu0
  %v1798 = vadd.f32 0.0, %v1797
  %v1799 = vpop.f32.mrf.mxu0
  %1800 = vmatprep.mubr.bf16.mxu0 0
  %1801 = vmatmul.mubr.bf16.gmra.mxu0 %v998
  %v1802 = vpop.f32.mrf.mxu0
  %v1803 = vadd.f32 0.0, %v1802
  %v1804 = vpop.f32.mrf.mxu0
  %v1805 = vpop.f32.mrf.mxu0
  %v1806 = vadd.f32 0.0, %v1805
  %v1807 = vpop.f32.mrf.mxu0
  %1808 = vmatprep.mubr.bf16.mxu0 0
  %1809 = vmatmul.mubr.bf16.gmra.mxu0 %v1001
  %v1810 = vpop.f32.mrf.mxu0
  %v1811 = vadd.f32 0.0, %v1810
  %v1812 = vpop.f32.mrf.mxu0
  %v1813 = vpop.f32.mrf.mxu0
  %v1814 = vadd.f32 0.0, %v1813
  %v1815 = vpop.f32.mrf.mxu0
  %1816 = vmatprep.mubr.bf16.mxu0 0
  %1817 = vmatmul.mubr.bf16.gmra.mxu0 %v1004
  %v1818 = vpop.f32.mrf.mxu0
  %v1819 = vadd.f32 0.0, %v1818
  %v1820 = vpop.f32.mrf.mxu0
  %v1821 = vpop.f32.mrf.mxu0
  %v1822 = vadd.f32 0.0, %v1821
  %v1823 = vpop.f32.mrf.mxu0
  %1824 = vmatprep.mubr.bf16.mxu0 0
  %1825 = vmatmul.mubr.bf16.gmra.mxu0 %v1007
  %v1826 = vpop.f32.mrf.mxu0
  %v1827 = vadd.f32 0.0, %v1826
  %v1828 = vpop.f32.mrf.mxu0
  %v1829 = vpop.f32.mrf.mxu0
  %v1830 = vadd.f32 0.0, %v1829
  %v1831 = vpop.f32.mrf.mxu0
  %1832 = vdwg.mxu0
  %v1833 = vmax.f32 %v1051, 0.0
  %v1834 = vmax.f32 %v1054, 0.0
  %v1835 = vmax.f32 %v1059, 0.0
  %v1836 = vmax.f32 %v1062, 0.0
  %v1837 = vmax.f32 %v1067, 0.0
  %v1838 = vmax.f32 %v1070, 0.0
  %v1839 = vmax.f32 %v1075, 0.0
  %v1840 = vmax.f32 %v1078, 0.0
  %v1841 = vmax.f32 %v1083, 0.0
  %v1842 = vmax.f32 %v1086, 0.0
  %v1843 = vmax.f32 %v1091, 0.0
  %v1844 = vmax.f32 %v1094, 0.0
  %v1845 = vmax.f32 %v1099, 0.0
  %v1846 = vmax.f32 %v1102, 0.0
  %v1847 = vmax.f32 %v1107, 0.0
  %v1848 = vmax.f32 %v1110, 0.0
  %v1849 = vmax.f32 %v1115, 0.0
  %v1850 = vmax.f32 %v1118, 0.0
  %v1851 = vmax.f32 %v1123, 0.0
  %v1852 = vmax.f32 %v1126, 0.0
  %v1853 = vmax.f32 %v1131, 0.0
  %v1854 = vmax.f32 %v1134, 0.0
  %v1855 = vmax.f32 %v1139, 0.0
  %v1856 = vmax.f32 %v1142, 0.0
  %v1857 = vmax.f32 %v1147, 0.0
  %v1858 = vmax.f32 %v1150, 0.0
  %v1859 = vmax.f32 %v1155, 0.0
  %v1860 = vmax.f32 %v1158, 0.0
  %v1861 = vmax.f32 %v1163, 0.0
  %v1862 = vmax.f32 %v1166, 0.0
  %v1863 = vmax.f32 %v1171, 0.0
  %v1864 = vmax.f32 %v1174, 0.0
  %v1865 = vmax.f32 %v1179, 0.0
  %v1866 = vmax.f32 %v1182, 0.0
  %v1867 = vmax.f32 %v1187, 0.0
  %v1868 = vmax.f32 %v1190, 0.0
  %v1869 = vmax.f32 %v1195, 0.0
  %v1870 = vmax.f32 %v1198, 0.0
  %v1871 = vmax.f32 %v1203, 0.0
  %v1872 = vmax.f32 %v1206, 0.0
  %v1873 = vmax.f32 %v1211, 0.0
  %v1874 = vmax.f32 %v1214, 0.0
  %v1875 = vmax.f32 %v1219, 0.0
  %v1876 = vmax.f32 %v1222, 0.0
  %v1877 = vmax.f32 %v1227, 0.0
  %v1878 = vmax.f32 %v1230, 0.0
  %v1879 = vmax.f32 %v1235, 0.0
  %v1880 = vmax.f32 %v1238, 0.0
  %v1881 = vmax.f32 %v1243, 0.0
  %v1882 = vmax.f32 %v1246, 0.0
  %v1883 = vmax.f32 %v1251, 0.0
  %v1884 = vmax.f32 %v1254, 0.0
  %v1885 = vmax.f32 %v1259, 0.0
  %v1886 = vmax.f32 %v1262, 0.0
  %v1887 = vmax.f32 %v1267, 0.0
  %v1888 = vmax.f32 %v1270, 0.0
  %v1889 = vmax.f32 %v1275, 0.0
  %v1890 = vmax.f32 %v1278, 0.0
  %v1891 = vmax.f32 %v1283, 0.0
  %v1892 = vmax.f32 %v1286, 0.0
  %v1893 = vmax.f32 %v1291, 0.0
  %v1894 = vmax.f32 %v1294, 0.0
  %v1895 = vmax.f32 %v1299, 0.0
  %v1896 = vmax.f32 %v1302, 0.0
  %v1897 = vmax.f32 %v1307, 0.0
  %v1898 = vmax.f32 %v1310, 0.0
  %v1899 = vmax.f32 %v1315, 0.0
  %v1900 = vmax.f32 %v1318, 0.0
  %v1901 = vmax.f32 %v1323, 0.0
  %v1902 = vmax.f32 %v1326, 0.0
  %v1903 = vmax.f32 %v1331, 0.0
  %v1904 = vmax.f32 %v1334, 0.0
  %v1905 = vmax.f32 %v1339, 0.0
  %v1906 = vmax.f32 %v1342, 0.0
  %v1907 = vmax.f32 %v1347, 0.0
  %v1908 = vmax.f32 %v1350, 0.0
  %v1909 = vmax.f32 %v1355, 0.0
  %v1910 = vmax.f32 %v1358, 0.0
  %v1911 = vmax.f32 %v1363, 0.0
  %v1912 = vmax.f32 %v1366, 0.0
  %v1913 = vmax.f32 %v1371, 0.0
  %v1914 = vmax.f32 %v1374, 0.0
  %v1915 = vmax.f32 %v1379, 0.0
  %v1916 = vmax.f32 %v1382, 0.0
  %v1917 = vmax.f32 %v1387, 0.0
  %v1918 = vmax.f32 %v1390, 0.0
  %v1919 = vmax.f32 %v1395, 0.0
  %v1920 = vmax.f32 %v1398, 0.0
  %v1921 = vmax.f32 %v1403, 0.0
  %v1922 = vmax.f32 %v1406, 0.0
  %v1923 = vmax.f32 %v1411, 0.0
  %v1924 = vmax.f32 %v1414, 0.0
  %v1925 = vmax.f32 %v1419, 0.0
  %v1926 = vmax.f32 %v1422, 0.0
  %v1927 = vmax.f32 %v1427, 0.0
  %v1928 = vmax.f32 %v1430, 0.0
  %v1929 = vmax.f32 %v1435, 0.0
  %v1930 = vmax.f32 %v1438, 0.0
  %v1931 = vmax.f32 %v1443, 0.0
  %v1932 = vmax.f32 %v1446, 0.0
  %v1933 = vmax.f32 %v1451, 0.0
  %v1934 = vmax.f32 %v1454, 0.0
  %v1935 = vmax.f32 %v1459, 0.0
  %v1936 = vmax.f32 %v1462, 0.0
  %v1937 = vmax.f32 %v1467, 0.0
  %v1938 = vmax.f32 %v1470, 0.0
  %v1939 = vmax.f32 %v1475, 0.0
  %v1940 = vmax.f32 %v1478, 0.0
  %v1941 = vmax.f32 %v1483, 0.0
  %v1942 = vmax.f32 %v1486, 0.0
  %v1943 = vmax.f32 %v1491, 0.0
  %v1944 = vmax.f32 %v1494, 0.0
  %v1945 = vmax.f32 %v1499, 0.0
  %v1946 = vmax.f32 %v1502, 0.0
  %v1947 = vmax.f32 %v1507, 0.0
  %v1948 = vmax.f32 %v1510, 0.0
  %v1949 = vmax.f32 %v1515, 0.0
  %v1950 = vmax.f32 %v1518, 0.0
  %v1951 = vmax.f32 %v1523, 0.0
  %v1952 = vmax.f32 %v1526, 0.0
  %v1953 = vmax.f32 %v1531, 0.0
  %v1954 = vmax.f32 %v1534, 0.0
  %v1955 = vmax.f32 %v1539, 0.0
  %v1956 = vmax.f32 %v1542, 0.0
  %v1957 = vmax.f32 %v1547, 0.0
  %v1958 = vmax.f32 %v1550, 0.0
  %v1959 = vmax.f32 %v1555, 0.0
  %v1960 = vmax.f32 %v1558, 0.0
  %v1961 = vmax.f32 %v1563, 0.0
  %v1962 = vmax.f32 %v1566, 0.0
  %v1963 = vmax.f32 %v1571, 0.0
  %v1964 = vmax.f32 %v1574, 0.0
  %v1965 = vmax.f32 %v1579, 0.0
  %v1966 = vmax.f32 %v1582, 0.0
  %v1967 = vmax.f32 %v1587, 0.0
  %v1968 = vmax.f32 %v1590, 0.0
  %v1969 = vmax.f32 %v1595, 0.0
  %v1970 = vmax.f32 %v1598, 0.0
  %v1971 = vmax.f32 %v1603, 0.0
  %v1972 = vmax.f32 %v1606, 0.0
  %v1973 = vmax.f32 %v1611, 0.0
  %v1974 = vmax.f32 %v1614, 0.0
  %v1975 = vmax.f32 %v1619, 0.0
  %v1976 = vmax.f32 %v1622, 0.0
  %v1977 = vmax.f32 %v1627, 0.0
  %v1978 = vmax.f32 %v1630, 0.0
  %v1979 = vmax.f32 %v1635, 0.0
  %v1980 = vmax.f32 %v1638, 0.0
  %v1981 = vmax.f32 %v1643, 0.0
  %v1982 = vmax.f32 %v1646, 0.0
  %v1983 = vmax.f32 %v1651, 0.0
  %v1984 = vmax.f32 %v1654, 0.0
  %v1985 = vmax.f32 %v1659, 0.0
  %v1986 = vmax.f32 %v1662, 0.0
  %v1987 = vmax.f32 %v1667, 0.0
  %v1988 = vmax.f32 %v1670, 0.0
  %v1989 = vmax.f32 %v1675, 0.0
  %v1990 = vmax.f32 %v1678, 0.0
  %v1991 = vmax.f32 %v1683, 0.0
  %v1992 = vmax.f32 %v1686, 0.0
  %v1993 = vmax.f32 %v1691, 0.0
  %v1994 = vmax.f32 %v1694, 0.0
  %v1995 = vmax.f32 %v1699, 0.0
  %v1996 = vmax.f32 %v1702, 0.0
  %v1997 = vmax.f32 %v1707, 0.0
  %v1998 = vmax.f32 %v1710, 0.0
  %v1999 = vmax.f32 %v1715, 0.0
  %v2000 = vmax.f32 %v1718, 0.0
  %v2001 = vmax.f32 %v1723, 0.0
  %v2002 = vmax.f32 %v1726, 0.0
  %v2003 = vmax.f32 %v1731, 0.0
  %v2004 = vmax.f32 %v1734, 0.0
  %v2005 = vmax.f32 %v1739, 0.0
  %v2006 = vmax.f32 %v1742, 0.0
  %v2007 = vmax.f32 %v1747, 0.0
  %v2008 = vmax.f32 %v1750, 0.0
  %v2009 = vmax.f32 %v1755, 0.0
  %v2010 = vmax.f32 %v1758, 0.0
  %v2011 = vmax.f32 %v1763, 0.0
  %v2012 = vmax.f32 %v1766, 0.0
  %v2013 = vmax.f32 %v1771, 0.0
  %v2014 = vmax.f32 %v1774, 0.0
  %v2015 = vmax.f32 %v1779, 0.0
  %v2016 = vmax.f32 %v1782, 0.0
  %v2017 = vmax.f32 %v1787, 0.0
  %v2018 = vmax.f32 %v1790, 0.0
  %v2019 = vmax.f32 %v1795, 0.0
  %v2020 = vmax.f32 %v1798, 0.0
  %v2021 = vmax.f32 %v1803, 0.0
  %v2022 = vmax.f32 %v1806, 0.0
  %v2023 = vmax.f32 %v1811, 0.0
  %v2024 = vmax.f32 %v1814, 0.0
  %v2025 = vmax.f32 %v1819, 0.0
  %v2026 = vmax.f32 %v1822, 0.0
  %v2027 = vmax.f32 %v1827, 0.0
  %v2028 = vmax.f32 %v1830, 0.0
  %vm2029 = vcmask 257024
  %2030 = vst.msk [vmem:[#allocation2] sm:$0xf] %vm2029, 0
  %2031 = vst.msk [vmem:[#allocation2 + $0x4] sm:$0xf] %vm2029, 0
  %2032 = vst.msk [vmem:[#allocation2 + $0x8] sm:$0xf] %vm2029, 0
  %2033 = vst.msk [vmem:[#allocation2 + $0xc] sm:$0xf] %vm2029, 0
  %2034 = vst.msk [vmem:[#allocation2 + $0x10] sm:$0xf] %vm2029, 0
  %2035 = vst.msk [vmem:[#allocation2 + $0x14] sm:$0xf] %vm2029, 0
  %2036 = vst.msk [vmem:[#allocation2 + $0x18] sm:$0xf] %vm2029, 0
  %2037 = vst.msk [vmem:[#allocation2 + $0x1c] sm:$0xf] %vm2029, 0
  %2038 = vst.msk [vmem:[#allocation2 + $0x20] sm:$0xf] %vm2029, 0
  %2039 = vst.msk [vmem:[#allocation2 + $0x24] sm:$0xf] %vm2029, 0
  %2040 = vst.msk [vmem:[#allocation2 + $0x28] sm:$0xf] %vm2029, 0
  %2041 = vst.msk [vmem:[#allocation2 + $0x2c] sm:$0xf] %vm2029, 0
  %2042 = vst.msk [vmem:[#allocation2 + $0x30] sm:$0xf] %vm2029, 0
  %2043 = vst.msk [vmem:[#allocation2 + $0x34] sm:$0xf] %vm2029, 0
  %2044 = vst.msk [vmem:[#allocation2 + $0x38] sm:$0xf] %vm2029, 0
  %2045 = vst.msk [vmem:[#allocation2 + $0x3c] sm:$0xf] %vm2029, 0
  %2046 = vst.msk [vmem:[#allocation2 + $0x40] sm:$0xf] %vm2029, 0
  %2047 = vst.msk [vmem:[#allocation2 + $0x44] sm:$0xf] %vm2029, 0
  %2048 = vst.msk [vmem:[#allocation2 + $0x48] sm:$0xf] %vm2029, 0
  %2049 = vst.msk [vmem:[#allocation2 + $0x4c] sm:$0xf] %vm2029, 0
  %2050 = vst.msk [vmem:[#allocation2 + $0x50] sm:$0xf] %vm2029, 0
  %2051 = vst.msk [vmem:[#allocation2 + $0x54] sm:$0xf] %vm2029, 0
  %2052 = vst.msk [vmem:[#allocation2 + $0x58] sm:$0xf] %vm2029, 0
  %2053 = vst.msk [vmem:[#allocation2 + $0x5c] sm:$0xf] %vm2029, 0
  %2054 = vst.msk [vmem:[#allocation2 + $0x60] sm:$0xf] %vm2029, 0
  %2055 = vst.msk [vmem:[#allocation2 + $0x64] sm:$0xf] %vm2029, 0
  %2056 = vst.msk [vmem:[#allocation2 + $0x68] sm:$0xf] %vm2029, 0
  %2057 = vst.msk [vmem:[#allocation2 + $0x6c] sm:$0xf] %vm2029, 0
  %2058 = vst.msk [vmem:[#allocation2 + $0x70] sm:$0xf] %vm2029, 0
  %2059 = vst.msk [vmem:[#allocation2 + $0x74] sm:$0xf] %vm2029, 0
  %2060 = vst.msk [vmem:[#allocation2 + $0x78] sm:$0xf] %vm2029, 0
  %2061 = vst.msk [vmem:[#allocation2 + $0x7c] sm:$0xf] %vm2029, 0
  %2062 = vst.msk [vmem:[#allocation2 + $0x80] sm:$0xf] %vm2029, 0
  %2063 = vst.msk [vmem:[#allocation2 + $0x84] sm:$0xf] %vm2029, 0
  %2064 = vst.msk [vmem:[#allocation2 + $0x88] sm:$0xf] %vm2029, 0
  %2065 = vst.msk [vmem:[#allocation2 + $0x8c] sm:$0xf] %vm2029, 0
  %2066 = vst.msk [vmem:[#allocation2 + $0x90] sm:$0xf] %vm2029, 0
  %2067 = vst.msk [vmem:[#allocation2 + $0x94] sm:$0xf] %vm2029, 0
  %2068 = vst.msk [vmem:[#allocation2 + $0x98] sm:$0xf] %vm2029, 0
  %2069 = vst.msk [vmem:[#allocation2 + $0x9c] sm:$0xf] %vm2029, 0
  %2070 = vst.msk [vmem:[#allocation2 + $0xa0] sm:$0xf] %vm2029, 0
  %2071 = vst.msk [vmem:[#allocation2 + $0xa4] sm:$0xf] %vm2029, 0
  %2072 = vst.msk [vmem:[#allocation2 + $0xa8] sm:$0xf] %vm2029, 0
  %2073 = vst.msk [vmem:[#allocation2 + $0xac] sm:$0xf] %vm2029, 0
  %2074 = vst.msk [vmem:[#allocation2 + $0xb0] sm:$0xf] %vm2029, 0
  %2075 = vst.msk [vmem:[#allocation2 + $0xb4] sm:$0xf] %vm2029, 0
  %2076 = vst.msk [vmem:[#allocation2 + $0xb8] sm:$0xf] %vm2029, 0
  %2077 = vst.msk [vmem:[#allocation2 + $0xbc] sm:$0xf] %vm2029, 0
  %2078 = vst.msk [vmem:[#allocation2 + $0xc0] sm:$0xf] %vm2029, 0
  %2079 = vst.msk [vmem:[#allocation2 + $0xc4] sm:$0xf] %vm2029, 0
  %2080 = vst.msk [vmem:[#allocation2 + $0xc8] sm:$0xf] %vm2029, 0
  %2081 = vst.msk [vmem:[#allocation2 + $0xcc] sm:$0xf] %vm2029, 0
  %2082 = vst.msk [vmem:[#allocation2 + $0xd0] sm:$0xf] %vm2029, 0
  %2083 = vst.msk [vmem:[#allocation2 + $0xd4] sm:$0xf] %vm2029, 0
  %2084 = vst.msk [vmem:[#allocation2 + $0xd8] sm:$0xf] %vm2029, 0
  %2085 = vst.msk [vmem:[#allocation2 + $0xdc] sm:$0xf] %vm2029, 0
  %2086 = vst.msk [vmem:[#allocation2 + $0xe0] sm:$0xf] %vm2029, 0
  %2087 = vst.msk [vmem:[#allocation2 + $0xe4] sm:$0xf] %vm2029, 0
  %2088 = vst.msk [vmem:[#allocation2 + $0xe8] sm:$0xf] %vm2029, 0
  %2089 = vst.msk [vmem:[#allocation2 + $0xec] sm:$0xf] %vm2029, 0
  %2090 = vst.msk [vmem:[#allocation2 + $0xf0] sm:$0xf] %vm2029, 0
  %2091 = vst.msk [vmem:[#allocation2 + $0xf4] sm:$0xf] %vm2029, 0
  %2092 = vst.msk [vmem:[#allocation2 + $0xf8] sm:$0xf] %vm2029, 0
  %2093 = vst.msk [vmem:[#allocation2 + $0xfc] sm:$0xf] %vm2029, 0
  %2094 = vst.msk [vmem:[#allocation2 + $0x100] sm:$0xf] %vm2029, 0
  %2095 = vst.msk [vmem:[#allocation2 + $0x104] sm:$0xf] %vm2029, 0
  %2096 = vst.msk [vmem:[#allocation2 + $0x108] sm:$0xf] %vm2029, 0
  %2097 = vst.msk [vmem:[#allocation2 + $0x10c] sm:$0xf] %vm2029, 0
  %v2123 = vrot.slane %v1857, 4
  %v2124 = vrot.slane %v1858, 4
  %v2125 = vsel %vm1009, %v2123, %v2124
  %v2126 = vrot.slane %v1859, 4
  %v2127 = vsel %vm1009, %v2124, %v2126
  %v2128 = vrot.slane %v1860, 4
  %v2129 = vsel %vm1009, %v2126, %v2128
  %v2130 = vrot.slane %v1861, 4
  %v2131 = vsel %vm1009, %v2128, %v2130
  %v2132 = vrot.slane %v1862, 4
  %v2133 = vsel %vm1009, %v2130, %v2132
  %v2134 = vrot.slane %v1863, 4
  %v2135 = vsel %vm1009, %v2132, %v2134
  %v2136 = vrot.slane %v1864, 4
  %v2137 = vsel %vm1009, %v2134, %v2136
  %v2138 = vrot.slane %v1865, 4
  %v2139 = vsel %vm1009, %v2136, %v2138
  %v2140 = vrot.slane %v1866, 4
  %v2141 = vsel %vm1009, %v2138, %v2140
  %v2142 = vrot.slane %v1867, 4
  %v2143 = vsel %vm1009, %v2140, %v2142
  %v2144 = vrot.slane %v1868, 4
  %v2145 = vsel %vm1009, %v2142, %v2144
  %v2146 = vrot.slane %v1869, 4
  %v2147 = vsel %vm1009, %v2144, %v2146
  %v2148 = vrot.slane %v1870, 4
  %v2149 = vsel %vm1009, %v2146, %v2148
  %v2150 = vrot.slane %v1871, 4
  %v2151 = vsel %vm1009, %v2148, %v2150
  %v2152 = vrot.slane %v1872, 4
  %v2153 = vsel %vm1009, %v2150, %v2152
  %v2154 = vrot.slane %v1873, 4
  %v2155 = vsel %vm1009, %v2152, %v2154
  %v2156 = vrot.slane %v1874, 4
  %v2157 = vsel %vm1009, %v2154, %v2156
  %v2158 = vrot.slane %v1875, 4
  %v2159 = vsel %vm1009, %v2156, %v2158
  %v2160 = vrot.slane %v1876, 4
  %v2161 = vsel %vm1009, %v2158, %v2160
  %v2162 = vrot.slane %v1877, 4
  %v2163 = vsel %vm1009, %v2160, %v2162
  %v2164 = vrot.slane %v1878, 4
  %v2165 = vsel %vm1009, %v2162, %v2164
  %v2166 = vrot.slane %v1879, 4
  %v2167 = vsel %vm1009, %v2164, %v2166
  %v2168 = vrot.slane %v1880, 4
  %v2169 = vsel %vm1009, %v2166, %v2168
  %v2170 = vrot.slane %v1881, 4
  %v2171 = vsel %vm1009, %v2168, %v2170
  %v2197 = vmax.f32 %v1833, %v2125
  %v2198 = vmax.f32 %v1834, %v2127
  %v2199 = vmax.f32 %v1835, %v2129
  %v2200 = vmax.f32 %v1836, %v2131
  %v2201 = vmax.f32 %v1837, %v2133
  %v2202 = vmax.f32 %v1838, %v2135
  %v2203 = vmax.f32 %v1839, %v2137
  %v2204 = vmax.f32 %v1840, %v2139
  %v2205 = vmax.f32 %v1841, %v2141
  %v2206 = vmax.f32 %v1842, %v2143
  %v2207 = vmax.f32 %v1843, %v2145
  %v2208 = vmax.f32 %v1844, %v2147
  %v2209 = vmax.f32 %v1845, %v2149
  %v2210 = vmax.f32 %v1846, %v2151
  %v2211 = vmax.f32 %v1847, %v2153
  %v2212 = vmax.f32 %v1848, %v2155
  %v2213 = vmax.f32 %v1849, %v2157
  %v2214 = vmax.f32 %v1850, %v2159
  %v2215 = vmax.f32 %v1851, %v2161
  %v2216 = vmax.f32 %v1852, %v2163
  %v2217 = vmax.f32 %v1853, %v2165
  %v2218 = vmax.f32 %v1854, %v2167
  %v2219 = vmax.f32 %v1855, %v2169
  %v2220 = vmax.f32 %v1856, %v2171
  %v2221 = vmax.f32 %v1857, %v2170
  %v2247 = vrot.slane %v1906, 4
  %v2248 = vrot.slane %v1907, 4
  %v2249 = vsel %vm1009, %v2247, %v2248
  %v2250 = vrot.slane %v1908, 4
  %v2251 = vsel %vm1009, %v2248, %v2250
  %v2252 = vrot.slane %v1909, 4
  %v2253 = vsel %vm1009, %v2250, %v2252
  %v2254 = vrot.slane %v1910, 4
  %v2255 = vsel %vm1009, %v2252, %v2254
  %v2256 = vrot.slane %v1911, 4
  %v2257 = vsel %vm1009, %v2254, %v2256
  %v2258 = vrot.slane %v1912, 4
  %v2259 = vsel %vm1009, %v2256, %v2258
  %v2260 = vrot.slane %v1913, 4
  %v2261 = vsel %vm1009, %v2258, %v2260
  %v2262 = vrot.slane %v1914, 4
  %v2263 = vsel %vm1009, %v2260, %v2262
  %v2264 = vrot.slane %v1915, 4
  %v2265 = vsel %vm1009, %v2262, %v2264
  %v2266 = vrot.slane %v1916, 4
  %v2267 = vsel %vm1009, %v2264, %v2266
  %v2268 = vrot.slane %v1917, 4
  %v2269 = vsel %vm1009, %v2266, %v2268
  %v2270 = vrot.slane %v1918, 4
  %v2271 = vsel %vm1009, %v2268, %v2270
  %v2272 = vrot.slane %v1919, 4
  %v2273 = vsel %vm1009, %v2270, %v2272
  %v2274 = vrot.slane %v1920, 4
  %v2275 = vsel %vm1009, %v2272, %v2274
  %v2276 = vrot.slane %v1921, 4
  %v2277 = vsel %vm1009, %v2274, %v2276
  %v2278 = vrot.slane %v1922, 4
  %v2279 = vsel %vm1009, %v2276, %v2278
  %v2280 = vrot.slane %v1923, 4
  %v2281 = vsel %vm1009, %v2278, %v2280
  %v2282 = vrot.slane %v1924, 4
  %v2283 = vsel %vm1009, %v2280, %v2282
  %v2284 = vrot.slane %v1925, 4
  %v2285 = vsel %vm1009, %v2282, %v2284
  %v2286 = vrot.slane %v1926, 4
  %v2287 = vsel %vm1009, %v2284, %v2286
  %v2288 = vrot.slane %v1927, 4
  %v2289 = vsel %vm1009, %v2286, %v2288
  %v2290 = vrot.slane %v1928, 4
  %v2291 = vsel %vm1009, %v2288, %v2290
  %v2292 = vrot.slane %v1929, 4
  %v2293 = vsel %vm1009, %v2290, %v2292
  %v2294 = vrot.slane %v1930, 4
  %v2295 = vsel %vm1009, %v2292, %v2294
  %v2321 = vmax.f32 %v1882, %v2249
  %v2322 = vmax.f32 %v1883, %v2251
  %v2323 = vmax.f32 %v1884, %v2253
  %v2324 = vmax.f32 %v1885, %v2255
  %v2325 = vmax.f32 %v1886, %v2257
  %v2326 = vmax.f32 %v1887, %v2259
  %v2327 = vmax.f32 %v1888, %v2261
  %v2328 = vmax.f32 %v1889, %v2263
  %v2329 = vmax.f32 %v1890, %v2265
  %v2330 = vmax.f32 %v1891, %v2267
  %v2331 = vmax.f32 %v1892, %v2269
  %v2332 = vmax.f32 %v1893, %v2271
  %v2333 = vmax.f32 %v1894, %v2273
  %v2334 = vmax.f32 %v1895, %v2275
  %v2335 = vmax.f32 %v1896, %v2277
  %v2336 = vmax.f32 %v1897, %v2279
  %v2337 = vmax.f32 %v1898, %v2281
  %v2338 = vmax.f32 %v1899, %v2283
  %v2339 = vmax.f32 %v1900, %v2285
  %v2340 = vmax.f32 %v1901, %v2287
  %v2341 = vmax.f32 %v1902, %v2289
  %v2342 = vmax.f32 %v1903, %v2291
  %v2343 = vmax.f32 %v1904, %v2293
  %v2344 = vmax.f32 %v1905, %v2295
  %v2345 = vmax.f32 %v1906, %v2294
  %v2346 = vmax.f32 %v2197, %v2321
  %v2347 = vmax.f32 %v2198, %v2322
  %v2348 = vmax.f32 %v2199, %v2323
  %v2349 = vmax.f32 %v2200, %v2324
  %v2350 = vmax.f32 %v2201, %v2325
  %v2351 = vmax.f32 %v2202, %v2326
  %v2352 = vmax.f32 %v2203, %v2327
  %v2353 = vmax.f32 %v2204, %v2328
  %v2354 = vmax.f32 %v2205, %v2329
  %v2355 = vmax.f32 %v2206, %v2330
  %v2356 = vmax.f32 %v2207, %v2331
  %v2357 = vmax.f32 %v2208, %v2332
  %v2358 = vmax.f32 %v2209, %v2333
  %v2359 = vmax.f32 %v2210, %v2334
  %v2360 = vmax.f32 %v2211, %v2335
  %v2361 = vmax.f32 %v2212, %v2336
  %v2362 = vmax.f32 %v2213, %v2337
  %v2363 = vmax.f32 %v2214, %v2338
  %v2364 = vmax.f32 %v2215, %v2339
  %v2365 = vmax.f32 %v2216, %v2340
  %v2366 = vmax.f32 %v2217, %v2341
  %v2367 = vmax.f32 %v2218, %v2342
  %v2368 = vmax.f32 %v2219, %v2343
  %v2369 = vmax.f32 %v2220, %v2344
  %v2370 = vmax.f32 %v2221, %v2345
  %v2371 = vpack.c.bf16 %v2347, %v2346
  %v2372 = vpack.c.bf16 %v2349, %v2348
  %v2373 = vpack.c.bf16 %v2351, %v2350
  %v2374 = vpack.c.bf16 %v2353, %v2352
  %v2375 = vpack.c.bf16 %v2355, %v2354
  %v2376 = vpack.c.bf16 %v2357, %v2356
  %v2377 = vpack.c.bf16 %v2359, %v2358
  %v2378 = vpack.c.bf16 %v2361, %v2360
  %v2379 = vpack.c.bf16 %v2363, %v2362
  %v2380 = vpack.c.bf16 %v2365, %v2364
  %v2381 = vpack.c.bf16 %v2367, %v2366
  %v2382 = vpack.c.bf16 %v2369, %v2368
  %v2383 = vpack.c.bf16 %v2370, %v2370
  %v2388 = vunpack.c.l.b16 %v2371
  %v2389 = vunpack.c.h.b16 %v2371
  %v2390 = vunpack.c.l.b16 %v2372
  %v2391 = vunpack.c.h.b16 %v2372
  %v2392 = vunpack.c.l.b16 %v2373
  %v2393 = vunpack.c.h.b16 %v2373
  %v2394 = vunpack.c.l.b16 %v2374
  %v2395 = vpack.c.b16 %v2388, %v2388
  %v2396 = vpack.c.b16 %v2389, %v2389
  %v2397 = vpack.c.b16 %v2390, %v2390
  %v2398 = vpack.c.b16 %v2391, %v2391
  %v2399 = vpack.c.b16 %v2392, %v2392
  %v2400 = vpack.c.b16 %v2393, %v2393
  %v2401 = vpack.c.b16 %v2394, %v2394
  %2409 = vst.msk [vmem:[#allocation2 + $0x8] sm:$0xf] %vm2029, %v2395
  %2410 = vst.msk [vmem:[#allocation2 + $0xc] sm:$0xf] %vm2029, %v2396
  %2411 = vst.msk [vmem:[#allocation2 + $0x10] sm:$0xf] %vm2029, %v2397
  %2412 = vst.msk [vmem:[#allocation2 + $0x14] sm:$0xf] %vm2029, %v2398
  %2413 = vst.msk [vmem:[#allocation2 + $0x18] sm:$0xf] %vm2029, %v2399
  %2414 = vst.msk [vmem:[#allocation2 + $0x1c] sm:$0xf] %vm2029, %v2400
  %vm2415 = vcmask 253952
  %vm2416 = vsmask.f32 256
  %vm2417 = vmand %vm2415, %vm2416
  %v2418 = vld [vmem:[#allocation2 + $0x20] sm:$0x1]
  %v2419 = vsel %vm2417, %v2401, %v2418
  %2420 = vst [vmem:[#allocation2 + $0x20] sm:$0x1] %v2419
  %v2424 = vunpack.c.h.b16 %v2374
  %v2425 = vunpack.c.l.b16 %v2375
  %v2426 = vunpack.c.h.b16 %v2375
  %v2427 = vunpack.c.l.b16 %v2376
  %v2428 = vunpack.c.h.b16 %v2376
  %v2429 = vunpack.c.l.b16 %v2377
  %v2430 = vpack.c.b16 %v2424, %v2424
  %v2431 = vpack.c.b16 %v2425, %v2425
  %v2432 = vpack.c.b16 %v2426, %v2426
  %v2433 = vpack.c.b16 %v2427, %v2427
  %v2434 = vpack.c.b16 %v2428, %v2428
  %v2435 = vpack.c.b16 %v2429, %v2429
  %vm2436 = vsmask.f32 3328
  %vm2437 = vsmask.f32 7440
  %vm2438 = vmor %vm2436, %vm2437
  %v2440 = vshrl.u32 %v2401, 16
  %v2442 = vrot.slane %v2440, 4
  %v2443 = vshll.u32 %v2401, 16
  %v2445 = vrot.slane %v2443, 5
  %v2446 = vor.u32 %v2442, %v2445
  %v2447 = vrot.slane %v2446, 4
  %v2449 = vshll.u32 %v2430, 16
  %v2451 = vrot.slane %v2449, 5
  %v2452 = vsel %vm2438, %v2447, %v2451
  %v2453 = vshrl.u32 %v2430, 16
  %v2455 = vrot.slane %v2453, 4
  %v2456 = vor.u32 %v2455, %v2451
  %v2457 = vrot.slane %v2456, 4
  %v2459 = vshll.u32 %v2431, 16
  %v2461 = vrot.slane %v2459, 5
  %v2462 = vsel %vm2438, %v2457, %v2461
  %v2463 = vshrl.u32 %v2431, 16
  %v2465 = vrot.slane %v2463, 4
  %v2466 = vor.u32 %v2465, %v2461
  %v2467 = vrot.slane %v2466, 4
  %v2469 = vshll.u32 %v2432, 16
  %v2471 = vrot.slane %v2469, 5
  %v2472 = vsel %vm2438, %v2467, %v2471
  %v2473 = vshrl.u32 %v2432, 16
  %v2475 = vrot.slane %v2473, 4
  %v2476 = vor.u32 %v2475, %v2471
  %v2477 = vrot.slane %v2476, 4
  %v2479 = vshll.u32 %v2433, 16
  %v2481 = vrot.slane %v2479, 5
  %v2482 = vsel %vm2438, %v2477, %v2481
  %v2483 = vshrl.u32 %v2433, 16
  %v2485 = vrot.slane %v2483, 4
  %v2486 = vor.u32 %v2485, %v2481
  %v2487 = vrot.slane %v2486, 4
  %v2489 = vshll.u32 %v2434, 16
  %v2491 = vrot.slane %v2489, 5
  %v2492 = vsel %vm2438, %v2487, %v2491
  %v2493 = vshrl.u32 %v2434, 16
  %v2495 = vrot.slane %v2493, 4
  %v2496 = vor.u32 %v2495, %v2491
  %v2497 = vrot.slane %v2496, 4
  %v2499 = vshll.u32 %v2435, 16
  %v2501 = vrot.slane %v2499, 5
  %v2502 = vsel %vm2438, %v2497, %v2501
  %v2503 = vshrl.u32 %v2435, 16
  %v2505 = vrot.slane %v2503, 4
  %v2506 = vrot.slane %v2505, 4
  %2514 = vst.msk [vmem:[#allocation2 + $0x48] sm:$0xf] %vm2029, %v2452
  %2515 = vst.msk [vmem:[#allocation2 + $0x4c] sm:$0xf] %vm2029, %v2462
  %2516 = vst.msk [vmem:[#allocation2 + $0x50] sm:$0xf] %vm2029, %v2472
  %2517 = vst.msk [vmem:[#allocation2 + $0x54] sm:$0xf] %vm2029, %v2482
  %2518 = vst.msk [vmem:[#allocation2 + $0x58] sm:$0xf] %vm2029, %v2492
  %2519 = vst.msk [vmem:[#allocation2 + $0x5c] sm:$0xf] %vm2029, %v2502
  %v2520 = vld [vmem:[#allocation2 + $0x60] sm:$0x1]
  %v2521 = vsel %vm2417, %v2506, %v2520
  %2522 = vst [vmem:[#allocation2 + $0x60] sm:$0x1] %v2521
  %v2526 = vunpack.c.h.b16 %v2377
  %v2527 = vunpack.c.l.b16 %v2378
  %v2528 = vunpack.c.h.b16 %v2378
  %v2529 = vunpack.c.l.b16 %v2379
  %v2530 = vunpack.c.h.b16 %v2379
  %v2531 = vunpack.c.l.b16 %v2380
  %v2532 = vpack.c.b16 %v2526, %v2526
  %v2533 = vpack.c.b16 %v2527, %v2527
  %v2534 = vpack.c.b16 %v2528, %v2528
  %v2535 = vpack.c.b16 %v2529, %v2529
  %v2536 = vpack.c.b16 %v2530, %v2530
  %v2537 = vpack.c.b16 %v2531, %v2531
  %vm2538 = vcmask 1042432
  %vm2539 = vcmask 1046532
  %vm2540 = vmor %vm2538, %vm2539
  %v2541 = vrot.slane %v2435, 5
  %v2542 = vrot.slane %v2541, 4
  %v2543 = vrot.slane %v2532, 5
  %v2544 = vsel %vm2540, %v2542, %v2543
  %v2545 = vrot.slane %v2543, 4
  %v2546 = vrot.slane %v2533, 5
  %v2547 = vsel %vm2540, %v2545, %v2546
  %v2548 = vrot.slane %v2546, 4
  %v2549 = vrot.slane %v2534, 5
  %v2550 = vsel %vm2540, %v2548, %v2549
  %v2551 = vrot.slane %v2549, 4
  %v2552 = vrot.slane %v2535, 5
  %v2553 = vsel %vm2540, %v2551, %v2552
  %v2554 = vrot.slane %v2552, 4
  %v2555 = vrot.slane %v2536, 5
  %v2556 = vsel %vm2540, %v2554, %v2555
  %v2557 = vrot.slane %v2555, 4
  %v2558 = vrot.slane %v2537, 5
  %v2559 = vsel %vm2540, %v2557, %v2558
  %v2560 = vrot.slane %v2558, 4
  %2568 = vst.msk [vmem:[#allocation2 + $0x88] sm:$0xf] %vm2029, %v2544
  %2569 = vst.msk [vmem:[#allocation2 + $0x8c] sm:$0xf] %vm2029, %v2547
  %2570 = vst.msk [vmem:[#allocation2 + $0x90] sm:$0xf] %vm2029, %v2550
  %2571 = vst.msk [vmem:[#allocation2 + $0x94] sm:$0xf] %vm2029, %v2553
  %2572 = vst.msk [vmem:[#allocation2 + $0x98] sm:$0xf] %vm2029, %v2556
  %2573 = vst.msk [vmem:[#allocation2 + $0x9c] sm:$0xf] %vm2029, %v2559
  %v2574 = vld [vmem:[#allocation2 + $0xa0] sm:$0x1]
  %v2575 = vsel %vm2417, %v2560, %v2574
  %2576 = vst [vmem:[#allocation2 + $0xa0] sm:$0x1] %v2575
  %v2580 = vunpack.c.h.b16 %v2380
  %v2581 = vunpack.c.l.b16 %v2381
  %v2582 = vunpack.c.h.b16 %v2381
  %v2583 = vunpack.c.l.b16 %v2382
  %v2584 = vunpack.c.h.b16 %v2382
  %v2585 = vunpack.c.l.b16 %v2383
  %v2586 = vpack.c.b16 %v2580, %v2580
  %v2587 = vpack.c.b16 %v2581, %v2581
  %v2588 = vpack.c.b16 %v2582, %v2582
  %v2589 = vpack.c.b16 %v2583, %v2583
  %v2590 = vpack.c.b16 %v2584, %v2584
  %v2591 = vpack.c.b16 %v2585, %v2585
  %vm2592 = vsmask.f32 2304
  %vm2593 = vsmask.f32 6416
  %vm2594 = vmor %vm2592, %vm2593
  %v2596 = vshrl.u32 %v2537, 16
  %v2598 = vrot.slane %v2596, 5
  %v2599 = vshll.u32 %v2537, 16
  %v2601 = vrot.slane %v2599, 6
  %v2602 = vor.u32 %v2598, %v2601
  %v2603 = vrot.slane %v2602, 4
  %v2605 = vshrl.u32 %v2586, 16
  %v2607 = vrot.slane %v2605, 5
  %v2608 = vshll.u32 %v2586, 16
  %v2610 = vrot.slane %v2608, 6
  %v2611 = vor.u32 %v2607, %v2610
  %v2612 = vsel %vm2594, %v2603, %v2611
  %v2613 = vrot.slane %v2611, 4
  %v2615 = vshrl.u32 %v2587, 16
  %v2617 = vrot.slane %v2615, 5
  %v2618 = vshll.u32 %v2587, 16
  %v2620 = vrot.slane %v2618, 6
  %v2621 = vor.u32 %v2617, %v2620
  %v2622 = vsel %vm2594, %v2613, %v2621
  %v2623 = vrot.slane %v2621, 4
  %v2625 = vshrl.u32 %v2588, 16
  %v2627 = vrot.slane %v2625, 5
  %v2628 = vshll.u32 %v2588, 16
  %v2630 = vrot.slane %v2628, 6
  %v2631 = vor.u32 %v2627, %v2630
  %v2632 = vsel %vm2594, %v2623, %v2631
  %v2633 = vrot.slane %v2631, 4
  %v2635 = vshrl.u32 %v2589, 16
  %v2637 = vrot.slane %v2635, 5
  %v2638 = vshll.u32 %v2589, 16
  %v2640 = vrot.slane %v2638, 6
  %v2641 = vor.u32 %v2637, %v2640
  %v2642 = vsel %vm2594, %v2633, %v2641
  %v2643 = vrot.slane %v2641, 4
  %v2645 = vshrl.u32 %v2590, 16
  %v2647 = vrot.slane %v2645, 5
  %v2648 = vshll.u32 %v2590, 16
  %v2650 = vrot.slane %v2648, 6
  %v2651 = vor.u32 %v2647, %v2650
  %v2652 = vsel %vm2594, %v2643, %v2651
  %v2653 = vrot.slane %v2651, 4
  %v2655 = vshrl.u32 %v2591, 16
  %v2657 = vrot.slane %v2655, 5
  %v2658 = vshll.u32 %v2591, 16
  %v2660 = vrot.slane %v2658, 6
  %v2661 = vor.u32 %v2657, %v2660
  %v2662 = vsel %vm2594, %v2653, %v2661
  %v2663 = vrot.slane %v2657, 4
  %2671 = vst.msk [vmem:[#allocation2 + $0xc8] sm:$0xf] %vm2029, %v2612
  %2672 = vst.msk [vmem:[#allocation2 + $0xcc] sm:$0xf] %vm2029, %v2622
  %2673 = vst.msk [vmem:[#allocation2 + $0xd0] sm:$0xf] %vm2029, %v2632
  %2674 = vst.msk [vmem:[#allocation2 + $0xd4] sm:$0xf] %vm2029, %v2642
  %2675 = vst.msk [vmem:[#allocation2 + $0xd8] sm:$0xf] %vm2029, %v2652
  %2676 = vst.msk [vmem:[#allocation2 + $0xdc] sm:$0xf] %vm2029, %v2662
  %v2677 = vld [vmem:[#allocation2 + $0xe0] sm:$0x1]
  %v2678 = vsel %vm2417, %v2663, %v2677
  %2679 = vst [vmem:[#allocation2 + $0xe0] sm:$0x1] %v2678
  %v2705 = vrot.slane %v1955, 4
  %v2706 = vrot.slane %v1956, 4
  %v2707 = vsel %vm1009, %v2705, %v2706
  %v2708 = vrot.slane %v1957, 4
  %v2709 = vsel %vm1009, %v2706, %v2708
  %v2710 = vrot.slane %v1958, 4
  %v2711 = vsel %vm1009, %v2708, %v2710
  %v2712 = vrot.slane %v1959, 4
  %v2713 = vsel %vm1009, %v2710, %v2712
  %v2714 = vrot.slane %v1960, 4
  %v2715 = vsel %vm1009, %v2712, %v2714
  %v2716 = vrot.slane %v1961, 4
  %v2717 = vsel %vm1009, %v2714, %v2716
  %v2718 = vrot.slane %v1962, 4
  %v2719 = vsel %vm1009, %v2716, %v2718
  %v2720 = vrot.slane %v1963, 4
  %v2721 = vsel %vm1009, %v2718, %v2720
  %v2722 = vrot.slane %v1964, 4
  %v2723 = vsel %vm1009, %v2720, %v2722
  %v2724 = vrot.slane %v1965, 4
  %v2725 = vsel %vm1009, %v2722, %v2724
  %v2726 = vrot.slane %v1966, 4
  %v2727 = vsel %vm1009, %v2724, %v2726
  %v2728 = vrot.slane %v1967, 4
  %v2729 = vsel %vm1009, %v2726, %v2728
  %v2730 = vrot.slane %v1968, 4
  %v2731 = vsel %vm1009, %v2728, %v2730
  %v2732 = vrot.slane %v1969, 4
  %v2733 = vsel %vm1009, %v2730, %v2732
  %v2734 = vrot.slane %v1970, 4
  %v2735 = vsel %vm1009, %v2732, %v2734
  %v2736 = vrot.slane %v1971, 4
  %v2737 = vsel %vm1009, %v2734, %v2736
  %v2738 = vrot.slane %v1972, 4
  %v2739 = vsel %vm1009, %v2736, %v2738
  %v2740 = vrot.slane %v1973, 4
  %v2741 = vsel %vm1009, %v2738, %v2740
  %v2742 = vrot.slane %v1974, 4
  %v2743 = vsel %vm1009, %v2740, %v2742
  %v2744 = vrot.slane %v1975, 4
  %v2745 = vsel %vm1009, %v2742, %v2744
  %v2746 = vrot.slane %v1976, 4
  %v2747 = vsel %vm1009, %v2744, %v2746
  %v2748 = vrot.slane %v1977, 4
  %v2749 = vsel %vm1009, %v2746, %v2748
  %v2750 = vrot.slane %v1978, 4
  %v2751 = vsel %vm1009, %v2748, %v2750
  %v2752 = vrot.slane %v1979, 4
  %v2753 = vsel %vm1009, %v2750, %v2752
  %v2779 = vmax.f32 %v1931, %v2707
  %v2780 = vmax.f32 %v1932, %v2709
  %v2781 = vmax.f32 %v1933, %v2711
  %v2782 = vmax.f32 %v1934, %v2713
  %v2783 = vmax.f32 %v1935, %v2715
  %v2784 = vmax.f32 %v1936, %v2717
  %v2785 = vmax.f32 %v1937, %v2719
  %v2786 = vmax.f32 %v1938, %v2721
  %v2787 = vmax.f32 %v1939, %v2723
  %v2788 = vmax.f32 %v1940, %v2725
  %v2789 = vmax.f32 %v1941, %v2727
  %v2790 = vmax.f32 %v1942, %v2729
  %v2791 = vmax.f32 %v1943, %v2731
  %v2792 = vmax.f32 %v1944, %v2733
  %v2793 = vmax.f32 %v1945, %v2735
  %v2794 = vmax.f32 %v1946, %v2737
  %v2795 = vmax.f32 %v1947, %v2739
  %v2796 = vmax.f32 %v1948, %v2741
  %v2797 = vmax.f32 %v1949, %v2743
  %v2798 = vmax.f32 %v1950, %v2745
  %v2799 = vmax.f32 %v1951, %v2747
  %v2800 = vmax.f32 %v1952, %v2749
  %v2801 = vmax.f32 %v1953, %v2751
  %v2802 = vmax.f32 %v1954, %v2753
  %v2803 = vmax.f32 %v1955, %v2752
  %v2829 = vrot.slane %v2004, 4
  %v2830 = vrot.slane %v2005, 4
  %v2831 = vsel %vm1009, %v2829, %v2830
  %v2832 = vrot.slane %v2006, 4
  %v2833 = vsel %vm1009, %v2830, %v2832
  %v2834 = vrot.slane %v2007, 4
  %v2835 = vsel %vm1009, %v2832, %v2834
  %v2836 = vrot.slane %v2008, 4
  %v2837 = vsel %vm1009, %v2834, %v2836
  %v2838 = vrot.slane %v2009, 4
  %v2839 = vsel %vm1009, %v2836, %v2838
  %v2840 = vrot.slane %v2010, 4
  %v2841 = vsel %vm1009, %v2838, %v2840
  %v2842 = vrot.slane %v2011, 4
  %v2843 = vsel %vm1009, %v2840, %v2842
  %v2844 = vrot.slane %v2012, 4
  %v2845 = vsel %vm1009, %v2842, %v2844
  %v2846 = vrot.slane %v2013, 4
  %v2847 = vsel %vm1009, %v2844, %v2846
  %v2848 = vrot.slane %v2014, 4
  %v2849 = vsel %vm1009, %v2846, %v2848
  %v2850 = vrot.slane %v2015, 4
  %v2851 = vsel %vm1009, %v2848, %v2850
  %v2852 = vrot.slane %v2016, 4
  %v2853 = vsel %vm1009, %v2850, %v2852
  %v2854 = vrot.slane %v2017, 4
  %v2855 = vsel %vm1009, %v2852, %v2854
  %v2856 = vrot.slane %v2018, 4
  %v2857 = vsel %vm1009, %v2854, %v2856
  %v2858 = vrot.slane %v2019, 4
  %v2859 = vsel %vm1009, %v2856, %v2858
  %v2860 = vrot.slane %v2020, 4
  %v2861 = vsel %vm1009, %v2858, %v2860
  %v2862 = vrot.slane %v2021, 4
  %v2863 = vsel %vm1009, %v2860, %v2862
  %v2864 = vrot.slane %v2022, 4
  %v2865 = vsel %vm1009, %v2862, %v2864
  %v2866 = vrot.slane %v2023, 4
  %v2867 = vsel %vm1009, %v2864, %v2866
  %v2868 = vrot.slane %v2024, 4
  %v2869 = vsel %vm1009, %v2866, %v2868
  %v2870 = vrot.slane %v2025, 4
  %v2871 = vsel %vm1009, %v2868, %v2870
  %v2872 = vrot.slane %v2026, 4
  %v2873 = vsel %vm1009, %v2870, %v2872
  %v2874 = vrot.slane %v2027, 4
  %v2875 = vsel %vm1009, %v2872, %v2874
  %v2876 = vrot.slane %v2028, 4
  %v2877 = vsel %vm1009, %v2874, %v2876
  %v2903 = vmax.f32 %v1980, %v2831
  %v2904 = vmax.f32 %v1981, %v2833
  %v2905 = vmax.f32 %v1982, %v2835
  %v2906 = vmax.f32 %v1983, %v2837
  %v2907 = vmax.f32 %v1984, %v2839
  %v2908 = vmax.f32 %v1985, %v2841
  %v2909 = vmax.f32 %v1986, %v2843
  %v2910 = vmax.f32 %v1987, %v2845
  %v2911 = vmax.f32 %v1988, %v2847
  %v2912 = vmax.f32 %v1989, %v2849
  %v2913 = vmax.f32 %v1990, %v2851
  %v2914 = vmax.f32 %v1991, %v2853
  %v2915 = vmax.f32 %v1992, %v2855
  %v2916 = vmax.f32 %v1993, %v2857
  %v2917 = vmax.f32 %v1994, %v2859
  %v2918 = vmax.f32 %v1995, %v2861
  %v2919 = vmax.f32 %v1996, %v2863
  %v2920 = vmax.f32 %v1997, %v2865
  %v2921 = vmax.f32 %v1998, %v2867
  %v2922 = vmax.f32 %v1999, %v2869
  %v2923 = vmax.f32 %v2000, %v2871
  %v2924 = vmax.f32 %v2001, %v2873
  %v2925 = vmax.f32 %v2002, %v2875
  %v2926 = vmax.f32 %v2003, %v2877
  %v2927 = vmax.f32 %v2004, %v2876
  %v2928 = vmax.f32 %v2779, %v2903
  %v2929 = vmax.f32 %v2780, %v2904
  %v2930 = vmax.f32 %v2781, %v2905
  %v2931 = vmax.f32 %v2782, %v2906
  %v2932 = vmax.f32 %v2783, %v2907
  %v2933 = vmax.f32 %v2784, %v2908
  %v2934 = vmax.f32 %v2785, %v2909
  %v2935 = vmax.f32 %v2786, %v2910
  %v2936 = vmax.f32 %v2787, %v2911
  %v2937 = vmax.f32 %v2788, %v2912
  %v2938 = vmax.f32 %v2789, %v2913
  %v2939 = vmax.f32 %v2790, %v2914
  %v2940 = vmax.f32 %v2791, %v2915
  %v2941 = vmax.f32 %v2792, %v2916
  %v2942 = vmax.f32 %v2793, %v2917
  %v2943 = vmax.f32 %v2794, %v2918
  %v2944 = vmax.f32 %v2795, %v2919
  %v2945 = vmax.f32 %v2796, %v2920
  %v2946 = vmax.f32 %v2797, %v2921
  %v2947 = vmax.f32 %v2798, %v2922
  %v2948 = vmax.f32 %v2799, %v2923
  %v2949 = vmax.f32 %v2800, %v2924
  %v2950 = vmax.f32 %v2801, %v2925
  %v2951 = vmax.f32 %v2802, %v2926
  %v2952 = vmax.f32 %v2803, %v2927
  %v2953 = vpack.c.bf16 %v2929, %v2928
  %v2954 = vpack.c.bf16 %v2931, %v2930
  %v2955 = vpack.c.bf16 %v2933, %v2932
  %v2956 = vpack.c.bf16 %v2935, %v2934
  %v2957 = vpack.c.bf16 %v2937, %v2936
  %v2958 = vpack.c.bf16 %v2939, %v2938
  %v2959 = vpack.c.bf16 %v2941, %v2940
  %v2960 = vpack.c.bf16 %v2943, %v2942
  %v2961 = vpack.c.bf16 %v2945, %v2944
  %v2962 = vpack.c.bf16 %v2947, %v2946
  %v2963 = vpack.c.bf16 %v2949, %v2948
  %v2964 = vpack.c.bf16 %v2951, %v2950
  %v2965 = vpack.c.bf16 %v2952, %v2952
  %v2970 = vunpack.c.l.b16 %v2953
  %v2971 = vunpack.c.h.b16 %v2953
  %v2972 = vunpack.c.l.b16 %v2954
  %v2973 = vunpack.c.h.b16 %v2954
  %v2974 = vunpack.c.l.b16 %v2955
  %v2975 = vunpack.c.h.b16 %v2955
  %v2976 = vunpack.c.l.b16 %v2956
  %v2977 = vpack.c.b16 %v2970, %v2970
  %v2978 = vpack.c.b16 %v2971, %v2971
  %v2979 = vpack.c.b16 %v2972, %v2972
  %v2980 = vpack.c.b16 %v2973, %v2973
  %v2981 = vpack.c.b16 %v2974, %v2974
  %v2982 = vpack.c.b16 %v2975, %v2975
  %v2983 = vpack.c.b16 %v2976, %v2976
  %2991 = vst.msk [vmem:[#allocation2 + $0x28] sm:$0xf] %vm2029, %v2977
  %2992 = vst.msk [vmem:[#allocation2 + $0x2c] sm:$0xf] %vm2029, %v2978
  %2993 = vst.msk [vmem:[#allocation2 + $0x30] sm:$0xf] %vm2029, %v2979
  %2994 = vst.msk [vmem:[#allocation2 + $0x34] sm:$0xf] %vm2029, %v2980
  %2995 = vst.msk [vmem:[#allocation2 + $0x38] sm:$0xf] %vm2029, %v2981
  %2996 = vst.msk [vmem:[#allocation2 + $0x3c] sm:$0xf] %vm2029, %v2982
  %v2997 = vld [vmem:[#allocation2 + $0x40] sm:$0x1]
  %v2998 = vsel %vm2417, %v2983, %v2997
  %2999 = vst [vmem:[#allocation2 + $0x40] sm:$0x1] %v2998
  %v3003 = vunpack.c.h.b16 %v2956
  %v3004 = vunpack.c.l.b16 %v2957
  %v3005 = vunpack.c.h.b16 %v2957
  %v3006 = vunpack.c.l.b16 %v2958
  %v3007 = vunpack.c.h.b16 %v2958
  %v3008 = vunpack.c.l.b16 %v2959
  %v3009 = vpack.c.b16 %v3003, %v3003
  %v3010 = vpack.c.b16 %v3004, %v3004
  %v3011 = vpack.c.b16 %v3005, %v3005
  %v3012 = vpack.c.b16 %v3006, %v3006
  %v3013 = vpack.c.b16 %v3007, %v3007
  %v3014 = vpack.c.b16 %v3008, %v3008
  %v3016 = vshrl.u32 %v2983, 16
  %v3018 = vrot.slane %v3016, 4
  %v3019 = vshll.u32 %v2983, 16
  %v3021 = vrot.slane %v3019, 5
  %v3022 = vor.u32 %v3018, %v3021
  %v3023 = vrot.slane %v3022, 4
  %v3025 = vshll.u32 %v3009, 16
  %v3027 = vrot.slane %v3025, 5
  %v3028 = vsel %vm2438, %v3023, %v3027
  %v3029 = vshrl.u32 %v3009, 16
  %v3031 = vrot.slane %v3029, 4
  %v3032 = vor.u32 %v3031, %v3027
  %v3033 = vrot.slane %v3032, 4
  %v3035 = vshll.u32 %v3010, 16
  %v3037 = vrot.slane %v3035, 5
  %v3038 = vsel %vm2438, %v3033, %v3037
  %v3039 = vshrl.u32 %v3010, 16
  %v3041 = vrot.slane %v3039, 4
  %v3042 = vor.u32 %v3041, %v3037
  %v3043 = vrot.slane %v3042, 4
  %v3045 = vshll.u32 %v3011, 16
  %v3047 = vrot.slane %v3045, 5
  %v3048 = vsel %vm2438, %v3043, %v3047
  %v3049 = vshrl.u32 %v3011, 16
  %v3051 = vrot.slane %v3049, 4
  %v3052 = vor.u32 %v3051, %v3047
  %v3053 = vrot.slane %v3052, 4
  %v3055 = vshll.u32 %v3012, 16
  %v3057 = vrot.slane %v3055, 5
  %v3058 = vsel %vm2438, %v3053, %v3057
  %v3059 = vshrl.u32 %v3012, 16
  %v3061 = vrot.slane %v3059, 4
  %v3062 = vor.u32 %v3061, %v3057
  %v3063 = vrot.slane %v3062, 4
  %v3065 = vshll.u32 %v3013, 16
  %v3067 = vrot.slane %v3065, 5
  %v3068 = vsel %vm2438, %v3063, %v3067
  %v3069 = vshrl.u32 %v3013, 16
  %v3071 = vrot.slane %v3069, 4
  %v3072 = vor.u32 %v3071, %v3067
  %v3073 = vrot.slane %v3072, 4
  %v3075 = vshll.u32 %v3014, 16
  %v3077 = vrot.slane %v3075, 5
  %v3078 = vsel %vm2438, %v3073, %v3077
  %v3079 = vshrl.u32 %v3014, 16
  %v3081 = vrot.slane %v3079, 4
  %v3082 = vrot.slane %v3081, 4
  %3090 = vst.msk [vmem:[#allocation2 + $0x68] sm:$0xf] %vm2029, %v3028
  %3091 = vst.msk [vmem:[#allocation2 + $0x6c] sm:$0xf] %vm2029, %v3038
  %3092 = vst.msk [vmem:[#allocation2 + $0x70] sm:$0xf] %vm2029, %v3048
  %3093 = vst.msk [vmem:[#allocation2 + $0x74] sm:$0xf] %vm2029, %v3058
  %3094 = vst.msk [vmem:[#allocation2 + $0x78] sm:$0xf] %vm2029, %v3068
  %3095 = vst.msk [vmem:[#allocation2 + $0x7c] sm:$0xf] %vm2029, %v3078
  %v3096 = vld [vmem:[#allocation2 + $0x80] sm:$0x1]
  %v3097 = vsel %vm2417, %v3082, %v3096
  %3098 = vst [vmem:[#allocation2 + $0x80] sm:$0x1] %v3097
  %v3102 = vunpack.c.h.b16 %v2959
  %v3103 = vunpack.c.l.b16 %v2960
  %v3104 = vunpack.c.h.b16 %v2960
  %v3105 = vunpack.c.l.b16 %v2961
  %v3106 = vunpack.c.h.b16 %v2961
  %v3107 = vunpack.c.l.b16 %v2962
  %v3108 = vpack.c.b16 %v3102, %v3102
  %v3109 = vpack.c.b16 %v3103, %v3103
  %v3110 = vpack.c.b16 %v3104, %v3104
  %v3111 = vpack.c.b16 %v3105, %v3105
  %v3112 = vpack.c.b16 %v3106, %v3106
  %v3113 = vpack.c.b16 %v3107, %v3107
  %v3114 = vrot.slane %v3014, 5
  %v3115 = vrot.slane %v3114, 4
  %v3116 = vrot.slane %v3108, 5
  %v3117 = vsel %vm2540, %v3115, %v3116
  %v3118 = vrot.slane %v3116, 4
  %v3119 = vrot.slane %v3109, 5
  %v3120 = vsel %vm2540, %v3118, %v3119
  %v3121 = vrot.slane %v3119, 4
  %v3122 = vrot.slane %v3110, 5
  %v3123 = vsel %vm2540, %v3121, %v3122
  %v3124 = vrot.slane %v3122, 4
  %v3125 = vrot.slane %v3111, 5
  %v3126 = vsel %vm2540, %v3124, %v3125
  %v3127 = vrot.slane %v3125, 4
  %v3128 = vrot.slane %v3112, 5
  %v3129 = vsel %vm2540, %v3127, %v3128
  %v3130 = vrot.slane %v3128, 4
  %v3131 = vrot.slane %v3113, 5
  %v3132 = vsel %vm2540, %v3130, %v3131
  %v3133 = vrot.slane %v3131, 4
  %3141 = vst.msk [vmem:[#allocation2 + $0xa8] sm:$0xf] %vm2029, %v3117
  %3142 = vst.msk [vmem:[#allocation2 + $0xac] sm:$0xf] %vm2029, %v3120
  %3143 = vst.msk [vmem:[#allocation2 + $0xb0] sm:$0xf] %vm2029, %v3123
  %3144 = vst.msk [vmem:[#allocation2 + $0xb4] sm:$0xf] %vm2029, %v3126
  %3145 = vst.msk [vmem:[#allocation2 + $0xb8] sm:$0xf] %vm2029, %v3129
  %3146 = vst.msk [vmem:[#allocation2 + $0xbc] sm:$0xf] %vm2029, %v3132
  %v3147 = vld [vmem:[#allocation2 + $0xc0] sm:$0x1]
  %v3148 = vsel %vm2417, %v3133, %v3147
  %3149 = vst [vmem:[#allocation2 + $0xc0] sm:$0x1] %v3148
  %v3153 = vunpack.c.h.b16 %v2962
  %v3154 = vunpack.c.l.b16 %v2963
  %v3155 = vunpack.c.h.b16 %v2963
  %v3156 = vunpack.c.l.b16 %v2964
  %v3157 = vunpack.c.h.b16 %v2964
  %v3158 = vunpack.c.l.b16 %v2965
  %v3159 = vpack.c.b16 %v3153, %v3153
  %v3160 = vpack.c.b16 %v3154, %v3154
  %v3161 = vpack.c.b16 %v3155, %v3155
  %v3162 = vpack.c.b16 %v3156, %v3156
  %v3163 = vpack.c.b16 %v3157, %v3157
  %v3164 = vpack.c.b16 %v3158, %v3158
  %v3166 = vshrl.u32 %v3113, 16
  %v3168 = vrot.slane %v3166, 5
  %v3169 = vshll.u32 %v3113, 16
  %v3171 = vrot.slane %v3169, 6
  %v3172 = vor.u32 %v3168, %v3171
  %v3173 = vrot.slane %v3172, 4
  %v3175 = vshrl.u32 %v3159, 16
  %v3177 = vrot.slane %v3175, 5
  %v3178 = vshll.u32 %v3159, 16
  %v3180 = vrot.slane %v3178, 6
  %v3181 = vor.u32 %v3177, %v3180
  %v3182 = vsel %vm2594, %v3173, %v3181
  %v3183 = vrot.slane %v3181, 4
  %v3185 = vshrl.u32 %v3160, 16
  %v3187 = vrot.slane %v3185, 5
  %v3188 = vshll.u32 %v3160, 16
  %v3190 = vrot.slane %v3188, 6
  %v3191 = vor.u32 %v3187, %v3190
  %v3192 = vsel %vm2594, %v3183, %v3191
  %v3193 = vrot.slane %v3191, 4
  %v3195 = vshrl.u32 %v3161, 16
  %v3197 = vrot.slane %v3195, 5
  %v3198 = vshll.u32 %v3161, 16
  %v3200 = vrot.slane %v3198, 6
  %v3201 = vor.u32 %v3197, %v3200
  %v3202 = vsel %vm2594, %v3193, %v3201
  %v3203 = vrot.slane %v3201, 4
  %v3205 = vshrl.u32 %v3162, 16
  %v3207 = vrot.slane %v3205, 5
  %v3208 = vshll.u32 %v3162, 16
  %v3210 = vrot.slane %v3208, 6
  %v3211 = vor.u32 %v3207, %v3210
  %v3212 = vsel %vm2594, %v3203, %v3211
  %v3213 = vrot.slane %v3211, 4
  %v3215 = vshrl.u32 %v3163, 16
  %v3217 = vrot.slane %v3215, 5
  %v3218 = vshll.u32 %v3163, 16
  %v3220 = vrot.slane %v3218, 6
  %v3221 = vor.u32 %v3217, %v3220
  %v3222 = vsel %vm2594, %v3213, %v3221
  %v3223 = vrot.slane %v3221, 4
  %v3225 = vshrl.u32 %v3164, 16
  %v3227 = vrot.slane %v3225, 5
  %v3228 = vshll.u32 %v3164, 16
  %v3230 = vrot.slane %v3228, 6
  %v3231 = vor.u32 %v3227, %v3230
  %v3232 = vsel %vm2594, %v3223, %v3231
  %v3233 = vrot.slane %v3227, 4
  %3241 = vst.msk [vmem:[#allocation2 + $0xe8] sm:$0xf] %vm2029, %v3182
  %3242 = vst.msk [vmem:[#allocation2 + $0xec] sm:$0xf] %vm2029, %v3192
  %3243 = vst.msk [vmem:[#allocation2 + $0xf0] sm:$0xf] %vm2029, %v3202
  %3244 = vst.msk [vmem:[#allocation2 + $0xf4] sm:$0xf] %vm2029, %v3212
  %3245 = vst.msk [vmem:[#allocation2 + $0xf8] sm:$0xf] %vm2029, %v3222
  %3246 = vst.msk [vmem:[#allocation2 + $0xfc] sm:$0xf] %vm2029, %v3232
  %v3247 = vld [vmem:[#allocation2 + $0x100] sm:$0x1]
  %v3248 = vsel %vm2417, %v3233, %v3247
  %3249 = vst [vmem:[#allocation2 + $0x100] sm:$0x1] %v3248
  %v3250 = vld [vmem:[%s4] sm:$0xf]
  %v3251 = vld [vmem:[%s4 + $0x4] sm:$0xf]
  %v3252 = vld [vmem:[%s4 + $0x8] sm:$0xf]
  %v3253 = vld [vmem:[%s4 + $0xc] sm:$0xf]
  %v3254 = vld [vmem:[%s4 + $0x10] sm:$0xf]
  %v3255 = vld [vmem:[%s4 + $0x14] sm:$0xf]
  %v3256 = vld [vmem:[%s4 + $0x18] sm:$0xf]
  %v3257 = vld [vmem:[%s4 + $0x1c] sm:$0xf]
  %v3258 = vld [vmem:[%s4 + $0x20] sm:$0xf]
  %v3259 = vld [vmem:[%s4 + $0x24] sm:$0xf]
  %v3260 = vld [vmem:[%s4 + $0x28] sm:$0xf]
  %v3261 = vld [vmem:[%s4 + $0x2c] sm:$0xf]
  %v3262 = vld [vmem:[%s4 + $0x30] sm:$0xf]
  %v3263 = vld [vmem:[%s4 + $0x34] sm:$0xf]
  %v3264 = vld [vmem:[%s4 + $0x38] sm:$0xf]
  %v3265 = vld [vmem:[%s4 + $0x3c] sm:$0xf]
  %v3266 = vld [vmem:[#allocation2 + $0xc4] sm:$0xf]
  %v3267 = vld [vmem:[#allocation2 + $0xc8] sm:$0xf]
  %v3268 = vld [vmem:[#allocation2 + $0xcc] sm:$0xf]
  %v3269 = vld [vmem:[#allocation2 + $0xd0] sm:$0xf]
  %v3270 = vld [vmem:[#allocation2 + $0xd4] sm:$0xf]
  %v3271 = vld [vmem:[#allocation2 + $0xd8] sm:$0xf]
  %v3272 = vld [vmem:[#allocation2 + $0xdc] sm:$0xf]
  %v3273 = vld [vmem:[#allocation2 + $0xe0] sm:$0xf]
  %v3274 = vld [vmem:[#allocation2 + $0xe4] sm:$0xf]
  %v3275 = vld [vmem:[#allocation2 + $0xe8] sm:$0xf]
  %v3276 = vld [vmem:[#allocation2 + $0xec] sm:$0xf]
  %v3277 = vld [vmem:[#allocation2 + $0xf0] sm:$0xf]
  %v3278 = vld [vmem:[#allocation2 + $0xf4] sm:$0xf]
  %v3279 = vld [vmem:[#allocation2 + $0xf8] sm:$0xf]
  %v3280 = vld [vmem:[#allocation2 + $0xfc] sm:$0xf]
  %v3281 = vld [vmem:[#allocation2 + $0x100] sm:$0xf]
  %3283 = vset.pattern.permute.xlu0 0
  %3284 = vperm.xlu0 %3283, %v3250
  %v3285 = vpop.permute.xlu0 %3284
  %v3288 = vunpack.c.l.s4 839922192
  %v3289 = vunpack.c.0.s8 %v3288
  %v3290 = vlaneseq
  %v3291 = vshrl.u32 %v3290, 7
  %v3292 = vsub.s32 %v3289, %v3291
  %v3293 = vrot.slane %v3285, %v3292
  %3295 = vset.pattern.permute.xlu0 0
  %3296 = vperm.xlu0 %3295, %v3251
  %v3297 = vpop.permute.xlu0 %3296
  %v3300 = vunpack.c.l.s4 839922192
  %v3301 = vunpack.c.0.s8 %v3300
  %v3302 = vlaneseq
  %v3303 = vshrl.u32 %v3302, 7
  %v3304 = vsub.s32 %v3301, %v3303
  %v3305 = vrot.slane %v3297, %v3304
  %3307 = vset.pattern.permute.xlu0 0
  %3308 = vperm.xlu0 %3307, %v3252
  %v3309 = vpop.permute.xlu0 %3308
  %v3312 = vunpack.c.l.s4 839922192
  %v3313 = vunpack.c.0.s8 %v3312
  %v3314 = vlaneseq
  %v3315 = vshrl.u32 %v3314, 7
  %v3316 = vsub.s32 %v3313, %v3315
  %v3317 = vrot.slane %v3309, %v3316
  %3319 = vset.pattern.permute.xlu0 0
  %3320 = vperm.xlu0 %3319, %v3253
  %v3321 = vpop.permute.xlu0 %3320
  %v3324 = vunpack.c.l.s4 839922192
  %v3325 = vunpack.c.0.s8 %v3324
  %v3326 = vlaneseq
  %v3327 = vshrl.u32 %v3326, 7
  %v3328 = vsub.s32 %v3325, %v3327
  %v3329 = vrot.slane %v3321, %v3328
  %3331 = vset.pattern.permute.xlu0 0
  %3332 = vperm.xlu0 %3331, %v3254
  %v3333 = vpop.permute.xlu0 %3332
  %v3336 = vunpack.c.l.s4 839922192
  %v3337 = vunpack.c.0.s8 %v3336
  %v3338 = vlaneseq
  %v3339 = vshrl.u32 %v3338, 7
  %v3340 = vsub.s32 %v3337, %v3339
  %v3341 = vrot.slane %v3333, %v3340
  %3343 = vset.pattern.permute.xlu0 0
  %3344 = vperm.xlu0 %3343, %v3255
  %v3345 = vpop.permute.xlu0 %3344
  %v3348 = vunpack.c.l.s4 839922192
  %v3349 = vunpack.c.0.s8 %v3348
  %v3350 = vlaneseq
  %v3351 = vshrl.u32 %v3350, 7
  %v3352 = vsub.s32 %v3349, %v3351
  %v3353 = vrot.slane %v3345, %v3352
  %3355 = vset.pattern.permute.xlu0 0
  %3356 = vperm.xlu0 %3355, %v3256
  %v3357 = vpop.permute.xlu0 %3356
  %v3360 = vunpack.c.l.s4 839922192
  %v3361 = vunpack.c.0.s8 %v3360
  %v3362 = vlaneseq
  %v3363 = vshrl.u32 %v3362, 7
  %v3364 = vsub.s32 %v3361, %v3363
  %v3365 = vrot.slane %v3357, %v3364
  %3367 = vset.pattern.permute.xlu0 0
  %3368 = vperm.xlu0 %3367, %v3257
  %v3369 = vpop.permute.xlu0 %3368
  %v3372 = vunpack.c.l.s4 839922192
  %v3373 = vunpack.c.0.s8 %v3372
  %v3374 = vlaneseq
  %v3375 = vshrl.u32 %v3374, 7
  %v3376 = vsub.s32 %v3373, %v3375
  %v3377 = vrot.slane %v3369, %v3376
  %3379 = vset.pattern.permute.xlu0 0
  %3380 = vperm.xlu0 %3379, %v3258
  %v3381 = vpop.permute.xlu0 %3380
  %v3384 = vunpack.c.l.s4 839922192
  %v3385 = vunpack.c.0.s8 %v3384
  %v3386 = vlaneseq
  %v3387 = vshrl.u32 %v3386, 7
  %v3388 = vsub.s32 %v3385, %v3387
  %v3389 = vrot.slane %v3381, %v3388
  %3391 = vset.pattern.permute.xlu0 0
  %3392 = vperm.xlu0 %3391, %v3259
  %v3393 = vpop.permute.xlu0 %3392
  %v3396 = vunpack.c.l.s4 839922192
  %v3397 = vunpack.c.0.s8 %v3396
  %v3398 = vlaneseq
  %v3399 = vshrl.u32 %v3398, 7
  %v3400 = vsub.s32 %v3397, %v3399
  %v3401 = vrot.slane %v3393, %v3400
  %3403 = vset.pattern.permute.xlu0 0
  %3404 = vperm.xlu0 %3403, %v3260
  %v3405 = vpop.permute.xlu0 %3404
  %v3408 = vunpack.c.l.s4 839922192
  %v3409 = vunpack.c.0.s8 %v3408
  %v3410 = vlaneseq
  %v3411 = vshrl.u32 %v3410, 7
  %v3412 = vsub.s32 %v3409, %v3411
  %v3413 = vrot.slane %v3405, %v3412
  %3415 = vset.pattern.permute.xlu0 0
  %3416 = vperm.xlu0 %3415, %v3261
  %v3417 = vpop.permute.xlu0 %3416
  %v3420 = vunpack.c.l.s4 839922192
  %v3421 = vunpack.c.0.s8 %v3420
  %v3422 = vlaneseq
  %v3423 = vshrl.u32 %v3422, 7
  %v3424 = vsub.s32 %v3421, %v3423
  %v3425 = vrot.slane %v3417, %v3424
  %3427 = vset.pattern.permute.xlu0 0
  %3428 = vperm.xlu0 %3427, %v3262
  %v3429 = vpop.permute.xlu0 %3428
  %v3432 = vunpack.c.l.s4 839922192
  %v3433 = vunpack.c.0.s8 %v3432
  %v3434 = vlaneseq
  %v3435 = vshrl.u32 %v3434, 7
  %v3436 = vsub.s32 %v3433, %v3435
  %v3437 = vrot.slane %v3429, %v3436
  %3439 = vset.pattern.permute.xlu0 0
  %3440 = vperm.xlu0 %3439, %v3263
  %v3441 = vpop.permute.xlu0 %3440
  %v3444 = vunpack.c.l.s4 839922192
  %v3445 = vunpack.c.0.s8 %v3444
  %v3446 = vlaneseq
  %v3447 = vshrl.u32 %v3446, 7
  %v3448 = vsub.s32 %v3445, %v3447
  %v3449 = vrot.slane %v3441, %v3448
  %3451 = vset.pattern.permute.xlu0 0
  %3452 = vperm.xlu0 %3451, %v3264
  %v3453 = vpop.permute.xlu0 %3452
  %v3456 = vunpack.c.l.s4 839922192
  %v3457 = vunpack.c.0.s8 %v3456
  %v3458 = vlaneseq
  %v3459 = vshrl.u32 %v3458, 7
  %v3460 = vsub.s32 %v3457, %v3459
  %v3461 = vrot.slane %v3453, %v3460
  %3463 = vset.pattern.permute.xlu0 0
  %3464 = vperm.xlu0 %3463, %v3265
  %v3465 = vpop.permute.xlu0 %3464
  %v3468 = vunpack.c.l.s4 839922192
  %v3469 = vunpack.c.0.s8 %v3468
  %v3470 = vlaneseq
  %v3471 = vshrl.u32 %v3470, 7
  %v3472 = vsub.s32 %v3469, %v3471
  %v3473 = vrot.slane %v3465, %v3472
  %v3474 = vmul.bf16 %v3266, %v3293
  %v3475 = vmul.bf16 %v3267, %v3305
  %v3476 = vmul.bf16 %v3268, %v3317
  %v3477 = vmul.bf16 %v3269, %v3329
  %v3478 = vmul.bf16 %v3270, %v3341
  %v3479 = vmul.bf16 %v3271, %v3353
  %v3480 = vmul.bf16 %v3272, %v3365
  %v3481 = vmul.bf16 %v3273, %v3377
  %v3482 = vmul.bf16 %v3274, %v3389
  %v3483 = vmul.bf16 %v3275, %v3401
  %v3484 = vmul.bf16 %v3276, %v3413
  %v3485 = vmul.bf16 %v3277, %v3425
  %v3486 = vmul.bf16 %v3278, %v3437
  %v3487 = vmul.bf16 %v3279, %v3449
  %v3488 = vmul.bf16 %v3280, %v3461
  %v3489 = vmul.bf16 %v3281, %v3473
  %3490 = vst.msk [vmem:[#allocation3] sm:$0xf] %vm2029, %v3474
  %3491 = vst.msk [vmem:[#allocation3 + $0xc] sm:$0xf] %vm2029, %v3475
  %3492 = vst.msk [vmem:[#allocation3 + $0x18] sm:$0xf] %vm2029, %v3476
  %3493 = vst.msk [vmem:[#allocation3 + $0x24] sm:$0xf] %vm2029, %v3477
  %3494 = vst.msk [vmem:[#allocation3 + $0x30] sm:$0xf] %vm2029, %v3478
  %3495 = vst.msk [vmem:[#allocation3 + $0x3c] sm:$0xf] %vm2029, %v3479
  %3496 = vst.msk [vmem:[#allocation3 + $0x48] sm:$0xf] %vm2029, %v3480
  %3497 = vst.msk [vmem:[#allocation3 + $0x54] sm:$0xf] %vm2029, %v3481
  %3498 = vst.msk [vmem:[#allocation3 + $0x60] sm:$0xf] %vm2029, %v3482
  %3499 = vst.msk [vmem:[#allocation3 + $0x6c] sm:$0xf] %vm2029, %v3483
  %3500 = vst.msk [vmem:[#allocation3 + $0x78] sm:$0xf] %vm2029, %v3484
  %3501 = vst.msk [vmem:[#allocation3 + $0x84] sm:$0xf] %vm2029, %v3485
  %3502 = vst.msk [vmem:[#allocation3 + $0x90] sm:$0xf] %vm2029, %v3486
  %3503 = vst.msk [vmem:[#allocation3 + $0x9c] sm:$0xf] %vm2029, %v3487
  %3504 = vst.msk [vmem:[#allocation3 + $0xa8] sm:$0xf] %vm2029, %v3488
  %3505 = vst.msk [vmem:[#allocation3 + $0xb4] sm:$0xf] %vm2029, %v3489
  %v3506 = vld [vmem:[#allocation2 + $0x84] sm:$0xf]
  %v3507 = vld [vmem:[#allocation2 + $0x88] sm:$0xf]
  %v3508 = vld [vmem:[#allocation2 + $0x8c] sm:$0xf]
  %v3509 = vld [vmem:[#allocation2 + $0x90] sm:$0xf]
  %v3510 = vld [vmem:[#allocation2 + $0x94] sm:$0xf]
  %v3511 = vld [vmem:[#allocation2 + $0x98] sm:$0xf]
  %v3512 = vld [vmem:[#allocation2 + $0x9c] sm:$0xf]
  %v3513 = vld [vmem:[#allocation2 + $0xa0] sm:$0xf]
  %v3514 = vld [vmem:[#allocation2 + $0xa4] sm:$0xf]
  %v3515 = vld [vmem:[#allocation2 + $0xa8] sm:$0xf]
  %v3516 = vld [vmem:[#allocation2 + $0xac] sm:$0xf]
  %v3517 = vld [vmem:[#allocation2 + $0xb0] sm:$0xf]
  %v3518 = vld [vmem:[#allocation2 + $0xb4] sm:$0xf]
  %v3519 = vld [vmem:[#allocation2 + $0xb8] sm:$0xf]
  %v3520 = vld [vmem:[#allocation2 + $0xbc] sm:$0xf]
  %v3521 = vld [vmem:[#allocation2 + $0xc0] sm:$0xf]
  %v3522 = vld [vmem:[#allocation2 + $0xc4] sm:$0x1]
  %v3524 = vshrl.u32 %v3506, 16
  %v3526 = vrot.slane %v3524, 4
  %v3527 = vshll.u32 %v3506, 16
  %v3529 = vrot.slane %v3527, 5
  %v3530 = vor.u32 %v3526, %v3529
  %v3531 = vrot.slane %v3530, 4
  %v3533 = vshll.u32 %v3507, 16
  %v3535 = vrot.slane %v3533, 5
  %v3536 = vsel %vm2438, %v3531, %v3535
  %v3537 = vshrl.u32 %v3507, 16
  %v3539 = vrot.slane %v3537, 4
  %v3540 = vor.u32 %v3539, %v3535
  %v3541 = vrot.slane %v3540, 4
  %v3543 = vshll.u32 %v3508, 16
  %v3545 = vrot.slane %v3543, 5
  %v3546 = vsel %vm2438, %v3541, %v3545
  %v3547 = vshrl.u32 %v3508, 16
  %v3549 = vrot.slane %v3547, 4
  %v3550 = vor.u32 %v3549, %v3545
  %v3551 = vrot.slane %v3550, 4
  %v3553 = vshll.u32 %v3509, 16
  %v3555 = vrot.slane %v3553, 5
  %v3556 = vsel %vm2438, %v3551, %v3555
  %v3557 = vshrl.u32 %v3509, 16
  %v3559 = vrot.slane %v3557, 4
  %v3560 = vor.u32 %v3559, %v3555
  %v3561 = vrot.slane %v3560, 4
  %v3563 = vshll.u32 %v3510, 16
  %v3565 = vrot.slane %v3563, 5
  %v3566 = vsel %vm2438, %v3561, %v3565
  %v3567 = vshrl.u32 %v3510, 16
  %v3569 = vrot.slane %v3567, 4
  %v3570 = vor.u32 %v3569, %v3565
  %v3571 = vrot.slane %v3570, 4
  %v3573 = vshll.u32 %v3511, 16
  %v3575 = vrot.slane %v3573, 5
  %v3576 = vsel %vm2438, %v3571, %v3575
  %v3577 = vshrl.u32 %v3511, 16
  %v3579 = vrot.slane %v3577, 4
  %v3580 = vor.u32 %v3579, %v3575
  %v3581 = vrot.slane %v3580, 4
  %v3583 = vshll.u32 %v3512, 16
  %v3585 = vrot.slane %v3583, 5
  %v3586 = vsel %vm2438, %v3581, %v3585
  %v3587 = vshrl.u32 %v3512, 16
  %v3589 = vrot.slane %v3587, 4
  %v3590 = vor.u32 %v3589, %v3585
  %v3591 = vrot.slane %v3590, 4
  %v3593 = vshll.u32 %v3513, 16
  %v3595 = vrot.slane %v3593, 5
  %v3596 = vsel %vm2438, %v3591, %v3595
  %v3597 = vshrl.u32 %v3513, 16
  %v3599 = vrot.slane %v3597, 4
  %v3600 = vor.u32 %v3599, %v3595
  %v3601 = vrot.slane %v3600, 4
  %v3603 = vshll.u32 %v3514, 16
  %v3605 = vrot.slane %v3603, 5
  %v3606 = vsel %vm2438, %v3601, %v3605
  %v3607 = vshrl.u32 %v3514, 16
  %v3609 = vrot.slane %v3607, 4
  %v3610 = vor.u32 %v3609, %v3605
  %v3611 = vrot.slane %v3610, 4
  %v3613 = vshll.u32 %v3515, 16
  %v3615 = vrot.slane %v3613, 5
  %v3616 = vsel %vm2438, %v3611, %v3615
  %v3617 = vshrl.u32 %v3515, 16
  %v3619 = vrot.slane %v3617, 4
  %v3620 = vor.u32 %v3619, %v3615
  %v3621 = vrot.slane %v3620, 4
  %v3623 = vshll.u32 %v3516, 16
  %v3625 = vrot.slane %v3623, 5
  %v3626 = vsel %vm2438, %v3621, %v3625
  %v3627 = vshrl.u32 %v3516, 16
  %v3629 = vrot.slane %v3627, 4
  %v3630 = vor.u32 %v3629, %v3625
  %v3631 = vrot.slane %v3630, 4
  %v3633 = vshll.u32 %v3517, 16
  %v3635 = vrot.slane %v3633, 5
  %v3636 = vsel %vm2438, %v3631, %v3635
  %v3637 = vshrl.u32 %v3517, 16
  %v3639 = vrot.slane %v3637, 4
  %v3640 = vor.u32 %v3639, %v3635
  %v3641 = vrot.slane %v3640, 4
  %v3643 = vshll.u32 %v3518, 16
  %v3645 = vrot.slane %v3643, 5
  %v3646 = vsel %vm2438, %v3641, %v3645
  %v3647 = vshrl.u32 %v3518, 16
  %v3649 = vrot.slane %v3647, 4
  %v3650 = vor.u32 %v3649, %v3645
  %v3651 = vrot.slane %v3650, 4
  %v3653 = vshll.u32 %v3519, 16
  %v3655 = vrot.slane %v3653, 5
  %v3656 = vsel %vm2438, %v3651, %v3655
  %v3657 = vshrl.u32 %v3519, 16
  %v3659 = vrot.slane %v3657, 4
  %v3660 = vor.u32 %v3659, %v3655
  %v3661 = vrot.slane %v3660, 4
  %v3663 = vshll.u32 %v3520, 16
  %v3665 = vrot.slane %v3663, 5
  %v3666 = vsel %vm2438, %v3661, %v3665
  %v3667 = vshrl.u32 %v3520, 16
  %v3669 = vrot.slane %v3667, 4
  %v3670 = vor.u32 %v3669, %v3665
  %v3671 = vrot.slane %v3670, 4
  %v3673 = vshll.u32 %v3521, 16
  %v3675 = vrot.slane %v3673, 5
  %v3676 = vsel %vm2438, %v3671, %v3675
  %v3677 = vshrl.u32 %v3521, 16
  %v3679 = vrot.slane %v3677, 4
  %v3680 = vor.u32 %v3679, %v3675
  %v3681 = vrot.slane %v3680, 4
  %v3683 = vshll.u32 %v3522, 16
  %v3685 = vrot.slane %v3683, 5
  %v3686 = vsel %vm2438, %v3681, %v3685
  %3687 = vrot.lane.b32.xlu0 %v3536, 32
  %v3688 = vpop.permute.xlu0 %3687
  %3689 = vrot.lane.b32.xlu0 %v3546, 32
  %v3690 = vpop.permute.xlu0 %3689
  %3691 = vrot.lane.b32.xlu0 %v3556, 32
  %v3692 = vpop.permute.xlu0 %3691
  %3693 = vrot.lane.b32.xlu0 %v3566, 32
  %v3694 = vpop.permute.xlu0 %3693
  %3695 = vrot.lane.b32.xlu0 %v3576, 32
  %v3696 = vpop.permute.xlu0 %3695
  %3697 = vrot.lane.b32.xlu0 %v3586, 32
  %v3698 = vpop.permute.xlu0 %3697
  %3699 = vrot.lane.b32.xlu0 %v3596, 32
  %v3700 = vpop.permute.xlu0 %3699
  %3701 = vrot.lane.b32.xlu0 %v3606, 32
  %v3702 = vpop.permute.xlu0 %3701
  %3703 = vrot.lane.b32.xlu0 %v3616, 32
  %v3704 = vpop.permute.xlu0 %3703
  %3705 = vrot.lane.b32.xlu0 %v3626, 32
  %v3706 = vpop.permute.xlu0 %3705
  %3707 = vrot.lane.b32.xlu0 %v3636, 32
  %v3708 = vpop.permute.xlu0 %3707
  %3709 = vrot.lane.b32.xlu0 %v3646, 32
  %v3710 = vpop.permute.xlu0 %3709
  %3711 = vrot.lane.b32.xlu0 %v3656, 32
  %v3712 = vpop.permute.xlu0 %3711
  %3713 = vrot.lane.b32.xlu0 %v3666, 32
  %v3714 = vpop.permute.xlu0 %3713
  %3715 = vrot.lane.b32.xlu0 %v3676, 32
  %v3716 = vpop.permute.xlu0 %3715
  %3717 = vrot.lane.b32.xlu0 %v3686, 32
  %v3718 = vpop.permute.xlu0 %3717
  %vm3735 = vcmask 519424
  %3736 = vst.msk [vmem:[#allocation3] sm:$0xf] %vm3735, %v3688
  %3737 = vst.msk [vmem:[#allocation3 + $0xc] sm:$0xf] %vm3735, %v3690
  %3738 = vst.msk [vmem:[#allocation3 + $0x18] sm:$0xf] %vm3735, %v3692
  %3739 = vst.msk [vmem:[#allocation3 + $0x24] sm:$0xf] %vm3735, %v3694
  %3740 = vst.msk [vmem:[#allocation3 + $0x30] sm:$0xf] %vm3735, %v3696
  %3741 = vst.msk [vmem:[#allocation3 + $0x3c] sm:$0xf] %vm3735, %v3698
  %3742 = vst.msk [vmem:[#allocation3 + $0x48] sm:$0xf] %vm3735, %v3700
  %3743 = vst.msk [vmem:[#allocation3 + $0x54] sm:$0xf] %vm3735, %v3702
  %3744 = vst.msk [vmem:[#allocation3 + $0x60] sm:$0xf] %vm3735, %v3704
  %3745 = vst.msk [vmem:[#allocation3 + $0x6c] sm:$0xf] %vm3735, %v3706
  %3746 = vst.msk [vmem:[#allocation3 + $0x78] sm:$0xf] %vm3735, %v3708
  %3747 = vst.msk [vmem:[#allocation3 + $0x84] sm:$0xf] %vm3735, %v3710
  %3748 = vst.msk [vmem:[#allocation3 + $0x90] sm:$0xf] %vm3735, %v3712
  %3749 = vst.msk [vmem:[#allocation3 + $0x9c] sm:$0xf] %vm3735, %v3714
  %3750 = vst.msk [vmem:[#allocation3 + $0xa8] sm:$0xf] %vm3735, %v3716
  %3751 = vst.msk [vmem:[#allocation3 + $0xb4] sm:$0xf] %vm3735, %v3718
  %v3752 = vld [vmem:[#allocation2 + $0xc4] sm:$0xf]
  %v3753 = vld [vmem:[#allocation2 + $0xc8] sm:$0xf]
  %v3754 = vld [vmem:[#allocation2 + $0xcc] sm:$0xf]
  %v3755 = vld [vmem:[#allocation2 + $0xd0] sm:$0xf]
  %v3756 = vld [vmem:[#allocation2 + $0xd4] sm:$0xf]
  %v3757 = vld [vmem:[#allocation2 + $0xd8] sm:$0xf]
  %v3758 = vld [vmem:[#allocation2 + $0xdc] sm:$0xf]
  %v3759 = vld [vmem:[#allocation2 + $0xe0] sm:$0xf]
  %v3760 = vld [vmem:[#allocation2 + $0xe4] sm:$0xf]
  %v3761 = vld [vmem:[#allocation2 + $0xe8] sm:$0xf]
  %v3762 = vld [vmem:[#allocation2 + $0xec] sm:$0xf]
  %v3763 = vld [vmem:[#allocation2 + $0xf0] sm:$0xf]
  %v3764 = vld [vmem:[#allocation2 + $0xf4] sm:$0xf]
  %v3765 = vld [vmem:[#allocation2 + $0xf8] sm:$0xf]
  %v3766 = vld [vmem:[#allocation2 + $0xfc] sm:$0xf]
  %v3767 = vld [vmem:[#allocation2 + $0x100] sm:$0xf]
  %v3768 = vld [vmem:[#allocation2 + $0x104] sm:$0x1]
  %v3770 = vshrl.u32 %v3752, 16
  %v3772 = vrot.slane %v3770, 4
  %v3773 = vshll.u32 %v3752, 16
  %v3775 = vrot.slane %v3773, 5
  %v3776 = vor.u32 %v3772, %v3775
  %v3777 = vrot.slane %v3776, 4
  %v3779 = vshll.u32 %v3753, 16
  %v3781 = vrot.slane %v3779, 5
  %v3782 = vsel %vm2438, %v3777, %v3781
  %v3783 = vshrl.u32 %v3753, 16
  %v3785 = vrot.slane %v3783, 4
  %v3786 = vor.u32 %v3785, %v3781
  %v3787 = vrot.slane %v3786, 4
  %v3789 = vshll.u32 %v3754, 16
  %v3791 = vrot.slane %v3789, 5
  %v3792 = vsel %vm2438, %v3787, %v3791
  %v3793 = vshrl.u32 %v3754, 16
  %v3795 = vrot.slane %v3793, 4
  %v3796 = vor.u32 %v3795, %v3791
  %v3797 = vrot.slane %v3796, 4
  %v3799 = vshll.u32 %v3755, 16
  %v3801 = vrot.slane %v3799, 5
  %v3802 = vsel %vm2438, %v3797, %v3801
  %v3803 = vshrl.u32 %v3755, 16
  %v3805 = vrot.slane %v3803, 4
  %v3806 = vor.u32 %v3805, %v3801
  %v3807 = vrot.slane %v3806, 4
  %v3809 = vshll.u32 %v3756, 16
  %v3811 = vrot.slane %v3809, 5
  %v3812 = vsel %vm2438, %v3807, %v3811
  %v3813 = vshrl.u32 %v3756, 16
  %v3815 = vrot.slane %v3813, 4
  %v3816 = vor.u32 %v3815, %v3811
  %v3817 = vrot.slane %v3816, 4
  %v3819 = vshll.u32 %v3757, 16
  %v3821 = vrot.slane %v3819, 5
  %v3822 = vsel %vm2438, %v3817, %v3821
  %v3823 = vshrl.u32 %v3757, 16
  %v3825 = vrot.slane %v3823, 4
  %v3826 = vor.u32 %v3825, %v3821
  %v3827 = vrot.slane %v3826, 4
  %v3829 = vshll.u32 %v3758, 16
  %v3831 = vrot.slane %v3829, 5
  %v3832 = vsel %vm2438, %v3827, %v3831
  %v3833 = vshrl.u32 %v3758, 16
  %v3835 = vrot.slane %v3833, 4
  %v3836 = vor.u32 %v3835, %v3831
  %v3837 = vrot.slane %v3836, 4
  %v3839 = vshll.u32 %v3759, 16
  %v3841 = vrot.slane %v3839, 5
  %v3842 = vsel %vm2438, %v3837, %v3841
  %v3843 = vshrl.u32 %v3759, 16
  %v3845 = vrot.slane %v3843, 4
  %v3846 = vor.u32 %v3845, %v3841
  %v3847 = vrot.slane %v3846, 4
  %v3849 = vshll.u32 %v3760, 16
  %v3851 = vrot.slane %v3849, 5
  %v3852 = vsel %vm2438, %v3847, %v3851
  %v3853 = vshrl.u32 %v3760, 16
  %v3855 = vrot.slane %v3853, 4
  %v3856 = vor.u32 %v3855, %v3851
  %v3857 = vrot.slane %v3856, 4
  %v3859 = vshll.u32 %v3761, 16
  %v3861 = vrot.slane %v3859, 5
  %v3862 = vsel %vm2438, %v3857, %v3861
  %v3863 = vshrl.u32 %v3761, 16
  %v3865 = vrot.slane %v3863, 4
  %v3866 = vor.u32 %v3865, %v3861
  %v3867 = vrot.slane %v3866, 4
  %v3869 = vshll.u32 %v3762, 16
  %v3871 = vrot.slane %v3869, 5
  %v3872 = vsel %vm2438, %v3867, %v3871
  %v3873 = vshrl.u32 %v3762, 16
  %v3875 = vrot.slane %v3873, 4
  %v3876 = vor.u32 %v3875, %v3871
  %v3877 = vrot.slane %v3876, 4
  %v3879 = vshll.u32 %v3763, 16
  %v3881 = vrot.slane %v3879, 5
  %v3882 = vsel %vm2438, %v3877, %v3881
  %v3883 = vshrl.u32 %v3763, 16
  %v3885 = vrot.slane %v3883, 4
  %v3886 = vor.u32 %v3885, %v3881
  %v3887 = vrot.slane %v3886, 4
  %v3889 = vshll.u32 %v3764, 16
  %v3891 = vrot.slane %v3889, 5
  %v3892 = vsel %vm2438, %v3887, %v3891
  %v3893 = vshrl.u32 %v3764, 16
  %v3895 = vrot.slane %v3893, 4
  %v3896 = vor.u32 %v3895, %v3891
  %v3897 = vrot.slane %v3896, 4
  %v3899 = vshll.u32 %v3765, 16
  %v3901 = vrot.slane %v3899, 5
  %v3902 = vsel %vm2438, %v3897, %v3901
  %v3903 = vshrl.u32 %v3765, 16
  %v3905 = vrot.slane %v3903, 4
  %v3906 = vor.u32 %v3905, %v3901
  %v3907 = vrot.slane %v3906, 4
  %v3909 = vshll.u32 %v3766, 16
  %v3911 = vrot.slane %v3909, 5
  %v3912 = vsel %vm2438, %v3907, %v3911
  %v3913 = vshrl.u32 %v3766, 16
  %v3915 = vrot.slane %v3913, 4
  %v3916 = vor.u32 %v3915, %v3911
  %v3917 = vrot.slane %v3916, 4
  %v3919 = vshll.u32 %v3767, 16
  %v3921 = vrot.slane %v3919, 5
  %v3922 = vsel %vm2438, %v3917, %v3921
  %v3923 = vshrl.u32 %v3767, 16
  %v3925 = vrot.slane %v3923, 4
  %v3926 = vor.u32 %v3925, %v3921
  %v3927 = vrot.slane %v3926, 4
  %v3929 = vshll.u32 %v3768, 16
  %v3931 = vrot.slane %v3929, 5
  %v3932 = vsel %vm2438, %v3927, %v3931
  %3933 = vrot.lane.b32.xlu0 %v3782, 64
  %v3934 = vpop.permute.xlu0 %3933
  %3935 = vrot.lane.b32.xlu0 %v3792, 64
  %v3936 = vpop.permute.xlu0 %3935
  %3937 = vrot.lane.b32.xlu0 %v3802, 64
  %v3938 = vpop.permute.xlu0 %3937
  %3939 = vrot.lane.b32.xlu0 %v3812, 64
  %v3940 = vpop.permute.xlu0 %3939
  %3941 = vrot.lane.b32.xlu0 %v3822, 64
  %v3942 = vpop.permute.xlu0 %3941
  %3943 = vrot.lane.b32.xlu0 %v3832, 64
  %v3944 = vpop.permute.xlu0 %3943
  %3945 = vrot.lane.b32.xlu0 %v3842, 64
  %v3946 = vpop.permute.xlu0 %3945
  %3947 = vrot.lane.b32.xlu0 %v3852, 64
  %v3948 = vpop.permute.xlu0 %3947
  %3949 = vrot.lane.b32.xlu0 %v3862, 64
  %v3950 = vpop.permute.xlu0 %3949
  %3951 = vrot.lane.b32.xlu0 %v3872, 64
  %v3952 = vpop.permute.xlu0 %3951
  %3953 = vrot.lane.b32.xlu0 %v3882, 64
  %v3954 = vpop.permute.xlu0 %3953
  %3955 = vrot.lane.b32.xlu0 %v3892, 64
  %v3956 = vpop.permute.xlu0 %3955
  %3957 = vrot.lane.b32.xlu0 %v3902, 64
  %v3958 = vpop.permute.xlu0 %3957
  %3959 = vrot.lane.b32.xlu0 %v3912, 64
  %v3960 = vpop.permute.xlu0 %3959
  %3961 = vrot.lane.b32.xlu0 %v3922, 64
  %v3962 = vpop.permute.xlu0 %3961
  %3963 = vrot.lane.b32.xlu0 %v3932, 64
  %v3964 = vpop.permute.xlu0 %3963
  %vm3981 = vcmask 781824
  %3982 = vst.msk [vmem:[#allocation3] sm:$0xf] %vm3981, %v3934
  %3983 = vst.msk [vmem:[#allocation3 + $0xc] sm:$0xf] %vm3981, %v3936
  %3984 = vst.msk [vmem:[#allocation3 + $0x18] sm:$0xf] %vm3981, %v3938
  %3985 = vst.msk [vmem:[#allocation3 + $0x24] sm:$0xf] %vm3981, %v3940
  %3986 = vst.msk [vmem:[#allocation3 + $0x30] sm:$0xf] %vm3981, %v3942
  %3987 = vst.msk [vmem:[#allocation3 + $0x3c] sm:$0xf] %vm3981, %v3944
  %3988 = vst.msk [vmem:[#allocation3 + $0x48] sm:$0xf] %vm3981, %v3946
  %3989 = vst.msk [vmem:[#allocation3 + $0x54] sm:$0xf] %vm3981, %v3948
  %3990 = vst.msk [vmem:[#allocation3 + $0x60] sm:$0xf] %vm3981, %v3950
  %3991 = vst.msk [vmem:[#allocation3 + $0x6c] sm:$0xf] %vm3981, %v3952
  %3992 = vst.msk [vmem:[#allocation3 + $0x78] sm:$0xf] %vm3981, %v3954
  %3993 = vst.msk [vmem:[#allocation3 + $0x84] sm:$0xf] %vm3981, %v3956
  %3994 = vst.msk [vmem:[#allocation3 + $0x90] sm:$0xf] %vm3981, %v3958
  %3995 = vst.msk [vmem:[#allocation3 + $0x9c] sm:$0xf] %vm3981, %v3960
  %3996 = vst.msk [vmem:[#allocation3 + $0xa8] sm:$0xf] %vm3981, %v3962
  %3997 = vst.msk [vmem:[#allocation3 + $0xb4] sm:$0xf] %vm3981, %v3964
  %v3998 = vld [vmem:[#allocation2 + $0x44] sm:$0x8]
  %v3999 = vld [vmem:[#allocation2 + $0x48] sm:$0xf]
  %v4000 = vld [vmem:[#allocation2 + $0x4c] sm:$0xf]
  %v4001 = vld [vmem:[#allocation2 + $0x50] sm:$0xf]
  %v4002 = vld [vmem:[#allocation2 + $0x54] sm:$0xf]
  %v4003 = vld [vmem:[#allocation2 + $0x58] sm:$0xf]
  %v4004 = vld [vmem:[#allocation2 + $0x5c] sm:$0xf]
  %v4005 = vld [vmem:[#allocation2 + $0x60] sm:$0xf]
  %v4006 = vld [vmem:[#allocation2 + $0x64] sm:$0xf]
  %v4007 = vld [vmem:[#allocation2 + $0x68] sm:$0xf]
  %v4008 = vld [vmem:[#allocation2 + $0x6c] sm:$0xf]
  %v4009 = vld [vmem:[#allocation2 + $0x70] sm:$0xf]
  %v4010 = vld [vmem:[#allocation2 + $0x74] sm:$0xf]
  %v4011 = vld [vmem:[#allocation2 + $0x78] sm:$0xf]
  %v4012 = vld [vmem:[#allocation2 + $0x7c] sm:$0xf]
  %v4013 = vld [vmem:[#allocation2 + $0x80] sm:$0xf]
  %v4014 = vld [vmem:[#allocation2 + $0x84] sm:$0xf]
  %v4016 = vshll.u32 %v3293, 16
  %v4018 = vrot.slane %v4016, 5
  %v4019 = vshrl.u32 %v3293, 16
  %v4021 = vrot.slane %v4019, 4
  %v4022 = vor.u32 %v4021, %v4018
  %v4023 = vrot.slane %v4022, 4
  %v4025 = vshll.u32 %v3305, 16
  %v4027 = vrot.slane %v4025, 5
  %v4028 = vsel %vm2438, %v4023, %v4027
  %v4029 = vshrl.u32 %v3305, 16
  %v4031 = vrot.slane %v4029, 4
  %v4032 = vor.u32 %v4031, %v4027
  %v4033 = vrot.slane %v4032, 4
  %v4035 = vshll.u32 %v3317, 16
  %v4037 = vrot.slane %v4035, 5
  %v4038 = vsel %vm2438, %v4033, %v4037
  %v4039 = vshrl.u32 %v3317, 16
  %v4041 = vrot.slane %v4039, 4
  %v4042 = vor.u32 %v4041, %v4037
  %v4043 = vrot.slane %v4042, 4
  %v4045 = vshll.u32 %v3329, 16
  %v4047 = vrot.slane %v4045, 5
  %v4048 = vsel %vm2438, %v4043, %v4047
  %v4049 = vshrl.u32 %v3329, 16
  %v4051 = vrot.slane %v4049, 4
  %v4052 = vor.u32 %v4051, %v4047
  %v4053 = vrot.slane %v4052, 4
  %v4055 = vshll.u32 %v3341, 16
  %v4057 = vrot.slane %v4055, 5
  %v4058 = vsel %vm2438, %v4053, %v4057
  %v4059 = vshrl.u32 %v3341, 16
  %v4061 = vrot.slane %v4059, 4
  %v4062 = vor.u32 %v4061, %v4057
  %v4063 = vrot.slane %v4062, 4
  %v4065 = vshll.u32 %v3353, 16
  %v4067 = vrot.slane %v4065, 5
  %v4068 = vsel %vm2438, %v4063, %v4067
  %v4069 = vshrl.u32 %v3353, 16
  %v4071 = vrot.slane %v4069, 4
  %v4072 = vor.u32 %v4071, %v4067
  %v4073 = vrot.slane %v4072, 4
  %v4075 = vshll.u32 %v3365, 16
  %v4077 = vrot.slane %v4075, 5
  %v4078 = vsel %vm2438, %v4073, %v4077
  %v4079 = vshrl.u32 %v3365, 16
  %v4081 = vrot.slane %v4079, 4
  %v4082 = vor.u32 %v4081, %v4077
  %v4083 = vrot.slane %v4082, 4
  %v4085 = vshll.u32 %v3377, 16
  %v4087 = vrot.slane %v4085, 5
  %v4088 = vsel %vm2438, %v4083, %v4087
  %v4089 = vshrl.u32 %v3377, 16
  %v4091 = vrot.slane %v4089, 4
  %v4092 = vor.u32 %v4091, %v4087
  %v4093 = vrot.slane %v4092, 4
  %v4095 = vshll.u32 %v3389, 16
  %v4097 = vrot.slane %v4095, 5
  %v4098 = vsel %vm2438, %v4093, %v4097
  %v4099 = vshrl.u32 %v3389, 16
  %v4101 = vrot.slane %v4099, 4
  %v4102 = vor.u32 %v4101, %v4097
  %v4103 = vrot.slane %v4102, 4
  %v4105 = vshll.u32 %v3401, 16
  %v4107 = vrot.slane %v4105, 5
  %v4108 = vsel %vm2438, %v4103, %v4107
  %v4109 = vshrl.u32 %v3401, 16
  %v4111 = vrot.slane %v4109, 4
  %v4112 = vor.u32 %v4111, %v4107
  %v4113 = vrot.slane %v4112, 4
  %v4115 = vshll.u32 %v3413, 16
  %v4117 = vrot.slane %v4115, 5
  %v4118 = vsel %vm2438, %v4113, %v4117
  %v4119 = vshrl.u32 %v3413, 16
  %v4121 = vrot.slane %v4119, 4
  %v4122 = vor.u32 %v4121, %v4117
  %v4123 = vrot.slane %v4122, 4
  %v4125 = vshll.u32 %v3425, 16
  %v4127 = vrot.slane %v4125, 5
  %v4128 = vsel %vm2438, %v4123, %v4127
  %v4129 = vshrl.u32 %v3425, 16
  %v4131 = vrot.slane %v4129, 4
  %v4132 = vor.u32 %v4131, %v4127
  %v4133 = vrot.slane %v4132, 4
  %v4135 = vshll.u32 %v3437, 16
  %v4137 = vrot.slane %v4135, 5
  %v4138 = vsel %vm2438, %v4133, %v4137
  %v4139 = vshrl.u32 %v3437, 16
  %v4141 = vrot.slane %v4139, 4
  %v4142 = vor.u32 %v4141, %v4137
  %v4143 = vrot.slane %v4142, 4
  %v4145 = vshll.u32 %v3449, 16
  %v4147 = vrot.slane %v4145, 5
  %v4148 = vsel %vm2438, %v4143, %v4147
  %v4149 = vshrl.u32 %v3449, 16
  %v4151 = vrot.slane %v4149, 4
  %v4152 = vor.u32 %v4151, %v4147
  %v4153 = vrot.slane %v4152, 4
  %v4155 = vshll.u32 %v3461, 16
  %v4157 = vrot.slane %v4155, 5
  %v4158 = vsel %vm2438, %v4153, %v4157
  %v4159 = vshrl.u32 %v3461, 16
  %v4161 = vrot.slane %v4159, 4
  %v4162 = vor.u32 %v4161, %v4157
  %v4163 = vrot.slane %v4162, 4
  %v4165 = vshll.u32 %v3473, 16
  %v4167 = vrot.slane %v4165, 5
  %v4168 = vsel %vm2438, %v4163, %v4167
  %v4169 = vshrl.u32 %v3473, 16
  %v4171 = vrot.slane %v4169, 4
  %v4172 = vor.u32 %v4171, %v4167
  %v4173 = vrot.slane %v4172, 4
  %v4191 = vmul.bf16 %v3998, %v4018
  %v4192 = vmul.bf16 %v3999, %v4028
  %v4193 = vmul.bf16 %v4000, %v4038
  %v4194 = vmul.bf16 %v4001, %v4048
  %v4195 = vmul.bf16 %v4002, %v4058
  %v4196 = vmul.bf16 %v4003, %v4068
  %v4197 = vmul.bf16 %v4004, %v4078
  %v4198 = vmul.bf16 %v4005, %v4088
  %v4199 = vmul.bf16 %v4006, %v4098
  %v4200 = vmul.bf16 %v4007, %v4108
  %v4201 = vmul.bf16 %v4008, %v4118
  %v4202 = vmul.bf16 %v4009, %v4128
  %v4203 = vmul.bf16 %v4010, %v4138
  %v4204 = vmul.bf16 %v4011, %v4148
  %v4205 = vmul.bf16 %v4012, %v4158
  %v4206 = vmul.bf16 %v4013, %v4168
  %v4207 = vmul.bf16 %v4014, %v4173
  %vm4208 = vsmask.f32 4368
  %vm4209 = vmor %vm2416, %vm4208
  %v4211 = vshrl.u32 %v4191, 16
  %v4213 = vrot.slane %v4211, 7
  %v4214 = vrot.slane %v4213, 4
  %v4216 = vshrl.u32 %v4192, 16
  %v4218 = vrot.slane %v4216, 7
  %v4219 = vshll.u32 %v4192, 16
  %v4221 = vor.u32 %v4218, %v4219
  %v4222 = vsel %vm4209, %v4214, %v4221
  %v4223 = vrot.slane %v4218, 4
  %v4225 = vshrl.u32 %v4193, 16
  %v4227 = vrot.slane %v4225, 7
  %v4228 = vshll.u32 %v4193, 16
  %v4230 = vor.u32 %v4227, %v4228
  %v4231 = vsel %vm4209, %v4223, %v4230
  %v4232 = vrot.slane %v4227, 4
  %v4234 = vshrl.u32 %v4194, 16
  %v4236 = vrot.slane %v4234, 7
  %v4237 = vshll.u32 %v4194, 16
  %v4239 = vor.u32 %v4236, %v4237
  %v4240 = vsel %vm4209, %v4232, %v4239
  %v4241 = vrot.slane %v4236, 4
  %v4243 = vshrl.u32 %v4195, 16
  %v4245 = vrot.slane %v4243, 7
  %v4246 = vshll.u32 %v4195, 16
  %v4248 = vor.u32 %v4245, %v4246
  %v4249 = vsel %vm4209, %v4241, %v4248
  %v4250 = vrot.slane %v4245, 4
  %v4252 = vshrl.u32 %v4196, 16
  %v4254 = vrot.slane %v4252, 7
  %v4255 = vshll.u32 %v4196, 16
  %v4257 = vor.u32 %v4254, %v4255
  %v4258 = vsel %vm4209, %v4250, %v4257
  %v4259 = vrot.slane %v4254, 4
  %v4261 = vshrl.u32 %v4197, 16
  %v4263 = vrot.slane %v4261, 7
  %v4264 = vshll.u32 %v4197, 16
  %v4266 = vor.u32 %v4263, %v4264
  %v4267 = vsel %vm4209, %v4259, %v4266
  %v4268 = vrot.slane %v4263, 4
  %v4270 = vshrl.u32 %v4198, 16
  %v4272 = vrot.slane %v4270, 7
  %v4273 = vshll.u32 %v4198, 16
  %v4275 = vor.u32 %v4272, %v4273
  %v4276 = vsel %vm4209, %v4268, %v4275
  %v4277 = vrot.slane %v4272, 4
  %v4279 = vshrl.u32 %v4199, 16
  %v4281 = vrot.slane %v4279, 7
  %v4282 = vshll.u32 %v4199, 16
  %v4284 = vor.u32 %v4281, %v4282
  %v4285 = vsel %vm4209, %v4277, %v4284
  %v4286 = vrot.slane %v4281, 4
  %v4288 = vshrl.u32 %v4200, 16
  %v4290 = vrot.slane %v4288, 7
  %v4291 = vshll.u32 %v4200, 16
  %v4293 = vor.u32 %v4290, %v4291
  %v4294 = vsel %vm4209, %v4286, %v4293
  %v4295 = vrot.slane %v4290, 4
  %v4297 = vshrl.u32 %v4201, 16
  %v4299 = vrot.slane %v4297, 7
  %v4300 = vshll.u32 %v4201, 16
  %v4302 = vor.u32 %v4299, %v4300
  %v4303 = vsel %vm4209, %v4295, %v4302
  %v4304 = vrot.slane %v4299, 4
  %v4306 = vshrl.u32 %v4202, 16
  %v4308 = vrot.slane %v4306, 7
  %v4309 = vshll.u32 %v4202, 16
  %v4311 = vor.u32 %v4308, %v4309
  %v4312 = vsel %vm4209, %v4304, %v4311
  %v4313 = vrot.slane %v4308, 4
  %v4315 = vshrl.u32 %v4203, 16
  %v4317 = vrot.slane %v4315, 7
  %v4318 = vshll.u32 %v4203, 16
  %v4320 = vor.u32 %v4317, %v4318
  %v4321 = vsel %vm4209, %v4313, %v4320
  %v4322 = vrot.slane %v4317, 4
  %v4324 = vshrl.u32 %v4204, 16
  %v4326 = vrot.slane %v4324, 7
  %v4327 = vshll.u32 %v4204, 16
  %v4329 = vor.u32 %v4326, %v4327
  %v4330 = vsel %vm4209, %v4322, %v4329
  %v4331 = vrot.slane %v4326, 4
  %v4333 = vshrl.u32 %v4205, 16
  %v4335 = vrot.slane %v4333, 7
  %v4336 = vshll.u32 %v4205, 16
  %v4338 = vor.u32 %v4335, %v4336
  %v4339 = vsel %vm4209, %v4331, %v4338
  %v4340 = vrot.slane %v4335, 4
  %v4342 = vshrl.u32 %v4206, 16
  %v4344 = vrot.slane %v4342, 7
  %v4345 = vshll.u32 %v4206, 16
  %v4347 = vor.u32 %v4344, %v4345
  %v4348 = vsel %vm4209, %v4340, %v4347
  %v4349 = vrot.slane %v4344, 4
  %v4351 = vshrl.u32 %v4207, 16
  %v4353 = vrot.slane %v4351, 7
  %v4354 = vshll.u32 %v4207, 16
  %v4356 = vor.u32 %v4353, %v4354
  %v4357 = vsel %vm4209, %v4349, %v4356
  %4358 = vrot.lane.b32.xlu0 %v4222, 96
  %v4359 = vpop.permute.xlu0 %4358
  %4360 = vrot.lane.b32.xlu0 %v4231, 96
  %v4361 = vpop.permute.xlu0 %4360
  %4362 = vrot.lane.b32.xlu0 %v4240, 96
  %v4363 = vpop.permute.xlu0 %4362
  %4364 = vrot.lane.b32.xlu0 %v4249, 96
  %v4365 = vpop.permute.xlu0 %4364
  %4366 = vrot.lane.b32.xlu0 %v4258, 96
  %v4367 = vpop.permute.xlu0 %4366
  %4368 = vrot.lane.b32.xlu0 %v4267, 96
  %v4369 = vpop.permute.xlu0 %4368
  %4370 = vrot.lane.b32.xlu0 %v4276, 96
  %v4371 = vpop.permute.xlu0 %4370
  %4372 = vrot.lane.b32.xlu0 %v4285, 96
  %v4373 = vpop.permute.xlu0 %4372
  %4374 = vrot.lane.b32.xlu0 %v4294, 96
  %v4375 = vpop.permute.xlu0 %4374
  %4376 = vrot.lane.b32.xlu0 %v4303, 96
  %v4377 = vpop.permute.xlu0 %4376
  %4378 = vrot.lane.b32.xlu0 %v4312, 96
  %v4379 = vpop.permute.xlu0 %4378
  %4380 = vrot.lane.b32.xlu0 %v4321, 96
  %v4381 = vpop.permute.xlu0 %4380
  %4382 = vrot.lane.b32.xlu0 %v4330, 96
  %v4383 = vpop.permute.xlu0 %4382
  %4384 = vrot.lane.b32.xlu0 %v4339, 96
  %v4385 = vpop.permute.xlu0 %4384
  %4386 = vrot.lane.b32.xlu0 %v4348, 96
  %v4387 = vpop.permute.xlu0 %4386
  %4388 = vrot.lane.b32.xlu0 %v4357, 96
  %v4389 = vpop.permute.xlu0 %4388
  %vm4406 = vcmask 1044224
  %4407 = vst.msk [vmem:[#allocation3] sm:$0xf] %vm4406, %v4359
  %4408 = vst.msk [vmem:[#allocation3 + $0xc] sm:$0xf] %vm4406, %v4361
  %4409 = vst.msk [vmem:[#allocation3 + $0x18] sm:$0xf] %vm4406, %v4363
  %4410 = vst.msk [vmem:[#allocation3 + $0x24] sm:$0xf] %vm4406, %v4365
  %4411 = vst.msk [vmem:[#allocation3 + $0x30] sm:$0xf] %vm4406, %v4367
  %4412 = vst.msk [vmem:[#allocation3 + $0x3c] sm:$0xf] %vm4406, %v4369
  %4413 = vst.msk [vmem:[#allocation3 + $0x48] sm:$0xf] %vm4406, %v4371
  %4414 = vst.msk [vmem:[#allocation3 + $0x54] sm:$0xf] %vm4406, %v4373
  %4415 = vst.msk [vmem:[#allocation3 + $0x60] sm:$0xf] %vm4406, %v4375
  %4416 = vst.msk [vmem:[#allocation3 + $0x6c] sm:$0xf] %vm4406, %v4377
  %4417 = vst.msk [vmem:[#allocation3 + $0x78] sm:$0xf] %vm4406, %v4379
  %4418 = vst.msk [vmem:[#allocation3 + $0x84] sm:$0xf] %vm4406, %v4381
  %4419 = vst.msk [vmem:[#allocation3 + $0x90] sm:$0xf] %vm4406, %v4383
  %4420 = vst.msk [vmem:[#allocation3 + $0x9c] sm:$0xf] %vm4406, %v4385
  %4421 = vst.msk [vmem:[#allocation3 + $0xa8] sm:$0xf] %vm4406, %v4387
  %4422 = vst.msk [vmem:[#allocation3 + $0xb4] sm:$0xf] %vm4406, %v4389
  %v4423 = vld [vmem:[#allocation2 + $0x8] sm:$0xf]
  %v4424 = vld [vmem:[#allocation2 + $0xc] sm:$0xf]
  %v4425 = vld [vmem:[#allocation2 + $0x10] sm:$0xf]
  %v4426 = vld [vmem:[#allocation2 + $0x14] sm:$0xf]
  %v4427 = vld [vmem:[#allocation2 + $0x18] sm:$0xf]
  %v4428 = vld [vmem:[#allocation2 + $0x1c] sm:$0xf]
  %v4429 = vld [vmem:[#allocation2 + $0x20] sm:$0xf]
  %v4430 = vld [vmem:[#allocation2 + $0x24] sm:$0xf]
  %v4431 = vld [vmem:[#allocation2 + $0x28] sm:$0xf]
  %v4432 = vld [vmem:[#allocation2 + $0x2c] sm:$0xf]
  %v4433 = vld [vmem:[#allocation2 + $0x30] sm:$0xf]
  %v4434 = vld [vmem:[#allocation2 + $0x34] sm:$0xf]
  %v4435 = vld [vmem:[#allocation2 + $0x38] sm:$0xf]
  %v4436 = vld [vmem:[#allocation2 + $0x3c] sm:$0xf]
  %v4437 = vld [vmem:[#allocation2 + $0x40] sm:$0xf]
  %v4438 = vld [vmem:[#allocation2 + $0x44] sm:$0xf]
  %4439 = vst.msk [vmem:[#allocation3 + $0x4] sm:$0xf] %vm2029, %v4423
  %4440 = vst.msk [vmem:[#allocation3 + $0x10] sm:$0xf] %vm2029, %v4424
  %4441 = vst.msk [vmem:[#allocation3 + $0x1c] sm:$0xf] %vm2029, %v4425
  %4442 = vst.msk [vmem:[#allocation3 + $0x28] sm:$0xf] %vm2029, %v4426
  %4443 = vst.msk [vmem:[#allocation3 + $0x34] sm:$0xf] %vm2029, %v4427
  %4444 = vst.msk [vmem:[#allocation3 + $0x40] sm:$0xf] %vm2029, %v4428
  %4445 = vst.msk [vmem:[#allocation3 + $0x4c] sm:$0xf] %vm2029, %v4429
  %4446 = vst.msk [vmem:[#allocation3 + $0x58] sm:$0xf] %vm2029, %v4430
  %4447 = vst.msk [vmem:[#allocation3 + $0x64] sm:$0xf] %vm2029, %v4431
  %4448 = vst.msk [vmem:[#allocation3 + $0x70] sm:$0xf] %vm2029, %v4432
  %4449 = vst.msk [vmem:[#allocation3 + $0x7c] sm:$0xf] %vm2029, %v4433
  %4450 = vst.msk [vmem:[#allocation3 + $0x88] sm:$0xf] %vm2029, %v4434
  %4451 = vst.msk [vmem:[#allocation3 + $0x94] sm:$0xf] %vm2029, %v4435
  %4452 = vst.msk [vmem:[#allocation3 + $0xa0] sm:$0xf] %vm2029, %v4436
  %4453 = vst.msk [vmem:[#allocation3 + $0xac] sm:$0xf] %vm2029, %v4437
  %4454 = vst.msk [vmem:[#allocation3 + $0xb8] sm:$0xf] %vm2029, %v4438
  %v4455 = vld [vmem:[#allocation2 + $0x48] sm:$0xf]
  %v4456 = vld [vmem:[#allocation2 + $0x4c] sm:$0xf]
  %v4457 = vld [vmem:[#allocation2 + $0x50] sm:$0xf]
  %v4458 = vld [vmem:[#allocation2 + $0x54] sm:$0xf]
  %v4459 = vld [vmem:[#allocation2 + $0x58] sm:$0xf]
  %v4460 = vld [vmem:[#allocation2 + $0x5c] sm:$0xf]
  %v4461 = vld [vmem:[#allocation2 + $0x60] sm:$0xf]
  %v4462 = vld [vmem:[#allocation2 + $0x64] sm:$0xf]
  %v4463 = vld [vmem:[#allocation2 + $0x68] sm:$0xf]
  %v4464 = vld [vmem:[#allocation2 + $0x6c] sm:$0xf]
  %v4465 = vld [vmem:[#allocation2 + $0x70] sm:$0xf]
  %v4466 = vld [vmem:[#allocation2 + $0x74] sm:$0xf]
  %v4467 = vld [vmem:[#allocation2 + $0x78] sm:$0xf]
  %v4468 = vld [vmem:[#allocation2 + $0x7c] sm:$0xf]
  %v4469 = vld [vmem:[#allocation2 + $0x80] sm:$0xf]
  %v4470 = vld [vmem:[#allocation2 + $0x84] sm:$0xf]
  %4487 = vrot.lane.b32.xlu0 %v4455, 32
  %v4488 = vpop.permute.xlu0 %4487
  %4489 = vrot.lane.b32.xlu0 %v4456, 32
  %v4490 = vpop.permute.xlu0 %4489
  %4491 = vrot.lane.b32.xlu0 %v4457, 32
  %v4492 = vpop.permute.xlu0 %4491
  %4493 = vrot.lane.b32.xlu0 %v4458, 32
  %v4494 = vpop.permute.xlu0 %4493
  %4495 = vrot.lane.b32.xlu0 %v4459, 32
  %v4496 = vpop.permute.xlu0 %4495
  %4497 = vrot.lane.b32.xlu0 %v4460, 32
  %v4498 = vpop.permute.xlu0 %4497
  %4499 = vrot.lane.b32.xlu0 %v4461, 32
  %v4500 = vpop.permute.xlu0 %4499
  %4501 = vrot.lane.b32.xlu0 %v4462, 32
  %v4502 = vpop.permute.xlu0 %4501
  %4503 = vrot.lane.b32.xlu0 %v4463, 32
  %v4504 = vpop.permute.xlu0 %4503
  %4505 = vrot.lane.b32.xlu0 %v4464, 32
  %v4506 = vpop.permute.xlu0 %4505
  %4507 = vrot.lane.b32.xlu0 %v4465, 32
  %v4508 = vpop.permute.xlu0 %4507
  %4509 = vrot.lane.b32.xlu0 %v4466, 32
  %v4510 = vpop.permute.xlu0 %4509
  %4511 = vrot.lane.b32.xlu0 %v4467, 32
  %v4512 = vpop.permute.xlu0 %4511
  %4513 = vrot.lane.b32.xlu0 %v4468, 32
  %v4514 = vpop.permute.xlu0 %4513
  %4515 = vrot.lane.b32.xlu0 %v4469, 32
  %v4516 = vpop.permute.xlu0 %4515
  %4517 = vrot.lane.b32.xlu0 %v4470, 32
  %v4518 = vpop.permute.xlu0 %4517
  %4535 = vst.msk [vmem:[#allocation3 + $0x4] sm:$0xf] %vm3735, %v4488
  %4536 = vst.msk [vmem:[#allocation3 + $0x10] sm:$0xf] %vm3735, %v4490
  %4537 = vst.msk [vmem:[#allocation3 + $0x1c] sm:$0xf] %vm3735, %v4492
  %4538 = vst.msk [vmem:[#allocation3 + $0x28] sm:$0xf] %vm3735, %v4494
  %4539 = vst.msk [vmem:[#allocation3 + $0x34] sm:$0xf] %vm3735, %v4496
  %4540 = vst.msk [vmem:[#allocation3 + $0x40] sm:$0xf] %vm3735, %v4498
  %4541 = vst.msk [vmem:[#allocation3 + $0x4c] sm:$0xf] %vm3735, %v4500
  %4542 = vst.msk [vmem:[#allocation3 + $0x58] sm:$0xf] %vm3735, %v4502
  %4543 = vst.msk [vmem:[#allocation3 + $0x64] sm:$0xf] %vm3735, %v4504
  %4544 = vst.msk [vmem:[#allocation3 + $0x70] sm:$0xf] %vm3735, %v4506
  %4545 = vst.msk [vmem:[#allocation3 + $0x7c] sm:$0xf] %vm3735, %v4508
  %4546 = vst.msk [vmem:[#allocation3 + $0x88] sm:$0xf] %vm3735, %v4510
  %4547 = vst.msk [vmem:[#allocation3 + $0x94] sm:$0xf] %vm3735, %v4512
  %4548 = vst.msk [vmem:[#allocation3 + $0xa0] sm:$0xf] %vm3735, %v4514
  %4549 = vst.msk [vmem:[#allocation3 + $0xac] sm:$0xf] %vm3735, %v4516
  %4550 = vst.msk [vmem:[#allocation3 + $0xb8] sm:$0xf] %vm3735, %v4518
  %v4551 = vld [vmem:[#allocation2 + $0xc4] sm:$0x8]
  %v4552 = vld [vmem:[#allocation2 + $0xc8] sm:$0xf]
  %v4553 = vld [vmem:[#allocation2 + $0xcc] sm:$0xf]
  %v4554 = vld [vmem:[#allocation2 + $0xd0] sm:$0xf]
  %v4555 = vld [vmem:[#allocation2 + $0xd4] sm:$0xf]
  %v4556 = vld [vmem:[#allocation2 + $0xd8] sm:$0xf]
  %v4557 = vld [vmem:[#allocation2 + $0xdc] sm:$0xf]
  %v4558 = vld [vmem:[#allocation2 + $0xe0] sm:$0xf]
  %v4559 = vld [vmem:[#allocation2 + $0xe4] sm:$0xf]
  %v4560 = vld [vmem:[#allocation2 + $0xe8] sm:$0xf]
  %v4561 = vld [vmem:[#allocation2 + $0xec] sm:$0xf]
  %v4562 = vld [vmem:[#allocation2 + $0xf0] sm:$0xf]
  %v4563 = vld [vmem:[#allocation2 + $0xf4] sm:$0xf]
  %v4564 = vld [vmem:[#allocation2 + $0xf8] sm:$0xf]
  %v4565 = vld [vmem:[#allocation2 + $0xfc] sm:$0xf]
  %v4566 = vld [vmem:[#allocation2 + $0x100] sm:$0xf]
  %v4567 = vld [vmem:[#allocation2 + $0x104] sm:$0xf]
  %v4568 = vmul.bf16 %v4551, %v4018
  %v4569 = vmul.bf16 %v4552, %v4028
  %v4570 = vmul.bf16 %v4553, %v4038
  %v4571 = vmul.bf16 %v4554, %v4048
  %v4572 = vmul.bf16 %v4555, %v4058
  %v4573 = vmul.bf16 %v4556, %v4068
  %v4574 = vmul.bf16 %v4557, %v4078
  %v4575 = vmul.bf16 %v4558, %v4088
  %v4576 = vmul.bf16 %v4559, %v4098
  %v4577 = vmul.bf16 %v4560, %v4108
  %v4578 = vmul.bf16 %v4561, %v4118
  %v4579 = vmul.bf16 %v4562, %v4128
  %v4580 = vmul.bf16 %v4563, %v4138
  %v4581 = vmul.bf16 %v4564, %v4148
  %v4582 = vmul.bf16 %v4565, %v4158
  %v4583 = vmul.bf16 %v4566, %v4168
  %v4584 = vmul.bf16 %v4567, %v4173
  %v4586 = vshrl.u32 %v4568, 16
  %v4588 = vrot.slane %v4586, 7
  %v4589 = vrot.slane %v4588, 4
  %v4591 = vshrl.u32 %v4569, 16
  %v4593 = vrot.slane %v4591, 7
  %v4594 = vshll.u32 %v4569, 16
  %v4596 = vor.u32 %v4593, %v4594
  %v4597 = vsel %vm4209, %v4589, %v4596
  %v4598 = vrot.slane %v4593, 4
  %v4600 = vshrl.u32 %v4570, 16
  %v4602 = vrot.slane %v4600, 7
  %v4603 = vshll.u32 %v4570, 16
  %v4605 = vor.u32 %v4602, %v4603
  %v4606 = vsel %vm4209, %v4598, %v4605
  %v4607 = vrot.slane %v4602, 4
  %v4609 = vshrl.u32 %v4571, 16
  %v4611 = vrot.slane %v4609, 7
  %v4612 = vshll.u32 %v4571, 16
  %v4614 = vor.u32 %v4611, %v4612
  %v4615 = vsel %vm4209, %v4607, %v4614
  %v4616 = vrot.slane %v4611, 4
  %v4618 = vshrl.u32 %v4572, 16
  %v4620 = vrot.slane %v4618, 7
  %v4621 = vshll.u32 %v4572, 16
  %v4623 = vor.u32 %v4620, %v4621
  %v4624 = vsel %vm4209, %v4616, %v4623
  %v4625 = vrot.slane %v4620, 4
  %v4627 = vshrl.u32 %v4573, 16
  %v4629 = vrot.slane %v4627, 7
  %v4630 = vshll.u32 %v4573, 16
  %v4632 = vor.u32 %v4629, %v4630
  %v4633 = vsel %vm4209, %v4625, %v4632
  %v4634 = vrot.slane %v4629, 4
  %v4636 = vshrl.u32 %v4574, 16
  %v4638 = vrot.slane %v4636, 7
  %v4639 = vshll.u32 %v4574, 16
  %v4641 = vor.u32 %v4638, %v4639
  %v4642 = vsel %vm4209, %v4634, %v4641
  %v4643 = vrot.slane %v4638, 4
  %v4645 = vshrl.u32 %v4575, 16
  %v4647 = vrot.slane %v4645, 7
  %v4648 = vshll.u32 %v4575, 16
  %v4650 = vor.u32 %v4647, %v4648
  %v4651 = vsel %vm4209, %v4643, %v4650
  %v4652 = vrot.slane %v4647, 4
  %v4654 = vshrl.u32 %v4576, 16
  %v4656 = vrot.slane %v4654, 7
  %v4657 = vshll.u32 %v4576, 16
  %v4659 = vor.u32 %v4656, %v4657
  %v4660 = vsel %vm4209, %v4652, %v4659
  %v4661 = vrot.slane %v4656, 4
  %v4663 = vshrl.u32 %v4577, 16
  %v4665 = vrot.slane %v4663, 7
  %v4666 = vshll.u32 %v4577, 16
  %v4668 = vor.u32 %v4665, %v4666
  %v4669 = vsel %vm4209, %v4661, %v4668
  %v4670 = vrot.slane %v4665, 4
  %v4672 = vshrl.u32 %v4578, 16
  %v4674 = vrot.slane %v4672, 7
  %v4675 = vshll.u32 %v4578, 16
  %v4677 = vor.u32 %v4674, %v4675
  %v4678 = vsel %vm4209, %v4670, %v4677
  %v4679 = vrot.slane %v4674, 4
  %v4681 = vshrl.u32 %v4579, 16
  %v4683 = vrot.slane %v4681, 7
  %v4684 = vshll.u32 %v4579, 16
  %v4686 = vor.u32 %v4683, %v4684
  %v4687 = vsel %vm4209, %v4679, %v4686
  %v4688 = vrot.slane %v4683, 4
  %v4690 = vshrl.u32 %v4580, 16
  %v4692 = vrot.slane %v4690, 7
  %v4693 = vshll.u32 %v4580, 16
  %v4695 = vor.u32 %v4692, %v4693
  %v4696 = vsel %vm4209, %v4688, %v4695
  %v4697 = vrot.slane %v4692, 4
  %v4699 = vshrl.u32 %v4581, 16
  %v4701 = vrot.slane %v4699, 7
  %v4702 = vshll.u32 %v4581, 16
  %v4704 = vor.u32 %v4701, %v4702
  %v4705 = vsel %vm4209, %v4697, %v4704
  %v4706 = vrot.slane %v4701, 4
  %v4708 = vshrl.u32 %v4582, 16
  %v4710 = vrot.slane %v4708, 7
  %v4711 = vshll.u32 %v4582, 16
  %v4713 = vor.u32 %v4710, %v4711
  %v4714 = vsel %vm4209, %v4706, %v4713
  %v4715 = vrot.slane %v4710, 4
  %v4717 = vshrl.u32 %v4583, 16
  %v4719 = vrot.slane %v4717, 7
  %v4720 = vshll.u32 %v4583, 16
  %v4722 = vor.u32 %v4719, %v4720
  %v4723 = vsel %vm4209, %v4715, %v4722
  %v4724 = vrot.slane %v4719, 4
  %v4726 = vshrl.u32 %v4584, 16
  %v4728 = vrot.slane %v4726, 7
  %v4729 = vshll.u32 %v4584, 16
  %v4731 = vor.u32 %v4728, %v4729
  %v4732 = vsel %vm4209, %v4724, %v4731
  %4733 = vrot.lane.b32.xlu0 %v4597, 64
  %v4734 = vpop.permute.xlu0 %4733
  %4735 = vrot.lane.b32.xlu0 %v4606, 64
  %v4736 = vpop.permute.xlu0 %4735
  %4737 = vrot.lane.b32.xlu0 %v4615, 64
  %v4738 = vpop.permute.xlu0 %4737
  %4739 = vrot.lane.b32.xlu0 %v4624, 64
  %v4740 = vpop.permute.xlu0 %4739
  %4741 = vrot.lane.b32.xlu0 %v4633, 64
  %v4742 = vpop.permute.xlu0 %4741
  %4743 = vrot.lane.b32.xlu0 %v4642, 64
  %v4744 = vpop.permute.xlu0 %4743
  %4745 = vrot.lane.b32.xlu0 %v4651, 64
  %v4746 = vpop.permute.xlu0 %4745
  %4747 = vrot.lane.b32.xlu0 %v4660, 64
  %v4748 = vpop.permute.xlu0 %4747
  %4749 = vrot.lane.b32.xlu0 %v4669, 64
  %v4750 = vpop.permute.xlu0 %4749
  %4751 = vrot.lane.b32.xlu0 %v4678, 64
  %v4752 = vpop.permute.xlu0 %4751
  %4753 = vrot.lane.b32.xlu0 %v4687, 64
  %v4754 = vpop.permute.xlu0 %4753
  %4755 = vrot.lane.b32.xlu0 %v4696, 64
  %v4756 = vpop.permute.xlu0 %4755
  %4757 = vrot.lane.b32.xlu0 %v4705, 64
  %v4758 = vpop.permute.xlu0 %4757
  %4759 = vrot.lane.b32.xlu0 %v4714, 64
  %v4760 = vpop.permute.xlu0 %4759
  %4761 = vrot.lane.b32.xlu0 %v4723, 64
  %v4762 = vpop.permute.xlu0 %4761
  %4763 = vrot.lane.b32.xlu0 %v4732, 64
  %v4764 = vpop.permute.xlu0 %4763
  %4781 = vst.msk [vmem:[#allocation3 + $0x4] sm:$0xf] %vm3981, %v4734
  %4782 = vst.msk [vmem:[#allocation3 + $0x10] sm:$0xf] %vm3981, %v4736
  %4783 = vst.msk [vmem:[#allocation3 + $0x1c] sm:$0xf] %vm3981, %v4738
  %4784 = vst.msk [vmem:[#allocation3 + $0x28] sm:$0xf] %vm3981, %v4740
  %4785 = vst.msk [vmem:[#allocation3 + $0x34] sm:$0xf] %vm3981, %v4742
  %4786 = vst.msk [vmem:[#allocation3 + $0x40] sm:$0xf] %vm3981, %v4744
  %4787 = vst.msk [vmem:[#allocation3 + $0x4c] sm:$0xf] %vm3981, %v4746
  %4788 = vst.msk [vmem:[#allocation3 + $0x58] sm:$0xf] %vm3981, %v4748
  %4789 = vst.msk [vmem:[#allocation3 + $0x64] sm:$0xf] %vm3981, %v4750
  %4790 = vst.msk [vmem:[#allocation3 + $0x70] sm:$0xf] %vm3981, %v4752
  %4791 = vst.msk [vmem:[#allocation3 + $0x7c] sm:$0xf] %vm3981, %v4754
  %4792 = vst.msk [vmem:[#allocation3 + $0x88] sm:$0xf] %vm3981, %v4756
  %4793 = vst.msk [vmem:[#allocation3 + $0x94] sm:$0xf] %vm3981, %v4758
  %4794 = vst.msk [vmem:[#allocation3 + $0xa0] sm:$0xf] %vm3981, %v4760
  %4795 = vst.msk [vmem:[#allocation3 + $0xac] sm:$0xf] %vm3981, %v4762
  %4796 = vst.msk [vmem:[#allocation3 + $0xb8] sm:$0xf] %vm3981, %v4764
  %v4797 = vld [vmem:[#allocation2 + $0x88] sm:$0xf]
  %v4798 = vld [vmem:[#allocation2 + $0x8c] sm:$0xf]
  %v4799 = vld [vmem:[#allocation2 + $0x90] sm:$0xf]
  %v4800 = vld [vmem:[#allocation2 + $0x94] sm:$0xf]
  %v4801 = vld [vmem:[#allocation2 + $0x98] sm:$0xf]
  %v4802 = vld [vmem:[#allocation2 + $0x9c] sm:$0xf]
  %v4803 = vld [vmem:[#allocation2 + $0xa0] sm:$0xf]
  %v4804 = vld [vmem:[#allocation2 + $0xa4] sm:$0xf]
  %v4805 = vld [vmem:[#allocation2 + $0xa8] sm:$0xf]
  %v4806 = vld [vmem:[#allocation2 + $0xac] sm:$0xf]
  %v4807 = vld [vmem:[#allocation2 + $0xb0] sm:$0xf]
  %v4808 = vld [vmem:[#allocation2 + $0xb4] sm:$0xf]
  %v4809 = vld [vmem:[#allocation2 + $0xb8] sm:$0xf]
  %v4810 = vld [vmem:[#allocation2 + $0xbc] sm:$0xf]
  %v4811 = vld [vmem:[#allocation2 + $0xc0] sm:$0xf]
  %v4812 = vld [vmem:[#allocation2 + $0xc4] sm:$0xf]
  %4829 = vrot.lane.b32.xlu0 %v4797, 96
  %v4830 = vpop.permute.xlu0 %4829
  %4831 = vrot.lane.b32.xlu0 %v4798, 96
  %v4832 = vpop.permute.xlu0 %4831
  %4833 = vrot.lane.b32.xlu0 %v4799, 96
  %v4834 = vpop.permute.xlu0 %4833
  %4835 = vrot.lane.b32.xlu0 %v4800, 96
  %v4836 = vpop.permute.xlu0 %4835
  %4837 = vrot.lane.b32.xlu0 %v4801, 96
  %v4838 = vpop.permute.xlu0 %4837
  %4839 = vrot.lane.b32.xlu0 %v4802, 96
  %v4840 = vpop.permute.xlu0 %4839
  %4841 = vrot.lane.b32.xlu0 %v4803, 96
  %v4842 = vpop.permute.xlu0 %4841
  %4843 = vrot.lane.b32.xlu0 %v4804, 96
  %v4844 = vpop.permute.xlu0 %4843
  %4845 = vrot.lane.b32.xlu0 %v4805, 96
  %v4846 = vpop.permute.xlu0 %4845
  %4847 = vrot.lane.b32.xlu0 %v4806, 96
  %v4848 = vpop.permute.xlu0 %4847
  %4849 = vrot.lane.b32.xlu0 %v4807, 96
  %v4850 = vpop.permute.xlu0 %4849
  %4851 = vrot.lane.b32.xlu0 %v4808, 96
  %v4852 = vpop.permute.xlu0 %4851
  %4853 = vrot.lane.b32.xlu0 %v4809, 96
  %v4854 = vpop.permute.xlu0 %4853
  %4855 = vrot.lane.b32.xlu0 %v4810, 96
  %v4856 = vpop.permute.xlu0 %4855
  %4857 = vrot.lane.b32.xlu0 %v4811, 96
  %v4858 = vpop.permute.xlu0 %4857
  %4859 = vrot.lane.b32.xlu0 %v4812, 96
  %v4860 = vpop.permute.xlu0 %4859
  %4877 = vst.msk [vmem:[#allocation3 + $0x4] sm:$0xf] %vm4406, %v4830
  %4878 = vst.msk [vmem:[#allocation3 + $0x10] sm:$0xf] %vm4406, %v4832
  %4879 = vst.msk [vmem:[#allocation3 + $0x1c] sm:$0xf] %vm4406, %v4834
  %4880 = vst.msk [vmem:[#allocation3 + $0x28] sm:$0xf] %vm4406, %v4836
  %4881 = vst.msk [vmem:[#allocation3 + $0x34] sm:$0xf] %vm4406, %v4838
  %4882 = vst.msk [vmem:[#allocation3 + $0x40] sm:$0xf] %vm4406, %v4840
  %4883 = vst.msk [vmem:[#allocation3 + $0x4c] sm:$0xf] %vm4406, %v4842
  %4884 = vst.msk [vmem:[#allocation3 + $0x58] sm:$0xf] %vm4406, %v4844
  %4885 = vst.msk [vmem:[#allocation3 + $0x64] sm:$0xf] %vm4406, %v4846
  %4886 = vst.msk [vmem:[#allocation3 + $0x70] sm:$0xf] %vm4406, %v4848
  %4887 = vst.msk [vmem:[#allocation3 + $0x7c] sm:$0xf] %vm4406, %v4850
  %4888 = vst.msk [vmem:[#allocation3 + $0x88] sm:$0xf] %vm4406, %v4852
  %4889 = vst.msk [vmem:[#allocation3 + $0x94] sm:$0xf] %vm4406, %v4854
  %4890 = vst.msk [vmem:[#allocation3 + $0xa0] sm:$0xf] %vm4406, %v4856
  %4891 = vst.msk [vmem:[#allocation3 + $0xac] sm:$0xf] %vm4406, %v4858
  %4892 = vst.msk [vmem:[#allocation3 + $0xb8] sm:$0xf] %vm4406, %v4860
  %v4893 = vld [vmem:[#allocation2 + $0xc8] sm:$0xf]
  %v4894 = vld [vmem:[#allocation2 + $0xcc] sm:$0xf]
  %v4895 = vld [vmem:[#allocation2 + $0xd0] sm:$0xf]
  %v4896 = vld [vmem:[#allocation2 + $0xd4] sm:$0xf]
  %v4897 = vld [vmem:[#allocation2 + $0xd8] sm:$0xf]
  %v4898 = vld [vmem:[#allocation2 + $0xdc] sm:$0xf]
  %v4899 = vld [vmem:[#allocation2 + $0xe0] sm:$0xf]
  %v4900 = vld [vmem:[#allocation2 + $0xe4] sm:$0xf]
  %v4901 = vld [vmem:[#allocation2 + $0xe8] sm:$0xf]
  %v4902 = vld [vmem:[#allocation2 + $0xec] sm:$0xf]
  %v4903 = vld [vmem:[#allocation2 + $0xf0] sm:$0xf]
  %v4904 = vld [vmem:[#allocation2 + $0xf4] sm:$0xf]
  %v4905 = vld [vmem:[#allocation2 + $0xf8] sm:$0xf]
  %v4906 = vld [vmem:[#allocation2 + $0xfc] sm:$0xf]
  %v4907 = vld [vmem:[#allocation2 + $0x100] sm:$0xf]
  %v4908 = vld [vmem:[#allocation2 + $0x104] sm:$0xf]
  %4909 = vst.msk [vmem:[#allocation3 + $0x8] sm:$0xf] %vm2029, %v4893
  %4910 = vst.msk [vmem:[#allocation3 + $0x14] sm:$0xf] %vm2029, %v4894
  %4911 = vst.msk [vmem:[#allocation3 + $0x20] sm:$0xf] %vm2029, %v4895
  %4912 = vst.msk [vmem:[#allocation3 + $0x2c] sm:$0xf] %vm2029, %v4896
  %4913 = vst.msk [vmem:[#allocation3 + $0x38] sm:$0xf] %vm2029, %v4897
  %4914 = vst.msk [vmem:[#allocation3 + $0x44] sm:$0xf] %vm2029, %v4898
  %4915 = vst.msk [vmem:[#allocation3 + $0x50] sm:$0xf] %vm2029, %v4899
  %4916 = vst.msk [vmem:[#allocation3 + $0x5c] sm:$0xf] %vm2029, %v4900
  %4917 = vst.msk [vmem:[#allocation3 + $0x68] sm:$0xf] %vm2029, %v4901
  %4918 = vst.msk [vmem:[#allocation3 + $0x74] sm:$0xf] %vm2029, %v4902
  %4919 = vst.msk [vmem:[#allocation3 + $0x80] sm:$0xf] %vm2029, %v4903
  %4920 = vst.msk [vmem:[#allocation3 + $0x8c] sm:$0xf] %vm2029, %v4904
  %4921 = vst.msk [vmem:[#allocation3 + $0x98] sm:$0xf] %vm2029, %v4905
  %4922 = vst.msk [vmem:[#allocation3 + $0xa4] sm:$0xf] %vm2029, %v4906
  %4923 = vst.msk [vmem:[#allocation3 + $0xb0] sm:$0xf] %vm2029, %v4907
  %4924 = vst.msk [vmem:[#allocation3 + $0xbc] sm:$0xf] %vm2029, %v4908
  %v4925 = vld [vmem:[#allocation2 + $0x84] sm:$0xf]
  %v4926 = vld [vmem:[#allocation2 + $0x88] sm:$0xf]
  %v4927 = vld [vmem:[#allocation2 + $0x8c] sm:$0xf]
  %v4928 = vld [vmem:[#allocation2 + $0x90] sm:$0xf]
  %v4929 = vld [vmem:[#allocation2 + $0x94] sm:$0xf]
  %v4930 = vld [vmem:[#allocation2 + $0x98] sm:$0xf]
  %v4931 = vld [vmem:[#allocation2 + $0x9c] sm:$0xf]
  %v4932 = vld [vmem:[#allocation2 + $0xa0] sm:$0xf]
  %v4933 = vld [vmem:[#allocation2 + $0xa4] sm:$0xf]
  %v4934 = vld [vmem:[#allocation2 + $0xa8] sm:$0xf]
  %v4935 = vld [vmem:[#allocation2 + $0xac] sm:$0xf]
  %v4936 = vld [vmem:[#allocation2 + $0xb0] sm:$0xf]
  %v4937 = vld [vmem:[#allocation2 + $0xb4] sm:$0xf]
  %v4938 = vld [vmem:[#allocation2 + $0xb8] sm:$0xf]
  %v4939 = vld [vmem:[#allocation2 + $0xbc] sm:$0xf]
  %v4940 = vld [vmem:[#allocation2 + $0xc0] sm:$0xf]
  %v4941 = vld [vmem:[#allocation2 + $0xc4] sm:$0x1]
  %v4943 = vshrl.u32 %v4925, 16
  %v4945 = vrot.slane %v4943, 4
  %v4946 = vshll.u32 %v4925, 16
  %v4948 = vrot.slane %v4946, 5
  %v4949 = vor.u32 %v4945, %v4948
  %v4950 = vrot.slane %v4949, 4
  %v4952 = vshll.u32 %v4926, 16
  %v4954 = vrot.slane %v4952, 5
  %v4955 = vsel %vm2438, %v4950, %v4954
  %v4956 = vshrl.u32 %v4926, 16
  %v4958 = vrot.slane %v4956, 4
  %v4959 = vor.u32 %v4958, %v4954
  %v4960 = vrot.slane %v4959, 4
  %v4962 = vshll.u32 %v4927, 16
  %v4964 = vrot.slane %v4962, 5
  %v4965 = vsel %vm2438, %v4960, %v4964
  %v4966 = vshrl.u32 %v4927, 16
  %v4968 = vrot.slane %v4966, 4
  %v4969 = vor.u32 %v4968, %v4964
  %v4970 = vrot.slane %v4969, 4
  %v4972 = vshll.u32 %v4928, 16
  %v4974 = vrot.slane %v4972, 5
  %v4975 = vsel %vm2438, %v4970, %v4974
  %v4976 = vshrl.u32 %v4928, 16
  %v4978 = vrot.slane %v4976, 4
  %v4979 = vor.u32 %v4978, %v4974
  %v4980 = vrot.slane %v4979, 4
  %v4982 = vshll.u32 %v4929, 16
  %v4984 = vrot.slane %v4982, 5
  %v4985 = vsel %vm2438, %v4980, %v4984
  %v4986 = vshrl.u32 %v4929, 16
  %v4988 = vrot.slane %v4986, 4
  %v4989 = vor.u32 %v4988, %v4984
  %v4990 = vrot.slane %v4989, 4
  %v4992 = vshll.u32 %v4930, 16
  %v4994 = vrot.slane %v4992, 5
  %v4995 = vsel %vm2438, %v4990, %v4994
  %v4996 = vshrl.u32 %v4930, 16
  %v4998 = vrot.slane %v4996, 4
  %v4999 = vor.u32 %v4998, %v4994
  %v5000 = vrot.slane %v4999, 4
  %v5002 = vshll.u32 %v4931, 16
  %v5004 = vrot.slane %v5002, 5
  %v5005 = vsel %vm2438, %v5000, %v5004
  %v5006 = vshrl.u32 %v4931, 16
  %v5008 = vrot.slane %v5006, 4
  %v5009 = vor.u32 %v5008, %v5004
  %v5010 = vrot.slane %v5009, 4
  %v5012 = vshll.u32 %v4932, 16
  %v5014 = vrot.slane %v5012, 5
  %v5015 = vsel %vm2438, %v5010, %v5014
  %v5016 = vshrl.u32 %v4932, 16
  %v5018 = vrot.slane %v5016, 4
  %v5019 = vor.u32 %v5018, %v5014
  %v5020 = vrot.slane %v5019, 4
  %v5022 = vshll.u32 %v4933, 16
  %v5024 = vrot.slane %v5022, 5
  %v5025 = vsel %vm2438, %v5020, %v5024
  %v5026 = vshrl.u32 %v4933, 16
  %v5028 = vrot.slane %v5026, 4
  %v5029 = vor.u32 %v5028, %v5024
  %v5030 = vrot.slane %v5029, 4
  %v5032 = vshll.u32 %v4934, 16
  %v5034 = vrot.slane %v5032, 5
  %v5035 = vsel %vm2438, %v5030, %v5034
  %v5036 = vshrl.u32 %v4934, 16
  %v5038 = vrot.slane %v5036, 4
  %v5039 = vor.u32 %v5038, %v5034
  %v5040 = vrot.slane %v5039, 4
  %v5042 = vshll.u32 %v4935, 16
  %v5044 = vrot.slane %v5042, 5
  %v5045 = vsel %vm2438, %v5040, %v5044
  %v5046 = vshrl.u32 %v4935, 16
  %v5048 = vrot.slane %v5046, 4
  %v5049 = vor.u32 %v5048, %v5044
  %v5050 = vrot.slane %v5049, 4
  %v5052 = vshll.u32 %v4936, 16
  %v5054 = vrot.slane %v5052, 5
  %v5055 = vsel %vm2438, %v5050, %v5054
  %v5056 = vshrl.u32 %v4936, 16
  %v5058 = vrot.slane %v5056, 4
  %v5059 = vor.u32 %v5058, %v5054
  %v5060 = vrot.slane %v5059, 4
  %v5062 = vshll.u32 %v4937, 16
  %v5064 = vrot.slane %v5062, 5
  %v5065 = vsel %vm2438, %v5060, %v5064
  %v5066 = vshrl.u32 %v4937, 16
  %v5068 = vrot.slane %v5066, 4
  %v5069 = vor.u32 %v5068, %v5064
  %v5070 = vrot.slane %v5069, 4
  %v5072 = vshll.u32 %v4938, 16
  %v5074 = vrot.slane %v5072, 5
  %v5075 = vsel %vm2438, %v5070, %v5074
  %v5076 = vshrl.u32 %v4938, 16
  %v5078 = vrot.slane %v5076, 4
  %v5079 = vor.u32 %v5078, %v5074
  %v5080 = vrot.slane %v5079, 4
  %v5082 = vshll.u32 %v4939, 16
  %v5084 = vrot.slane %v5082, 5
  %v5085 = vsel %vm2438, %v5080, %v5084
  %v5086 = vshrl.u32 %v4939, 16
  %v5088 = vrot.slane %v5086, 4
  %v5089 = vor.u32 %v5088, %v5084
  %v5090 = vrot.slane %v5089, 4
  %v5092 = vshll.u32 %v4940, 16
  %v5094 = vrot.slane %v5092, 5
  %v5095 = vsel %vm2438, %v5090, %v5094
  %v5096 = vshrl.u32 %v4940, 16
  %v5098 = vrot.slane %v5096, 4
  %v5099 = vor.u32 %v5098, %v5094
  %v5100 = vrot.slane %v5099, 4
  %v5102 = vshll.u32 %v4941, 16
  %v5104 = vrot.slane %v5102, 5
  %v5105 = vsel %vm2438, %v5100, %v5104
  %5122 = vst.msk [vmem:[#allocation3 + $0xc0] sm:$0xf] %vm2029, %v4955
  %5123 = vst.msk [vmem:[#allocation3 + $0xcc] sm:$0xf] %vm2029, %v4965
  %5124 = vst.msk [vmem:[#allocation3 + $0xd8] sm:$0xf] %vm2029, %v4975
  %5125 = vst.msk [vmem:[#allocation3 + $0xe4] sm:$0xf] %vm2029, %v4985
  %5126 = vst.msk [vmem:[#allocation3 + $0xf0] sm:$0xf] %vm2029, %v4995
  %5127 = vst.msk [vmem:[#allocation3 + $0xfc] sm:$0xf] %vm2029, %v5005
  %5128 = vst.msk [vmem:[#allocation3 + $0x108] sm:$0xf] %vm2029, %v5015
  %5129 = vst.msk [vmem:[#allocation3 + $0x114] sm:$0xf] %vm2029, %v5025
  %5130 = vst.msk [vmem:[#allocation3 + $0x120] sm:$0xf] %vm2029, %v5035
  %5131 = vst.msk [vmem:[#allocation3 + $0x12c] sm:$0xf] %vm2029, %v5045
  %5132 = vst.msk [vmem:[#allocation3 + $0x138] sm:$0xf] %vm2029, %v5055
  %5133 = vst.msk [vmem:[#allocation3 + $0x144] sm:$0xf] %vm2029, %v5065
  %5134 = vst.msk [vmem:[#allocation3 + $0x150] sm:$0xf] %vm2029, %v5075
  %5135 = vst.msk [vmem:[#allocation3 + $0x15c] sm:$0xf] %vm2029, %v5085
  %5136 = vst.msk [vmem:[#allocation3 + $0x168] sm:$0xf] %vm2029, %v5095
  %5137 = vst.msk [vmem:[#allocation3 + $0x174] sm:$0xf] %vm2029, %v5105
  %v5138 = vld [vmem:[#allocation2 + $0xc4] sm:$0xf]
  %v5139 = vld [vmem:[#allocation2 + $0xc8] sm:$0xf]
  %v5140 = vld [vmem:[#allocation2 + $0xcc] sm:$0xf]
  %v5141 = vld [vmem:[#allocation2 + $0xd0] sm:$0xf]
  %v5142 = vld [vmem:[#allocation2 + $0xd4] sm:$0xf]
  %v5143 = vld [vmem:[#allocation2 + $0xd8] sm:$0xf]
  %v5144 = vld [vmem:[#allocation2 + $0xdc] sm:$0xf]
  %v5145 = vld [vmem:[#allocation2 + $0xe0] sm:$0xf]
  %v5146 = vld [vmem:[#allocation2 + $0xe4] sm:$0xf]
  %v5147 = vld [vmem:[#allocation2 + $0xe8] sm:$0xf]
  %v5148 = vld [vmem:[#allocation2 + $0xec] sm:$0xf]
  %v5149 = vld [vmem:[#allocation2 + $0xf0] sm:$0xf]
  %v5150 = vld [vmem:[#allocation2 + $0xf4] sm:$0xf]
  %v5151 = vld [vmem:[#allocation2 + $0xf8] sm:$0xf]
  %v5152 = vld [vmem:[#allocation2 + $0xfc] sm:$0xf]
  %v5153 = vld [vmem:[#allocation2 + $0x100] sm:$0xf]
  %v5154 = vld [vmem:[#allocation2 + $0x104] sm:$0x1]
  %v5156 = vshrl.u32 %v5138, 16
  %v5158 = vrot.slane %v5156, 4
  %v5159 = vshll.u32 %v5138, 16
  %v5161 = vrot.slane %v5159, 5
  %v5162 = vor.u32 %v5158, %v5161
  %v5163 = vrot.slane %v5162, 4
  %v5165 = vshll.u32 %v5139, 16
  %v5167 = vrot.slane %v5165, 5
  %v5168 = vsel %vm2438, %v5163, %v5167
  %v5169 = vshrl.u32 %v5139, 16
  %v5171 = vrot.slane %v5169, 4
  %v5172 = vor.u32 %v5171, %v5167
  %v5173 = vrot.slane %v5172, 4
  %v5175 = vshll.u32 %v5140, 16
  %v5177 = vrot.slane %v5175, 5
  %v5178 = vsel %vm2438, %v5173, %v5177
  %v5179 = vshrl.u32 %v5140, 16
  %v5181 = vrot.slane %v5179, 4
  %v5182 = vor.u32 %v5181, %v5177
  %v5183 = vrot.slane %v5182, 4
  %v5185 = vshll.u32 %v5141, 16
  %v5187 = vrot.slane %v5185, 5
  %v5188 = vsel %vm2438, %v5183, %v5187
  %v5189 = vshrl.u32 %v5141, 16
  %v5191 = vrot.slane %v5189, 4
  %v5192 = vor.u32 %v5191, %v5187
  %v5193 = vrot.slane %v5192, 4
  %v5195 = vshll.u32 %v5142, 16
  %v5197 = vrot.slane %v5195, 5
  %v5198 = vsel %vm2438, %v5193, %v5197
  %v5199 = vshrl.u32 %v5142, 16
  %v5201 = vrot.slane %v5199, 4
  %v5202 = vor.u32 %v5201, %v5197
  %v5203 = vrot.slane %v5202, 4
  %v5205 = vshll.u32 %v5143, 16
  %v5207 = vrot.slane %v5205, 5
  %v5208 = vsel %vm2438, %v5203, %v5207
  %v5209 = vshrl.u32 %v5143, 16
  %v5211 = vrot.slane %v5209, 4
  %v5212 = vor.u32 %v5211, %v5207
  %v5213 = vrot.slane %v5212, 4
  %v5215 = vshll.u32 %v5144, 16
  %v5217 = vrot.slane %v5215, 5
  %v5218 = vsel %vm2438, %v5213, %v5217
  %v5219 = vshrl.u32 %v5144, 16
  %v5221 = vrot.slane %v5219, 4
  %v5222 = vor.u32 %v5221, %v5217
  %v5223 = vrot.slane %v5222, 4
  %v5225 = vshll.u32 %v5145, 16
  %v5227 = vrot.slane %v5225, 5
  %v5228 = vsel %vm2438, %v5223, %v5227
  %v5229 = vshrl.u32 %v5145, 16
  %v5231 = vrot.slane %v5229, 4
  %v5232 = vor.u32 %v5231, %v5227
  %v5233 = vrot.slane %v5232, 4
  %v5235 = vshll.u32 %v5146, 16
  %v5237 = vrot.slane %v5235, 5
  %v5238 = vsel %vm2438, %v5233, %v5237
  %v5239 = vshrl.u32 %v5146, 16
  %v5241 = vrot.slane %v5239, 4
  %v5242 = vor.u32 %v5241, %v5237
  %v5243 = vrot.slane %v5242, 4
  %v5245 = vshll.u32 %v5147, 16
  %v5247 = vrot.slane %v5245, 5
  %v5248 = vsel %vm2438, %v5243, %v5247
  %v5249 = vshrl.u32 %v5147, 16
  %v5251 = vrot.slane %v5249, 4
  %v5252 = vor.u32 %v5251, %v5247
  %v5253 = vrot.slane %v5252, 4
  %v5255 = vshll.u32 %v5148, 16
  %v5257 = vrot.slane %v5255, 5
  %v5258 = vsel %vm2438, %v5253, %v5257
  %v5259 = vshrl.u32 %v5148, 16
  %v5261 = vrot.slane %v5259, 4
  %v5262 = vor.u32 %v5261, %v5257
  %v5263 = vrot.slane %v5262, 4
  %v5265 = vshll.u32 %v5149, 16
  %v5267 = vrot.slane %v5265, 5
  %v5268 = vsel %vm2438, %v5263, %v5267
  %v5269 = vshrl.u32 %v5149, 16
  %v5271 = vrot.slane %v5269, 4
  %v5272 = vor.u32 %v5271, %v5267
  %v5273 = vrot.slane %v5272, 4
  %v5275 = vshll.u32 %v5150, 16
  %v5277 = vrot.slane %v5275, 5
  %v5278 = vsel %vm2438, %v5273, %v5277
  %v5279 = vshrl.u32 %v5150, 16
  %v5281 = vrot.slane %v5279, 4
  %v5282 = vor.u32 %v5281, %v5277
  %v5283 = vrot.slane %v5282, 4
  %v5285 = vshll.u32 %v5151, 16
  %v5287 = vrot.slane %v5285, 5
  %v5288 = vsel %vm2438, %v5283, %v5287
  %v5289 = vshrl.u32 %v5151, 16
  %v5291 = vrot.slane %v5289, 4
  %v5292 = vor.u32 %v5291, %v5287
  %v5293 = vrot.slane %v5292, 4
  %v5295 = vshll.u32 %v5152, 16
  %v5297 = vrot.slane %v5295, 5
  %v5298 = vsel %vm2438, %v5293, %v5297
  %v5299 = vshrl.u32 %v5152, 16
  %v5301 = vrot.slane %v5299, 4
  %v5302 = vor.u32 %v5301, %v5297
  %v5303 = vrot.slane %v5302, 4
  %v5305 = vshll.u32 %v5153, 16
  %v5307 = vrot.slane %v5305, 5
  %v5308 = vsel %vm2438, %v5303, %v5307
  %v5309 = vshrl.u32 %v5153, 16
  %v5311 = vrot.slane %v5309, 4
  %v5312 = vor.u32 %v5311, %v5307
  %v5313 = vrot.slane %v5312, 4
  %v5315 = vshll.u32 %v5154, 16
  %v5317 = vrot.slane %v5315, 5
  %v5318 = vsel %vm2438, %v5313, %v5317
  %5319 = vrot.lane.b32.xlu0 %v5168, 32
  %v5320 = vpop.permute.xlu0 %5319
  %5321 = vrot.lane.b32.xlu0 %v5178, 32
  %v5322 = vpop.permute.xlu0 %5321
  %5323 = vrot.lane.b32.xlu0 %v5188, 32
  %v5324 = vpop.permute.xlu0 %5323
  %5325 = vrot.lane.b32.xlu0 %v5198, 32
  %v5326 = vpop.permute.xlu0 %5325
  %5327 = vrot.lane.b32.xlu0 %v5208, 32
  %v5328 = vpop.permute.xlu0 %5327
  %5329 = vrot.lane.b32.xlu0 %v5218, 32
  %v5330 = vpop.permute.xlu0 %5329
  %5331 = vrot.lane.b32.xlu0 %v5228, 32
  %v5332 = vpop.permute.xlu0 %5331
  %5333 = vrot.lane.b32.xlu0 %v5238, 32
  %v5334 = vpop.permute.xlu0 %5333
  %5335 = vrot.lane.b32.xlu0 %v5248, 32
  %v5336 = vpop.permute.xlu0 %5335
  %5337 = vrot.lane.b32.xlu0 %v5258, 32
  %v5338 = vpop.permute.xlu0 %5337
  %5339 = vrot.lane.b32.xlu0 %v5268, 32
  %v5340 = vpop.permute.xlu0 %5339
  %5341 = vrot.lane.b32.xlu0 %v5278, 32
  %v5342 = vpop.permute.xlu0 %5341
  %5343 = vrot.lane.b32.xlu0 %v5288, 32
  %v5344 = vpop.permute.xlu0 %5343
  %5345 = vrot.lane.b32.xlu0 %v5298, 32
  %v5346 = vpop.permute.xlu0 %5345
  %5347 = vrot.lane.b32.xlu0 %v5308, 32
  %v5348 = vpop.permute.xlu0 %5347
  %5349 = vrot.lane.b32.xlu0 %v5318, 32
  %v5350 = vpop.permute.xlu0 %5349
  %5367 = vst.msk [vmem:[#allocation3 + $0xc0] sm:$0xf] %vm3735, %v5320
  %5368 = vst.msk [vmem:[#allocation3 + $0xcc] sm:$0xf] %vm3735, %v5322
  %5369 = vst.msk [vmem:[#allocation3 + $0xd8] sm:$0xf] %vm3735, %v5324
  %5370 = vst.msk [vmem:[#allocation3 + $0xe4] sm:$0xf] %vm3735, %v5326
  %5371 = vst.msk [vmem:[#allocation3 + $0xf0] sm:$0xf] %vm3735, %v5328
  %5372 = vst.msk [vmem:[#allocation3 + $0xfc] sm:$0xf] %vm3735, %v5330
  %5373 = vst.msk [vmem:[#allocation3 + $0x108] sm:$0xf] %vm3735, %v5332
  %5374 = vst.msk [vmem:[#allocation3 + $0x114] sm:$0xf] %vm3735, %v5334
  %5375 = vst.msk [vmem:[#allocation3 + $0x120] sm:$0xf] %vm3735, %v5336
  %5376 = vst.msk [vmem:[#allocation3 + $0x12c] sm:$0xf] %vm3735, %v5338
  %5377 = vst.msk [vmem:[#allocation3 + $0x138] sm:$0xf] %vm3735, %v5340
  %5378 = vst.msk [vmem:[#allocation3 + $0x144] sm:$0xf] %vm3735, %v5342
  %5379 = vst.msk [vmem:[#allocation3 + $0x150] sm:$0xf] %vm3735, %v5344
  %5380 = vst.msk [vmem:[#allocation3 + $0x15c] sm:$0xf] %vm3735, %v5346
  %5381 = vst.msk [vmem:[#allocation3 + $0x168] sm:$0xf] %vm3735, %v5348
  %5382 = vst.msk [vmem:[#allocation3 + $0x174] sm:$0xf] %vm3735, %v5350
  %v5383 = vld [vmem:[#allocation2 + $0x84] sm:$0xe]
  %v5384 = vld [vmem:[#allocation2 + $0x88] sm:$0xf]
  %v5385 = vld [vmem:[#allocation2 + $0x8c] sm:$0xf]
  %v5386 = vld [vmem:[#allocation2 + $0x90] sm:$0xf]
  %v5387 = vld [vmem:[#allocation2 + $0x94] sm:$0xf]
  %v5388 = vld [vmem:[#allocation2 + $0x98] sm:$0xf]
  %v5389 = vld [vmem:[#allocation2 + $0x9c] sm:$0xf]
  %v5390 = vld [vmem:[#allocation2 + $0xa0] sm:$0xf]
  %v5391 = vld [vmem:[#allocation2 + $0xa4] sm:$0xf]
  %v5392 = vld [vmem:[#allocation2 + $0xa8] sm:$0xf]
  %v5393 = vld [vmem:[#allocation2 + $0xac] sm:$0xf]
  %v5394 = vld [vmem:[#allocation2 + $0xb0] sm:$0xf]
  %v5395 = vld [vmem:[#allocation2 + $0xb4] sm:$0xf]
  %v5396 = vld [vmem:[#allocation2 + $0xb8] sm:$0xf]
  %v5397 = vld [vmem:[#allocation2 + $0xbc] sm:$0xf]
  %v5398 = vld [vmem:[#allocation2 + $0xc0] sm:$0xf]
  %v5399 = vld [vmem:[#allocation2 + $0xc4] sm:$0x1]
  %5400 = vset.pattern.permute.xlu0 1
  %5401 = vperm.xlu0 %5400, %v3250
  %v5402 = vpop.permute.xlu0 %5401
  %v5405 = vunpack.c.l.s4 839922192
  %v5406 = vunpack.c.0.s8 %v5405
  %v5407 = vlaneseq
  %v5408 = vshrl.u32 %v5407, 7
  %v5409 = vsub.s32 %v5406, %v5408
  %v5410 = vrot.slane %v5402, %v5409
  %5411 = vset.pattern.permute.xlu0 1
  %5412 = vperm.xlu0 %5411, %v3251
  %v5413 = vpop.permute.xlu0 %5412
  %v5416 = vunpack.c.l.s4 839922192
  %v5417 = vunpack.c.0.s8 %v5416
  %v5418 = vlaneseq
  %v5419 = vshrl.u32 %v5418, 7
  %v5420 = vsub.s32 %v5417, %v5419
  %v5421 = vrot.slane %v5413, %v5420
  %5422 = vset.pattern.permute.xlu0 1
  %5423 = vperm.xlu0 %5422, %v3252
  %v5424 = vpop.permute.xlu0 %5423
  %v5427 = vunpack.c.l.s4 839922192
  %v5428 = vunpack.c.0.s8 %v5427
  %v5429 = vlaneseq
  %v5430 = vshrl.u32 %v5429, 7
  %v5431 = vsub.s32 %v5428, %v5430
  %v5432 = vrot.slane %v5424, %v5431
  %5433 = vset.pattern.permute.xlu0 1
  %5434 = vperm.xlu0 %5433, %v3253
  %v5435 = vpop.permute.xlu0 %5434
  %v5438 = vunpack.c.l.s4 839922192
  %v5439 = vunpack.c.0.s8 %v5438
  %v5440 = vlaneseq
  %v5441 = vshrl.u32 %v5440, 7
  %v5442 = vsub.s32 %v5439, %v5441
  %v5443 = vrot.slane %v5435, %v5442
  %5444 = vset.pattern.permute.xlu0 1
  %5445 = vperm.xlu0 %5444, %v3254
  %v5446 = vpop.permute.xlu0 %5445
  %v5449 = vunpack.c.l.s4 839922192
  %v5450 = vunpack.c.0.s8 %v5449
  %v5451 = vlaneseq
  %v5452 = vshrl.u32 %v5451, 7
  %v5453 = vsub.s32 %v5450, %v5452
  %v5454 = vrot.slane %v5446, %v5453
  %5455 = vset.pattern.permute.xlu0 1
  %5456 = vperm.xlu0 %5455, %v3255
  %v5457 = vpop.permute.xlu0 %5456
  %v5460 = vunpack.c.l.s4 839922192
  %v5461 = vunpack.c.0.s8 %v5460
  %v5462 = vlaneseq
  %v5463 = vshrl.u32 %v5462, 7
  %v5464 = vsub.s32 %v5461, %v5463
  %v5465 = vrot.slane %v5457, %v5464
  %5466 = vset.pattern.permute.xlu0 1
  %5467 = vperm.xlu0 %5466, %v3256
  %v5468 = vpop.permute.xlu0 %5467
  %v5471 = vunpack.c.l.s4 839922192
  %v5472 = vunpack.c.0.s8 %v5471
  %v5473 = vlaneseq
  %v5474 = vshrl.u32 %v5473, 7
  %v5475 = vsub.s32 %v5472, %v5474
  %v5476 = vrot.slane %v5468, %v5475
  %5477 = vset.pattern.permute.xlu0 1
  %5478 = vperm.xlu0 %5477, %v3257
  %v5479 = vpop.permute.xlu0 %5478
  %v5482 = vunpack.c.l.s4 839922192
  %v5483 = vunpack.c.0.s8 %v5482
  %v5484 = vlaneseq
  %v5485 = vshrl.u32 %v5484, 7
  %v5486 = vsub.s32 %v5483, %v5485
  %v5487 = vrot.slane %v5479, %v5486
  %5488 = vset.pattern.permute.xlu0 1
  %5489 = vperm.xlu0 %5488, %v3258
  %v5490 = vpop.permute.xlu0 %5489
  %v5493 = vunpack.c.l.s4 839922192
  %v5494 = vunpack.c.0.s8 %v5493
  %v5495 = vlaneseq
  %v5496 = vshrl.u32 %v5495, 7
  %v5497 = vsub.s32 %v5494, %v5496
  %v5498 = vrot.slane %v5490, %v5497
  %5499 = vset.pattern.permute.xlu0 1
  %5500 = vperm.xlu0 %5499, %v3259
  %v5501 = vpop.permute.xlu0 %5500
  %v5504 = vunpack.c.l.s4 839922192
  %v5505 = vunpack.c.0.s8 %v5504
  %v5506 = vlaneseq
  %v5507 = vshrl.u32 %v5506, 7
  %v5508 = vsub.s32 %v5505, %v5507
  %v5509 = vrot.slane %v5501, %v5508
  %5510 = vset.pattern.permute.xlu0 1
  %5511 = vperm.xlu0 %5510, %v3260
  %v5512 = vpop.permute.xlu0 %5511
  %v5515 = vunpack.c.l.s4 839922192
  %v5516 = vunpack.c.0.s8 %v5515
  %v5517 = vlaneseq
  %v5518 = vshrl.u32 %v5517, 7
  %v5519 = vsub.s32 %v5516, %v5518
  %v5520 = vrot.slane %v5512, %v5519
  %5521 = vset.pattern.permute.xlu0 1
  %5522 = vperm.xlu0 %5521, %v3261
  %v5523 = vpop.permute.xlu0 %5522
  %v5526 = vunpack.c.l.s4 839922192
  %v5527 = vunpack.c.0.s8 %v5526
  %v5528 = vlaneseq
  %v5529 = vshrl.u32 %v5528, 7
  %v5530 = vsub.s32 %v5527, %v5529
  %v5531 = vrot.slane %v5523, %v5530
  %5532 = vset.pattern.permute.xlu0 1
  %5533 = vperm.xlu0 %5532, %v3262
  %v5534 = vpop.permute.xlu0 %5533
  %v5537 = vunpack.c.l.s4 839922192
  %v5538 = vunpack.c.0.s8 %v5537
  %v5539 = vlaneseq
  %v5540 = vshrl.u32 %v5539, 7
  %v5541 = vsub.s32 %v5538, %v5540
  %v5542 = vrot.slane %v5534, %v5541
  %5543 = vset.pattern.permute.xlu0 1
  %5544 = vperm.xlu0 %5543, %v3263
  %v5545 = vpop.permute.xlu0 %5544
  %v5548 = vunpack.c.l.s4 839922192
  %v5549 = vunpack.c.0.s8 %v5548
  %v5550 = vlaneseq
  %v5551 = vshrl.u32 %v5550, 7
  %v5552 = vsub.s32 %v5549, %v5551
  %v5553 = vrot.slane %v5545, %v5552
  %5554 = vset.pattern.permute.xlu0 1
  %5555 = vperm.xlu0 %5554, %v3264
  %v5556 = vpop.permute.xlu0 %5555
  %v5559 = vunpack.c.l.s4 839922192
  %v5560 = vunpack.c.0.s8 %v5559
  %v5561 = vlaneseq
  %v5562 = vshrl.u32 %v5561, 7
  %v5563 = vsub.s32 %v5560, %v5562
  %v5564 = vrot.slane %v5556, %v5563
  %5565 = vset.pattern.permute.xlu0 1
  %5566 = vperm.xlu0 %5565, %v3265
  %v5567 = vpop.permute.xlu0 %5566
  %v5570 = vunpack.c.l.s4 839922192
  %v5571 = vunpack.c.0.s8 %v5570
  %v5572 = vlaneseq
  %v5573 = vshrl.u32 %v5572, 7
  %v5574 = vsub.s32 %v5571, %v5573
  %v5575 = vrot.slane %v5567, %v5574
  %vm5592 = vcmask 1040384
  %vm5593 = vcmask 1044484
  %vm5594 = vmor %vm5592, %vm5593
  %v5595 = vrot.slane %v5410, 7
  %v5596 = vrot.slane %v5595, 4
  %v5597 = vrot.slane %v5421, 7
  %v5598 = vsel %vm5594, %v5596, %v5597
  %v5599 = vrot.slane %v5597, 4
  %v5600 = vrot.slane %v5432, 7
  %v5601 = vsel %vm5594, %v5599, %v5600
  %v5602 = vrot.slane %v5600, 4
  %v5603 = vrot.slane %v5443, 7
  %v5604 = vsel %vm5594, %v5602, %v5603
  %v5605 = vrot.slane %v5603, 4
  %v5606 = vrot.slane %v5454, 7
  %v5607 = vsel %vm5594, %v5605, %v5606
  %v5608 = vrot.slane %v5606, 4
  %v5609 = vrot.slane %v5465, 7
  %v5610 = vsel %vm5594, %v5608, %v5609
  %v5611 = vrot.slane %v5609, 4
  %v5612 = vrot.slane %v5476, 7
  %v5613 = vsel %vm5594, %v5611, %v5612
  %v5614 = vrot.slane %v5612, 4
  %v5615 = vrot.slane %v5487, 7
  %v5616 = vsel %vm5594, %v5614, %v5615
  %v5617 = vrot.slane %v5615, 4
  %v5618 = vrot.slane %v5498, 7
  %v5619 = vsel %vm5594, %v5617, %v5618
  %v5620 = vrot.slane %v5618, 4
  %v5621 = vrot.slane %v5509, 7
  %v5622 = vsel %vm5594, %v5620, %v5621
  %v5623 = vrot.slane %v5621, 4
  %v5624 = vrot.slane %v5520, 7
  %v5625 = vsel %vm5594, %v5623, %v5624
  %v5626 = vrot.slane %v5624, 4
  %v5627 = vrot.slane %v5531, 7
  %v5628 = vsel %vm5594, %v5626, %v5627
  %v5629 = vrot.slane %v5627, 4
  %v5630 = vrot.slane %v5542, 7
  %v5631 = vsel %vm5594, %v5629, %v5630
  %v5632 = vrot.slane %v5630, 4
  %v5633 = vrot.slane %v5553, 7
  %v5634 = vsel %vm5594, %v5632, %v5633
  %v5635 = vrot.slane %v5633, 4
  %v5636 = vrot.slane %v5564, 7
  %v5637 = vsel %vm5594, %v5635, %v5636
  %v5638 = vrot.slane %v5636, 4
  %v5639 = vrot.slane %v5575, 7
  %v5640 = vsel %vm5594, %v5638, %v5639
  %v5641 = vrot.slane %v5639, 4
  %v5659 = vmul.bf16 %v5383, %v5595
  %v5660 = vmul.bf16 %v5384, %v5598
  %v5661 = vmul.bf16 %v5385, %v5601
  %v5662 = vmul.bf16 %v5386, %v5604
  %v5663 = vmul.bf16 %v5387, %v5607
  %v5664 = vmul.bf16 %v5388, %v5610
  %v5665 = vmul.bf16 %v5389, %v5613
  %v5666 = vmul.bf16 %v5390, %v5616
  %v5667 = vmul.bf16 %v5391, %v5619
  %v5668 = vmul.bf16 %v5392, %v5622
  %v5669 = vmul.bf16 %v5393, %v5625
  %v5670 = vmul.bf16 %v5394, %v5628
  %v5671 = vmul.bf16 %v5395, %v5631
  %v5672 = vmul.bf16 %v5396, %v5634
  %v5673 = vmul.bf16 %v5397, %v5637
  %v5674 = vmul.bf16 %v5398, %v5640
  %v5675 = vmul.bf16 %v5399, %v5641
  %v5693 = vrot.slane %v5659, 5
  %v5694 = vrot.slane %v5693, 4
  %v5695 = vrot.slane %v5660, 5
  %v5696 = vsel %vm2540, %v5694, %v5695
  %v5697 = vrot.slane %v5695, 4
  %v5698 = vrot.slane %v5661, 5
  %v5699 = vsel %vm2540, %v5697, %v5698
  %v5700 = vrot.slane %v5698, 4
  %v5701 = vrot.slane %v5662, 5
  %v5702 = vsel %vm2540, %v5700, %v5701
  %v5703 = vrot.slane %v5701, 4
  %v5704 = vrot.slane %v5663, 5
  %v5705 = vsel %vm2540, %v5703, %v5704
  %v5706 = vrot.slane %v5704, 4
  %v5707 = vrot.slane %v5664, 5
  %v5708 = vsel %vm2540, %v5706, %v5707
  %v5709 = vrot.slane %v5707, 4
  %v5710 = vrot.slane %v5665, 5
  %v5711 = vsel %vm2540, %v5709, %v5710
  %v5712 = vrot.slane %v5710, 4
  %v5713 = vrot.slane %v5666, 5
  %v5714 = vsel %vm2540, %v5712, %v5713
  %v5715 = vrot.slane %v5713, 4
  %v5716 = vrot.slane %v5667, 5
  %v5717 = vsel %vm2540, %v5715, %v5716
  %v5718 = vrot.slane %v5716, 4
  %v5719 = vrot.slane %v5668, 5
  %v5720 = vsel %vm2540, %v5718, %v5719
  %v5721 = vrot.slane %v5719, 4
  %v5722 = vrot.slane %v5669, 5
  %v5723 = vsel %vm2540, %v5721, %v5722
  %v5724 = vrot.slane %v5722, 4
  %v5725 = vrot.slane %v5670, 5
  %v5726 = vsel %vm2540, %v5724, %v5725
  %v5727 = vrot.slane %v5725, 4
  %v5728 = vrot.slane %v5671, 5
  %v5729 = vsel %vm2540, %v5727, %v5728
  %v5730 = vrot.slane %v5728, 4
  %v5731 = vrot.slane %v5672, 5
  %v5732 = vsel %vm2540, %v5730, %v5731
  %v5733 = vrot.slane %v5731, 4
  %v5734 = vrot.slane %v5673, 5
  %v5735 = vsel %vm2540, %v5733, %v5734
  %v5736 = vrot.slane %v5734, 4
  %v5737 = vrot.slane %v5674, 5
  %v5738 = vsel %vm2540, %v5736, %v5737
  %v5739 = vrot.slane %v5737, 4
  %v5740 = vrot.slane %v5675, 5
  %v5741 = vsel %vm2540, %v5739, %v5740
  %5742 = vrot.lane.b32.xlu0 %v5696, 64
  %v5743 = vpop.permute.xlu0 %5742
  %5744 = vrot.lane.b32.xlu0 %v5699, 64
  %v5745 = vpop.permute.xlu0 %5744
  %5746 = vrot.lane.b32.xlu0 %v5702, 64
  %v5747 = vpop.permute.xlu0 %5746
  %5748 = vrot.lane.b32.xlu0 %v5705, 64
  %v5749 = vpop.permute.xlu0 %5748
  %5750 = vrot.lane.b32.xlu0 %v5708, 64
  %v5751 = vpop.permute.xlu0 %5750
  %5752 = vrot.lane.b32.xlu0 %v5711, 64
  %v5753 = vpop.permute.xlu0 %5752
  %5754 = vrot.lane.b32.xlu0 %v5714, 64
  %v5755 = vpop.permute.xlu0 %5754
  %5756 = vrot.lane.b32.xlu0 %v5717, 64
  %v5757 = vpop.permute.xlu0 %5756
  %5758 = vrot.lane.b32.xlu0 %v5720, 64
  %v5759 = vpop.permute.xlu0 %5758
  %5760 = vrot.lane.b32.xlu0 %v5723, 64
  %v5761 = vpop.permute.xlu0 %5760
  %5762 = vrot.lane.b32.xlu0 %v5726, 64
  %v5763 = vpop.permute.xlu0 %5762
  %5764 = vrot.lane.b32.xlu0 %v5729, 64
  %v5765 = vpop.permute.xlu0 %5764
  %5766 = vrot.lane.b32.xlu0 %v5732, 64
  %v5767 = vpop.permute.xlu0 %5766
  %5768 = vrot.lane.b32.xlu0 %v5735, 64
  %v5769 = vpop.permute.xlu0 %5768
  %5770 = vrot.lane.b32.xlu0 %v5738, 64
  %v5771 = vpop.permute.xlu0 %5770
  %5772 = vrot.lane.b32.xlu0 %v5741, 64
  %v5773 = vpop.permute.xlu0 %5772
  %5790 = vst.msk [vmem:[#allocation3 + $0xc0] sm:$0xf] %vm3981, %v5743
  %5791 = vst.msk [vmem:[#allocation3 + $0xcc] sm:$0xf] %vm3981, %v5745
  %5792 = vst.msk [vmem:[#allocation3 + $0xd8] sm:$0xf] %vm3981, %v5747
  %5793 = vst.msk [vmem:[#allocation3 + $0xe4] sm:$0xf] %vm3981, %v5749
  %5794 = vst.msk [vmem:[#allocation3 + $0xf0] sm:$0xf] %vm3981, %v5751
  %5795 = vst.msk [vmem:[#allocation3 + $0xfc] sm:$0xf] %vm3981, %v5753
  %5796 = vst.msk [vmem:[#allocation3 + $0x108] sm:$0xf] %vm3981, %v5755
  %5797 = vst.msk [vmem:[#allocation3 + $0x114] sm:$0xf] %vm3981, %v5757
  %5798 = vst.msk [vmem:[#allocation3 + $0x120] sm:$0xf] %vm3981, %v5759
  %5799 = vst.msk [vmem:[#allocation3 + $0x12c] sm:$0xf] %vm3981, %v5761
  %5800 = vst.msk [vmem:[#allocation3 + $0x138] sm:$0xf] %vm3981, %v5763
  %5801 = vst.msk [vmem:[#allocation3 + $0x144] sm:$0xf] %vm3981, %v5765
  %5802 = vst.msk [vmem:[#allocation3 + $0x150] sm:$0xf] %vm3981, %v5767
  %5803 = vst.msk [vmem:[#allocation3 + $0x15c] sm:$0xf] %vm3981, %v5769
  %5804 = vst.msk [vmem:[#allocation3 + $0x168] sm:$0xf] %vm3981, %v5771
  %5805 = vst.msk [vmem:[#allocation3 + $0x174] sm:$0xf] %vm3981, %v5773
  %v5806 = vld [vmem:[#allocation2 + $0x8] sm:$0xf]
  %v5807 = vld [vmem:[#allocation2 + $0xc] sm:$0xf]
  %v5808 = vld [vmem:[#allocation2 + $0x10] sm:$0xf]
  %v5809 = vld [vmem:[#allocation2 + $0x14] sm:$0xf]
  %v5810 = vld [vmem:[#allocation2 + $0x18] sm:$0xf]
  %v5811 = vld [vmem:[#allocation2 + $0x1c] sm:$0xf]
  %v5812 = vld [vmem:[#allocation2 + $0x20] sm:$0xf]
  %v5813 = vld [vmem:[#allocation2 + $0x24] sm:$0xf]
  %v5814 = vld [vmem:[#allocation2 + $0x28] sm:$0xf]
  %v5815 = vld [vmem:[#allocation2 + $0x2c] sm:$0xf]
  %v5816 = vld [vmem:[#allocation2 + $0x30] sm:$0xf]
  %v5817 = vld [vmem:[#allocation2 + $0x34] sm:$0xf]
  %v5818 = vld [vmem:[#allocation2 + $0x38] sm:$0xf]
  %v5819 = vld [vmem:[#allocation2 + $0x3c] sm:$0xf]
  %v5820 = vld [vmem:[#allocation2 + $0x40] sm:$0xf]
  %v5821 = vld [vmem:[#allocation2 + $0x44] sm:$0xf]
  %5838 = vrot.lane.b32.xlu0 %v5806, 96
  %v5839 = vpop.permute.xlu0 %5838
  %5840 = vrot.lane.b32.xlu0 %v5807, 96
  %v5841 = vpop.permute.xlu0 %5840
  %5842 = vrot.lane.b32.xlu0 %v5808, 96
  %v5843 = vpop.permute.xlu0 %5842
  %5844 = vrot.lane.b32.xlu0 %v5809, 96
  %v5845 = vpop.permute.xlu0 %5844
  %5846 = vrot.lane.b32.xlu0 %v5810, 96
  %v5847 = vpop.permute.xlu0 %5846
  %5848 = vrot.lane.b32.xlu0 %v5811, 96
  %v5849 = vpop.permute.xlu0 %5848
  %5850 = vrot.lane.b32.xlu0 %v5812, 96
  %v5851 = vpop.permute.xlu0 %5850
  %5852 = vrot.lane.b32.xlu0 %v5813, 96
  %v5853 = vpop.permute.xlu0 %5852
  %5854 = vrot.lane.b32.xlu0 %v5814, 96
  %v5855 = vpop.permute.xlu0 %5854
  %5856 = vrot.lane.b32.xlu0 %v5815, 96
  %v5857 = vpop.permute.xlu0 %5856
  %5858 = vrot.lane.b32.xlu0 %v5816, 96
  %v5859 = vpop.permute.xlu0 %5858
  %5860 = vrot.lane.b32.xlu0 %v5817, 96
  %v5861 = vpop.permute.xlu0 %5860
  %5862 = vrot.lane.b32.xlu0 %v5818, 96
  %v5863 = vpop.permute.xlu0 %5862
  %5864 = vrot.lane.b32.xlu0 %v5819, 96
  %v5865 = vpop.permute.xlu0 %5864
  %5866 = vrot.lane.b32.xlu0 %v5820, 96
  %v5867 = vpop.permute.xlu0 %5866
  %5868 = vrot.lane.b32.xlu0 %v5821, 96
  %v5869 = vpop.permute.xlu0 %5868
  %5886 = vst.msk [vmem:[#allocation3 + $0xc0] sm:$0xf] %vm4406, %v5839
  %5887 = vst.msk [vmem:[#allocation3 + $0xcc] sm:$0xf] %vm4406, %v5841
  %5888 = vst.msk [vmem:[#allocation3 + $0xd8] sm:$0xf] %vm4406, %v5843
  %5889 = vst.msk [vmem:[#allocation3 + $0xe4] sm:$0xf] %vm4406, %v5845
  %5890 = vst.msk [vmem:[#allocation3 + $0xf0] sm:$0xf] %vm4406, %v5847
  %5891 = vst.msk [vmem:[#allocation3 + $0xfc] sm:$0xf] %vm4406, %v5849
  %5892 = vst.msk [vmem:[#allocation3 + $0x108] sm:$0xf] %vm4406, %v5851
  %5893 = vst.msk [vmem:[#allocation3 + $0x114] sm:$0xf] %vm4406, %v5853
  %5894 = vst.msk [vmem:[#allocation3 + $0x120] sm:$0xf] %vm4406, %v5855
  %5895 = vst.msk [vmem:[#allocation3 + $0x12c] sm:$0xf] %vm4406, %v5857
  %5896 = vst.msk [vmem:[#allocation3 + $0x138] sm:$0xf] %vm4406, %v5859
  %5897 = vst.msk [vmem:[#allocation3 + $0x144] sm:$0xf] %vm4406, %v5861
  %5898 = vst.msk [vmem:[#allocation3 + $0x150] sm:$0xf] %vm4406, %v5863
  %5899 = vst.msk [vmem:[#allocation3 + $0x15c] sm:$0xf] %vm4406, %v5865
  %5900 = vst.msk [vmem:[#allocation3 + $0x168] sm:$0xf] %vm4406, %v5867
  %5901 = vst.msk [vmem:[#allocation3 + $0x174] sm:$0xf] %vm4406, %v5869
  %v5902 = vld [vmem:[#allocation2 + $0x48] sm:$0xf]
  %v5903 = vld [vmem:[#allocation2 + $0x4c] sm:$0xf]
  %v5904 = vld [vmem:[#allocation2 + $0x50] sm:$0xf]
  %v5905 = vld [vmem:[#allocation2 + $0x54] sm:$0xf]
  %v5906 = vld [vmem:[#allocation2 + $0x58] sm:$0xf]
  %v5907 = vld [vmem:[#allocation2 + $0x5c] sm:$0xf]
  %v5908 = vld [vmem:[#allocation2 + $0x60] sm:$0xf]
  %v5909 = vld [vmem:[#allocation2 + $0x64] sm:$0xf]
  %v5910 = vld [vmem:[#allocation2 + $0x68] sm:$0xf]
  %v5911 = vld [vmem:[#allocation2 + $0x6c] sm:$0xf]
  %v5912 = vld [vmem:[#allocation2 + $0x70] sm:$0xf]
  %v5913 = vld [vmem:[#allocation2 + $0x74] sm:$0xf]
  %v5914 = vld [vmem:[#allocation2 + $0x78] sm:$0xf]
  %v5915 = vld [vmem:[#allocation2 + $0x7c] sm:$0xf]
  %v5916 = vld [vmem:[#allocation2 + $0x80] sm:$0xf]
  %v5917 = vld [vmem:[#allocation2 + $0x84] sm:$0xf]
  %5918 = vst.msk [vmem:[#allocation3 + $0xc4] sm:$0xf] %vm2029, %v5902
  %5919 = vst.msk [vmem:[#allocation3 + $0xd0] sm:$0xf] %vm2029, %v5903
  %5920 = vst.msk [vmem:[#allocation3 + $0xdc] sm:$0xf] %vm2029, %v5904
  %5921 = vst.msk [vmem:[#allocation3 + $0xe8] sm:$0xf] %vm2029, %v5905
  %5922 = vst.msk [vmem:[#allocation3 + $0xf4] sm:$0xf] %vm2029, %v5906
  %5923 = vst.msk [vmem:[#allocation3 + $0x100] sm:$0xf] %vm2029, %v5907
  %5924 = vst.msk [vmem:[#allocation3 + $0x10c] sm:$0xf] %vm2029, %v5908
  %5925 = vst.msk [vmem:[#allocation3 + $0x118] sm:$0xf] %vm2029, %v5909
  %5926 = vst.msk [vmem:[#allocation3 + $0x124] sm:$0xf] %vm2029, %v5910
  %5927 = vst.msk [vmem:[#allocation3 + $0x130] sm:$0xf] %vm2029, %v5911
  %5928 = vst.msk [vmem:[#allocation3 + $0x13c] sm:$0xf] %vm2029, %v5912
  %5929 = vst.msk [vmem:[#allocation3 + $0x148] sm:$0xf] %vm2029, %v5913
  %5930 = vst.msk [vmem:[#allocation3 + $0x154] sm:$0xf] %vm2029, %v5914
  %5931 = vst.msk [vmem:[#allocation3 + $0x160] sm:$0xf] %vm2029, %v5915
  %5932 = vst.msk [vmem:[#allocation3 + $0x16c] sm:$0xf] %vm2029, %v5916
  %5933 = vst.msk [vmem:[#allocation3 + $0x178] sm:$0xf] %vm2029, %v5917
  %v5934 = vld [vmem:[#allocation2 + $0x8] sm:$0xf]
  %v5935 = vld [vmem:[#allocation2 + $0xc] sm:$0xf]
  %v5936 = vld [vmem:[#allocation2 + $0x10] sm:$0xf]
  %v5937 = vld [vmem:[#allocation2 + $0x14] sm:$0xf]
  %v5938 = vld [vmem:[#allocation2 + $0x18] sm:$0xf]
  %v5939 = vld [vmem:[#allocation2 + $0x1c] sm:$0xf]
  %v5940 = vld [vmem:[#allocation2 + $0x20] sm:$0xf]
  %v5941 = vld [vmem:[#allocation2 + $0x24] sm:$0xf]
  %v5942 = vld [vmem:[#allocation2 + $0x28] sm:$0xf]
  %v5943 = vld [vmem:[#allocation2 + $0x2c] sm:$0xf]
  %v5944 = vld [vmem:[#allocation2 + $0x30] sm:$0xf]
  %v5945 = vld [vmem:[#allocation2 + $0x34] sm:$0xf]
  %v5946 = vld [vmem:[#allocation2 + $0x38] sm:$0xf]
  %v5947 = vld [vmem:[#allocation2 + $0x3c] sm:$0xf]
  %v5948 = vld [vmem:[#allocation2 + $0x40] sm:$0xf]
  %v5949 = vld [vmem:[#allocation2 + $0x44] sm:$0xf]
  %v5950 = vld [vmem:[#allocation2 + $0x48] sm:$0x1]
  %v5952 = vshrl.u32 %v5410, 16
  %v5954 = vrot.slane %v5952, 7
  %v5955 = vshll.u32 %v5410, 16
  %v5957 = vor.u32 %v5954, %v5955
  %v5958 = vrot.slane %v5954, 4
  %v5960 = vshrl.u32 %v5421, 16
  %v5962 = vrot.slane %v5960, 7
  %v5963 = vshll.u32 %v5421, 16
  %v5965 = vor.u32 %v5962, %v5963
  %v5966 = vsel %vm4209, %v5958, %v5965
  %v5967 = vrot.slane %v5962, 4
  %v5969 = vshrl.u32 %v5432, 16
  %v5971 = vrot.slane %v5969, 7
  %v5972 = vshll.u32 %v5432, 16
  %v5974 = vor.u32 %v5971, %v5972
  %v5975 = vsel %vm4209, %v5967, %v5974
  %v5976 = vrot.slane %v5971, 4
  %v5978 = vshrl.u32 %v5443, 16
  %v5980 = vrot.slane %v5978, 7
  %v5981 = vshll.u32 %v5443, 16
  %v5983 = vor.u32 %v5980, %v5981
  %v5984 = vsel %vm4209, %v5976, %v5983
  %v5985 = vrot.slane %v5980, 4
  %v5987 = vshrl.u32 %v5454, 16
  %v5989 = vrot.slane %v5987, 7
  %v5990 = vshll.u32 %v5454, 16
  %v5992 = vor.u32 %v5989, %v5990
  %v5993 = vsel %vm4209, %v5985, %v5992
  %v5994 = vrot.slane %v5989, 4
  %v5996 = vshrl.u32 %v5465, 16
  %v5998 = vrot.slane %v5996, 7
  %v5999 = vshll.u32 %v5465, 16
  %v6001 = vor.u32 %v5998, %v5999
  %v6002 = vsel %vm4209, %v5994, %v6001
  %v6003 = vrot.slane %v5998, 4
  %v6005 = vshrl.u32 %v5476, 16
  %v6007 = vrot.slane %v6005, 7
  %v6008 = vshll.u32 %v5476, 16
  %v6010 = vor.u32 %v6007, %v6008
  %v6011 = vsel %vm4209, %v6003, %v6010
  %v6012 = vrot.slane %v6007, 4
  %v6014 = vshrl.u32 %v5487, 16
  %v6016 = vrot.slane %v6014, 7
  %v6017 = vshll.u32 %v5487, 16
  %v6019 = vor.u32 %v6016, %v6017
  %v6020 = vsel %vm4209, %v6012, %v6019
  %v6021 = vrot.slane %v6016, 4
  %v6023 = vshrl.u32 %v5498, 16
  %v6025 = vrot.slane %v6023, 7
  %v6026 = vshll.u32 %v5498, 16
  %v6028 = vor.u32 %v6025, %v6026
  %v6029 = vsel %vm4209, %v6021, %v6028
  %v6030 = vrot.slane %v6025, 4
  %v6032 = vshrl.u32 %v5509, 16
  %v6034 = vrot.slane %v6032, 7
  %v6035 = vshll.u32 %v5509, 16
  %v6037 = vor.u32 %v6034, %v6035
  %v6038 = vsel %vm4209, %v6030, %v6037
  %v6039 = vrot.slane %v6034, 4
  %v6041 = vshrl.u32 %v5520, 16
  %v6043 = vrot.slane %v6041, 7
  %v6044 = vshll.u32 %v5520, 16
  %v6046 = vor.u32 %v6043, %v6044
  %v6047 = vsel %vm4209, %v6039, %v6046
  %v6048 = vrot.slane %v6043, 4
  %v6050 = vshrl.u32 %v5531, 16
  %v6052 = vrot.slane %v6050, 7
  %v6053 = vshll.u32 %v5531, 16
  %v6055 = vor.u32 %v6052, %v6053
  %v6056 = vsel %vm4209, %v6048, %v6055
  %v6057 = vrot.slane %v6052, 4
  %v6059 = vshrl.u32 %v5542, 16
  %v6061 = vrot.slane %v6059, 7
  %v6062 = vshll.u32 %v5542, 16
  %v6064 = vor.u32 %v6061, %v6062
  %v6065 = vsel %vm4209, %v6057, %v6064
  %v6066 = vrot.slane %v6061, 4
  %v6068 = vshrl.u32 %v5553, 16
  %v6070 = vrot.slane %v6068, 7
  %v6071 = vshll.u32 %v5553, 16
  %v6073 = vor.u32 %v6070, %v6071
  %v6074 = vsel %vm4209, %v6066, %v6073
  %v6075 = vrot.slane %v6070, 4
  %v6077 = vshrl.u32 %v5564, 16
  %v6079 = vrot.slane %v6077, 7
  %v6080 = vshll.u32 %v5564, 16
  %v6082 = vor.u32 %v6079, %v6080
  %v6083 = vsel %vm4209, %v6075, %v6082
  %v6084 = vrot.slane %v6079, 4
  %v6086 = vshrl.u32 %v5575, 16
  %v6088 = vrot.slane %v6086, 7
  %v6089 = vshll.u32 %v5575, 16
  %v6091 = vor.u32 %v6088, %v6089
  %v6092 = vsel %vm4209, %v6084, %v6091
  %v6093 = vrot.slane %v6088, 4
  %v6111 = vmul.bf16 %v5934, %v5957
  %v6112 = vmul.bf16 %v5935, %v5966
  %v6113 = vmul.bf16 %v5936, %v5975
  %v6114 = vmul.bf16 %v5937, %v5984
  %v6115 = vmul.bf16 %v5938, %v5993
  %v6116 = vmul.bf16 %v5939, %v6002
  %v6117 = vmul.bf16 %v5940, %v6011
  %v6118 = vmul.bf16 %v5941, %v6020
  %v6119 = vmul.bf16 %v5942, %v6029
  %v6120 = vmul.bf16 %v5943, %v6038
  %v6121 = vmul.bf16 %v5944, %v6047
  %v6122 = vmul.bf16 %v5945, %v6056
  %v6123 = vmul.bf16 %v5946, %v6065
  %v6124 = vmul.bf16 %v5947, %v6074
  %v6125 = vmul.bf16 %v5948, %v6083
  %v6126 = vmul.bf16 %v5949, %v6092
  %v6127 = vmul.bf16 %v5950, %v6093
  %v6129 = vshrl.u32 %v6111, 16
  %v6131 = vrot.slane %v6129, 4
  %v6132 = vshll.u32 %v6111, 16
  %v6134 = vrot.slane %v6132, 5
  %v6135 = vor.u32 %v6131, %v6134
  %v6136 = vrot.slane %v6135, 4
  %v6138 = vshll.u32 %v6112, 16
  %v6140 = vrot.slane %v6138, 5
  %v6141 = vsel %vm2438, %v6136, %v6140
  %v6142 = vshrl.u32 %v6112, 16
  %v6144 = vrot.slane %v6142, 4
  %v6145 = vor.u32 %v6144, %v6140
  %v6146 = vrot.slane %v6145, 4
  %v6148 = vshll.u32 %v6113, 16
  %v6150 = vrot.slane %v6148, 5
  %v6151 = vsel %vm2438, %v6146, %v6150
  %v6152 = vshrl.u32 %v6113, 16
  %v6154 = vrot.slane %v6152, 4
  %v6155 = vor.u32 %v6154, %v6150
  %v6156 = vrot.slane %v6155, 4
  %v6158 = vshll.u32 %v6114, 16
  %v6160 = vrot.slane %v6158, 5
  %v6161 = vsel %vm2438, %v6156, %v6160
  %v6162 = vshrl.u32 %v6114, 16
  %v6164 = vrot.slane %v6162, 4
  %v6165 = vor.u32 %v6164, %v6160
  %v6166 = vrot.slane %v6165, 4
  %v6168 = vshll.u32 %v6115, 16
  %v6170 = vrot.slane %v6168, 5
  %v6171 = vsel %vm2438, %v6166, %v6170
  %v6172 = vshrl.u32 %v6115, 16
  %v6174 = vrot.slane %v6172, 4
  %v6175 = vor.u32 %v6174, %v6170
  %v6176 = vrot.slane %v6175, 4
  %v6178 = vshll.u32 %v6116, 16
  %v6180 = vrot.slane %v6178, 5
  %v6181 = vsel %vm2438, %v6176, %v6180
  %v6182 = vshrl.u32 %v6116, 16
  %v6184 = vrot.slane %v6182, 4
  %v6185 = vor.u32 %v6184, %v6180
  %v6186 = vrot.slane %v6185, 4
  %v6188 = vshll.u32 %v6117, 16
  %v6190 = vrot.slane %v6188, 5
  %v6191 = vsel %vm2438, %v6186, %v6190
  %v6192 = vshrl.u32 %v6117, 16
  %v6194 = vrot.slane %v6192, 4
  %v6195 = vor.u32 %v6194, %v6190
  %v6196 = vrot.slane %v6195, 4
  %v6198 = vshll.u32 %v6118, 16
  %v6200 = vrot.slane %v6198, 5
  %v6201 = vsel %vm2438, %v6196, %v6200
  %v6202 = vshrl.u32 %v6118, 16
  %v6204 = vrot.slane %v6202, 4
  %v6205 = vor.u32 %v6204, %v6200
  %v6206 = vrot.slane %v6205, 4
  %v6208 = vshll.u32 %v6119, 16
  %v6210 = vrot.slane %v6208, 5
  %v6211 = vsel %vm2438, %v6206, %v6210
  %v6212 = vshrl.u32 %v6119, 16
  %v6214 = vrot.slane %v6212, 4
  %v6215 = vor.u32 %v6214, %v6210
  %v6216 = vrot.slane %v6215, 4
  %v6218 = vshll.u32 %v6120, 16
  %v6220 = vrot.slane %v6218, 5
  %v6221 = vsel %vm2438, %v6216, %v6220
  %v6222 = vshrl.u32 %v6120, 16
  %v6224 = vrot.slane %v6222, 4
  %v6225 = vor.u32 %v6224, %v6220
  %v6226 = vrot.slane %v6225, 4
  %v6228 = vshll.u32 %v6121, 16
  %v6230 = vrot.slane %v6228, 5
  %v6231 = vsel %vm2438, %v6226, %v6230
  %v6232 = vshrl.u32 %v6121, 16
  %v6234 = vrot.slane %v6232, 4
  %v6235 = vor.u32 %v6234, %v6230
  %v6236 = vrot.slane %v6235, 4
  %v6238 = vshll.u32 %v6122, 16
  %v6240 = vrot.slane %v6238, 5
  %v6241 = vsel %vm2438, %v6236, %v6240
  %v6242 = vshrl.u32 %v6122, 16
  %v6244 = vrot.slane %v6242, 4
  %v6245 = vor.u32 %v6244, %v6240
  %v6246 = vrot.slane %v6245, 4
  %v6248 = vshll.u32 %v6123, 16
  %v6250 = vrot.slane %v6248, 5
  %v6251 = vsel %vm2438, %v6246, %v6250
  %v6252 = vshrl.u32 %v6123, 16
  %v6254 = vrot.slane %v6252, 4
  %v6255 = vor.u32 %v6254, %v6250
  %v6256 = vrot.slane %v6255, 4
  %v6258 = vshll.u32 %v6124, 16
  %v6260 = vrot.slane %v6258, 5
  %v6261 = vsel %vm2438, %v6256, %v6260
  %v6262 = vshrl.u32 %v6124, 16
  %v6264 = vrot.slane %v6262, 4
  %v6265 = vor.u32 %v6264, %v6260
  %v6266 = vrot.slane %v6265, 4
  %v6268 = vshll.u32 %v6125, 16
  %v6270 = vrot.slane %v6268, 5
  %v6271 = vsel %vm2438, %v6266, %v6270
  %v6272 = vshrl.u32 %v6125, 16
  %v6274 = vrot.slane %v6272, 4
  %v6275 = vor.u32 %v6274, %v6270
  %v6276 = vrot.slane %v6275, 4
  %v6278 = vshll.u32 %v6126, 16
  %v6280 = vrot.slane %v6278, 5
  %v6281 = vsel %vm2438, %v6276, %v6280
  %v6282 = vshrl.u32 %v6126, 16
  %v6284 = vrot.slane %v6282, 4
  %v6285 = vor.u32 %v6284, %v6280
  %v6286 = vrot.slane %v6285, 4
  %v6288 = vshll.u32 %v6127, 16
  %v6290 = vrot.slane %v6288, 5
  %v6291 = vsel %vm2438, %v6286, %v6290
  %6292 = vrot.lane.b32.xlu0 %v6141, 32
  %v6293 = vpop.permute.xlu0 %6292
  %6294 = vrot.lane.b32.xlu0 %v6151, 32
  %v6295 = vpop.permute.xlu0 %6294
  %6296 = vrot.lane.b32.xlu0 %v6161, 32
  %v6297 = vpop.permute.xlu0 %6296
  %6298 = vrot.lane.b32.xlu0 %v6171, 32
  %v6299 = vpop.permute.xlu0 %6298
  %6300 = vrot.lane.b32.xlu0 %v6181, 32
  %v6301 = vpop.permute.xlu0 %6300
  %6302 = vrot.lane.b32.xlu0 %v6191, 32
  %v6303 = vpop.permute.xlu0 %6302
  %6304 = vrot.lane.b32.xlu0 %v6201, 32
  %v6305 = vpop.permute.xlu0 %6304
  %6306 = vrot.lane.b32.xlu0 %v6211, 32
  %v6307 = vpop.permute.xlu0 %6306
  %6308 = vrot.lane.b32.xlu0 %v6221, 32
  %v6309 = vpop.permute.xlu0 %6308
  %6310 = vrot.lane.b32.xlu0 %v6231, 32
  %v6311 = vpop.permute.xlu0 %6310
  %6312 = vrot.lane.b32.xlu0 %v6241, 32
  %v6313 = vpop.permute.xlu0 %6312
  %6314 = vrot.lane.b32.xlu0 %v6251, 32
  %v6315 = vpop.permute.xlu0 %6314
  %6316 = vrot.lane.b32.xlu0 %v6261, 32
  %v6317 = vpop.permute.xlu0 %6316
  %6318 = vrot.lane.b32.xlu0 %v6271, 32
  %v6319 = vpop.permute.xlu0 %6318
  %6320 = vrot.lane.b32.xlu0 %v6281, 32
  %v6321 = vpop.permute.xlu0 %6320
  %6322 = vrot.lane.b32.xlu0 %v6291, 32
  %v6323 = vpop.permute.xlu0 %6322
  %6340 = vst.msk [vmem:[#allocation3 + $0xc4] sm:$0xf] %vm3735, %v6293
  %6341 = vst.msk [vmem:[#allocation3 + $0xd0] sm:$0xf] %vm3735, %v6295
  %6342 = vst.msk [vmem:[#allocation3 + $0xdc] sm:$0xf] %vm3735, %v6297
  %6343 = vst.msk [vmem:[#allocation3 + $0xe8] sm:$0xf] %vm3735, %v6299
  %6344 = vst.msk [vmem:[#allocation3 + $0xf4] sm:$0xf] %vm3735, %v6301
  %6345 = vst.msk [vmem:[#allocation3 + $0x100] sm:$0xf] %vm3735, %v6303
  %6346 = vst.msk [vmem:[#allocation3 + $0x10c] sm:$0xf] %vm3735, %v6305
  %6347 = vst.msk [vmem:[#allocation3 + $0x118] sm:$0xf] %vm3735, %v6307
  %6348 = vst.msk [vmem:[#allocation3 + $0x124] sm:$0xf] %vm3735, %v6309
  %6349 = vst.msk [vmem:[#allocation3 + $0x130] sm:$0xf] %vm3735, %v6311
  %6350 = vst.msk [vmem:[#allocation3 + $0x13c] sm:$0xf] %vm3735, %v6313
  %6351 = vst.msk [vmem:[#allocation3 + $0x148] sm:$0xf] %vm3735, %v6315
  %6352 = vst.msk [vmem:[#allocation3 + $0x154] sm:$0xf] %vm3735, %v6317
  %6353 = vst.msk [vmem:[#allocation3 + $0x160] sm:$0xf] %vm3735, %v6319
  %6354 = vst.msk [vmem:[#allocation3 + $0x16c] sm:$0xf] %vm3735, %v6321
  %6355 = vst.msk [vmem:[#allocation3 + $0x178] sm:$0xf] %vm3735, %v6323
  %v6356 = vld [vmem:[#allocation2 + $0x88] sm:$0xf]
  %v6357 = vld [vmem:[#allocation2 + $0x8c] sm:$0xf]
  %v6358 = vld [vmem:[#allocation2 + $0x90] sm:$0xf]
  %v6359 = vld [vmem:[#allocation2 + $0x94] sm:$0xf]
  %v6360 = vld [vmem:[#allocation2 + $0x98] sm:$0xf]
  %v6361 = vld [vmem:[#allocation2 + $0x9c] sm:$0xf]
  %v6362 = vld [vmem:[#allocation2 + $0xa0] sm:$0xf]
  %v6363 = vld [vmem:[#allocation2 + $0xa4] sm:$0xf]
  %v6364 = vld [vmem:[#allocation2 + $0xa8] sm:$0xf]
  %v6365 = vld [vmem:[#allocation2 + $0xac] sm:$0xf]
  %v6366 = vld [vmem:[#allocation2 + $0xb0] sm:$0xf]
  %v6367 = vld [vmem:[#allocation2 + $0xb4] sm:$0xf]
  %v6368 = vld [vmem:[#allocation2 + $0xb8] sm:$0xf]
  %v6369 = vld [vmem:[#allocation2 + $0xbc] sm:$0xf]
  %v6370 = vld [vmem:[#allocation2 + $0xc0] sm:$0xf]
  %v6371 = vld [vmem:[#allocation2 + $0xc4] sm:$0xf]
  %6388 = vrot.lane.b32.xlu0 %v6356, 64
  %v6389 = vpop.permute.xlu0 %6388
  %6390 = vrot.lane.b32.xlu0 %v6357, 64
  %v6391 = vpop.permute.xlu0 %6390
  %6392 = vrot.lane.b32.xlu0 %v6358, 64
  %v6393 = vpop.permute.xlu0 %6392
  %6394 = vrot.lane.b32.xlu0 %v6359, 64
  %v6395 = vpop.permute.xlu0 %6394
  %6396 = vrot.lane.b32.xlu0 %v6360, 64
  %v6397 = vpop.permute.xlu0 %6396
  %6398 = vrot.lane.b32.xlu0 %v6361, 64
  %v6399 = vpop.permute.xlu0 %6398
  %6400 = vrot.lane.b32.xlu0 %v6362, 64
  %v6401 = vpop.permute.xlu0 %6400
  %6402 = vrot.lane.b32.xlu0 %v6363, 64
  %v6403 = vpop.permute.xlu0 %6402
  %6404 = vrot.lane.b32.xlu0 %v6364, 64
  %v6405 = vpop.permute.xlu0 %6404
  %6406 = vrot.lane.b32.xlu0 %v6365, 64
  %v6407 = vpop.permute.xlu0 %6406
  %6408 = vrot.lane.b32.xlu0 %v6366, 64
  %v6409 = vpop.permute.xlu0 %6408
  %6410 = vrot.lane.b32.xlu0 %v6367, 64
  %v6411 = vpop.permute.xlu0 %6410
  %6412 = vrot.lane.b32.xlu0 %v6368, 64
  %v6413 = vpop.permute.xlu0 %6412
  %6414 = vrot.lane.b32.xlu0 %v6369, 64
  %v6415 = vpop.permute.xlu0 %6414
  %6416 = vrot.lane.b32.xlu0 %v6370, 64
  %v6417 = vpop.permute.xlu0 %6416
  %6418 = vrot.lane.b32.xlu0 %v6371, 64
  %v6419 = vpop.permute.xlu0 %6418
  %6436 = vst.msk [vmem:[#allocation3 + $0xc4] sm:$0xf] %vm3981, %v6389
  %6437 = vst.msk [vmem:[#allocation3 + $0xd0] sm:$0xf] %vm3981, %v6391
  %6438 = vst.msk [vmem:[#allocation3 + $0xdc] sm:$0xf] %vm3981, %v6393
  %6439 = vst.msk [vmem:[#allocation3 + $0xe8] sm:$0xf] %vm3981, %v6395
  %6440 = vst.msk [vmem:[#allocation3 + $0xf4] sm:$0xf] %vm3981, %v6397
  %6441 = vst.msk [vmem:[#allocation3 + $0x100] sm:$0xf] %vm3981, %v6399
  %6442 = vst.msk [vmem:[#allocation3 + $0x10c] sm:$0xf] %vm3981, %v6401
  %6443 = vst.msk [vmem:[#allocation3 + $0x118] sm:$0xf] %vm3981, %v6403
  %6444 = vst.msk [vmem:[#allocation3 + $0x124] sm:$0xf] %vm3981, %v6405
  %6445 = vst.msk [vmem:[#allocation3 + $0x130] sm:$0xf] %vm3981, %v6407
  %6446 = vst.msk [vmem:[#allocation3 + $0x13c] sm:$0xf] %vm3981, %v6409
  %6447 = vst.msk [vmem:[#allocation3 + $0x148] sm:$0xf] %vm3981, %v6411
  %6448 = vst.msk [vmem:[#allocation3 + $0x154] sm:$0xf] %vm3981, %v6413
  %6449 = vst.msk [vmem:[#allocation3 + $0x160] sm:$0xf] %vm3981, %v6415
  %6450 = vst.msk [vmem:[#allocation3 + $0x16c] sm:$0xf] %vm3981, %v6417
  %6451 = vst.msk [vmem:[#allocation3 + $0x178] sm:$0xf] %vm3981, %v6419
  %v6452 = vld [vmem:[#allocation2 + $0xc8] sm:$0xf]
  %v6453 = vld [vmem:[#allocation2 + $0xcc] sm:$0xf]
  %v6454 = vld [vmem:[#allocation2 + $0xd0] sm:$0xf]
  %v6455 = vld [vmem:[#allocation2 + $0xd4] sm:$0xf]
  %v6456 = vld [vmem:[#allocation2 + $0xd8] sm:$0xf]
  %v6457 = vld [vmem:[#allocation2 + $0xdc] sm:$0xf]
  %v6458 = vld [vmem:[#allocation2 + $0xe0] sm:$0xf]
  %v6459 = vld [vmem:[#allocation2 + $0xe4] sm:$0xf]
  %v6460 = vld [vmem:[#allocation2 + $0xe8] sm:$0xf]
  %v6461 = vld [vmem:[#allocation2 + $0xec] sm:$0xf]
  %v6462 = vld [vmem:[#allocation2 + $0xf0] sm:$0xf]
  %v6463 = vld [vmem:[#allocation2 + $0xf4] sm:$0xf]
  %v6464 = vld [vmem:[#allocation2 + $0xf8] sm:$0xf]
  %v6465 = vld [vmem:[#allocation2 + $0xfc] sm:$0xf]
  %v6466 = vld [vmem:[#allocation2 + $0x100] sm:$0xf]
  %v6467 = vld [vmem:[#allocation2 + $0x104] sm:$0xf]
  %6484 = vrot.lane.b32.xlu0 %v6452, 96
  %v6485 = vpop.permute.xlu0 %6484
  %6486 = vrot.lane.b32.xlu0 %v6453, 96
  %v6487 = vpop.permute.xlu0 %6486
  %6488 = vrot.lane.b32.xlu0 %v6454, 96
  %v6489 = vpop.permute.xlu0 %6488
  %6490 = vrot.lane.b32.xlu0 %v6455, 96
  %v6491 = vpop.permute.xlu0 %6490
  %6492 = vrot.lane.b32.xlu0 %v6456, 96
  %v6493 = vpop.permute.xlu0 %6492
  %6494 = vrot.lane.b32.xlu0 %v6457, 96
  %v6495 = vpop.permute.xlu0 %6494
  %6496 = vrot.lane.b32.xlu0 %v6458, 96
  %v6497 = vpop.permute.xlu0 %6496
  %6498 = vrot.lane.b32.xlu0 %v6459, 96
  %v6499 = vpop.permute.xlu0 %6498
  %6500 = vrot.lane.b32.xlu0 %v6460, 96
  %v6501 = vpop.permute.xlu0 %6500
  %6502 = vrot.lane.b32.xlu0 %v6461, 96
  %v6503 = vpop.permute.xlu0 %6502
  %6504 = vrot.lane.b32.xlu0 %v6462, 96
  %v6505 = vpop.permute.xlu0 %6504
  %6506 = vrot.lane.b32.xlu0 %v6463, 96
  %v6507 = vpop.permute.xlu0 %6506
  %6508 = vrot.lane.b32.xlu0 %v6464, 96
  %v6509 = vpop.permute.xlu0 %6508
  %6510 = vrot.lane.b32.xlu0 %v6465, 96
  %v6511 = vpop.permute.xlu0 %6510
  %6512 = vrot.lane.b32.xlu0 %v6466, 96
  %v6513 = vpop.permute.xlu0 %6512
  %6514 = vrot.lane.b32.xlu0 %v6467, 96
  %v6515 = vpop.permute.xlu0 %6514
  %6532 = vst.msk [vmem:[#allocation3 + $0xc4] sm:$0xf] %vm4406, %v6485
  %6533 = vst.msk [vmem:[#allocation3 + $0xd0] sm:$0xf] %vm4406, %v6487
  %6534 = vst.msk [vmem:[#allocation3 + $0xdc] sm:$0xf] %vm4406, %v6489
  %6535 = vst.msk [vmem:[#allocation3 + $0xe8] sm:$0xf] %vm4406, %v6491
  %6536 = vst.msk [vmem:[#allocation3 + $0xf4] sm:$0xf] %vm4406, %v6493
  %6537 = vst.msk [vmem:[#allocation3 + $0x100] sm:$0xf] %vm4406, %v6495
  %6538 = vst.msk [vmem:[#allocation3 + $0x10c] sm:$0xf] %vm4406, %v6497
  %6539 = vst.msk [vmem:[#allocation3 + $0x118] sm:$0xf] %vm4406, %v6499
  %6540 = vst.msk [vmem:[#allocation3 + $0x124] sm:$0xf] %vm4406, %v6501
  %6541 = vst.msk [vmem:[#allocation3 + $0x130] sm:$0xf] %vm4406, %v6503
  %6542 = vst.msk [vmem:[#allocation3 + $0x13c] sm:$0xf] %vm4406, %v6505
  %6543 = vst.msk [vmem:[#allocation3 + $0x148] sm:$0xf] %vm4406, %v6507
  %6544 = vst.msk [vmem:[#allocation3 + $0x154] sm:$0xf] %vm4406, %v6509
  %6545 = vst.msk [vmem:[#allocation3 + $0x160] sm:$0xf] %vm4406, %v6511
  %6546 = vst.msk [vmem:[#allocation3 + $0x16c] sm:$0xf] %vm4406, %v6513
  %6547 = vst.msk [vmem:[#allocation3 + $0x178] sm:$0xf] %vm4406, %v6515
  %v6548 = vld [vmem:[#allocation2 + $0x88] sm:$0xf]
  %v6549 = vld [vmem:[#allocation2 + $0x8c] sm:$0xf]
  %v6550 = vld [vmem:[#allocation2 + $0x90] sm:$0xf]
  %v6551 = vld [vmem:[#allocation2 + $0x94] sm:$0xf]
  %v6552 = vld [vmem:[#allocation2 + $0x98] sm:$0xf]
  %v6553 = vld [vmem:[#allocation2 + $0x9c] sm:$0xf]
  %v6554 = vld [vmem:[#allocation2 + $0xa0] sm:$0xf]
  %v6555 = vld [vmem:[#allocation2 + $0xa4] sm:$0xf]
  %v6556 = vld [vmem:[#allocation2 + $0xa8] sm:$0xf]
  %v6557 = vld [vmem:[#allocation2 + $0xac] sm:$0xf]
  %v6558 = vld [vmem:[#allocation2 + $0xb0] sm:$0xf]
  %v6559 = vld [vmem:[#allocation2 + $0xb4] sm:$0xf]
  %v6560 = vld [vmem:[#allocation2 + $0xb8] sm:$0xf]
  %v6561 = vld [vmem:[#allocation2 + $0xbc] sm:$0xf]
  %v6562 = vld [vmem:[#allocation2 + $0xc0] sm:$0xf]
  %v6563 = vld [vmem:[#allocation2 + $0xc4] sm:$0xf]
  %v6564 = vld [vmem:[#allocation2 + $0xc8] sm:$0x1]
  %v6565 = vmul.bf16 %v6548, %v5957
  %v6566 = vmul.bf16 %v6549, %v5966
  %v6567 = vmul.bf16 %v6550, %v5975
  %v6568 = vmul.bf16 %v6551, %v5984
  %v6569 = vmul.bf16 %v6552, %v5993
  %v6570 = vmul.bf16 %v6553, %v6002
  %v6571 = vmul.bf16 %v6554, %v6011
  %v6572 = vmul.bf16 %v6555, %v6020
  %v6573 = vmul.bf16 %v6556, %v6029
  %v6574 = vmul.bf16 %v6557, %v6038
  %v6575 = vmul.bf16 %v6558, %v6047
  %v6576 = vmul.bf16 %v6559, %v6056
  %v6577 = vmul.bf16 %v6560, %v6065
  %v6578 = vmul.bf16 %v6561, %v6074
  %v6579 = vmul.bf16 %v6562, %v6083
  %v6580 = vmul.bf16 %v6563, %v6092
  %v6581 = vmul.bf16 %v6564, %v6093
  %v6583 = vshrl.u32 %v6565, 16
  %v6585 = vrot.slane %v6583, 4
  %v6586 = vshll.u32 %v6565, 16
  %v6588 = vrot.slane %v6586, 5
  %v6589 = vor.u32 %v6585, %v6588
  %v6590 = vrot.slane %v6589, 4
  %v6592 = vshll.u32 %v6566, 16
  %v6594 = vrot.slane %v6592, 5
  %v6595 = vsel %vm2438, %v6590, %v6594
  %v6596 = vshrl.u32 %v6566, 16
  %v6598 = vrot.slane %v6596, 4
  %v6599 = vor.u32 %v6598, %v6594
  %v6600 = vrot.slane %v6599, 4
  %v6602 = vshll.u32 %v6567, 16
  %v6604 = vrot.slane %v6602, 5
  %v6605 = vsel %vm2438, %v6600, %v6604
  %v6606 = vshrl.u32 %v6567, 16
  %v6608 = vrot.slane %v6606, 4
  %v6609 = vor.u32 %v6608, %v6604
  %v6610 = vrot.slane %v6609, 4
  %v6612 = vshll.u32 %v6568, 16
  %v6614 = vrot.slane %v6612, 5
  %v6615 = vsel %vm2438, %v6610, %v6614
  %v6616 = vshrl.u32 %v6568, 16
  %v6618 = vrot.slane %v6616, 4
  %v6619 = vor.u32 %v6618, %v6614
  %v6620 = vrot.slane %v6619, 4
  %v6622 = vshll.u32 %v6569, 16
  %v6624 = vrot.slane %v6622, 5
  %v6625 = vsel %vm2438, %v6620, %v6624
  %v6626 = vshrl.u32 %v6569, 16
  %v6628 = vrot.slane %v6626, 4
  %v6629 = vor.u32 %v6628, %v6624
  %v6630 = vrot.slane %v6629, 4
  %v6632 = vshll.u32 %v6570, 16
  %v6634 = vrot.slane %v6632, 5
  %v6635 = vsel %vm2438, %v6630, %v6634
  %v6636 = vshrl.u32 %v6570, 16
  %v6638 = vrot.slane %v6636, 4
  %v6639 = vor.u32 %v6638, %v6634
  %v6640 = vrot.slane %v6639, 4
  %v6642 = vshll.u32 %v6571, 16
  %v6644 = vrot.slane %v6642, 5
  %v6645 = vsel %vm2438, %v6640, %v6644
  %v6646 = vshrl.u32 %v6571, 16
  %v6648 = vrot.slane %v6646, 4
  %v6649 = vor.u32 %v6648, %v6644
  %v6650 = vrot.slane %v6649, 4
  %v6652 = vshll.u32 %v6572, 16
  %v6654 = vrot.slane %v6652, 5
  %v6655 = vsel %vm2438, %v6650, %v6654
  %v6656 = vshrl.u32 %v6572, 16
  %v6658 = vrot.slane %v6656, 4
  %v6659 = vor.u32 %v6658, %v6654
  %v6660 = vrot.slane %v6659, 4
  %v6662 = vshll.u32 %v6573, 16
  %v6664 = vrot.slane %v6662, 5
  %v6665 = vsel %vm2438, %v6660, %v6664
  %v6666 = vshrl.u32 %v6573, 16
  %v6668 = vrot.slane %v6666, 4
  %v6669 = vor.u32 %v6668, %v6664
  %v6670 = vrot.slane %v6669, 4
  %v6672 = vshll.u32 %v6574, 16
  %v6674 = vrot.slane %v6672, 5
  %v6675 = vsel %vm2438, %v6670, %v6674
  %v6676 = vshrl.u32 %v6574, 16
  %v6678 = vrot.slane %v6676, 4
  %v6679 = vor.u32 %v6678, %v6674
  %v6680 = vrot.slane %v6679, 4
  %v6682 = vshll.u32 %v6575, 16
  %v6684 = vrot.slane %v6682, 5
  %v6685 = vsel %vm2438, %v6680, %v6684
  %v6686 = vshrl.u32 %v6575, 16
  %v6688 = vrot.slane %v6686, 4
  %v6689 = vor.u32 %v6688, %v6684
  %v6690 = vrot.slane %v6689, 4
  %v6692 = vshll.u32 %v6576, 16
  %v6694 = vrot.slane %v6692, 5
  %v6695 = vsel %vm2438, %v6690, %v6694
  %v6696 = vshrl.u32 %v6576, 16
  %v6698 = vrot.slane %v6696, 4
  %v6699 = vor.u32 %v6698, %v6694
  %v6700 = vrot.slane %v6699, 4
  %v6702 = vshll.u32 %v6577, 16
  %v6704 = vrot.slane %v6702, 5
  %v6705 = vsel %vm2438, %v6700, %v6704
  %v6706 = vshrl.u32 %v6577, 16
  %v6708 = vrot.slane %v6706, 4
  %v6709 = vor.u32 %v6708, %v6704
  %v6710 = vrot.slane %v6709, 4
  %v6712 = vshll.u32 %v6578, 16
  %v6714 = vrot.slane %v6712, 5
  %v6715 = vsel %vm2438, %v6710, %v6714
  %v6716 = vshrl.u32 %v6578, 16
  %v6718 = vrot.slane %v6716, 4
  %v6719 = vor.u32 %v6718, %v6714
  %v6720 = vrot.slane %v6719, 4
  %v6722 = vshll.u32 %v6579, 16
  %v6724 = vrot.slane %v6722, 5
  %v6725 = vsel %vm2438, %v6720, %v6724
  %v6726 = vshrl.u32 %v6579, 16
  %v6728 = vrot.slane %v6726, 4
  %v6729 = vor.u32 %v6728, %v6724
  %v6730 = vrot.slane %v6729, 4
  %v6732 = vshll.u32 %v6580, 16
  %v6734 = vrot.slane %v6732, 5
  %v6735 = vsel %vm2438, %v6730, %v6734
  %v6736 = vshrl.u32 %v6580, 16
  %v6738 = vrot.slane %v6736, 4
  %v6739 = vor.u32 %v6738, %v6734
  %v6740 = vrot.slane %v6739, 4
  %v6742 = vshll.u32 %v6581, 16
  %v6744 = vrot.slane %v6742, 5
  %v6745 = vsel %vm2438, %v6740, %v6744
  %6762 = vst.msk [vmem:[#allocation3 + $0xc8] sm:$0xf] %vm2029, %v6595
  %6763 = vst.msk [vmem:[#allocation3 + $0xd4] sm:$0xf] %vm2029, %v6605
  %6764 = vst.msk [vmem:[#allocation3 + $0xe0] sm:$0xf] %vm2029, %v6615
  %6765 = vst.msk [vmem:[#allocation3 + $0xec] sm:$0xf] %vm2029, %v6625
  %6766 = vst.msk [vmem:[#allocation3 + $0xf8] sm:$0xf] %vm2029, %v6635
  %6767 = vst.msk [vmem:[#allocation3 + $0x104] sm:$0xf] %vm2029, %v6645
  %6768 = vst.msk [vmem:[#allocation3 + $0x110] sm:$0xf] %vm2029, %v6655
  %6769 = vst.msk [vmem:[#allocation3 + $0x11c] sm:$0xf] %vm2029, %v6665
  %6770 = vst.msk [vmem:[#allocation3 + $0x128] sm:$0xf] %vm2029, %v6675
  %6771 = vst.msk [vmem:[#allocation3 + $0x134] sm:$0xf] %vm2029, %v6685
  %6772 = vst.msk [vmem:[#allocation3 + $0x140] sm:$0xf] %vm2029, %v6695
  %6773 = vst.msk [vmem:[#allocation3 + $0x14c] sm:$0xf] %vm2029, %v6705
  %6774 = vst.msk [vmem:[#allocation3 + $0x158] sm:$0xf] %vm2029, %v6715
  %6775 = vst.msk [vmem:[#allocation3 + $0x164] sm:$0xf] %vm2029, %v6725
  %6776 = vst.msk [vmem:[#allocation3 + $0x170] sm:$0xf] %vm2029, %v6735
  %6777 = vst.msk [vmem:[#allocation3 + $0x17c] sm:$0xf] %vm2029, %v6745
  %v6778 = vld [vmem:[#allocation2 + $0x44] sm:$0x8]
  %v6779 = vld [vmem:[#allocation2 + $0x48] sm:$0xf]
  %v6780 = vld [vmem:[#allocation2 + $0x4c] sm:$0xf]
  %v6781 = vld [vmem:[#allocation2 + $0x50] sm:$0xf]
  %v6782 = vld [vmem:[#allocation2 + $0x54] sm:$0xf]
  %v6783 = vld [vmem:[#allocation2 + $0x58] sm:$0xf]
  %v6784 = vld [vmem:[#allocation2 + $0x5c] sm:$0xf]
  %v6785 = vld [vmem:[#allocation2 + $0x60] sm:$0xf]
  %v6786 = vld [vmem:[#allocation2 + $0x64] sm:$0xf]
  %v6787 = vld [vmem:[#allocation2 + $0x68] sm:$0xf]
  %v6788 = vld [vmem:[#allocation2 + $0x6c] sm:$0xf]
  %v6789 = vld [vmem:[#allocation2 + $0x70] sm:$0xf]
  %v6790 = vld [vmem:[#allocation2 + $0x74] sm:$0xf]
  %v6791 = vld [vmem:[#allocation2 + $0x78] sm:$0xf]
  %v6792 = vld [vmem:[#allocation2 + $0x7c] sm:$0xf]
  %v6793 = vld [vmem:[#allocation2 + $0x80] sm:$0xf]
  %v6794 = vld [vmem:[#allocation2 + $0x84] sm:$0xf]
  %v6795 = vmul.bf16 %v6778, %v4018
  %v6796 = vmul.bf16 %v6779, %v4028
  %v6797 = vmul.bf16 %v6780, %v4038
  %v6798 = vmul.bf16 %v6781, %v4048
  %v6799 = vmul.bf16 %v6782, %v4058
  %v6800 = vmul.bf16 %v6783, %v4068
  %v6801 = vmul.bf16 %v6784, %v4078
  %v6802 = vmul.bf16 %v6785, %v4088
  %v6803 = vmul.bf16 %v6786, %v4098
  %v6804 = vmul.bf16 %v6787, %v4108
  %v6805 = vmul.bf16 %v6788, %v4118
  %v6806 = vmul.bf16 %v6789, %v4128
  %v6807 = vmul.bf16 %v6790, %v4138
  %v6808 = vmul.bf16 %v6791, %v4148
  %v6809 = vmul.bf16 %v6792, %v4158
  %v6810 = vmul.bf16 %v6793, %v4168
  %v6811 = vmul.bf16 %v6794, %v4173
  %v6813 = vshrl.u32 %v6795, 16
  %v6815 = vrot.slane %v6813, 7
  %v6816 = vrot.slane %v6815, 4
  %v6818 = vshrl.u32 %v6796, 16
  %v6820 = vrot.slane %v6818, 7
  %v6821 = vshll.u32 %v6796, 16
  %v6823 = vor.u32 %v6820, %v6821
  %v6824 = vsel %vm4209, %v6816, %v6823
  %v6825 = vrot.slane %v6820, 4
  %v6827 = vshrl.u32 %v6797, 16
  %v6829 = vrot.slane %v6827, 7
  %v6830 = vshll.u32 %v6797, 16
  %v6832 = vor.u32 %v6829, %v6830
  %v6833 = vsel %vm4209, %v6825, %v6832
  %v6834 = vrot.slane %v6829, 4
  %v6836 = vshrl.u32 %v6798, 16
  %v6838 = vrot.slane %v6836, 7
  %v6839 = vshll.u32 %v6798, 16
  %v6841 = vor.u32 %v6838, %v6839
  %v6842 = vsel %vm4209, %v6834, %v6841
  %v6843 = vrot.slane %v6838, 4
  %v6845 = vshrl.u32 %v6799, 16
  %v6847 = vrot.slane %v6845, 7
  %v6848 = vshll.u32 %v6799, 16
  %v6850 = vor.u32 %v6847, %v6848
  %v6851 = vsel %vm4209, %v6843, %v6850
  %v6852 = vrot.slane %v6847, 4
  %v6854 = vshrl.u32 %v6800, 16
  %v6856 = vrot.slane %v6854, 7
  %v6857 = vshll.u32 %v6800, 16
  %v6859 = vor.u32 %v6856, %v6857
  %v6860 = vsel %vm4209, %v6852, %v6859
  %v6861 = vrot.slane %v6856, 4
  %v6863 = vshrl.u32 %v6801, 16
  %v6865 = vrot.slane %v6863, 7
  %v6866 = vshll.u32 %v6801, 16
  %v6868 = vor.u32 %v6865, %v6866
  %v6869 = vsel %vm4209, %v6861, %v6868
  %v6870 = vrot.slane %v6865, 4
  %v6872 = vshrl.u32 %v6802, 16
  %v6874 = vrot.slane %v6872, 7
  %v6875 = vshll.u32 %v6802, 16
  %v6877 = vor.u32 %v6874, %v6875
  %v6878 = vsel %vm4209, %v6870, %v6877
  %v6879 = vrot.slane %v6874, 4
  %v6881 = vshrl.u32 %v6803, 16
  %v6883 = vrot.slane %v6881, 7
  %v6884 = vshll.u32 %v6803, 16
  %v6886 = vor.u32 %v6883, %v6884
  %v6887 = vsel %vm4209, %v6879, %v6886
  %v6888 = vrot.slane %v6883, 4
  %v6890 = vshrl.u32 %v6804, 16
  %v6892 = vrot.slane %v6890, 7
  %v6893 = vshll.u32 %v6804, 16
  %v6895 = vor.u32 %v6892, %v6893
  %v6896 = vsel %vm4209, %v6888, %v6895
  %v6897 = vrot.slane %v6892, 4
  %v6899 = vshrl.u32 %v6805, 16
  %v6901 = vrot.slane %v6899, 7
  %v6902 = vshll.u32 %v6805, 16
  %v6904 = vor.u32 %v6901, %v6902
  %v6905 = vsel %vm4209, %v6897, %v6904
  %v6906 = vrot.slane %v6901, 4
  %v6908 = vshrl.u32 %v6806, 16
  %v6910 = vrot.slane %v6908, 7
  %v6911 = vshll.u32 %v6806, 16
  %v6913 = vor.u32 %v6910, %v6911
  %v6914 = vsel %vm4209, %v6906, %v6913
  %v6915 = vrot.slane %v6910, 4
  %v6917 = vshrl.u32 %v6807, 16
  %v6919 = vrot.slane %v6917, 7
  %v6920 = vshll.u32 %v6807, 16
  %v6922 = vor.u32 %v6919, %v6920
  %v6923 = vsel %vm4209, %v6915, %v6922
  %v6924 = vrot.slane %v6919, 4
  %v6926 = vshrl.u32 %v6808, 16
  %v6928 = vrot.slane %v6926, 7
  %v6929 = vshll.u32 %v6808, 16
  %v6931 = vor.u32 %v6928, %v6929
  %v6932 = vsel %vm4209, %v6924, %v6931
  %v6933 = vrot.slane %v6928, 4
  %v6935 = vshrl.u32 %v6809, 16
  %v6937 = vrot.slane %v6935, 7
  %v6938 = vshll.u32 %v6809, 16
  %v6940 = vor.u32 %v6937, %v6938
  %v6941 = vsel %vm4209, %v6933, %v6940
  %v6942 = vrot.slane %v6937, 4
  %v6944 = vshrl.u32 %v6810, 16
  %v6946 = vrot.slane %v6944, 7
  %v6947 = vshll.u32 %v6810, 16
  %v6949 = vor.u32 %v6946, %v6947
  %v6950 = vsel %vm4209, %v6942, %v6949
  %v6951 = vrot.slane %v6946, 4
  %v6953 = vshrl.u32 %v6811, 16
  %v6955 = vrot.slane %v6953, 7
  %v6956 = vshll.u32 %v6811, 16
  %v6958 = vor.u32 %v6955, %v6956
  %v6959 = vsel %vm4209, %v6951, %v6958
  %6976 = vst.msk [vmem:[#allocation3 + $0x180] sm:$0xf] %vm2029, %v6824
  %6977 = vst.msk [vmem:[#allocation3 + $0x18c] sm:$0xf] %vm2029, %v6833
  %6978 = vst.msk [vmem:[#allocation3 + $0x198] sm:$0xf] %vm2029, %v6842
  %6979 = vst.msk [vmem:[#allocation3 + $0x1a4] sm:$0xf] %vm2029, %v6851
  %6980 = vst.msk [vmem:[#allocation3 + $0x1b0] sm:$0xf] %vm2029, %v6860
  %6981 = vst.msk [vmem:[#allocation3 + $0x1bc] sm:$0xf] %vm2029, %v6869
  %6982 = vst.msk [vmem:[#allocation3 + $0x1c8] sm:$0xf] %vm2029, %v6878
  %6983 = vst.msk [vmem:[#allocation3 + $0x1d4] sm:$0xf] %vm2029, %v6887
  %6984 = vst.msk [vmem:[#allocation3 + $0x1e0] sm:$0xf] %vm2029, %v6896
  %6985 = vst.msk [vmem:[#allocation3 + $0x1ec] sm:$0xf] %vm2029, %v6905
  %6986 = vst.msk [vmem:[#allocation3 + $0x1f8] sm:$0xf] %vm2029, %v6914
  %6987 = vst.msk [vmem:[#allocation3 + $0x204] sm:$0xf] %vm2029, %v6923
  %6988 = vst.msk [vmem:[#allocation3 + $0x210] sm:$0xf] %vm2029, %v6932
  %6989 = vst.msk [vmem:[#allocation3 + $0x21c] sm:$0xf] %vm2029, %v6941
  %6990 = vst.msk [vmem:[#allocation3 + $0x228] sm:$0xf] %vm2029, %v6950
  %6991 = vst.msk [vmem:[#allocation3 + $0x234] sm:$0xf] %vm2029, %v6959
  %v6992 = vld [vmem:[#allocation2 + $0x8] sm:$0xf]
  %v6993 = vld [vmem:[#allocation2 + $0xc] sm:$0xf]
  %v6994 = vld [vmem:[#allocation2 + $0x10] sm:$0xf]
  %v6995 = vld [vmem:[#allocation2 + $0x14] sm:$0xf]
  %v6996 = vld [vmem:[#allocation2 + $0x18] sm:$0xf]
  %v6997 = vld [vmem:[#allocation2 + $0x1c] sm:$0xf]
  %v6998 = vld [vmem:[#allocation2 + $0x20] sm:$0xf]
  %v6999 = vld [vmem:[#allocation2 + $0x24] sm:$0xf]
  %v7000 = vld [vmem:[#allocation2 + $0x28] sm:$0xf]
  %v7001 = vld [vmem:[#allocation2 + $0x2c] sm:$0xf]
  %v7002 = vld [vmem:[#allocation2 + $0x30] sm:$0xf]
  %v7003 = vld [vmem:[#allocation2 + $0x34] sm:$0xf]
  %v7004 = vld [vmem:[#allocation2 + $0x38] sm:$0xf]
  %v7005 = vld [vmem:[#allocation2 + $0x3c] sm:$0xf]
  %v7006 = vld [vmem:[#allocation2 + $0x40] sm:$0xf]
  %v7007 = vld [vmem:[#allocation2 + $0x44] sm:$0xf]
  %7024 = vrot.lane.b32.xlu0 %v6992, 32
  %v7025 = vpop.permute.xlu0 %7024
  %7026 = vrot.lane.b32.xlu0 %v6993, 32
  %v7027 = vpop.permute.xlu0 %7026
  %7028 = vrot.lane.b32.xlu0 %v6994, 32
  %v7029 = vpop.permute.xlu0 %7028
  %7030 = vrot.lane.b32.xlu0 %v6995, 32
  %v7031 = vpop.permute.xlu0 %7030
  %7032 = vrot.lane.b32.xlu0 %v6996, 32
  %v7033 = vpop.permute.xlu0 %7032
  %7034 = vrot.lane.b32.xlu0 %v6997, 32
  %v7035 = vpop.permute.xlu0 %7034
  %7036 = vrot.lane.b32.xlu0 %v6998, 32
  %v7037 = vpop.permute.xlu0 %7036
  %7038 = vrot.lane.b32.xlu0 %v6999, 32
  %v7039 = vpop.permute.xlu0 %7038
  %7040 = vrot.lane.b32.xlu0 %v7000, 32
  %v7041 = vpop.permute.xlu0 %7040
  %7042 = vrot.lane.b32.xlu0 %v7001, 32
  %v7043 = vpop.permute.xlu0 %7042
  %7044 = vrot.lane.b32.xlu0 %v7002, 32
  %v7045 = vpop.permute.xlu0 %7044
  %7046 = vrot.lane.b32.xlu0 %v7003, 32
  %v7047 = vpop.permute.xlu0 %7046
  %7048 = vrot.lane.b32.xlu0 %v7004, 32
  %v7049 = vpop.permute.xlu0 %7048
  %7050 = vrot.lane.b32.xlu0 %v7005, 32
  %v7051 = vpop.permute.xlu0 %7050
  %7052 = vrot.lane.b32.xlu0 %v7006, 32
  %v7053 = vpop.permute.xlu0 %7052
  %7054 = vrot.lane.b32.xlu0 %v7007, 32
  %v7055 = vpop.permute.xlu0 %7054
  %7072 = vst.msk [vmem:[#allocation3 + $0x180] sm:$0xf] %vm3735, %v7025
  %7073 = vst.msk [vmem:[#allocation3 + $0x18c] sm:$0xf] %vm3735, %v7027
  %7074 = vst.msk [vmem:[#allocation3 + $0x198] sm:$0xf] %vm3735, %v7029
  %7075 = vst.msk [vmem:[#allocation3 + $0x1a4] sm:$0xf] %vm3735, %v7031
  %7076 = vst.msk [vmem:[#allocation3 + $0x1b0] sm:$0xf] %vm3735, %v7033
  %7077 = vst.msk [vmem:[#allocation3 + $0x1bc] sm:$0xf] %vm3735, %v7035
  %7078 = vst.msk [vmem:[#allocation3 + $0x1c8] sm:$0xf] %vm3735, %v7037
  %7079 = vst.msk [vmem:[#allocation3 + $0x1d4] sm:$0xf] %vm3735, %v7039
  %7080 = vst.msk [vmem:[#allocation3 + $0x1e0] sm:$0xf] %vm3735, %v7041
  %7081 = vst.msk [vmem:[#allocation3 + $0x1ec] sm:$0xf] %vm3735, %v7043
  %7082 = vst.msk [vmem:[#allocation3 + $0x1f8] sm:$0xf] %vm3735, %v7045
  %7083 = vst.msk [vmem:[#allocation3 + $0x204] sm:$0xf] %vm3735, %v7047
  %7084 = vst.msk [vmem:[#allocation3 + $0x210] sm:$0xf] %vm3735, %v7049
  %7085 = vst.msk [vmem:[#allocation3 + $0x21c] sm:$0xf] %vm3735, %v7051
  %7086 = vst.msk [vmem:[#allocation3 + $0x228] sm:$0xf] %vm3735, %v7053
  %7087 = vst.msk [vmem:[#allocation3 + $0x234] sm:$0xf] %vm3735, %v7055
  %v7088 = vld [vmem:[#allocation2 + $0x48] sm:$0xf]
  %v7089 = vld [vmem:[#allocation2 + $0x4c] sm:$0xf]
  %v7090 = vld [vmem:[#allocation2 + $0x50] sm:$0xf]
  %v7091 = vld [vmem:[#allocation2 + $0x54] sm:$0xf]
  %v7092 = vld [vmem:[#allocation2 + $0x58] sm:$0xf]
  %v7093 = vld [vmem:[#allocation2 + $0x5c] sm:$0xf]
  %v7094 = vld [vmem:[#allocation2 + $0x60] sm:$0xf]
  %v7095 = vld [vmem:[#allocation2 + $0x64] sm:$0xf]
  %v7096 = vld [vmem:[#allocation2 + $0x68] sm:$0xf]
  %v7097 = vld [vmem:[#allocation2 + $0x6c] sm:$0xf]
  %v7098 = vld [vmem:[#allocation2 + $0x70] sm:$0xf]
  %v7099 = vld [vmem:[#allocation2 + $0x74] sm:$0xf]
  %v7100 = vld [vmem:[#allocation2 + $0x78] sm:$0xf]
  %v7101 = vld [vmem:[#allocation2 + $0x7c] sm:$0xf]
  %v7102 = vld [vmem:[#allocation2 + $0x80] sm:$0xf]
  %v7103 = vld [vmem:[#allocation2 + $0x84] sm:$0xf]
  %7120 = vrot.lane.b32.xlu0 %v7088, 64
  %v7121 = vpop.permute.xlu0 %7120
  %7122 = vrot.lane.b32.xlu0 %v7089, 64
  %v7123 = vpop.permute.xlu0 %7122
  %7124 = vrot.lane.b32.xlu0 %v7090, 64
  %v7125 = vpop.permute.xlu0 %7124
  %7126 = vrot.lane.b32.xlu0 %v7091, 64
  %v7127 = vpop.permute.xlu0 %7126
  %7128 = vrot.lane.b32.xlu0 %v7092, 64
  %v7129 = vpop.permute.xlu0 %7128
  %7130 = vrot.lane.b32.xlu0 %v7093, 64
  %v7131 = vpop.permute.xlu0 %7130
  %7132 = vrot.lane.b32.xlu0 %v7094, 64
  %v7133 = vpop.permute.xlu0 %7132
  %7134 = vrot.lane.b32.xlu0 %v7095, 64
  %v7135 = vpop.permute.xlu0 %7134
  %7136 = vrot.lane.b32.xlu0 %v7096, 64
  %v7137 = vpop.permute.xlu0 %7136
  %7138 = vrot.lane.b32.xlu0 %v7097, 64
  %v7139 = vpop.permute.xlu0 %7138
  %7140 = vrot.lane.b32.xlu0 %v7098, 64
  %v7141 = vpop.permute.xlu0 %7140
  %7142 = vrot.lane.b32.xlu0 %v7099, 64
  %v7143 = vpop.permute.xlu0 %7142
  %7144 = vrot.lane.b32.xlu0 %v7100, 64
  %v7145 = vpop.permute.xlu0 %7144
  %7146 = vrot.lane.b32.xlu0 %v7101, 64
  %v7147 = vpop.permute.xlu0 %7146
  %7148 = vrot.lane.b32.xlu0 %v7102, 64
  %v7149 = vpop.permute.xlu0 %7148
  %7150 = vrot.lane.b32.xlu0 %v7103, 64
  %v7151 = vpop.permute.xlu0 %7150
  %7168 = vst.msk [vmem:[#allocation3 + $0x180] sm:$0xf] %vm3981, %v7121
  %7169 = vst.msk [vmem:[#allocation3 + $0x18c] sm:$0xf] %vm3981, %v7123
  %7170 = vst.msk [vmem:[#allocation3 + $0x198] sm:$0xf] %vm3981, %v7125
  %7171 = vst.msk [vmem:[#allocation3 + $0x1a4] sm:$0xf] %vm3981, %v7127
  %7172 = vst.msk [vmem:[#allocation3 + $0x1b0] sm:$0xf] %vm3981, %v7129
  %7173 = vst.msk [vmem:[#allocation3 + $0x1bc] sm:$0xf] %vm3981, %v7131
  %7174 = vst.msk [vmem:[#allocation3 + $0x1c8] sm:$0xf] %vm3981, %v7133
  %7175 = vst.msk [vmem:[#allocation3 + $0x1d4] sm:$0xf] %vm3981, %v7135
  %7176 = vst.msk [vmem:[#allocation3 + $0x1e0] sm:$0xf] %vm3981, %v7137
  %7177 = vst.msk [vmem:[#allocation3 + $0x1ec] sm:$0xf] %vm3981, %v7139
  %7178 = vst.msk [vmem:[#allocation3 + $0x1f8] sm:$0xf] %vm3981, %v7141
  %7179 = vst.msk [vmem:[#allocation3 + $0x204] sm:$0xf] %vm3981, %v7143
  %7180 = vst.msk [vmem:[#allocation3 + $0x210] sm:$0xf] %vm3981, %v7145
  %7181 = vst.msk [vmem:[#allocation3 + $0x21c] sm:$0xf] %vm3981, %v7147
  %7182 = vst.msk [vmem:[#allocation3 + $0x228] sm:$0xf] %vm3981, %v7149
  %7183 = vst.msk [vmem:[#allocation3 + $0x234] sm:$0xf] %vm3981, %v7151
  %v7184 = vld [vmem:[#allocation2 + $0xc4] sm:$0x8]
  %v7185 = vld [vmem:[#allocation2 + $0xc8] sm:$0xf]
  %v7186 = vld [vmem:[#allocation2 + $0xcc] sm:$0xf]
  %v7187 = vld [vmem:[#allocation2 + $0xd0] sm:$0xf]
  %v7188 = vld [vmem:[#allocation2 + $0xd4] sm:$0xf]
  %v7189 = vld [vmem:[#allocation2 + $0xd8] sm:$0xf]
  %v7190 = vld [vmem:[#allocation2 + $0xdc] sm:$0xf]
  %v7191 = vld [vmem:[#allocation2 + $0xe0] sm:$0xf]
  %v7192 = vld [vmem:[#allocation2 + $0xe4] sm:$0xf]
  %v7193 = vld [vmem:[#allocation2 + $0xe8] sm:$0xf]
  %v7194 = vld [vmem:[#allocation2 + $0xec] sm:$0xf]
  %v7195 = vld [vmem:[#allocation2 + $0xf0] sm:$0xf]
  %v7196 = vld [vmem:[#allocation2 + $0xf4] sm:$0xf]
  %v7197 = vld [vmem:[#allocation2 + $0xf8] sm:$0xf]
  %v7198 = vld [vmem:[#allocation2 + $0xfc] sm:$0xf]
  %v7199 = vld [vmem:[#allocation2 + $0x100] sm:$0xf]
  %v7200 = vld [vmem:[#allocation2 + $0x104] sm:$0xf]
  %v7201 = vmul.bf16 %v7184, %v4018
  %v7202 = vmul.bf16 %v7185, %v4028
  %v7203 = vmul.bf16 %v7186, %v4038
  %v7204 = vmul.bf16 %v7187, %v4048
  %v7205 = vmul.bf16 %v7188, %v4058
  %v7206 = vmul.bf16 %v7189, %v4068
  %v7207 = vmul.bf16 %v7190, %v4078
  %v7208 = vmul.bf16 %v7191, %v4088
  %v7209 = vmul.bf16 %v7192, %v4098
  %v7210 = vmul.bf16 %v7193, %v4108
  %v7211 = vmul.bf16 %v7194, %v4118
  %v7212 = vmul.bf16 %v7195, %v4128
  %v7213 = vmul.bf16 %v7196, %v4138
  %v7214 = vmul.bf16 %v7197, %v4148
  %v7215 = vmul.bf16 %v7198, %v4158
  %v7216 = vmul.bf16 %v7199, %v4168
  %v7217 = vmul.bf16 %v7200, %v4173
  %v7219 = vshrl.u32 %v7201, 16
  %v7221 = vrot.slane %v7219, 7
  %v7222 = vrot.slane %v7221, 4
  %v7224 = vshrl.u32 %v7202, 16
  %v7226 = vrot.slane %v7224, 7
  %v7227 = vshll.u32 %v7202, 16
  %v7229 = vor.u32 %v7226, %v7227
  %v7230 = vsel %vm4209, %v7222, %v7229
  %v7231 = vrot.slane %v7226, 4
  %v7233 = vshrl.u32 %v7203, 16
  %v7235 = vrot.slane %v7233, 7
  %v7236 = vshll.u32 %v7203, 16
  %v7238 = vor.u32 %v7235, %v7236
  %v7239 = vsel %vm4209, %v7231, %v7238
  %v7240 = vrot.slane %v7235, 4
  %v7242 = vshrl.u32 %v7204, 16
  %v7244 = vrot.slane %v7242, 7
  %v7245 = vshll.u32 %v7204, 16
  %v7247 = vor.u32 %v7244, %v7245
  %v7248 = vsel %vm4209, %v7240, %v7247
  %v7249 = vrot.slane %v7244, 4
  %v7251 = vshrl.u32 %v7205, 16
  %v7253 = vrot.slane %v7251, 7
  %v7254 = vshll.u32 %v7205, 16
  %v7256 = vor.u32 %v7253, %v7254
  %v7257 = vsel %vm4209, %v7249, %v7256
  %v7258 = vrot.slane %v7253, 4
  %v7260 = vshrl.u32 %v7206, 16
  %v7262 = vrot.slane %v7260, 7
  %v7263 = vshll.u32 %v7206, 16
  %v7265 = vor.u32 %v7262, %v7263
  %v7266 = vsel %vm4209, %v7258, %v7265
  %v7267 = vrot.slane %v7262, 4
  %v7269 = vshrl.u32 %v7207, 16
  %v7271 = vrot.slane %v7269, 7
  %v7272 = vshll.u32 %v7207, 16
  %v7274 = vor.u32 %v7271, %v7272
  %v7275 = vsel %vm4209, %v7267, %v7274
  %v7276 = vrot.slane %v7271, 4
  %v7278 = vshrl.u32 %v7208, 16
  %v7280 = vrot.slane %v7278, 7
  %v7281 = vshll.u32 %v7208, 16
  %v7283 = vor.u32 %v7280, %v7281
  %v7284 = vsel %vm4209, %v7276, %v7283
  %v7285 = vrot.slane %v7280, 4
  %v7287 = vshrl.u32 %v7209, 16
  %v7289 = vrot.slane %v7287, 7
  %v7290 = vshll.u32 %v7209, 16
  %v7292 = vor.u32 %v7289, %v7290
  %v7293 = vsel %vm4209, %v7285, %v7292
  %v7294 = vrot.slane %v7289, 4
  %v7296 = vshrl.u32 %v7210, 16
  %v7298 = vrot.slane %v7296, 7
  %v7299 = vshll.u32 %v7210, 16
  %v7301 = vor.u32 %v7298, %v7299
  %v7302 = vsel %vm4209, %v7294, %v7301
  %v7303 = vrot.slane %v7298, 4
  %v7305 = vshrl.u32 %v7211, 16
  %v7307 = vrot.slane %v7305, 7
  %v7308 = vshll.u32 %v7211, 16
  %v7310 = vor.u32 %v7307, %v7308
  %v7311 = vsel %vm4209, %v7303, %v7310
  %v7312 = vrot.slane %v7307, 4
  %v7314 = vshrl.u32 %v7212, 16
  %v7316 = vrot.slane %v7314, 7
  %v7317 = vshll.u32 %v7212, 16
  %v7319 = vor.u32 %v7316, %v7317
  %v7320 = vsel %vm4209, %v7312, %v7319
  %v7321 = vrot.slane %v7316, 4
  %v7323 = vshrl.u32 %v7213, 16
  %v7325 = vrot.slane %v7323, 7
  %v7326 = vshll.u32 %v7213, 16
  %v7328 = vor.u32 %v7325, %v7326
  %v7329 = vsel %vm4209, %v7321, %v7328
  %v7330 = vrot.slane %v7325, 4
  %v7332 = vshrl.u32 %v7214, 16
  %v7334 = vrot.slane %v7332, 7
  %v7335 = vshll.u32 %v7214, 16
  %v7337 = vor.u32 %v7334, %v7335
  %v7338 = vsel %vm4209, %v7330, %v7337
  %v7339 = vrot.slane %v7334, 4
  %v7341 = vshrl.u32 %v7215, 16
  %v7343 = vrot.slane %v7341, 7
  %v7344 = vshll.u32 %v7215, 16
  %v7346 = vor.u32 %v7343, %v7344
  %v7347 = vsel %vm4209, %v7339, %v7346
  %v7348 = vrot.slane %v7343, 4
  %v7350 = vshrl.u32 %v7216, 16
  %v7352 = vrot.slane %v7350, 7
  %v7353 = vshll.u32 %v7216, 16
  %v7355 = vor.u32 %v7352, %v7353
  %v7356 = vsel %vm4209, %v7348, %v7355
  %v7357 = vrot.slane %v7352, 4
  %v7359 = vshrl.u32 %v7217, 16
  %v7361 = vrot.slane %v7359, 7
  %v7362 = vshll.u32 %v7217, 16
  %v7364 = vor.u32 %v7361, %v7362
  %v7365 = vsel %vm4209, %v7357, %v7364
  %7366 = vrot.lane.b32.xlu0 %v7230, 96
  %v7367 = vpop.permute.xlu0 %7366
  %7368 = vrot.lane.b32.xlu0 %v7239, 96
  %v7369 = vpop.permute.xlu0 %7368
  %7370 = vrot.lane.b32.xlu0 %v7248, 96
  %v7371 = vpop.permute.xlu0 %7370
  %7372 = vrot.lane.b32.xlu0 %v7257, 96
  %v7373 = vpop.permute.xlu0 %7372
  %7374 = vrot.lane.b32.xlu0 %v7266, 96
  %v7375 = vpop.permute.xlu0 %7374
  %7376 = vrot.lane.b32.xlu0 %v7275, 96
  %v7377 = vpop.permute.xlu0 %7376
  %7378 = vrot.lane.b32.xlu0 %v7284, 96
  %v7379 = vpop.permute.xlu0 %7378
  %7380 = vrot.lane.b32.xlu0 %v7293, 96
  %v7381 = vpop.permute.xlu0 %7380
  %7382 = vrot.lane.b32.xlu0 %v7302, 96
  %v7383 = vpop.permute.xlu0 %7382
  %7384 = vrot.lane.b32.xlu0 %v7311, 96
  %v7385 = vpop.permute.xlu0 %7384
  %7386 = vrot.lane.b32.xlu0 %v7320, 96
  %v7387 = vpop.permute.xlu0 %7386
  %7388 = vrot.lane.b32.xlu0 %v7329, 96
  %v7389 = vpop.permute.xlu0 %7388
  %7390 = vrot.lane.b32.xlu0 %v7338, 96
  %v7391 = vpop.permute.xlu0 %7390
  %7392 = vrot.lane.b32.xlu0 %v7347, 96
  %v7393 = vpop.permute.xlu0 %7392
  %7394 = vrot.lane.b32.xlu0 %v7356, 96
  %v7395 = vpop.permute.xlu0 %7394
  %7396 = vrot.lane.b32.xlu0 %v7365, 96
  %v7397 = vpop.permute.xlu0 %7396
  %7414 = vst.msk [vmem:[#allocation3 + $0x180] sm:$0xf] %vm4406, %v7367
  %7415 = vst.msk [vmem:[#allocation3 + $0x18c] sm:$0xf] %vm4406, %v7369
  %7416 = vst.msk [vmem:[#allocation3 + $0x198] sm:$0xf] %vm4406, %v7371
  %7417 = vst.msk [vmem:[#allocation3 + $0x1a4] sm:$0xf] %vm4406, %v7373
  %7418 = vst.msk [vmem:[#allocation3 + $0x1b0] sm:$0xf] %vm4406, %v7375
  %7419 = vst.msk [vmem:[#allocation3 + $0x1bc] sm:$0xf] %vm4406, %v7377
  %7420 = vst.msk [vmem:[#allocation3 + $0x1c8] sm:$0xf] %vm4406, %v7379
  %7421 = vst.msk [vmem:[#allocation3 + $0x1d4] sm:$0xf] %vm4406, %v7381
  %7422 = vst.msk [vmem:[#allocation3 + $0x1e0] sm:$0xf] %vm4406, %v7383
  %7423 = vst.msk [vmem:[#allocation3 + $0x1ec] sm:$0xf] %vm4406, %v7385
  %7424 = vst.msk [vmem:[#allocation3 + $0x1f8] sm:$0xf] %vm4406, %v7387
  %7425 = vst.msk [vmem:[#allocation3 + $0x204] sm:$0xf] %vm4406, %v7389
  %7426 = vst.msk [vmem:[#allocation3 + $0x210] sm:$0xf] %vm4406, %v7391
  %7427 = vst.msk [vmem:[#allocation3 + $0x21c] sm:$0xf] %vm4406, %v7393
  %7428 = vst.msk [vmem:[#allocation3 + $0x228] sm:$0xf] %vm4406, %v7395
  %7429 = vst.msk [vmem:[#allocation3 + $0x234] sm:$0xf] %vm4406, %v7397
  %v7430 = vld [vmem:[#allocation2 + $0x88] sm:$0xf]
  %v7431 = vld [vmem:[#allocation2 + $0x8c] sm:$0xf]
  %v7432 = vld [vmem:[#allocation2 + $0x90] sm:$0xf]
  %v7433 = vld [vmem:[#allocation2 + $0x94] sm:$0xf]
  %v7434 = vld [vmem:[#allocation2 + $0x98] sm:$0xf]
  %v7435 = vld [vmem:[#allocation2 + $0x9c] sm:$0xf]
  %v7436 = vld [vmem:[#allocation2 + $0xa0] sm:$0xf]
  %v7437 = vld [vmem:[#allocation2 + $0xa4] sm:$0xf]
  %v7438 = vld [vmem:[#allocation2 + $0xa8] sm:$0xf]
  %v7439 = vld [vmem:[#allocation2 + $0xac] sm:$0xf]
  %v7440 = vld [vmem:[#allocation2 + $0xb0] sm:$0xf]
  %v7441 = vld [vmem:[#allocation2 + $0xb4] sm:$0xf]
  %v7442 = vld [vmem:[#allocation2 + $0xb8] sm:$0xf]
  %v7443 = vld [vmem:[#allocation2 + $0xbc] sm:$0xf]
  %v7444 = vld [vmem:[#allocation2 + $0xc0] sm:$0xf]
  %v7445 = vld [vmem:[#allocation2 + $0xc4] sm:$0xf]
  %7446 = vst.msk [vmem:[#allocation3 + $0x184] sm:$0xf] %vm2029, %v7430
  %7447 = vst.msk [vmem:[#allocation3 + $0x190] sm:$0xf] %vm2029, %v7431
  %7448 = vst.msk [vmem:[#allocation3 + $0x19c] sm:$0xf] %vm2029, %v7432
  %7449 = vst.msk [vmem:[#allocation3 + $0x1a8] sm:$0xf] %vm2029, %v7433
  %7450 = vst.msk [vmem:[#allocation3 + $0x1b4] sm:$0xf] %vm2029, %v7434
  %7451 = vst.msk [vmem:[#allocation3 + $0x1c0] sm:$0xf] %vm2029, %v7435
  %7452 = vst.msk [vmem:[#allocation3 + $0x1cc] sm:$0xf] %vm2029, %v7436
  %7453 = vst.msk [vmem:[#allocation3 + $0x1d8] sm:$0xf] %vm2029, %v7437
  %7454 = vst.msk [vmem:[#allocation3 + $0x1e4] sm:$0xf] %vm2029, %v7438
  %7455 = vst.msk [vmem:[#allocation3 + $0x1f0] sm:$0xf] %vm2029, %v7439
  %7456 = vst.msk [vmem:[#allocation3 + $0x1fc] sm:$0xf] %vm2029, %v7440
  %7457 = vst.msk [vmem:[#allocation3 + $0x208] sm:$0xf] %vm2029, %v7441
  %7458 = vst.msk [vmem:[#allocation3 + $0x214] sm:$0xf] %vm2029, %v7442
  %7459 = vst.msk [vmem:[#allocation3 + $0x220] sm:$0xf] %vm2029, %v7443
  %7460 = vst.msk [vmem:[#allocation3 + $0x22c] sm:$0xf] %vm2029, %v7444
  %7461 = vst.msk [vmem:[#allocation3 + $0x238] sm:$0xf] %vm2029, %v7445
  %v7462 = vld [vmem:[#allocation2 + $0xc8] sm:$0xf]
  %v7463 = vld [vmem:[#allocation2 + $0xcc] sm:$0xf]
  %v7464 = vld [vmem:[#allocation2 + $0xd0] sm:$0xf]
  %v7465 = vld [vmem:[#allocation2 + $0xd4] sm:$0xf]
  %v7466 = vld [vmem:[#allocation2 + $0xd8] sm:$0xf]
  %v7467 = vld [vmem:[#allocation2 + $0xdc] sm:$0xf]
  %v7468 = vld [vmem:[#allocation2 + $0xe0] sm:$0xf]
  %v7469 = vld [vmem:[#allocation2 + $0xe4] sm:$0xf]
  %v7470 = vld [vmem:[#allocation2 + $0xe8] sm:$0xf]
  %v7471 = vld [vmem:[#allocation2 + $0xec] sm:$0xf]
  %v7472 = vld [vmem:[#allocation2 + $0xf0] sm:$0xf]
  %v7473 = vld [vmem:[#allocation2 + $0xf4] sm:$0xf]
  %v7474 = vld [vmem:[#allocation2 + $0xf8] sm:$0xf]
  %v7475 = vld [vmem:[#allocation2 + $0xfc] sm:$0xf]
  %v7476 = vld [vmem:[#allocation2 + $0x100] sm:$0xf]
  %v7477 = vld [vmem:[#allocation2 + $0x104] sm:$0xf]
  %7494 = vrot.lane.b32.xlu0 %v7462, 32
  %v7495 = vpop.permute.xlu0 %7494
  %7496 = vrot.lane.b32.xlu0 %v7463, 32
  %v7497 = vpop.permute.xlu0 %7496
  %7498 = vrot.lane.b32.xlu0 %v7464, 32
  %v7499 = vpop.permute.xlu0 %7498
  %7500 = vrot.lane.b32.xlu0 %v7465, 32
  %v7501 = vpop.permute.xlu0 %7500
  %7502 = vrot.lane.b32.xlu0 %v7466, 32
  %v7503 = vpop.permute.xlu0 %7502
  %7504 = vrot.lane.b32.xlu0 %v7467, 32
  %v7505 = vpop.permute.xlu0 %7504
  %7506 = vrot.lane.b32.xlu0 %v7468, 32
  %v7507 = vpop.permute.xlu0 %7506
  %7508 = vrot.lane.b32.xlu0 %v7469, 32
  %v7509 = vpop.permute.xlu0 %7508
  %7510 = vrot.lane.b32.xlu0 %v7470, 32
  %v7511 = vpop.permute.xlu0 %7510
  %7512 = vrot.lane.b32.xlu0 %v7471, 32
  %v7513 = vpop.permute.xlu0 %7512
  %7514 = vrot.lane.b32.xlu0 %v7472, 32
  %v7515 = vpop.permute.xlu0 %7514
  %7516 = vrot.lane.b32.xlu0 %v7473, 32
  %v7517 = vpop.permute.xlu0 %7516
  %7518 = vrot.lane.b32.xlu0 %v7474, 32
  %v7519 = vpop.permute.xlu0 %7518
  %7520 = vrot.lane.b32.xlu0 %v7475, 32
  %v7521 = vpop.permute.xlu0 %7520
  %7522 = vrot.lane.b32.xlu0 %v7476, 32
  %v7523 = vpop.permute.xlu0 %7522
  %7524 = vrot.lane.b32.xlu0 %v7477, 32
  %v7525 = vpop.permute.xlu0 %7524
  %7542 = vst.msk [vmem:[#allocation3 + $0x184] sm:$0xf] %vm3735, %v7495
  %7543 = vst.msk [vmem:[#allocation3 + $0x190] sm:$0xf] %vm3735, %v7497
  %7544 = vst.msk [vmem:[#allocation3 + $0x19c] sm:$0xf] %vm3735, %v7499
  %7545 = vst.msk [vmem:[#allocation3 + $0x1a8] sm:$0xf] %vm3735, %v7501
  %7546 = vst.msk [vmem:[#allocation3 + $0x1b4] sm:$0xf] %vm3735, %v7503
  %7547 = vst.msk [vmem:[#allocation3 + $0x1c0] sm:$0xf] %vm3735, %v7505
  %7548 = vst.msk [vmem:[#allocation3 + $0x1cc] sm:$0xf] %vm3735, %v7507
  %7549 = vst.msk [vmem:[#allocation3 + $0x1d8] sm:$0xf] %vm3735, %v7509
  %7550 = vst.msk [vmem:[#allocation3 + $0x1e4] sm:$0xf] %vm3735, %v7511
  %7551 = vst.msk [vmem:[#allocation3 + $0x1f0] sm:$0xf] %vm3735, %v7513
  %7552 = vst.msk [vmem:[#allocation3 + $0x1fc] sm:$0xf] %vm3735, %v7515
  %7553 = vst.msk [vmem:[#allocation3 + $0x208] sm:$0xf] %vm3735, %v7517
  %7554 = vst.msk [vmem:[#allocation3 + $0x214] sm:$0xf] %vm3735, %v7519
  %7555 = vst.msk [vmem:[#allocation3 + $0x220] sm:$0xf] %vm3735, %v7521
  %7556 = vst.msk [vmem:[#allocation3 + $0x22c] sm:$0xf] %vm3735, %v7523
  %7557 = vst.msk [vmem:[#allocation3 + $0x238] sm:$0xf] %vm3735, %v7525
  %v7558 = vld [vmem:[#allocation2 + $0x48] sm:$0x8]
  %v7559 = vld [vmem:[#allocation2 + $0x4c] sm:$0xf]
  %v7560 = vld [vmem:[#allocation2 + $0x50] sm:$0xf]
  %v7561 = vld [vmem:[#allocation2 + $0x54] sm:$0xf]
  %v7562 = vld [vmem:[#allocation2 + $0x58] sm:$0xf]
  %v7563 = vld [vmem:[#allocation2 + $0x5c] sm:$0xf]
  %v7564 = vld [vmem:[#allocation2 + $0x60] sm:$0xf]
  %v7565 = vld [vmem:[#allocation2 + $0x64] sm:$0xf]
  %v7566 = vld [vmem:[#allocation2 + $0x68] sm:$0xf]
  %v7567 = vld [vmem:[#allocation2 + $0x6c] sm:$0xf]
  %v7568 = vld [vmem:[#allocation2 + $0x70] sm:$0xf]
  %v7569 = vld [vmem:[#allocation2 + $0x74] sm:$0xf]
  %v7570 = vld [vmem:[#allocation2 + $0x78] sm:$0xf]
  %v7571 = vld [vmem:[#allocation2 + $0x7c] sm:$0xf]
  %v7572 = vld [vmem:[#allocation2 + $0x80] sm:$0xf]
  %v7573 = vld [vmem:[#allocation2 + $0x84] sm:$0xf]
  %v7574 = vld [vmem:[#allocation2 + $0x88] sm:$0x7]
  %v7591 = vrot.slane %v3293, 5
  %v7592 = vrot.slane %v7591, 4
  %v7593 = vrot.slane %v3305, 5
  %v7594 = vsel %vm2540, %v7592, %v7593
  %v7595 = vrot.slane %v7593, 4
  %v7596 = vrot.slane %v3317, 5
  %v7597 = vsel %vm2540, %v7595, %v7596
  %v7598 = vrot.slane %v7596, 4
  %v7599 = vrot.slane %v3329, 5
  %v7600 = vsel %vm2540, %v7598, %v7599
  %v7601 = vrot.slane %v7599, 4
  %v7602 = vrot.slane %v3341, 5
  %v7603 = vsel %vm2540, %v7601, %v7602
  %v7604 = vrot.slane %v7602, 4
  %v7605 = vrot.slane %v3353, 5
  %v7606 = vsel %vm2540, %v7604, %v7605
  %v7607 = vrot.slane %v7605, 4
  %v7608 = vrot.slane %v3365, 5
  %v7609 = vsel %vm2540, %v7607, %v7608
  %v7610 = vrot.slane %v7608, 4
  %v7611 = vrot.slane %v3377, 5
  %v7612 = vsel %vm2540, %v7610, %v7611
  %v7613 = vrot.slane %v7611, 4
  %v7614 = vrot.slane %v3389, 5
  %v7615 = vsel %vm2540, %v7613, %v7614
  %v7616 = vrot.slane %v7614, 4
  %v7617 = vrot.slane %v3401, 5
  %v7618 = vsel %vm2540, %v7616, %v7617
  %v7619 = vrot.slane %v7617, 4
  %v7620 = vrot.slane %v3413, 5
  %v7621 = vsel %vm2540, %v7619, %v7620
  %v7622 = vrot.slane %v7620, 4
  %v7623 = vrot.slane %v3425, 5
  %v7624 = vsel %vm2540, %v7622, %v7623
  %v7625 = vrot.slane %v7623, 4
  %v7626 = vrot.slane %v3437, 5
  %v7627 = vsel %vm2540, %v7625, %v7626
  %v7628 = vrot.slane %v7626, 4
  %v7629 = vrot.slane %v3449, 5
  %v7630 = vsel %vm2540, %v7628, %v7629
  %v7631 = vrot.slane %v7629, 4
  %v7632 = vrot.slane %v3461, 5
  %v7633 = vsel %vm2540, %v7631, %v7632
  %v7634 = vrot.slane %v7632, 4
  %v7635 = vrot.slane %v3473, 5
  %v7636 = vsel %vm2540, %v7634, %v7635
  %v7637 = vrot.slane %v7635, 4
  %v7655 = vmul.bf16 %v7558, %v7591
  %v7656 = vmul.bf16 %v7559, %v7594
  %v7657 = vmul.bf16 %v7560, %v7597
  %v7658 = vmul.bf16 %v7561, %v7600
  %v7659 = vmul.bf16 %v7562, %v7603
  %v7660 = vmul.bf16 %v7563, %v7606
  %v7661 = vmul.bf16 %v7564, %v7609
  %v7662 = vmul.bf16 %v7565, %v7612
  %v7663 = vmul.bf16 %v7566, %v7615
  %v7664 = vmul.bf16 %v7567, %v7618
  %v7665 = vmul.bf16 %v7568, %v7621
  %v7666 = vmul.bf16 %v7569, %v7624
  %v7667 = vmul.bf16 %v7570, %v7627
  %v7668 = vmul.bf16 %v7571, %v7630
  %v7669 = vmul.bf16 %v7572, %v7633
  %v7670 = vmul.bf16 %v7573, %v7636
  %v7671 = vmul.bf16 %v7574, %v7637
  %v7689 = vrot.slane %v7655, 7
  %v7690 = vrot.slane %v7689, 4
  %v7691 = vrot.slane %v7656, 7
  %v7692 = vsel %vm5594, %v7690, %v7691
  %v7693 = vrot.slane %v7691, 4
  %v7694 = vrot.slane %v7657, 7
  %v7695 = vsel %vm5594, %v7693, %v7694
  %v7696 = vrot.slane %v7694, 4
  %v7697 = vrot.slane %v7658, 7
  %v7698 = vsel %vm5594, %v7696, %v7697
  %v7699 = vrot.slane %v7697, 4
  %v7700 = vrot.slane %v7659, 7
  %v7701 = vsel %vm5594, %v7699, %v7700
  %v7702 = vrot.slane %v7700, 4
  %v7703 = vrot.slane %v7660, 7
  %v7704 = vsel %vm5594, %v7702, %v7703
  %v7705 = vrot.slane %v7703, 4
  %v7706 = vrot.slane %v7661, 7
  %v7707 = vsel %vm5594, %v7705, %v7706
  %v7708 = vrot.slane %v7706, 4
  %v7709 = vrot.slane %v7662, 7
  %v7710 = vsel %vm5594, %v7708, %v7709
  %v7711 = vrot.slane %v7709, 4
  %v7712 = vrot.slane %v7663, 7
  %v7713 = vsel %vm5594, %v7711, %v7712
  %v7714 = vrot.slane %v7712, 4
  %v7715 = vrot.slane %v7664, 7
  %v7716 = vsel %vm5594, %v7714, %v7715
  %v7717 = vrot.slane %v7715, 4
  %v7718 = vrot.slane %v7665, 7
  %v7719 = vsel %vm5594, %v7717, %v7718
  %v7720 = vrot.slane %v7718, 4
  %v7721 = vrot.slane %v7666, 7
  %v7722 = vsel %vm5594, %v7720, %v7721
  %v7723 = vrot.slane %v7721, 4
  %v7724 = vrot.slane %v7667, 7
  %v7725 = vsel %vm5594, %v7723, %v7724
  %v7726 = vrot.slane %v7724, 4
  %v7727 = vrot.slane %v7668, 7
  %v7728 = vsel %vm5594, %v7726, %v7727
  %v7729 = vrot.slane %v7727, 4
  %v7730 = vrot.slane %v7669, 7
  %v7731 = vsel %vm5594, %v7729, %v7730
  %v7732 = vrot.slane %v7730, 4
  %v7733 = vrot.slane %v7670, 7
  %v7734 = vsel %vm5594, %v7732, %v7733
  %v7735 = vrot.slane %v7733, 4
  %v7736 = vrot.slane %v7671, 7
  %v7737 = vsel %vm5594, %v7735, %v7736
  %7738 = vrot.lane.b32.xlu0 %v7692, 64
  %v7739 = vpop.permute.xlu0 %7738
  %7740 = vrot.lane.b32.xlu0 %v7695, 64
  %v7741 = vpop.permute.xlu0 %7740
  %7742 = vrot.lane.b32.xlu0 %v7698, 64
  %v7743 = vpop.permute.xlu0 %7742
  %7744 = vrot.lane.b32.xlu0 %v7701, 64
  %v7745 = vpop.permute.xlu0 %7744
  %7746 = vrot.lane.b32.xlu0 %v7704, 64
  %v7747 = vpop.permute.xlu0 %7746
  %7748 = vrot.lane.b32.xlu0 %v7707, 64
  %v7749 = vpop.permute.xlu0 %7748
  %7750 = vrot.lane.b32.xlu0 %v7710, 64
  %v7751 = vpop.permute.xlu0 %7750
  %7752 = vrot.lane.b32.xlu0 %v7713, 64
  %v7753 = vpop.permute.xlu0 %7752
  %7754 = vrot.lane.b32.xlu0 %v7716, 64
  %v7755 = vpop.permute.xlu0 %7754
  %7756 = vrot.lane.b32.xlu0 %v7719, 64
  %v7757 = vpop.permute.xlu0 %7756
  %7758 = vrot.lane.b32.xlu0 %v7722, 64
  %v7759 = vpop.permute.xlu0 %7758
  %7760 = vrot.lane.b32.xlu0 %v7725, 64
  %v7761 = vpop.permute.xlu0 %7760
  %7762 = vrot.lane.b32.xlu0 %v7728, 64
  %v7763 = vpop.permute.xlu0 %7762
  %7764 = vrot.lane.b32.xlu0 %v7731, 64
  %v7765 = vpop.permute.xlu0 %7764
  %7766 = vrot.lane.b32.xlu0 %v7734, 64
  %v7767 = vpop.permute.xlu0 %7766
  %7768 = vrot.lane.b32.xlu0 %v7737, 64
  %v7769 = vpop.permute.xlu0 %7768
  %7786 = vst.msk [vmem:[#allocation3 + $0x184] sm:$0xf] %vm3981, %v7739
  %7787 = vst.msk [vmem:[#allocation3 + $0x190] sm:$0xf] %vm3981, %v7741
  %7788 = vst.msk [vmem:[#allocation3 + $0x19c] sm:$0xf] %vm3981, %v7743
  %7789 = vst.msk [vmem:[#allocation3 + $0x1a8] sm:$0xf] %vm3981, %v7745
  %7790 = vst.msk [vmem:[#allocation3 + $0x1b4] sm:$0xf] %vm3981, %v7747
  %7791 = vst.msk [vmem:[#allocation3 + $0x1c0] sm:$0xf] %vm3981, %v7749
  %7792 = vst.msk [vmem:[#allocation3 + $0x1cc] sm:$0xf] %vm3981, %v7751
  %7793 = vst.msk [vmem:[#allocation3 + $0x1d8] sm:$0xf] %vm3981, %v7753
  %7794 = vst.msk [vmem:[#allocation3 + $0x1e4] sm:$0xf] %vm3981, %v7755
  %7795 = vst.msk [vmem:[#allocation3 + $0x1f0] sm:$0xf] %vm3981, %v7757
  %7796 = vst.msk [vmem:[#allocation3 + $0x1fc] sm:$0xf] %vm3981, %v7759
  %7797 = vst.msk [vmem:[#allocation3 + $0x208] sm:$0xf] %vm3981, %v7761
  %7798 = vst.msk [vmem:[#allocation3 + $0x214] sm:$0xf] %vm3981, %v7763
  %7799 = vst.msk [vmem:[#allocation3 + $0x220] sm:$0xf] %vm3981, %v7765
  %7800 = vst.msk [vmem:[#allocation3 + $0x22c] sm:$0xf] %vm3981, %v7767
  %7801 = vst.msk [vmem:[#allocation3 + $0x238] sm:$0xf] %vm3981, %v7769
  %v7802 = vld [vmem:[#allocation2 + $0x8] sm:$0x8]
  %v7803 = vld [vmem:[#allocation2 + $0xc] sm:$0xf]
  %v7804 = vld [vmem:[#allocation2 + $0x10] sm:$0xf]
  %v7805 = vld [vmem:[#allocation2 + $0x14] sm:$0xf]
  %v7806 = vld [vmem:[#allocation2 + $0x18] sm:$0xf]
  %v7807 = vld [vmem:[#allocation2 + $0x1c] sm:$0xf]
  %v7808 = vld [vmem:[#allocation2 + $0x20] sm:$0xf]
  %v7809 = vld [vmem:[#allocation2 + $0x24] sm:$0xf]
  %v7810 = vld [vmem:[#allocation2 + $0x28] sm:$0xf]
  %v7811 = vld [vmem:[#allocation2 + $0x2c] sm:$0xf]
  %v7812 = vld [vmem:[#allocation2 + $0x30] sm:$0xf]
  %v7813 = vld [vmem:[#allocation2 + $0x34] sm:$0xf]
  %v7814 = vld [vmem:[#allocation2 + $0x38] sm:$0xf]
  %v7815 = vld [vmem:[#allocation2 + $0x3c] sm:$0xf]
  %v7816 = vld [vmem:[#allocation2 + $0x40] sm:$0xf]
  %v7817 = vld [vmem:[#allocation2 + $0x44] sm:$0xf]
  %v7818 = vld [vmem:[#allocation2 + $0x48] sm:$0xf]
  %v7820 = vshrl.u32 %v7802, 16
  %v7822 = vrot.slane %v7820, 7
  %v7823 = vrot.slane %v7822, 4
  %v7825 = vshrl.u32 %v7803, 16
  %v7827 = vrot.slane %v7825, 7
  %v7828 = vshll.u32 %v7803, 16
  %v7830 = vor.u32 %v7827, %v7828
  %v7831 = vsel %vm4209, %v7823, %v7830
  %v7832 = vrot.slane %v7827, 4
  %v7834 = vshrl.u32 %v7804, 16
  %v7836 = vrot.slane %v7834, 7
  %v7837 = vshll.u32 %v7804, 16
  %v7839 = vor.u32 %v7836, %v7837
  %v7840 = vsel %vm4209, %v7832, %v7839
  %v7841 = vrot.slane %v7836, 4
  %v7843 = vshrl.u32 %v7805, 16
  %v7845 = vrot.slane %v7843, 7
  %v7846 = vshll.u32 %v7805, 16
  %v7848 = vor.u32 %v7845, %v7846
  %v7849 = vsel %vm4209, %v7841, %v7848
  %v7850 = vrot.slane %v7845, 4
  %v7852 = vshrl.u32 %v7806, 16
  %v7854 = vrot.slane %v7852, 7
  %v7855 = vshll.u32 %v7806, 16
  %v7857 = vor.u32 %v7854, %v7855
  %v7858 = vsel %vm4209, %v7850, %v7857
  %v7859 = vrot.slane %v7854, 4
  %v7861 = vshrl.u32 %v7807, 16
  %v7863 = vrot.slane %v7861, 7
  %v7864 = vshll.u32 %v7807, 16
  %v7866 = vor.u32 %v7863, %v7864
  %v7867 = vsel %vm4209, %v7859, %v7866
  %v7868 = vrot.slane %v7863, 4
  %v7870 = vshrl.u32 %v7808, 16
  %v7872 = vrot.slane %v7870, 7
  %v7873 = vshll.u32 %v7808, 16
  %v7875 = vor.u32 %v7872, %v7873
  %v7876 = vsel %vm4209, %v7868, %v7875
  %v7877 = vrot.slane %v7872, 4
  %v7879 = vshrl.u32 %v7809, 16
  %v7881 = vrot.slane %v7879, 7
  %v7882 = vshll.u32 %v7809, 16
  %v7884 = vor.u32 %v7881, %v7882
  %v7885 = vsel %vm4209, %v7877, %v7884
  %v7886 = vrot.slane %v7881, 4
  %v7888 = vshrl.u32 %v7810, 16
  %v7890 = vrot.slane %v7888, 7
  %v7891 = vshll.u32 %v7810, 16
  %v7893 = vor.u32 %v7890, %v7891
  %v7894 = vsel %vm4209, %v7886, %v7893
  %v7895 = vrot.slane %v7890, 4
  %v7897 = vshrl.u32 %v7811, 16
  %v7899 = vrot.slane %v7897, 7
  %v7900 = vshll.u32 %v7811, 16
  %v7902 = vor.u32 %v7899, %v7900
  %v7903 = vsel %vm4209, %v7895, %v7902
  %v7904 = vrot.slane %v7899, 4
  %v7906 = vshrl.u32 %v7812, 16
  %v7908 = vrot.slane %v7906, 7
  %v7909 = vshll.u32 %v7812, 16
  %v7911 = vor.u32 %v7908, %v7909
  %v7912 = vsel %vm4209, %v7904, %v7911
  %v7913 = vrot.slane %v7908, 4
  %v7915 = vshrl.u32 %v7813, 16
  %v7917 = vrot.slane %v7915, 7
  %v7918 = vshll.u32 %v7813, 16
  %v7920 = vor.u32 %v7917, %v7918
  %v7921 = vsel %vm4209, %v7913, %v7920
  %v7922 = vrot.slane %v7917, 4
  %v7924 = vshrl.u32 %v7814, 16
  %v7926 = vrot.slane %v7924, 7
  %v7927 = vshll.u32 %v7814, 16
  %v7929 = vor.u32 %v7926, %v7927
  %v7930 = vsel %vm4209, %v7922, %v7929
  %v7931 = vrot.slane %v7926, 4
  %v7933 = vshrl.u32 %v7815, 16
  %v7935 = vrot.slane %v7933, 7
  %v7936 = vshll.u32 %v7815, 16
  %v7938 = vor.u32 %v7935, %v7936
  %v7939 = vsel %vm4209, %v7931, %v7938
  %v7940 = vrot.slane %v7935, 4
  %v7942 = vshrl.u32 %v7816, 16
  %v7944 = vrot.slane %v7942, 7
  %v7945 = vshll.u32 %v7816, 16
  %v7947 = vor.u32 %v7944, %v7945
  %v7948 = vsel %vm4209, %v7940, %v7947
  %v7949 = vrot.slane %v7944, 4
  %v7951 = vshrl.u32 %v7817, 16
  %v7953 = vrot.slane %v7951, 7
  %v7954 = vshll.u32 %v7817, 16
  %v7956 = vor.u32 %v7953, %v7954
  %v7957 = vsel %vm4209, %v7949, %v7956
  %v7958 = vrot.slane %v7953, 4
  %v7960 = vshrl.u32 %v7818, 16
  %v7962 = vrot.slane %v7960, 7
  %v7963 = vshll.u32 %v7818, 16
  %v7965 = vor.u32 %v7962, %v7963
  %v7966 = vsel %vm4209, %v7958, %v7965
  %7967 = vrot.lane.b32.xlu0 %v7831, 96
  %v7968 = vpop.permute.xlu0 %7967
  %7969 = vrot.lane.b32.xlu0 %v7840, 96
  %v7970 = vpop.permute.xlu0 %7969
  %7971 = vrot.lane.b32.xlu0 %v7849, 96
  %v7972 = vpop.permute.xlu0 %7971
  %7973 = vrot.lane.b32.xlu0 %v7858, 96
  %v7974 = vpop.permute.xlu0 %7973
  %7975 = vrot.lane.b32.xlu0 %v7867, 96
  %v7976 = vpop.permute.xlu0 %7975
  %7977 = vrot.lane.b32.xlu0 %v7876, 96
  %v7978 = vpop.permute.xlu0 %7977
  %7979 = vrot.lane.b32.xlu0 %v7885, 96
  %v7980 = vpop.permute.xlu0 %7979
  %7981 = vrot.lane.b32.xlu0 %v7894, 96
  %v7982 = vpop.permute.xlu0 %7981
  %7983 = vrot.lane.b32.xlu0 %v7903, 96
  %v7984 = vpop.permute.xlu0 %7983
  %7985 = vrot.lane.b32.xlu0 %v7912, 96
  %v7986 = vpop.permute.xlu0 %7985
  %7987 = vrot.lane.b32.xlu0 %v7921, 96
  %v7988 = vpop.permute.xlu0 %7987
  %7989 = vrot.lane.b32.xlu0 %v7930, 96
  %v7990 = vpop.permute.xlu0 %7989
  %7991 = vrot.lane.b32.xlu0 %v7939, 96
  %v7992 = vpop.permute.xlu0 %7991
  %7993 = vrot.lane.b32.xlu0 %v7948, 96
  %v7994 = vpop.permute.xlu0 %7993
  %7995 = vrot.lane.b32.xlu0 %v7957, 96
  %v7996 = vpop.permute.xlu0 %7995
  %7997 = vrot.lane.b32.xlu0 %v7966, 96
  %v7998 = vpop.permute.xlu0 %7997
  %8015 = vst.msk [vmem:[#allocation3 + $0x184] sm:$0xf] %vm4406, %v7968
  %8016 = vst.msk [vmem:[#allocation3 + $0x190] sm:$0xf] %vm4406, %v7970
  %8017 = vst.msk [vmem:[#allocation3 + $0x19c] sm:$0xf] %vm4406, %v7972
  %8018 = vst.msk [vmem:[#allocation3 + $0x1a8] sm:$0xf] %vm4406, %v7974
  %8019 = vst.msk [vmem:[#allocation3 + $0x1b4] sm:$0xf] %vm4406, %v7976
  %8020 = vst.msk [vmem:[#allocation3 + $0x1c0] sm:$0xf] %vm4406, %v7978
  %8021 = vst.msk [vmem:[#allocation3 + $0x1cc] sm:$0xf] %vm4406, %v7980
  %8022 = vst.msk [vmem:[#allocation3 + $0x1d8] sm:$0xf] %vm4406, %v7982
  %8023 = vst.msk [vmem:[#allocation3 + $0x1e4] sm:$0xf] %vm4406, %v7984
  %8024 = vst.msk [vmem:[#allocation3 + $0x1f0] sm:$0xf] %vm4406, %v7986
  %8025 = vst.msk [vmem:[#allocation3 + $0x1fc] sm:$0xf] %vm4406, %v7988
  %8026 = vst.msk [vmem:[#allocation3 + $0x208] sm:$0xf] %vm4406, %v7990
  %8027 = vst.msk [vmem:[#allocation3 + $0x214] sm:$0xf] %vm4406, %v7992
  %8028 = vst.msk [vmem:[#allocation3 + $0x220] sm:$0xf] %vm4406, %v7994
  %8029 = vst.msk [vmem:[#allocation3 + $0x22c] sm:$0xf] %vm4406, %v7996
  %8030 = vst.msk [vmem:[#allocation3 + $0x238] sm:$0xf] %vm4406, %v7998
  %v8031 = vld [vmem:[#allocation2 + $0x48] sm:$0x8]
  %v8032 = vld [vmem:[#allocation2 + $0x4c] sm:$0xf]
  %v8033 = vld [vmem:[#allocation2 + $0x50] sm:$0xf]
  %v8034 = vld [vmem:[#allocation2 + $0x54] sm:$0xf]
  %v8035 = vld [vmem:[#allocation2 + $0x58] sm:$0xf]
  %v8036 = vld [vmem:[#allocation2 + $0x5c] sm:$0xf]
  %v8037 = vld [vmem:[#allocation2 + $0x60] sm:$0xf]
  %v8038 = vld [vmem:[#allocation2 + $0x64] sm:$0xf]
  %v8039 = vld [vmem:[#allocation2 + $0x68] sm:$0xf]
  %v8040 = vld [vmem:[#allocation2 + $0x6c] sm:$0xf]
  %v8041 = vld [vmem:[#allocation2 + $0x70] sm:$0xf]
  %v8042 = vld [vmem:[#allocation2 + $0x74] sm:$0xf]
  %v8043 = vld [vmem:[#allocation2 + $0x78] sm:$0xf]
  %v8044 = vld [vmem:[#allocation2 + $0x7c] sm:$0xf]
  %v8045 = vld [vmem:[#allocation2 + $0x80] sm:$0xf]
  %v8046 = vld [vmem:[#allocation2 + $0x84] sm:$0xf]
  %v8047 = vld [vmem:[#allocation2 + $0x88] sm:$0xf]
  %v8049 = vshrl.u32 %v8031, 16
  %v8051 = vrot.slane %v8049, 7
  %v8052 = vrot.slane %v8051, 4
  %v8054 = vshrl.u32 %v8032, 16
  %v8056 = vrot.slane %v8054, 7
  %v8057 = vshll.u32 %v8032, 16
  %v8059 = vor.u32 %v8056, %v8057
  %v8060 = vsel %vm4209, %v8052, %v8059
  %v8061 = vrot.slane %v8056, 4
  %v8063 = vshrl.u32 %v8033, 16
  %v8065 = vrot.slane %v8063, 7
  %v8066 = vshll.u32 %v8033, 16
  %v8068 = vor.u32 %v8065, %v8066
  %v8069 = vsel %vm4209, %v8061, %v8068
  %v8070 = vrot.slane %v8065, 4
  %v8072 = vshrl.u32 %v8034, 16
  %v8074 = vrot.slane %v8072, 7
  %v8075 = vshll.u32 %v8034, 16
  %v8077 = vor.u32 %v8074, %v8075
  %v8078 = vsel %vm4209, %v8070, %v8077
  %v8079 = vrot.slane %v8074, 4
  %v8081 = vshrl.u32 %v8035, 16
  %v8083 = vrot.slane %v8081, 7
  %v8084 = vshll.u32 %v8035, 16
  %v8086 = vor.u32 %v8083, %v8084
  %v8087 = vsel %vm4209, %v8079, %v8086
  %v8088 = vrot.slane %v8083, 4
  %v8090 = vshrl.u32 %v8036, 16
  %v8092 = vrot.slane %v8090, 7
  %v8093 = vshll.u32 %v8036, 16
  %v8095 = vor.u32 %v8092, %v8093
  %v8096 = vsel %vm4209, %v8088, %v8095
  %v8097 = vrot.slane %v8092, 4
  %v8099 = vshrl.u32 %v8037, 16
  %v8101 = vrot.slane %v8099, 7
  %v8102 = vshll.u32 %v8037, 16
  %v8104 = vor.u32 %v8101, %v8102
  %v8105 = vsel %vm4209, %v8097, %v8104
  %v8106 = vrot.slane %v8101, 4
  %v8108 = vshrl.u32 %v8038, 16
  %v8110 = vrot.slane %v8108, 7
  %v8111 = vshll.u32 %v8038, 16
  %v8113 = vor.u32 %v8110, %v8111
  %v8114 = vsel %vm4209, %v8106, %v8113
  %v8115 = vrot.slane %v8110, 4
  %v8117 = vshrl.u32 %v8039, 16
  %v8119 = vrot.slane %v8117, 7
  %v8120 = vshll.u32 %v8039, 16
  %v8122 = vor.u32 %v8119, %v8120
  %v8123 = vsel %vm4209, %v8115, %v8122
  %v8124 = vrot.slane %v8119, 4
  %v8126 = vshrl.u32 %v8040, 16
  %v8128 = vrot.slane %v8126, 7
  %v8129 = vshll.u32 %v8040, 16
  %v8131 = vor.u32 %v8128, %v8129
  %v8132 = vsel %vm4209, %v8124, %v8131
  %v8133 = vrot.slane %v8128, 4
  %v8135 = vshrl.u32 %v8041, 16
  %v8137 = vrot.slane %v8135, 7
  %v8138 = vshll.u32 %v8041, 16
  %v8140 = vor.u32 %v8137, %v8138
  %v8141 = vsel %vm4209, %v8133, %v8140
  %v8142 = vrot.slane %v8137, 4
  %v8144 = vshrl.u32 %v8042, 16
  %v8146 = vrot.slane %v8144, 7
  %v8147 = vshll.u32 %v8042, 16
  %v8149 = vor.u32 %v8146, %v8147
  %v8150 = vsel %vm4209, %v8142, %v8149
  %v8151 = vrot.slane %v8146, 4
  %v8153 = vshrl.u32 %v8043, 16
  %v8155 = vrot.slane %v8153, 7
  %v8156 = vshll.u32 %v8043, 16
  %v8158 = vor.u32 %v8155, %v8156
  %v8159 = vsel %vm4209, %v8151, %v8158
  %v8160 = vrot.slane %v8155, 4
  %v8162 = vshrl.u32 %v8044, 16
  %v8164 = vrot.slane %v8162, 7
  %v8165 = vshll.u32 %v8044, 16
  %v8167 = vor.u32 %v8164, %v8165
  %v8168 = vsel %vm4209, %v8160, %v8167
  %v8169 = vrot.slane %v8164, 4
  %v8171 = vshrl.u32 %v8045, 16
  %v8173 = vrot.slane %v8171, 7
  %v8174 = vshll.u32 %v8045, 16
  %v8176 = vor.u32 %v8173, %v8174
  %v8177 = vsel %vm4209, %v8169, %v8176
  %v8178 = vrot.slane %v8173, 4
  %v8180 = vshrl.u32 %v8046, 16
  %v8182 = vrot.slane %v8180, 7
  %v8183 = vshll.u32 %v8046, 16
  %v8185 = vor.u32 %v8182, %v8183
  %v8186 = vsel %vm4209, %v8178, %v8185
  %v8187 = vrot.slane %v8182, 4
  %v8189 = vshrl.u32 %v8047, 16
  %v8191 = vrot.slane %v8189, 7
  %v8192 = vshll.u32 %v8047, 16
  %v8194 = vor.u32 %v8191, %v8192
  %v8195 = vsel %vm4209, %v8187, %v8194
  %8212 = vst.msk [vmem:[#allocation3 + $0x188] sm:$0xf] %vm2029, %v8060
  %8213 = vst.msk [vmem:[#allocation3 + $0x194] sm:$0xf] %vm2029, %v8069
  %8214 = vst.msk [vmem:[#allocation3 + $0x1a0] sm:$0xf] %vm2029, %v8078
  %8215 = vst.msk [vmem:[#allocation3 + $0x1ac] sm:$0xf] %vm2029, %v8087
  %8216 = vst.msk [vmem:[#allocation3 + $0x1b8] sm:$0xf] %vm2029, %v8096
  %8217 = vst.msk [vmem:[#allocation3 + $0x1c4] sm:$0xf] %vm2029, %v8105
  %8218 = vst.msk [vmem:[#allocation3 + $0x1d0] sm:$0xf] %vm2029, %v8114
  %8219 = vst.msk [vmem:[#allocation3 + $0x1dc] sm:$0xf] %vm2029, %v8123
  %8220 = vst.msk [vmem:[#allocation3 + $0x1e8] sm:$0xf] %vm2029, %v8132
  %8221 = vst.msk [vmem:[#allocation3 + $0x1f4] sm:$0xf] %vm2029, %v8141
  %8222 = vst.msk [vmem:[#allocation3 + $0x200] sm:$0xf] %vm2029, %v8150
  %8223 = vst.msk [vmem:[#allocation3 + $0x20c] sm:$0xf] %vm2029, %v8159
  %8224 = vst.msk [vmem:[#allocation3 + $0x218] sm:$0xf] %vm2029, %v8168
  %8225 = vst.msk [vmem:[#allocation3 + $0x224] sm:$0xf] %vm2029, %v8177
  %8226 = vst.msk [vmem:[#allocation3 + $0x230] sm:$0xf] %vm2029, %v8186
  %8227 = vst.msk [vmem:[#allocation3 + $0x23c] sm:$0xf] %vm2029, %v8195
  %v8228 = vld [vmem:[#allocation2 + $0x8] sm:$0xf]
  %v8229 = vld [vmem:[#allocation2 + $0xc] sm:$0xf]
  %v8230 = vld [vmem:[#allocation2 + $0x10] sm:$0xf]
  %v8231 = vld [vmem:[#allocation2 + $0x14] sm:$0xf]
  %v8232 = vld [vmem:[#allocation2 + $0x18] sm:$0xf]
  %v8233 = vld [vmem:[#allocation2 + $0x1c] sm:$0xf]
  %v8234 = vld [vmem:[#allocation2 + $0x20] sm:$0xf]
  %v8235 = vld [vmem:[#allocation2 + $0x24] sm:$0xf]
  %v8236 = vld [vmem:[#allocation2 + $0x28] sm:$0xf]
  %v8237 = vld [vmem:[#allocation2 + $0x2c] sm:$0xf]
  %v8238 = vld [vmem:[#allocation2 + $0x30] sm:$0xf]
  %v8239 = vld [vmem:[#allocation2 + $0x34] sm:$0xf]
  %v8240 = vld [vmem:[#allocation2 + $0x38] sm:$0xf]
  %v8241 = vld [vmem:[#allocation2 + $0x3c] sm:$0xf]
  %v8242 = vld [vmem:[#allocation2 + $0x40] sm:$0xf]
  %v8243 = vld [vmem:[#allocation2 + $0x44] sm:$0xf]
  %8244 = vst.msk [vmem:[#allocation3 + $0x240] sm:$0xf] %vm2029, %v8228
  %8245 = vst.msk [vmem:[#allocation3 + $0x24c] sm:$0xf] %vm2029, %v8229
  %8246 = vst.msk [vmem:[#allocation3 + $0x258] sm:$0xf] %vm2029, %v8230
  %8247 = vst.msk [vmem:[#allocation3 + $0x264] sm:$0xf] %vm2029, %v8231
  %8248 = vst.msk [vmem:[#allocation3 + $0x270] sm:$0xf] %vm2029, %v8232
  %8249 = vst.msk [vmem:[#allocation3 + $0x27c] sm:$0xf] %vm2029, %v8233
  %8250 = vst.msk [vmem:[#allocation3 + $0x288] sm:$0xf] %vm2029, %v8234
  %8251 = vst.msk [vmem:[#allocation3 + $0x294] sm:$0xf] %vm2029, %v8235
  %8252 = vst.msk [vmem:[#allocation3 + $0x2a0] sm:$0xf] %vm2029, %v8236
  %8253 = vst.msk [vmem:[#allocation3 + $0x2ac] sm:$0xf] %vm2029, %v8237
  %8254 = vst.msk [vmem:[#allocation3 + $0x2b8] sm:$0xf] %vm2029, %v8238
  %8255 = vst.msk [vmem:[#allocation3 + $0x2c4] sm:$0xf] %vm2029, %v8239
  %8256 = vst.msk [vmem:[#allocation3 + $0x2d0] sm:$0xf] %vm2029, %v8240
  %8257 = vst.msk [vmem:[#allocation3 + $0x2dc] sm:$0xf] %vm2029, %v8241
  %8258 = vst.msk [vmem:[#allocation3 + $0x2e8] sm:$0xf] %vm2029, %v8242
  %8259 = vst.msk [vmem:[#allocation3 + $0x2f4] sm:$0xf] %vm2029, %v8243
  %v8260 = vld [vmem:[#allocation2 + $0x48] sm:$0xf]
  %v8261 = vld [vmem:[#allocation2 + $0x4c] sm:$0xf]
  %v8262 = vld [vmem:[#allocation2 + $0x50] sm:$0xf]
  %v8263 = vld [vmem:[#allocation2 + $0x54] sm:$0xf]
  %v8264 = vld [vmem:[#allocation2 + $0x58] sm:$0xf]
  %v8265 = vld [vmem:[#allocation2 + $0x5c] sm:$0xf]
  %v8266 = vld [vmem:[#allocation2 + $0x60] sm:$0xf]
  %v8267 = vld [vmem:[#allocation2 + $0x64] sm:$0xf]
  %v8268 = vld [vmem:[#allocation2 + $0x68] sm:$0xf]
  %v8269 = vld [vmem:[#allocation2 + $0x6c] sm:$0xf]
  %v8270 = vld [vmem:[#allocation2 + $0x70] sm:$0xf]
  %v8271 = vld [vmem:[#allocation2 + $0x74] sm:$0xf]
  %v8272 = vld [vmem:[#allocation2 + $0x78] sm:$0xf]
  %v8273 = vld [vmem:[#allocation2 + $0x7c] sm:$0xf]
  %v8274 = vld [vmem:[#allocation2 + $0x80] sm:$0xf]
  %v8275 = vld [vmem:[#allocation2 + $0x84] sm:$0xf]
  %8292 = vrot.lane.b32.xlu0 %v8260, 32
  %v8293 = vpop.permute.xlu0 %8292
  %8294 = vrot.lane.b32.xlu0 %v8261, 32
  %v8295 = vpop.permute.xlu0 %8294
  %8296 = vrot.lane.b32.xlu0 %v8262, 32
  %v8297 = vpop.permute.xlu0 %8296
  %8298 = vrot.lane.b32.xlu0 %v8263, 32
  %v8299 = vpop.permute.xlu0 %8298
  %8300 = vrot.lane.b32.xlu0 %v8264, 32
  %v8301 = vpop.permute.xlu0 %8300
  %8302 = vrot.lane.b32.xlu0 %v8265, 32
  %v8303 = vpop.permute.xlu0 %8302
  %8304 = vrot.lane.b32.xlu0 %v8266, 32
  %v8305 = vpop.permute.xlu0 %8304
  %8306 = vrot.lane.b32.xlu0 %v8267, 32
  %v8307 = vpop.permute.xlu0 %8306
  %8308 = vrot.lane.b32.xlu0 %v8268, 32
  %v8309 = vpop.permute.xlu0 %8308
  %8310 = vrot.lane.b32.xlu0 %v8269, 32
  %v8311 = vpop.permute.xlu0 %8310
  %8312 = vrot.lane.b32.xlu0 %v8270, 32
  %v8313 = vpop.permute.xlu0 %8312
  %8314 = vrot.lane.b32.xlu0 %v8271, 32
  %v8315 = vpop.permute.xlu0 %8314
  %8316 = vrot.lane.b32.xlu0 %v8272, 32
  %v8317 = vpop.permute.xlu0 %8316
  %8318 = vrot.lane.b32.xlu0 %v8273, 32
  %v8319 = vpop.permute.xlu0 %8318
  %8320 = vrot.lane.b32.xlu0 %v8274, 32
  %v8321 = vpop.permute.xlu0 %8320
  %8322 = vrot.lane.b32.xlu0 %v8275, 32
  %v8323 = vpop.permute.xlu0 %8322
  %8340 = vst.msk [vmem:[#allocation3 + $0x240] sm:$0xf] %vm3735, %v8293
  %8341 = vst.msk [vmem:[#allocation3 + $0x24c] sm:$0xf] %vm3735, %v8295
  %8342 = vst.msk [vmem:[#allocation3 + $0x258] sm:$0xf] %vm3735, %v8297
  %8343 = vst.msk [vmem:[#allocation3 + $0x264] sm:$0xf] %vm3735, %v8299
  %8344 = vst.msk [vmem:[#allocation3 + $0x270] sm:$0xf] %vm3735, %v8301
  %8345 = vst.msk [vmem:[#allocation3 + $0x27c] sm:$0xf] %vm3735, %v8303
  %8346 = vst.msk [vmem:[#allocation3 + $0x288] sm:$0xf] %vm3735, %v8305
  %8347 = vst.msk [vmem:[#allocation3 + $0x294] sm:$0xf] %vm3735, %v8307
  %8348 = vst.msk [vmem:[#allocation3 + $0x2a0] sm:$0xf] %vm3735, %v8309
  %8349 = vst.msk [vmem:[#allocation3 + $0x2ac] sm:$0xf] %vm3735, %v8311
  %8350 = vst.msk [vmem:[#allocation3 + $0x2b8] sm:$0xf] %vm3735, %v8313
  %8351 = vst.msk [vmem:[#allocation3 + $0x2c4] sm:$0xf] %vm3735, %v8315
  %8352 = vst.msk [vmem:[#allocation3 + $0x2d0] sm:$0xf] %vm3735, %v8317
  %8353 = vst.msk [vmem:[#allocation3 + $0x2dc] sm:$0xf] %vm3735, %v8319
  %8354 = vst.msk [vmem:[#allocation3 + $0x2e8] sm:$0xf] %vm3735, %v8321
  %8355 = vst.msk [vmem:[#allocation3 + $0x2f4] sm:$0xf] %vm3735, %v8323
  %v8356 = vld [vmem:[#allocation2 + $0x8] sm:$0xf]
  %v8357 = vld [vmem:[#allocation2 + $0xc] sm:$0xf]
  %v8358 = vld [vmem:[#allocation2 + $0x10] sm:$0xf]
  %v8359 = vld [vmem:[#allocation2 + $0x14] sm:$0xf]
  %v8360 = vld [vmem:[#allocation2 + $0x18] sm:$0xf]
  %v8361 = vld [vmem:[#allocation2 + $0x1c] sm:$0xf]
  %v8362 = vld [vmem:[#allocation2 + $0x20] sm:$0xf]
  %v8363 = vld [vmem:[#allocation2 + $0x24] sm:$0xf]
  %v8364 = vld [vmem:[#allocation2 + $0x28] sm:$0xf]
  %v8365 = vld [vmem:[#allocation2 + $0x2c] sm:$0xf]
  %v8366 = vld [vmem:[#allocation2 + $0x30] sm:$0xf]
  %v8367 = vld [vmem:[#allocation2 + $0x34] sm:$0xf]
  %v8368 = vld [vmem:[#allocation2 + $0x38] sm:$0xf]
  %v8369 = vld [vmem:[#allocation2 + $0x3c] sm:$0xf]
  %v8370 = vld [vmem:[#allocation2 + $0x40] sm:$0xf]
  %v8371 = vld [vmem:[#allocation2 + $0x44] sm:$0xf]
  %v8372 = vld [vmem:[#allocation2 + $0x48] sm:$0x1]
  %v8373 = vmul.bf16 %v8356, %v5957
  %v8374 = vmul.bf16 %v8357, %v5966
  %v8375 = vmul.bf16 %v8358, %v5975
  %v8376 = vmul.bf16 %v8359, %v5984
  %v8377 = vmul.bf16 %v8360, %v5993
  %v8378 = vmul.bf16 %v8361, %v6002
  %v8379 = vmul.bf16 %v8362, %v6011
  %v8380 = vmul.bf16 %v8363, %v6020
  %v8381 = vmul.bf16 %v8364, %v6029
  %v8382 = vmul.bf16 %v8365, %v6038
  %v8383 = vmul.bf16 %v8366, %v6047
  %v8384 = vmul.bf16 %v8367, %v6056
  %v8385 = vmul.bf16 %v8368, %v6065
  %v8386 = vmul.bf16 %v8369, %v6074
  %v8387 = vmul.bf16 %v8370, %v6083
  %v8388 = vmul.bf16 %v8371, %v6092
  %v8389 = vmul.bf16 %v8372, %v6093
  %v8391 = vshrl.u32 %v8373, 16
  %v8393 = vrot.slane %v8391, 4
  %v8394 = vshll.u32 %v8373, 16
  %v8396 = vrot.slane %v8394, 5
  %v8397 = vor.u32 %v8393, %v8396
  %v8398 = vrot.slane %v8397, 4
  %v8400 = vshll.u32 %v8374, 16
  %v8402 = vrot.slane %v8400, 5
  %v8403 = vsel %vm2438, %v8398, %v8402
  %v8404 = vshrl.u32 %v8374, 16
  %v8406 = vrot.slane %v8404, 4
  %v8407 = vor.u32 %v8406, %v8402
  %v8408 = vrot.slane %v8407, 4
  %v8410 = vshll.u32 %v8375, 16
  %v8412 = vrot.slane %v8410, 5
  %v8413 = vsel %vm2438, %v8408, %v8412
  %v8414 = vshrl.u32 %v8375, 16
  %v8416 = vrot.slane %v8414, 4
  %v8417 = vor.u32 %v8416, %v8412
  %v8418 = vrot.slane %v8417, 4
  %v8420 = vshll.u32 %v8376, 16
  %v8422 = vrot.slane %v8420, 5
  %v8423 = vsel %vm2438, %v8418, %v8422
  %v8424 = vshrl.u32 %v8376, 16
  %v8426 = vrot.slane %v8424, 4
  %v8427 = vor.u32 %v8426, %v8422
  %v8428 = vrot.slane %v8427, 4
  %v8430 = vshll.u32 %v8377, 16
  %v8432 = vrot.slane %v8430, 5
  %v8433 = vsel %vm2438, %v8428, %v8432
  %v8434 = vshrl.u32 %v8377, 16
  %v8436 = vrot.slane %v8434, 4
  %v8437 = vor.u32 %v8436, %v8432
  %v8438 = vrot.slane %v8437, 4
  %v8440 = vshll.u32 %v8378, 16
  %v8442 = vrot.slane %v8440, 5
  %v8443 = vsel %vm2438, %v8438, %v8442
  %v8444 = vshrl.u32 %v8378, 16
  %v8446 = vrot.slane %v8444, 4
  %v8447 = vor.u32 %v8446, %v8442
  %v8448 = vrot.slane %v8447, 4
  %v8450 = vshll.u32 %v8379, 16
  %v8452 = vrot.slane %v8450, 5
  %v8453 = vsel %vm2438, %v8448, %v8452
  %v8454 = vshrl.u32 %v8379, 16
  %v8456 = vrot.slane %v8454, 4
  %v8457 = vor.u32 %v8456, %v8452
  %v8458 = vrot.slane %v8457, 4
  %v8460 = vshll.u32 %v8380, 16
  %v8462 = vrot.slane %v8460, 5
  %v8463 = vsel %vm2438, %v8458, %v8462
  %v8464 = vshrl.u32 %v8380, 16
  %v8466 = vrot.slane %v8464, 4
  %v8467 = vor.u32 %v8466, %v8462
  %v8468 = vrot.slane %v8467, 4
  %v8470 = vshll.u32 %v8381, 16
  %v8472 = vrot.slane %v8470, 5
  %v8473 = vsel %vm2438, %v8468, %v8472
  %v8474 = vshrl.u32 %v8381, 16
  %v8476 = vrot.slane %v8474, 4
  %v8477 = vor.u32 %v8476, %v8472
  %v8478 = vrot.slane %v8477, 4
  %v8480 = vshll.u32 %v8382, 16
  %v8482 = vrot.slane %v8480, 5
  %v8483 = vsel %vm2438, %v8478, %v8482
  %v8484 = vshrl.u32 %v8382, 16
  %v8486 = vrot.slane %v8484, 4
  %v8487 = vor.u32 %v8486, %v8482
  %v8488 = vrot.slane %v8487, 4
  %v8490 = vshll.u32 %v8383, 16
  %v8492 = vrot.slane %v8490, 5
  %v8493 = vsel %vm2438, %v8488, %v8492
  %v8494 = vshrl.u32 %v8383, 16
  %v8496 = vrot.slane %v8494, 4
  %v8497 = vor.u32 %v8496, %v8492
  %v8498 = vrot.slane %v8497, 4
  %v8500 = vshll.u32 %v8384, 16
  %v8502 = vrot.slane %v8500, 5
  %v8503 = vsel %vm2438, %v8498, %v8502
  %v8504 = vshrl.u32 %v8384, 16
  %v8506 = vrot.slane %v8504, 4
  %v8507 = vor.u32 %v8506, %v8502
  %v8508 = vrot.slane %v8507, 4
  %v8510 = vshll.u32 %v8385, 16
  %v8512 = vrot.slane %v8510, 5
  %v8513 = vsel %vm2438, %v8508, %v8512
  %v8514 = vshrl.u32 %v8385, 16
  %v8516 = vrot.slane %v8514, 4
  %v8517 = vor.u32 %v8516, %v8512
  %v8518 = vrot.slane %v8517, 4
  %v8520 = vshll.u32 %v8386, 16
  %v8522 = vrot.slane %v8520, 5
  %v8523 = vsel %vm2438, %v8518, %v8522
  %v8524 = vshrl.u32 %v8386, 16
  %v8526 = vrot.slane %v8524, 4
  %v8527 = vor.u32 %v8526, %v8522
  %v8528 = vrot.slane %v8527, 4
  %v8530 = vshll.u32 %v8387, 16
  %v8532 = vrot.slane %v8530, 5
  %v8533 = vsel %vm2438, %v8528, %v8532
  %v8534 = vshrl.u32 %v8387, 16
  %v8536 = vrot.slane %v8534, 4
  %v8537 = vor.u32 %v8536, %v8532
  %v8538 = vrot.slane %v8537, 4
  %v8540 = vshll.u32 %v8388, 16
  %v8542 = vrot.slane %v8540, 5
  %v8543 = vsel %vm2438, %v8538, %v8542
  %v8544 = vshrl.u32 %v8388, 16
  %v8546 = vrot.slane %v8544, 4
  %v8547 = vor.u32 %v8546, %v8542
  %v8548 = vrot.slane %v8547, 4
  %v8550 = vshll.u32 %v8389, 16
  %v8552 = vrot.slane %v8550, 5
  %v8553 = vsel %vm2438, %v8548, %v8552
  %8554 = vrot.lane.b32.xlu0 %v8403, 64
  %v8555 = vpop.permute.xlu0 %8554
  %8556 = vrot.lane.b32.xlu0 %v8413, 64
  %v8557 = vpop.permute.xlu0 %8556
  %8558 = vrot.lane.b32.xlu0 %v8423, 64
  %v8559 = vpop.permute.xlu0 %8558
  %8560 = vrot.lane.b32.xlu0 %v8433, 64
  %v8561 = vpop.permute.xlu0 %8560
  %8562 = vrot.lane.b32.xlu0 %v8443, 64
  %v8563 = vpop.permute.xlu0 %8562
  %8564 = vrot.lane.b32.xlu0 %v8453, 64
  %v8565 = vpop.permute.xlu0 %8564
  %8566 = vrot.lane.b32.xlu0 %v8463, 64
  %v8567 = vpop.permute.xlu0 %8566
  %8568 = vrot.lane.b32.xlu0 %v8473, 64
  %v8569 = vpop.permute.xlu0 %8568
  %8570 = vrot.lane.b32.xlu0 %v8483, 64
  %v8571 = vpop.permute.xlu0 %8570
  %8572 = vrot.lane.b32.xlu0 %v8493, 64
  %v8573 = vpop.permute.xlu0 %8572
  %8574 = vrot.lane.b32.xlu0 %v8503, 64
  %v8575 = vpop.permute.xlu0 %8574
  %8576 = vrot.lane.b32.xlu0 %v8513, 64
  %v8577 = vpop.permute.xlu0 %8576
  %8578 = vrot.lane.b32.xlu0 %v8523, 64
  %v8579 = vpop.permute.xlu0 %8578
  %8580 = vrot.lane.b32.xlu0 %v8533, 64
  %v8581 = vpop.permute.xlu0 %8580
  %8582 = vrot.lane.b32.xlu0 %v8543, 64
  %v8583 = vpop.permute.xlu0 %8582
  %8584 = vrot.lane.b32.xlu0 %v8553, 64
  %v8585 = vpop.permute.xlu0 %8584
  %8602 = vst.msk [vmem:[#allocation3 + $0x240] sm:$0xf] %vm3981, %v8555
  %8603 = vst.msk [vmem:[#allocation3 + $0x24c] sm:$0xf] %vm3981, %v8557
  %8604 = vst.msk [vmem:[#allocation3 + $0x258] sm:$0xf] %vm3981, %v8559
  %8605 = vst.msk [vmem:[#allocation3 + $0x264] sm:$0xf] %vm3981, %v8561
  %8606 = vst.msk [vmem:[#allocation3 + $0x270] sm:$0xf] %vm3981, %v8563
  %8607 = vst.msk [vmem:[#allocation3 + $0x27c] sm:$0xf] %vm3981, %v8565
  %8608 = vst.msk [vmem:[#allocation3 + $0x288] sm:$0xf] %vm3981, %v8567
  %8609 = vst.msk [vmem:[#allocation3 + $0x294] sm:$0xf] %vm3981, %v8569
  %8610 = vst.msk [vmem:[#allocation3 + $0x2a0] sm:$0xf] %vm3981, %v8571
  %8611 = vst.msk [vmem:[#allocation3 + $0x2ac] sm:$0xf] %vm3981, %v8573
  %8612 = vst.msk [vmem:[#allocation3 + $0x2b8] sm:$0xf] %vm3981, %v8575
  %8613 = vst.msk [vmem:[#allocation3 + $0x2c4] sm:$0xf] %vm3981, %v8577
  %8614 = vst.msk [vmem:[#allocation3 + $0x2d0] sm:$0xf] %vm3981, %v8579
  %8615 = vst.msk [vmem:[#allocation3 + $0x2dc] sm:$0xf] %vm3981, %v8581
  %8616 = vst.msk [vmem:[#allocation3 + $0x2e8] sm:$0xf] %vm3981, %v8583
  %8617 = vst.msk [vmem:[#allocation3 + $0x2f4] sm:$0xf] %vm3981, %v8585
  %v8618 = vld [vmem:[#allocation2 + $0x88] sm:$0xf]
  %v8619 = vld [vmem:[#allocation2 + $0x8c] sm:$0xf]
  %v8620 = vld [vmem:[#allocation2 + $0x90] sm:$0xf]
  %v8621 = vld [vmem:[#allocation2 + $0x94] sm:$0xf]
  %v8622 = vld [vmem:[#allocation2 + $0x98] sm:$0xf]
  %v8623 = vld [vmem:[#allocation2 + $0x9c] sm:$0xf]
  %v8624 = vld [vmem:[#allocation2 + $0xa0] sm:$0xf]
  %v8625 = vld [vmem:[#allocation2 + $0xa4] sm:$0xf]
  %v8626 = vld [vmem:[#allocation2 + $0xa8] sm:$0xf]
  %v8627 = vld [vmem:[#allocation2 + $0xac] sm:$0xf]
  %v8628 = vld [vmem:[#allocation2 + $0xb0] sm:$0xf]
  %v8629 = vld [vmem:[#allocation2 + $0xb4] sm:$0xf]
  %v8630 = vld [vmem:[#allocation2 + $0xb8] sm:$0xf]
  %v8631 = vld [vmem:[#allocation2 + $0xbc] sm:$0xf]
  %v8632 = vld [vmem:[#allocation2 + $0xc0] sm:$0xf]
  %v8633 = vld [vmem:[#allocation2 + $0xc4] sm:$0xf]
  %8650 = vrot.lane.b32.xlu0 %v8618, 96
  %v8651 = vpop.permute.xlu0 %8650
  %8652 = vrot.lane.b32.xlu0 %v8619, 96
  %v8653 = vpop.permute.xlu0 %8652
  %8654 = vrot.lane.b32.xlu0 %v8620, 96
  %v8655 = vpop.permute.xlu0 %8654
  %8656 = vrot.lane.b32.xlu0 %v8621, 96
  %v8657 = vpop.permute.xlu0 %8656
  %8658 = vrot.lane.b32.xlu0 %v8622, 96
  %v8659 = vpop.permute.xlu0 %8658
  %8660 = vrot.lane.b32.xlu0 %v8623, 96
  %v8661 = vpop.permute.xlu0 %8660
  %8662 = vrot.lane.b32.xlu0 %v8624, 96
  %v8663 = vpop.permute.xlu0 %8662
  %8664 = vrot.lane.b32.xlu0 %v8625, 96
  %v8665 = vpop.permute.xlu0 %8664
  %8666 = vrot.lane.b32.xlu0 %v8626, 96
  %v8667 = vpop.permute.xlu0 %8666
  %8668 = vrot.lane.b32.xlu0 %v8627, 96
  %v8669 = vpop.permute.xlu0 %8668
  %8670 = vrot.lane.b32.xlu0 %v8628, 96
  %v8671 = vpop.permute.xlu0 %8670
  %8672 = vrot.lane.b32.xlu0 %v8629, 96
  %v8673 = vpop.permute.xlu0 %8672
  %8674 = vrot.lane.b32.xlu0 %v8630, 96
  %v8675 = vpop.permute.xlu0 %8674
  %8676 = vrot.lane.b32.xlu0 %v8631, 96
  %v8677 = vpop.permute.xlu0 %8676
  %8678 = vrot.lane.b32.xlu0 %v8632, 96
  %v8679 = vpop.permute.xlu0 %8678
  %8680 = vrot.lane.b32.xlu0 %v8633, 96
  %v8681 = vpop.permute.xlu0 %8680
  %8698 = vst.msk [vmem:[#allocation3 + $0x240] sm:$0xf] %vm4406, %v8651
  %8699 = vst.msk [vmem:[#allocation3 + $0x24c] sm:$0xf] %vm4406, %v8653
  %8700 = vst.msk [vmem:[#allocation3 + $0x258] sm:$0xf] %vm4406, %v8655
  %8701 = vst.msk [vmem:[#allocation3 + $0x264] sm:$0xf] %vm4406, %v8657
  %8702 = vst.msk [vmem:[#allocation3 + $0x270] sm:$0xf] %vm4406, %v8659
  %8703 = vst.msk [vmem:[#allocation3 + $0x27c] sm:$0xf] %vm4406, %v8661
  %8704 = vst.msk [vmem:[#allocation3 + $0x288] sm:$0xf] %vm4406, %v8663
  %8705 = vst.msk [vmem:[#allocation3 + $0x294] sm:$0xf] %vm4406, %v8665
  %8706 = vst.msk [vmem:[#allocation3 + $0x2a0] sm:$0xf] %vm4406, %v8667
  %8707 = vst.msk [vmem:[#allocation3 + $0x2ac] sm:$0xf] %vm4406, %v8669
  %8708 = vst.msk [vmem:[#allocation3 + $0x2b8] sm:$0xf] %vm4406, %v8671
  %8709 = vst.msk [vmem:[#allocation3 + $0x2c4] sm:$0xf] %vm4406, %v8673
  %8710 = vst.msk [vmem:[#allocation3 + $0x2d0] sm:$0xf] %vm4406, %v8675
  %8711 = vst.msk [vmem:[#allocation3 + $0x2dc] sm:$0xf] %vm4406, %v8677
  %8712 = vst.msk [vmem:[#allocation3 + $0x2e8] sm:$0xf] %vm4406, %v8679
  %8713 = vst.msk [vmem:[#allocation3 + $0x2f4] sm:$0xf] %vm4406, %v8681
  %v8714 = vld [vmem:[#allocation2 + $0xc8] sm:$0xf]
  %v8715 = vld [vmem:[#allocation2 + $0xcc] sm:$0xf]
  %v8716 = vld [vmem:[#allocation2 + $0xd0] sm:$0xf]
  %v8717 = vld [vmem:[#allocation2 + $0xd4] sm:$0xf]
  %v8718 = vld [vmem:[#allocation2 + $0xd8] sm:$0xf]
  %v8719 = vld [vmem:[#allocation2 + $0xdc] sm:$0xf]
  %v8720 = vld [vmem:[#allocation2 + $0xe0] sm:$0xf]
  %v8721 = vld [vmem:[#allocation2 + $0xe4] sm:$0xf]
  %v8722 = vld [vmem:[#allocation2 + $0xe8] sm:$0xf]
  %v8723 = vld [vmem:[#allocation2 + $0xec] sm:$0xf]
  %v8724 = vld [vmem:[#allocation2 + $0xf0] sm:$0xf]
  %v8725 = vld [vmem:[#allocation2 + $0xf4] sm:$0xf]
  %v8726 = vld [vmem:[#allocation2 + $0xf8] sm:$0xf]
  %v8727 = vld [vmem:[#allocation2 + $0xfc] sm:$0xf]
  %v8728 = vld [vmem:[#allocation2 + $0x100] sm:$0xf]
  %v8729 = vld [vmem:[#allocation2 + $0x104] sm:$0xf]
  %8730 = vst.msk [vmem:[#allocation3 + $0x244] sm:$0xf] %vm2029, %v8714
  %8731 = vst.msk [vmem:[#allocation3 + $0x250] sm:$0xf] %vm2029, %v8715
  %8732 = vst.msk [vmem:[#allocation3 + $0x25c] sm:$0xf] %vm2029, %v8716
  %8733 = vst.msk [vmem:[#allocation3 + $0x268] sm:$0xf] %vm2029, %v8717
  %8734 = vst.msk [vmem:[#allocation3 + $0x274] sm:$0xf] %vm2029, %v8718
  %8735 = vst.msk [vmem:[#allocation3 + $0x280] sm:$0xf] %vm2029, %v8719
  %8736 = vst.msk [vmem:[#allocation3 + $0x28c] sm:$0xf] %vm2029, %v8720
  %8737 = vst.msk [vmem:[#allocation3 + $0x298] sm:$0xf] %vm2029, %v8721
  %8738 = vst.msk [vmem:[#allocation3 + $0x2a4] sm:$0xf] %vm2029, %v8722
  %8739 = vst.msk [vmem:[#allocation3 + $0x2b0] sm:$0xf] %vm2029, %v8723
  %8740 = vst.msk [vmem:[#allocation3 + $0x2bc] sm:$0xf] %vm2029, %v8724
  %8741 = vst.msk [vmem:[#allocation3 + $0x2c8] sm:$0xf] %vm2029, %v8725
  %8742 = vst.msk [vmem:[#allocation3 + $0x2d4] sm:$0xf] %vm2029, %v8726
  %8743 = vst.msk [vmem:[#allocation3 + $0x2e0] sm:$0xf] %vm2029, %v8727
  %8744 = vst.msk [vmem:[#allocation3 + $0x2ec] sm:$0xf] %vm2029, %v8728
  %8745 = vst.msk [vmem:[#allocation3 + $0x2f8] sm:$0xf] %vm2029, %v8729
  %v8746 = vld [vmem:[#allocation2 + $0x88] sm:$0xf]
  %v8747 = vld [vmem:[#allocation2 + $0x8c] sm:$0xf]
  %v8748 = vld [vmem:[#allocation2 + $0x90] sm:$0xf]
  %v8749 = vld [vmem:[#allocation2 + $0x94] sm:$0xf]
  %v8750 = vld [vmem:[#allocation2 + $0x98] sm:$0xf]
  %v8751 = vld [vmem:[#allocation2 + $0x9c] sm:$0xf]
  %v8752 = vld [vmem:[#allocation2 + $0xa0] sm:$0xf]
  %v8753 = vld [vmem:[#allocation2 + $0xa4] sm:$0xf]
  %v8754 = vld [vmem:[#allocation2 + $0xa8] sm:$0xf]
  %v8755 = vld [vmem:[#allocation2 + $0xac] sm:$0xf]
  %v8756 = vld [vmem:[#allocation2 + $0xb0] sm:$0xf]
  %v8757 = vld [vmem:[#allocation2 + $0xb4] sm:$0xf]
  %v8758 = vld [vmem:[#allocation2 + $0xb8] sm:$0xf]
  %v8759 = vld [vmem:[#allocation2 + $0xbc] sm:$0xf]
  %v8760 = vld [vmem:[#allocation2 + $0xc0] sm:$0xf]
  %v8761 = vld [vmem:[#allocation2 + $0xc4] sm:$0xf]
  %v8762 = vld [vmem:[#allocation2 + $0xc8] sm:$0x1]
  %v8763 = vmul.bf16 %v8746, %v5957
  %v8764 = vmul.bf16 %v8747, %v5966
  %v8765 = vmul.bf16 %v8748, %v5975
  %v8766 = vmul.bf16 %v8749, %v5984
  %v8767 = vmul.bf16 %v8750, %v5993
  %v8768 = vmul.bf16 %v8751, %v6002
  %v8769 = vmul.bf16 %v8752, %v6011
  %v8770 = vmul.bf16 %v8753, %v6020
  %v8771 = vmul.bf16 %v8754, %v6029
  %v8772 = vmul.bf16 %v8755, %v6038
  %v8773 = vmul.bf16 %v8756, %v6047
  %v8774 = vmul.bf16 %v8757, %v6056
  %v8775 = vmul.bf16 %v8758, %v6065
  %v8776 = vmul.bf16 %v8759, %v6074
  %v8777 = vmul.bf16 %v8760, %v6083
  %v8778 = vmul.bf16 %v8761, %v6092
  %v8779 = vmul.bf16 %v8762, %v6093
  %v8781 = vshrl.u32 %v8763, 16
  %v8783 = vrot.slane %v8781, 4
  %v8784 = vshll.u32 %v8763, 16
  %v8786 = vrot.slane %v8784, 5
  %v8787 = vor.u32 %v8783, %v8786
  %v8788 = vrot.slane %v8787, 4
  %v8790 = vshll.u32 %v8764, 16
  %v8792 = vrot.slane %v8790, 5
  %v8793 = vsel %vm2438, %v8788, %v8792
  %v8794 = vshrl.u32 %v8764, 16
  %v8796 = vrot.slane %v8794, 4
  %v8797 = vor.u32 %v8796, %v8792
  %v8798 = vrot.slane %v8797, 4
  %v8800 = vshll.u32 %v8765, 16
  %v8802 = vrot.slane %v8800, 5
  %v8803 = vsel %vm2438, %v8798, %v8802
  %v8804 = vshrl.u32 %v8765, 16
  %v8806 = vrot.slane %v8804, 4
  %v8807 = vor.u32 %v8806, %v8802
  %v8808 = vrot.slane %v8807, 4
  %v8810 = vshll.u32 %v8766, 16
  %v8812 = vrot.slane %v8810, 5
  %v8813 = vsel %vm2438, %v8808, %v8812
  %v8814 = vshrl.u32 %v8766, 16
  %v8816 = vrot.slane %v8814, 4
  %v8817 = vor.u32 %v8816, %v8812
  %v8818 = vrot.slane %v8817, 4
  %v8820 = vshll.u32 %v8767, 16
  %v8822 = vrot.slane %v8820, 5
  %v8823 = vsel %vm2438, %v8818, %v8822
  %v8824 = vshrl.u32 %v8767, 16
  %v8826 = vrot.slane %v8824, 4
  %v8827 = vor.u32 %v8826, %v8822
  %v8828 = vrot.slane %v8827, 4
  %v8830 = vshll.u32 %v8768, 16
  %v8832 = vrot.slane %v8830, 5
  %v8833 = vsel %vm2438, %v8828, %v8832
  %v8834 = vshrl.u32 %v8768, 16
  %v8836 = vrot.slane %v8834, 4
  %v8837 = vor.u32 %v8836, %v8832
  %v8838 = vrot.slane %v8837, 4
  %v8840 = vshll.u32 %v8769, 16
  %v8842 = vrot.slane %v8840, 5
  %v8843 = vsel %vm2438, %v8838, %v8842
  %v8844 = vshrl.u32 %v8769, 16
  %v8846 = vrot.slane %v8844, 4
  %v8847 = vor.u32 %v8846, %v8842
  %v8848 = vrot.slane %v8847, 4
  %v8850 = vshll.u32 %v8770, 16
  %v8852 = vrot.slane %v8850, 5
  %v8853 = vsel %vm2438, %v8848, %v8852
  %v8854 = vshrl.u32 %v8770, 16
  %v8856 = vrot.slane %v8854, 4
  %v8857 = vor.u32 %v8856, %v8852
  %v8858 = vrot.slane %v8857, 4
  %v8860 = vshll.u32 %v8771, 16
  %v8862 = vrot.slane %v8860, 5
  %v8863 = vsel %vm2438, %v8858, %v8862
  %v8864 = vshrl.u32 %v8771, 16
  %v8866 = vrot.slane %v8864, 4
  %v8867 = vor.u32 %v8866, %v8862
  %v8868 = vrot.slane %v8867, 4
  %v8870 = vshll.u32 %v8772, 16
  %v8872 = vrot.slane %v8870, 5
  %v8873 = vsel %vm2438, %v8868, %v8872
  %v8874 = vshrl.u32 %v8772, 16
  %v8876 = vrot.slane %v8874, 4
  %v8877 = vor.u32 %v8876, %v8872
  %v8878 = vrot.slane %v8877, 4
  %v8880 = vshll.u32 %v8773, 16
  %v8882 = vrot.slane %v8880, 5
  %v8883 = vsel %vm2438, %v8878, %v8882
  %v8884 = vshrl.u32 %v8773, 16
  %v8886 = vrot.slane %v8884, 4
  %v8887 = vor.u32 %v8886, %v8882
  %v8888 = vrot.slane %v8887, 4
  %v8890 = vshll.u32 %v8774, 16
  %v8892 = vrot.slane %v8890, 5
  %v8893 = vsel %vm2438, %v8888, %v8892
  %v8894 = vshrl.u32 %v8774, 16
  %v8896 = vrot.slane %v8894, 4
  %v8897 = vor.u32 %v8896, %v8892
  %v8898 = vrot.slane %v8897, 4
  %v8900 = vshll.u32 %v8775, 16
  %v8902 = vrot.slane %v8900, 5
  %v8903 = vsel %vm2438, %v8898, %v8902
  %v8904 = vshrl.u32 %v8775, 16
  %v8906 = vrot.slane %v8904, 4
  %v8907 = vor.u32 %v8906, %v8902
  %v8908 = vrot.slane %v8907, 4
  %v8910 = vshll.u32 %v8776, 16
  %v8912 = vrot.slane %v8910, 5
  %v8913 = vsel %vm2438, %v8908, %v8912
  %v8914 = vshrl.u32 %v8776, 16
  %v8916 = vrot.slane %v8914, 4
  %v8917 = vor.u32 %v8916, %v8912
  %v8918 = vrot.slane %v8917, 4
  %v8920 = vshll.u32 %v8777, 16
  %v8922 = vrot.slane %v8920, 5
  %v8923 = vsel %vm2438, %v8918, %v8922
  %v8924 = vshrl.u32 %v8777, 16
  %v8926 = vrot.slane %v8924, 4
  %v8927 = vor.u32 %v8926, %v8922
  %v8928 = vrot.slane %v8927, 4
  %v8930 = vshll.u32 %v8778, 16
  %v8932 = vrot.slane %v8930, 5
  %v8933 = vsel %vm2438, %v8928, %v8932
  %v8934 = vshrl.u32 %v8778, 16
  %v8936 = vrot.slane %v8934, 4
  %v8937 = vor.u32 %v8936, %v8932
  %v8938 = vrot.slane %v8937, 4
  %v8940 = vshll.u32 %v8779, 16
  %v8942 = vrot.slane %v8940, 5
  %v8943 = vsel %vm2438, %v8938, %v8942
  %8944 = vrot.lane.b32.xlu0 %v8793, 32
  %v8945 = vpop.permute.xlu0 %8944
  %8946 = vrot.lane.b32.xlu0 %v8803, 32
  %v8947 = vpop.permute.xlu0 %8946
  %8948 = vrot.lane.b32.xlu0 %v8813, 32
  %v8949 = vpop.permute.xlu0 %8948
  %8950 = vrot.lane.b32.xlu0 %v8823, 32
  %v8951 = vpop.permute.xlu0 %8950
  %8952 = vrot.lane.b32.xlu0 %v8833, 32
  %v8953 = vpop.permute.xlu0 %8952
  %8954 = vrot.lane.b32.xlu0 %v8843, 32
  %v8955 = vpop.permute.xlu0 %8954
  %8956 = vrot.lane.b32.xlu0 %v8853, 32
  %v8957 = vpop.permute.xlu0 %8956
  %8958 = vrot.lane.b32.xlu0 %v8863, 32
  %v8959 = vpop.permute.xlu0 %8958
  %8960 = vrot.lane.b32.xlu0 %v8873, 32
  %v8961 = vpop.permute.xlu0 %8960
  %8962 = vrot.lane.b32.xlu0 %v8883, 32
  %v8963 = vpop.permute.xlu0 %8962
  %8964 = vrot.lane.b32.xlu0 %v8893, 32
  %v8965 = vpop.permute.xlu0 %8964
  %8966 = vrot.lane.b32.xlu0 %v8903, 32
  %v8967 = vpop.permute.xlu0 %8966
  %8968 = vrot.lane.b32.xlu0 %v8913, 32
  %v8969 = vpop.permute.xlu0 %8968
  %8970 = vrot.lane.b32.xlu0 %v8923, 32
  %v8971 = vpop.permute.xlu0 %8970
  %8972 = vrot.lane.b32.xlu0 %v8933, 32
  %v8973 = vpop.permute.xlu0 %8972
  %8974 = vrot.lane.b32.xlu0 %v8943, 32
  %v8975 = vpop.permute.xlu0 %8974
  %8992 = vst.msk [vmem:[#allocation3 + $0x244] sm:$0xf] %vm3735, %v8945
  %8993 = vst.msk [vmem:[#allocation3 + $0x250] sm:$0xf] %vm3735, %v8947
  %8994 = vst.msk [vmem:[#allocation3 + $0x25c] sm:$0xf] %vm3735, %v8949
  %8995 = vst.msk [vmem:[#allocation3 + $0x268] sm:$0xf] %vm3735, %v8951
  %8996 = vst.msk [vmem:[#allocation3 + $0x274] sm:$0xf] %vm3735, %v8953
  %8997 = vst.msk [vmem:[#allocation3 + $0x280] sm:$0xf] %vm3735, %v8955
  %8998 = vst.msk [vmem:[#allocation3 + $0x28c] sm:$0xf] %vm3735, %v8957
  %8999 = vst.msk [vmem:[#allocation3 + $0x298] sm:$0xf] %vm3735, %v8959
  %9000 = vst.msk [vmem:[#allocation3 + $0x2a4] sm:$0xf] %vm3735, %v8961
  %9001 = vst.msk [vmem:[#allocation3 + $0x2b0] sm:$0xf] %vm3735, %v8963
  %9002 = vst.msk [vmem:[#allocation3 + $0x2bc] sm:$0xf] %vm3735, %v8965
  %9003 = vst.msk [vmem:[#allocation3 + $0x2c8] sm:$0xf] %vm3735, %v8967
  %9004 = vst.msk [vmem:[#allocation3 + $0x2d4] sm:$0xf] %vm3735, %v8969
  %9005 = vst.msk [vmem:[#allocation3 + $0x2e0] sm:$0xf] %vm3735, %v8971
  %9006 = vst.msk [vmem:[#allocation3 + $0x2ec] sm:$0xf] %vm3735, %v8973
  %9007 = vst.msk [vmem:[#allocation3 + $0x2f8] sm:$0xf] %vm3735, %v8975
  %v9008 = vld [vmem:[#allocation2 + $0x8] sm:$0x8]
  %v9009 = vld [vmem:[#allocation2 + $0xc] sm:$0xf]
  %v9010 = vld [vmem:[#allocation2 + $0x10] sm:$0xf]
  %v9011 = vld [vmem:[#allocation2 + $0x14] sm:$0xf]
  %v9012 = vld [vmem:[#allocation2 + $0x18] sm:$0xf]
  %v9013 = vld [vmem:[#allocation2 + $0x1c] sm:$0xf]
  %v9014 = vld [vmem:[#allocation2 + $0x20] sm:$0xf]
  %v9015 = vld [vmem:[#allocation2 + $0x24] sm:$0xf]
  %v9016 = vld [vmem:[#allocation2 + $0x28] sm:$0xf]
  %v9017 = vld [vmem:[#allocation2 + $0x2c] sm:$0xf]
  %v9018 = vld [vmem:[#allocation2 + $0x30] sm:$0xf]
  %v9019 = vld [vmem:[#allocation2 + $0x34] sm:$0xf]
  %v9020 = vld [vmem:[#allocation2 + $0x38] sm:$0xf]
  %v9021 = vld [vmem:[#allocation2 + $0x3c] sm:$0xf]
  %v9022 = vld [vmem:[#allocation2 + $0x40] sm:$0xf]
  %v9023 = vld [vmem:[#allocation2 + $0x44] sm:$0xf]
  %v9024 = vld [vmem:[#allocation2 + $0x48] sm:$0xf]
  %v9026 = vshrl.u32 %v9008, 16
  %v9028 = vrot.slane %v9026, 7
  %v9029 = vrot.slane %v9028, 4
  %v9031 = vshrl.u32 %v9009, 16
  %v9033 = vrot.slane %v9031, 7
  %v9034 = vshll.u32 %v9009, 16
  %v9036 = vor.u32 %v9033, %v9034
  %v9037 = vsel %vm4209, %v9029, %v9036
  %v9038 = vrot.slane %v9033, 4
  %v9040 = vshrl.u32 %v9010, 16
  %v9042 = vrot.slane %v9040, 7
  %v9043 = vshll.u32 %v9010, 16
  %v9045 = vor.u32 %v9042, %v9043
  %v9046 = vsel %vm4209, %v9038, %v9045
  %v9047 = vrot.slane %v9042, 4
  %v9049 = vshrl.u32 %v9011, 16
  %v9051 = vrot.slane %v9049, 7
  %v9052 = vshll.u32 %v9011, 16
  %v9054 = vor.u32 %v9051, %v9052
  %v9055 = vsel %vm4209, %v9047, %v9054
  %v9056 = vrot.slane %v9051, 4
  %v9058 = vshrl.u32 %v9012, 16
  %v9060 = vrot.slane %v9058, 7
  %v9061 = vshll.u32 %v9012, 16
  %v9063 = vor.u32 %v9060, %v9061
  %v9064 = vsel %vm4209, %v9056, %v9063
  %v9065 = vrot.slane %v9060, 4
  %v9067 = vshrl.u32 %v9013, 16
  %v9069 = vrot.slane %v9067, 7
  %v9070 = vshll.u32 %v9013, 16
  %v9072 = vor.u32 %v9069, %v9070
  %v9073 = vsel %vm4209, %v9065, %v9072
  %v9074 = vrot.slane %v9069, 4
  %v9076 = vshrl.u32 %v9014, 16
  %v9078 = vrot.slane %v9076, 7
  %v9079 = vshll.u32 %v9014, 16
  %v9081 = vor.u32 %v9078, %v9079
  %v9082 = vsel %vm4209, %v9074, %v9081
  %v9083 = vrot.slane %v9078, 4
  %v9085 = vshrl.u32 %v9015, 16
  %v9087 = vrot.slane %v9085, 7
  %v9088 = vshll.u32 %v9015, 16
  %v9090 = vor.u32 %v9087, %v9088
  %v9091 = vsel %vm4209, %v9083, %v9090
  %v9092 = vrot.slane %v9087, 4
  %v9094 = vshrl.u32 %v9016, 16
  %v9096 = vrot.slane %v9094, 7
  %v9097 = vshll.u32 %v9016, 16
  %v9099 = vor.u32 %v9096, %v9097
  %v9100 = vsel %vm4209, %v9092, %v9099
  %v9101 = vrot.slane %v9096, 4
  %v9103 = vshrl.u32 %v9017, 16
  %v9105 = vrot.slane %v9103, 7
  %v9106 = vshll.u32 %v9017, 16
  %v9108 = vor.u32 %v9105, %v9106
  %v9109 = vsel %vm4209, %v9101, %v9108
  %v9110 = vrot.slane %v9105, 4
  %v9112 = vshrl.u32 %v9018, 16
  %v9114 = vrot.slane %v9112, 7
  %v9115 = vshll.u32 %v9018, 16
  %v9117 = vor.u32 %v9114, %v9115
  %v9118 = vsel %vm4209, %v9110, %v9117
  %v9119 = vrot.slane %v9114, 4
  %v9121 = vshrl.u32 %v9019, 16
  %v9123 = vrot.slane %v9121, 7
  %v9124 = vshll.u32 %v9019, 16
  %v9126 = vor.u32 %v9123, %v9124
  %v9127 = vsel %vm4209, %v9119, %v9126
  %v9128 = vrot.slane %v9123, 4
  %v9130 = vshrl.u32 %v9020, 16
  %v9132 = vrot.slane %v9130, 7
  %v9133 = vshll.u32 %v9020, 16
  %v9135 = vor.u32 %v9132, %v9133
  %v9136 = vsel %vm4209, %v9128, %v9135
  %v9137 = vrot.slane %v9132, 4
  %v9139 = vshrl.u32 %v9021, 16
  %v9141 = vrot.slane %v9139, 7
  %v9142 = vshll.u32 %v9021, 16
  %v9144 = vor.u32 %v9141, %v9142
  %v9145 = vsel %vm4209, %v9137, %v9144
  %v9146 = vrot.slane %v9141, 4
  %v9148 = vshrl.u32 %v9022, 16
  %v9150 = vrot.slane %v9148, 7
  %v9151 = vshll.u32 %v9022, 16
  %v9153 = vor.u32 %v9150, %v9151
  %v9154 = vsel %vm4209, %v9146, %v9153
  %v9155 = vrot.slane %v9150, 4
  %v9157 = vshrl.u32 %v9023, 16
  %v9159 = vrot.slane %v9157, 7
  %v9160 = vshll.u32 %v9023, 16
  %v9162 = vor.u32 %v9159, %v9160
  %v9163 = vsel %vm4209, %v9155, %v9162
  %v9164 = vrot.slane %v9159, 4
  %v9166 = vshrl.u32 %v9024, 16
  %v9168 = vrot.slane %v9166, 7
  %v9169 = vshll.u32 %v9024, 16
  %v9171 = vor.u32 %v9168, %v9169
  %v9172 = vsel %vm4209, %v9164, %v9171
  %9173 = vrot.lane.b32.xlu0 %v9037, 64
  %v9174 = vpop.permute.xlu0 %9173
  %9175 = vrot.lane.b32.xlu0 %v9046, 64
  %v9176 = vpop.permute.xlu0 %9175
  %9177 = vrot.lane.b32.xlu0 %v9055, 64
  %v9178 = vpop.permute.xlu0 %9177
  %9179 = vrot.lane.b32.xlu0 %v9064, 64
  %v9180 = vpop.permute.xlu0 %9179
  %9181 = vrot.lane.b32.xlu0 %v9073, 64
  %v9182 = vpop.permute.xlu0 %9181
  %9183 = vrot.lane.b32.xlu0 %v9082, 64
  %v9184 = vpop.permute.xlu0 %9183
  %9185 = vrot.lane.b32.xlu0 %v9091, 64
  %v9186 = vpop.permute.xlu0 %9185
  %9187 = vrot.lane.b32.xlu0 %v9100, 64
  %v9188 = vpop.permute.xlu0 %9187
  %9189 = vrot.lane.b32.xlu0 %v9109, 64
  %v9190 = vpop.permute.xlu0 %9189
  %9191 = vrot.lane.b32.xlu0 %v9118, 64
  %v9192 = vpop.permute.xlu0 %9191
  %9193 = vrot.lane.b32.xlu0 %v9127, 64
  %v9194 = vpop.permute.xlu0 %9193
  %9195 = vrot.lane.b32.xlu0 %v9136, 64
  %v9196 = vpop.permute.xlu0 %9195
  %9197 = vrot.lane.b32.xlu0 %v9145, 64
  %v9198 = vpop.permute.xlu0 %9197
  %9199 = vrot.lane.b32.xlu0 %v9154, 64
  %v9200 = vpop.permute.xlu0 %9199
  %9201 = vrot.lane.b32.xlu0 %v9163, 64
  %v9202 = vpop.permute.xlu0 %9201
  %9203 = vrot.lane.b32.xlu0 %v9172, 64
  %v9204 = vpop.permute.xlu0 %9203
  %9221 = vst.msk [vmem:[#allocation3 + $0x244] sm:$0xf] %vm3981, %v9174
  %9222 = vst.msk [vmem:[#allocation3 + $0x250] sm:$0xf] %vm3981, %v9176
  %9223 = vst.msk [vmem:[#allocation3 + $0x25c] sm:$0xf] %vm3981, %v9178
  %9224 = vst.msk [vmem:[#allocation3 + $0x268] sm:$0xf] %vm3981, %v9180
  %9225 = vst.msk [vmem:[#allocation3 + $0x274] sm:$0xf] %vm3981, %v9182
  %9226 = vst.msk [vmem:[#allocation3 + $0x280] sm:$0xf] %vm3981, %v9184
  %9227 = vst.msk [vmem:[#allocation3 + $0x28c] sm:$0xf] %vm3981, %v9186
  %9228 = vst.msk [vmem:[#allocation3 + $0x298] sm:$0xf] %vm3981, %v9188
  %9229 = vst.msk [vmem:[#allocation3 + $0x2a4] sm:$0xf] %vm3981, %v9190
  %9230 = vst.msk [vmem:[#allocation3 + $0x2b0] sm:$0xf] %vm3981, %v9192
  %9231 = vst.msk [vmem:[#allocation3 + $0x2bc] sm:$0xf] %vm3981, %v9194
  %9232 = vst.msk [vmem:[#allocation3 + $0x2c8] sm:$0xf] %vm3981, %v9196
  %9233 = vst.msk [vmem:[#allocation3 + $0x2d4] sm:$0xf] %vm3981, %v9198
  %9234 = vst.msk [vmem:[#allocation3 + $0x2e0] sm:$0xf] %vm3981, %v9200
  %9235 = vst.msk [vmem:[#allocation3 + $0x2ec] sm:$0xf] %vm3981, %v9202
  %9236 = vst.msk [vmem:[#allocation3 + $0x2f8] sm:$0xf] %vm3981, %v9204
  %v9237 = vld [vmem:[#allocation2 + $0x48] sm:$0x8]
  %v9238 = vld [vmem:[#allocation2 + $0x4c] sm:$0xf]
  %v9239 = vld [vmem:[#allocation2 + $0x50] sm:$0xf]
  %v9240 = vld [vmem:[#allocation2 + $0x54] sm:$0xf]
  %v9241 = vld [vmem:[#allocation2 + $0x58] sm:$0xf]
  %v9242 = vld [vmem:[#allocation2 + $0x5c] sm:$0xf]
  %v9243 = vld [vmem:[#allocation2 + $0x60] sm:$0xf]
  %v9244 = vld [vmem:[#allocation2 + $0x64] sm:$0xf]
  %v9245 = vld [vmem:[#allocation2 + $0x68] sm:$0xf]
  %v9246 = vld [vmem:[#allocation2 + $0x6c] sm:$0xf]
  %v9247 = vld [vmem:[#allocation2 + $0x70] sm:$0xf]
  %v9248 = vld [vmem:[#allocation2 + $0x74] sm:$0xf]
  %v9249 = vld [vmem:[#allocation2 + $0x78] sm:$0xf]
  %v9250 = vld [vmem:[#allocation2 + $0x7c] sm:$0xf]
  %v9251 = vld [vmem:[#allocation2 + $0x80] sm:$0xf]
  %v9252 = vld [vmem:[#allocation2 + $0x84] sm:$0xf]
  %v9253 = vld [vmem:[#allocation2 + $0x88] sm:$0xf]
  %v9255 = vshrl.u32 %v9237, 16
  %v9257 = vrot.slane %v9255, 7
  %v9258 = vrot.slane %v9257, 4
  %v9260 = vshrl.u32 %v9238, 16
  %v9262 = vrot.slane %v9260, 7
  %v9263 = vshll.u32 %v9238, 16
  %v9265 = vor.u32 %v9262, %v9263
  %v9266 = vsel %vm4209, %v9258, %v9265
  %v9267 = vrot.slane %v9262, 4
  %v9269 = vshrl.u32 %v9239, 16
  %v9271 = vrot.slane %v9269, 7
  %v9272 = vshll.u32 %v9239, 16
  %v9274 = vor.u32 %v9271, %v9272
  %v9275 = vsel %vm4209, %v9267, %v9274
  %v9276 = vrot.slane %v9271, 4
  %v9278 = vshrl.u32 %v9240, 16
  %v9280 = vrot.slane %v9278, 7
  %v9281 = vshll.u32 %v9240, 16
  %v9283 = vor.u32 %v9280, %v9281
  %v9284 = vsel %vm4209, %v9276, %v9283
  %v9285 = vrot.slane %v9280, 4
  %v9287 = vshrl.u32 %v9241, 16
  %v9289 = vrot.slane %v9287, 7
  %v9290 = vshll.u32 %v9241, 16
  %v9292 = vor.u32 %v9289, %v9290
  %v9293 = vsel %vm4209, %v9285, %v9292
  %v9294 = vrot.slane %v9289, 4
  %v9296 = vshrl.u32 %v9242, 16
  %v9298 = vrot.slane %v9296, 7
  %v9299 = vshll.u32 %v9242, 16
  %v9301 = vor.u32 %v9298, %v9299
  %v9302 = vsel %vm4209, %v9294, %v9301
  %v9303 = vrot.slane %v9298, 4
  %v9305 = vshrl.u32 %v9243, 16
  %v9307 = vrot.slane %v9305, 7
  %v9308 = vshll.u32 %v9243, 16
  %v9310 = vor.u32 %v9307, %v9308
  %v9311 = vsel %vm4209, %v9303, %v9310
  %v9312 = vrot.slane %v9307, 4
  %v9314 = vshrl.u32 %v9244, 16
  %v9316 = vrot.slane %v9314, 7
  %v9317 = vshll.u32 %v9244, 16
  %v9319 = vor.u32 %v9316, %v9317
  %v9320 = vsel %vm4209, %v9312, %v9319
  %v9321 = vrot.slane %v9316, 4
  %v9323 = vshrl.u32 %v9245, 16
  %v9325 = vrot.slane %v9323, 7
  %v9326 = vshll.u32 %v9245, 16
  %v9328 = vor.u32 %v9325, %v9326
  %v9329 = vsel %vm4209, %v9321, %v9328
  %v9330 = vrot.slane %v9325, 4
  %v9332 = vshrl.u32 %v9246, 16
  %v9334 = vrot.slane %v9332, 7
  %v9335 = vshll.u32 %v9246, 16
  %v9337 = vor.u32 %v9334, %v9335
  %v9338 = vsel %vm4209, %v9330, %v9337
  %v9339 = vrot.slane %v9334, 4
  %v9341 = vshrl.u32 %v9247, 16
  %v9343 = vrot.slane %v9341, 7
  %v9344 = vshll.u32 %v9247, 16
  %v9346 = vor.u32 %v9343, %v9344
  %v9347 = vsel %vm4209, %v9339, %v9346
  %v9348 = vrot.slane %v9343, 4
  %v9350 = vshrl.u32 %v9248, 16
  %v9352 = vrot.slane %v9350, 7
  %v9353 = vshll.u32 %v9248, 16
  %v9355 = vor.u32 %v9352, %v9353
  %v9356 = vsel %vm4209, %v9348, %v9355
  %v9357 = vrot.slane %v9352, 4
  %v9359 = vshrl.u32 %v9249, 16
  %v9361 = vrot.slane %v9359, 7
  %v9362 = vshll.u32 %v9249, 16
  %v9364 = vor.u32 %v9361, %v9362
  %v9365 = vsel %vm4209, %v9357, %v9364
  %v9366 = vrot.slane %v9361, 4
  %v9368 = vshrl.u32 %v9250, 16
  %v9370 = vrot.slane %v9368, 7
  %v9371 = vshll.u32 %v9250, 16
  %v9373 = vor.u32 %v9370, %v9371
  %v9374 = vsel %vm4209, %v9366, %v9373
  %v9375 = vrot.slane %v9370, 4
  %v9377 = vshrl.u32 %v9251, 16
  %v9379 = vrot.slane %v9377, 7
  %v9380 = vshll.u32 %v9251, 16
  %v9382 = vor.u32 %v9379, %v9380
  %v9383 = vsel %vm4209, %v9375, %v9382
  %v9384 = vrot.slane %v9379, 4
  %v9386 = vshrl.u32 %v9252, 16
  %v9388 = vrot.slane %v9386, 7
  %v9389 = vshll.u32 %v9252, 16
  %v9391 = vor.u32 %v9388, %v9389
  %v9392 = vsel %vm4209, %v9384, %v9391
  %v9393 = vrot.slane %v9388, 4
  %v9395 = vshrl.u32 %v9253, 16
  %v9397 = vrot.slane %v9395, 7
  %v9398 = vshll.u32 %v9253, 16
  %v9400 = vor.u32 %v9397, %v9398
  %v9401 = vsel %vm4209, %v9393, %v9400
  %9402 = vrot.lane.b32.xlu0 %v9266, 96
  %v9403 = vpop.permute.xlu0 %9402
  %9404 = vrot.lane.b32.xlu0 %v9275, 96
  %v9405 = vpop.permute.xlu0 %9404
  %9406 = vrot.lane.b32.xlu0 %v9284, 96
  %v9407 = vpop.permute.xlu0 %9406
  %9408 = vrot.lane.b32.xlu0 %v9293, 96
  %v9409 = vpop.permute.xlu0 %9408
  %9410 = vrot.lane.b32.xlu0 %v9302, 96
  %v9411 = vpop.permute.xlu0 %9410
  %9412 = vrot.lane.b32.xlu0 %v9311, 96
  %v9413 = vpop.permute.xlu0 %9412
  %9414 = vrot.lane.b32.xlu0 %v9320, 96
  %v9415 = vpop.permute.xlu0 %9414
  %9416 = vrot.lane.b32.xlu0 %v9329, 96
  %v9417 = vpop.permute.xlu0 %9416
  %9418 = vrot.lane.b32.xlu0 %v9338, 96
  %v9419 = vpop.permute.xlu0 %9418
  %9420 = vrot.lane.b32.xlu0 %v9347, 96
  %v9421 = vpop.permute.xlu0 %9420
  %9422 = vrot.lane.b32.xlu0 %v9356, 96
  %v9423 = vpop.permute.xlu0 %9422
  %9424 = vrot.lane.b32.xlu0 %v9365, 96
  %v9425 = vpop.permute.xlu0 %9424
  %9426 = vrot.lane.b32.xlu0 %v9374, 96
  %v9427 = vpop.permute.xlu0 %9426
  %9428 = vrot.lane.b32.xlu0 %v9383, 96
  %v9429 = vpop.permute.xlu0 %9428
  %9430 = vrot.lane.b32.xlu0 %v9392, 96
  %v9431 = vpop.permute.xlu0 %9430
  %9432 = vrot.lane.b32.xlu0 %v9401, 96
  %v9433 = vpop.permute.xlu0 %9432
  %9450 = vst.msk [vmem:[#allocation3 + $0x244] sm:$0xf] %vm4406, %v9403
  %9451 = vst.msk [vmem:[#allocation3 + $0x250] sm:$0xf] %vm4406, %v9405
  %9452 = vst.msk [vmem:[#allocation3 + $0x25c] sm:$0xf] %vm4406, %v9407
  %9453 = vst.msk [vmem:[#allocation3 + $0x268] sm:$0xf] %vm4406, %v9409
  %9454 = vst.msk [vmem:[#allocation3 + $0x274] sm:$0xf] %vm4406, %v9411
  %9455 = vst.msk [vmem:[#allocation3 + $0x280] sm:$0xf] %vm4406, %v9413
  %9456 = vst.msk [vmem:[#allocation3 + $0x28c] sm:$0xf] %vm4406, %v9415
  %9457 = vst.msk [vmem:[#allocation3 + $0x298] sm:$0xf] %vm4406, %v9417
  %9458 = vst.msk [vmem:[#allocation3 + $0x2a4] sm:$0xf] %vm4406, %v9419
  %9459 = vst.msk [vmem:[#allocation3 + $0x2b0] sm:$0xf] %vm4406, %v9421
  %9460 = vst.msk [vmem:[#allocation3 + $0x2bc] sm:$0xf] %vm4406, %v9423
  %9461 = vst.msk [vmem:[#allocation3 + $0x2c8] sm:$0xf] %vm4406, %v9425
  %9462 = vst.msk [vmem:[#allocation3 + $0x2d4] sm:$0xf] %vm4406, %v9427
  %9463 = vst.msk [vmem:[#allocation3 + $0x2e0] sm:$0xf] %vm4406, %v9429
  %9464 = vst.msk [vmem:[#allocation3 + $0x2ec] sm:$0xf] %vm4406, %v9431
  %9465 = vst.msk [vmem:[#allocation3 + $0x2f8] sm:$0xf] %vm4406, %v9433
  %v9466 = vld [vmem:[#allocation2 + $0xc] sm:$0xf]
  %v9467 = vld [vmem:[#allocation2 + $0x10] sm:$0xf]
  %v9468 = vld [vmem:[#allocation2 + $0x14] sm:$0xf]
  %v9469 = vld [vmem:[#allocation2 + $0x18] sm:$0xf]
  %v9470 = vld [vmem:[#allocation2 + $0x1c] sm:$0xf]
  %v9471 = vld [vmem:[#allocation2 + $0x20] sm:$0xf]
  %v9472 = vld [vmem:[#allocation2 + $0x24] sm:$0xf]
  %v9473 = vld [vmem:[#allocation2 + $0x28] sm:$0xf]
  %v9474 = vld [vmem:[#allocation2 + $0x2c] sm:$0xf]
  %v9475 = vld [vmem:[#allocation2 + $0x30] sm:$0xf]
  %v9476 = vld [vmem:[#allocation2 + $0x34] sm:$0xf]
  %v9477 = vld [vmem:[#allocation2 + $0x38] sm:$0xf]
  %v9478 = vld [vmem:[#allocation2 + $0x3c] sm:$0xf]
  %v9479 = vld [vmem:[#allocation2 + $0x40] sm:$0xf]
  %v9480 = vld [vmem:[#allocation2 + $0x44] sm:$0xf]
  %v9481 = vld [vmem:[#allocation2 + $0x48] sm:$0xf]
  %v9482 = vmul.bf16 %v9466, %v5410
  %v9483 = vmul.bf16 %v9467, %v5421
  %v9484 = vmul.bf16 %v9468, %v5432
  %v9485 = vmul.bf16 %v9469, %v5443
  %v9486 = vmul.bf16 %v9470, %v5454
  %v9487 = vmul.bf16 %v9471, %v5465
  %v9488 = vmul.bf16 %v9472, %v5476
  %v9489 = vmul.bf16 %v9473, %v5487
  %v9490 = vmul.bf16 %v9474, %v5498
  %v9491 = vmul.bf16 %v9475, %v5509
  %v9492 = vmul.bf16 %v9476, %v5520
  %v9493 = vmul.bf16 %v9477, %v5531
  %v9494 = vmul.bf16 %v9478, %v5542
  %v9495 = vmul.bf16 %v9479, %v5553
  %v9496 = vmul.bf16 %v9480, %v5564
  %v9497 = vmul.bf16 %v9481, %v5575
  %9498 = vst.msk [vmem:[#allocation3 + $0x248] sm:$0xf] %vm2029, %v9482
  %9499 = vst.msk [vmem:[#allocation3 + $0x254] sm:$0xf] %vm2029, %v9483
  %9500 = vst.msk [vmem:[#allocation3 + $0x260] sm:$0xf] %vm2029, %v9484
  %9501 = vst.msk [vmem:[#allocation3 + $0x26c] sm:$0xf] %vm2029, %v9485
  %9502 = vst.msk [vmem:[#allocation3 + $0x278] sm:$0xf] %vm2029, %v9486
  %9503 = vst.msk [vmem:[#allocation3 + $0x284] sm:$0xf] %vm2029, %v9487
  %9504 = vst.msk [vmem:[#allocation3 + $0x290] sm:$0xf] %vm2029, %v9488
  %9505 = vst.msk [vmem:[#allocation3 + $0x29c] sm:$0xf] %vm2029, %v9489
  %9506 = vst.msk [vmem:[#allocation3 + $0x2a8] sm:$0xf] %vm2029, %v9490
  %9507 = vst.msk [vmem:[#allocation3 + $0x2b4] sm:$0xf] %vm2029, %v9491
  %9508 = vst.msk [vmem:[#allocation3 + $0x2c0] sm:$0xf] %vm2029, %v9492
  %9509 = vst.msk [vmem:[#allocation3 + $0x2cc] sm:$0xf] %vm2029, %v9493
  %9510 = vst.msk [vmem:[#allocation3 + $0x2d8] sm:$0xf] %vm2029, %v9494
  %9511 = vst.msk [vmem:[#allocation3 + $0x2e4] sm:$0xf] %vm2029, %v9495
  %9512 = vst.msk [vmem:[#allocation3 + $0x2f0] sm:$0xf] %vm2029, %v9496
  %9513 = vst.msk [vmem:[#allocation3 + $0x2fc] sm:$0xf] %vm2029, %v9497
  %v9514 = vld [vmem:[#allocation3] sm:$0xff]
  %v9515 = vld [vmem:[#allocation3 + $0x8] sm:$0xf]
  %v9516 = vld [vmem:[#allocation3 + $0xc] sm:$0xff]
  %v9517 = vld [vmem:[#allocation3 + $0x14] sm:$0xf]
  %v9518 = vld [vmem:[#allocation3 + $0x18] sm:$0xff]
  %v9519 = vld [vmem:[#allocation3 + $0x20] sm:$0xf]
  %v9520 = vld [vmem:[#allocation3 + $0x24] sm:$0xff]
  %v9521 = vld [vmem:[#allocation3 + $0x2c] sm:$0xf]
  %v9522 = vld [vmem:[#allocation3 + $0x30] sm:$0xff]
  %v9523 = vld [vmem:[#allocation3 + $0x38] sm:$0xf]
  %v9524 = vld [vmem:[#allocation3 + $0x3c] sm:$0xff]
  %v9525 = vld [vmem:[#allocation3 + $0x44] sm:$0xf]
  %v9526 = vld [vmem:[#allocation3 + $0x48] sm:$0xff]
  %v9527 = vld [vmem:[#allocation3 + $0x50] sm:$0xf]
  %v9528 = vld [vmem:[#allocation3 + $0x54] sm:$0xff]
  %v9529 = vld [vmem:[#allocation3 + $0x5c] sm:$0xf]
  %v9530 = vld [vmem:[#allocation3 + $0x60] sm:$0xff]
  %v9531 = vld [vmem:[#allocation3 + $0x68] sm:$0xf]
  %v9532 = vld [vmem:[#allocation3 + $0x6c] sm:$0xff]
  %v9533 = vld [vmem:[#allocation3 + $0x74] sm:$0xf]
  %v9534 = vld [vmem:[#allocation3 + $0x78] sm:$0xff]
  %v9535 = vld [vmem:[#allocation3 + $0x80] sm:$0xf]
  %v9536 = vld [vmem:[#allocation3 + $0x84] sm:$0xff]
  %v9537 = vld [vmem:[#allocation3 + $0x8c] sm:$0xf]
  %v9538 = vld [vmem:[#allocation3 + $0x90] sm:$0xff]
  %v9539 = vld [vmem:[#allocation3 + $0x98] sm:$0xf]
  %v9540 = vld [vmem:[#allocation3 + $0x9c] sm:$0xff]
  %v9541 = vld [vmem:[#allocation3 + $0xa4] sm:$0xf]
  %v9542 = vld [vmem:[#allocation3 + $0xa8] sm:$0xff]
  %v9543 = vld [vmem:[#allocation3 + $0xb0] sm:$0xf]
  %v9544 = vld [vmem:[#allocation3 + $0xb4] sm:$0xff]
  %v9545 = vld [vmem:[#allocation3 + $0xbc] sm:$0xf]
  %v9546 = vld [vmem:[#allocation3 + $0xc0] sm:$0xff]
  %v9547 = vld [vmem:[#allocation3 + $0xc8] sm:$0xf]
  %v9548 = vld [vmem:[#allocation3 + $0xcc] sm:$0xff]
  %v9549 = vld [vmem:[#allocation3 + $0xd4] sm:$0xf]
  %v9550 = vld [vmem:[#allocation3 + $0xd8] sm:$0xff]
  %v9551 = vld [vmem:[#allocation3 + $0xe0] sm:$0xf]
  %v9552 = vld [vmem:[#allocation3 + $0xe4] sm:$0xff]
  %v9553 = vld [vmem:[#allocation3 + $0xec] sm:$0xf]
  %v9554 = vld [vmem:[#allocation3 + $0xf0] sm:$0xff]
  %v9555 = vld [vmem:[#allocation3 + $0xf8] sm:$0xf]
  %v9556 = vld [vmem:[#allocation3 + $0xfc] sm:$0xff]
  %v9557 = vld [vmem:[#allocation3 + $0x104] sm:$0xf]
  %v9558 = vld [vmem:[#allocation3 + $0x108] sm:$0xff]
  %v9559 = vld [vmem:[#allocation3 + $0x110] sm:$0xf]
  %v9560 = vld [vmem:[#allocation3 + $0x114] sm:$0xff]
  %v9561 = vld [vmem:[#allocation3 + $0x11c] sm:$0xf]
  %v9562 = vld [vmem:[#allocation3 + $0x120] sm:$0xff]
  %v9563 = vld [vmem:[#allocation3 + $0x128] sm:$0xf]
  %v9564 = vld [vmem:[#allocation3 + $0x12c] sm:$0xff]
  %v9565 = vld [vmem:[#allocation3 + $0x134] sm:$0xf]
  %v9566 = vld [vmem:[#allocation3 + $0x138] sm:$0xff]
  %v9567 = vld [vmem:[#allocation3 + $0x140] sm:$0xf]
  %v9568 = vld [vmem:[#allocation3 + $0x144] sm:$0xff]
  %v9569 = vld [vmem:[#allocation3 + $0x14c] sm:$0xf]
  %v9570 = vld [vmem:[#allocation3 + $0x150] sm:$0xff]
  %v9571 = vld [vmem:[#allocation3 + $0x158] sm:$0xf]
  %v9572 = vld [vmem:[#allocation3 + $0x15c] sm:$0xff]
  %v9573 = vld [vmem:[#allocation3 + $0x164] sm:$0xf]
  %v9574 = vld [vmem:[#allocation3 + $0x168] sm:$0xff]
  %v9575 = vld [vmem:[#allocation3 + $0x170] sm:$0xf]
  %v9576 = vld [vmem:[#allocation3 + $0x174] sm:$0xff]
  %v9577 = vld [vmem:[#allocation3 + $0x17c] sm:$0xf]
  %v9578 = vld [vmem:[#allocation3 + $0x180] sm:$0xff]
  %v9579 = vld [vmem:[#allocation3 + $0x188] sm:$0xf]
  %v9580 = vld [vmem:[#allocation3 + $0x18c] sm:$0xff]
  %v9581 = vld [vmem:[#allocation3 + $0x194] sm:$0xf]
  %v9582 = vld [vmem:[#allocation3 + $0x198] sm:$0xff]
  %v9583 = vld [vmem:[#allocation3 + $0x1a0] sm:$0xf]
  %v9584 = vld [vmem:[#allocation3 + $0x1a4] sm:$0xff]
  %v9585 = vld [vmem:[#allocation3 + $0x1ac] sm:$0xf]
  %v9586 = vld [vmem:[#allocation3 + $0x1b0] sm:$0xff]
  %v9587 = vld [vmem:[#allocation3 + $0x1b8] sm:$0xf]
  %v9588 = vld [vmem:[#allocation3 + $0x1bc] sm:$0xff]
  %v9589 = vld [vmem:[#allocation3 + $0x1c4] sm:$0xf]
  %v9590 = vld [vmem:[#allocation3 + $0x1c8] sm:$0xff]
  %v9591 = vld [vmem:[#allocation3 + $0x1d0] sm:$0xf]
  %v9592 = vld [vmem:[#allocation3 + $0x1d4] sm:$0xff]
  %v9593 = vld [vmem:[#allocation3 + $0x1dc] sm:$0xf]
  %v9594 = vld [vmem:[#allocation3 + $0x1e0] sm:$0xff]
  %v9595 = vld [vmem:[#allocation3 + $0x1e8] sm:$0xf]
  %v9596 = vld [vmem:[#allocation3 + $0x1ec] sm:$0xff]
  %v9597 = vld [vmem:[#allocation3 + $0x1f4] sm:$0xf]
  %v9598 = vld [vmem:[#allocation3 + $0x1f8] sm:$0xff]
  %v9599 = vld [vmem:[#allocation3 + $0x200] sm:$0xf]
  %v9600 = vld [vmem:[#allocation3 + $0x204] sm:$0xff]
  %v9601 = vld [vmem:[#allocation3 + $0x20c] sm:$0xf]
  %v9602 = vld [vmem:[#allocation3 + $0x210] sm:$0xff]
  %v9603 = vld [vmem:[#allocation3 + $0x218] sm:$0xf]
  %v9604 = vld [vmem:[#allocation3 + $0x21c] sm:$0xff]
  %v9605 = vld [vmem:[#allocation3 + $0x224] sm:$0xf]
  %v9606 = vld [vmem:[#allocation3 + $0x228] sm:$0xff]
  %v9607 = vld [vmem:[#allocation3 + $0x230] sm:$0xf]
  %v9608 = vld [vmem:[#allocation3 + $0x234] sm:$0xff]
  %v9609 = vld [vmem:[#allocation3 + $0x23c] sm:$0xf]
  %v9610 = vld [vmem:[#allocation3 + $0x240] sm:$0xff]
  %v9611 = vld [vmem:[#allocation3 + $0x248] sm:$0xf]
  %v9612 = vld [vmem:[#allocation3 + $0x24c] sm:$0xff]
  %v9613 = vld [vmem:[#allocation3 + $0x254] sm:$0xf]
  %v9614 = vld [vmem:[#allocation3 + $0x258] sm:$0xff]
  %v9615 = vld [vmem:[#allocation3 + $0x260] sm:$0xf]
  %v9616 = vld [vmem:[#allocation3 + $0x264] sm:$0xff]
  %v9617 = vld [vmem:[#allocation3 + $0x26c] sm:$0xf]
  %v9618 = vld [vmem:[#allocation3 + $0x270] sm:$0xff]
  %v9619 = vld [vmem:[#allocation3 + $0x278] sm:$0xf]
  %v9620 = vld [vmem:[#allocation3 + $0x27c] sm:$0xff]
  %v9621 = vld [vmem:[#allocation3 + $0x284] sm:$0xf]
  %v9622 = vld [vmem:[#allocation3 + $0x288] sm:$0xff]
  %v9623 = vld [vmem:[#allocation3 + $0x290] sm:$0xf]
  %v9624 = vld [vmem:[#allocation3 + $0x294] sm:$0xff]
  %v9625 = vld [vmem:[#allocation3 + $0x29c] sm:$0xf]
  %v9626 = vld [vmem:[#allocation3 + $0x2a0] sm:$0xff]
  %v9627 = vld [vmem:[#allocation3 + $0x2a8] sm:$0xf]
  %v9628 = vld [vmem:[#allocation3 + $0x2ac] sm:$0xff]
  %v9629 = vld [vmem:[#allocation3 + $0x2b4] sm:$0xf]
  %v9630 = vld [vmem:[#allocation3 + $0x2b8] sm:$0xff]
  %v9631 = vld [vmem:[#allocation3 + $0x2c0] sm:$0xf]
  %v9632 = vld [vmem:[#allocation3 + $0x2c4] sm:$0xff]
  %v9633 = vld [vmem:[#allocation3 + $0x2cc] sm:$0xf]
  %v9634 = vld [vmem:[#allocation3 + $0x2d0] sm:$0xff]
  %v9635 = vld [vmem:[#allocation3 + $0x2d8] sm:$0xf]
  %v9636 = vld [vmem:[#allocation3 + $0x2dc] sm:$0xff]
  %v9637 = vld [vmem:[#allocation3 + $0x2e4] sm:$0xf]
  %v9638 = vld [vmem:[#allocation3 + $0x2e8] sm:$0xff]
  %v9639 = vld [vmem:[#allocation3 + $0x2f0] sm:$0xf]
  %v9640 = vld [vmem:[#allocation3 + $0x2f4] sm:$0xff]
  %v9641 = vld [vmem:[#allocation3 + $0x2fc] sm:$0xf]
  %v9642 = vld [vmem:[%s2] sm:$0xf]
  %v9643 = vld [vmem:[%s2 + $0x4] sm:$0xf]
  %v9644 = vld [vmem:[%s2 + $0x8] sm:$0xf]
  %v9645 = vld [vmem:[%s2 + $0xc] sm:$0xf]
  %v9646 = vld [vmem:[%s2 + $0x10] sm:$0xf]
  %v9647 = vld [vmem:[%s2 + $0x14] sm:$0xf]
  %v9648 = vld [vmem:[%s2 + $0x18] sm:$0xf]
  %v9649 = vld [vmem:[%s2 + $0x1c] sm:$0xf]
  %v9650 = vld [vmem:[%s2 + $0x20] sm:$0xf]
  %v9651 = vld [vmem:[%s2 + $0x24] sm:$0xf]
  %v9652 = vld [vmem:[%s2 + $0x28] sm:$0xf]
  %v9653 = vld [vmem:[%s2 + $0x2c] sm:$0xf]
  %v9654 = vld [vmem:[%s2 + $0x30] sm:$0xf]
  %v9655 = vld [vmem:[%s2 + $0x34] sm:$0xf]
  %v9656 = vld [vmem:[%s2 + $0x38] sm:$0xf]
  %v9657 = vld [vmem:[%s2 + $0x3c] sm:$0xf]
  %v9658 = vld [vmem:[%s2 + $0x40] sm:$0xf]
  %v9659 = vld [vmem:[%s2 + $0x44] sm:$0xf]
  %v9660 = vld [vmem:[%s2 + $0x48] sm:$0xf]
  %v9661 = vld [vmem:[%s2 + $0x4c] sm:$0xf]
  %v9662 = vld [vmem:[%s2 + $0x50] sm:$0xf]
  %v9663 = vld [vmem:[%s2 + $0x54] sm:$0xf]
  %v9664 = vld [vmem:[%s2 + $0x58] sm:$0xf]
  %v9665 = vld [vmem:[%s2 + $0x5c] sm:$0xf]
  %v9666 = vld [vmem:[%s2 + $0x60] sm:$0xf]
  %v9667 = vld [vmem:[%s2 + $0x64] sm:$0xf]
  %v9668 = vld [vmem:[%s2 + $0x68] sm:$0xf]
  %v9669 = vld [vmem:[%s2 + $0x6c] sm:$0xf]
  %v9670 = vld [vmem:[%s2 + $0x70] sm:$0xf]
  %v9671 = vld [vmem:[%s2 + $0x74] sm:$0xf]
  %v9672 = vld [vmem:[%s2 + $0x78] sm:$0xf]
  %v9673 = vld [vmem:[%s2 + $0x7c] sm:$0xf]
  %v9674 = vld [vmem:[%s2 + $0x80] sm:$0xf]
  %v9675 = vld [vmem:[%s2 + $0x84] sm:$0xf]
  %v9676 = vld [vmem:[%s2 + $0x88] sm:$0xf]
  %v9677 = vld [vmem:[%s2 + $0x8c] sm:$0xf]
  %v9806 = vunpack.c.l.b16 %v9514
  %v9807 = vunpack.c.h.b16 %v9514
  %v9808 = vunpack.c.l.b16 %v9515
  %v9809 = vunpack.c.l.b16 %v9516
  %v9810 = vunpack.c.h.b16 %v9516
  %v9811 = vunpack.c.l.b16 %v9517
  %v9812 = vunpack.c.l.b16 %v9518
  %v9813 = vunpack.c.h.b16 %v9518
  %v9814 = vunpack.c.l.b16 %v9519
  %v9815 = vunpack.c.l.b16 %v9520
  %v9816 = vunpack.c.h.b16 %v9520
  %v9817 = vunpack.c.l.b16 %v9521
  %v9818 = vunpack.c.l.b16 %v9522
  %v9819 = vunpack.c.h.b16 %v9522
  %v9820 = vunpack.c.l.b16 %v9523
  %v9821 = vunpack.c.l.b16 %v9524
  %v9822 = vunpack.c.h.b16 %v9524
  %v9823 = vunpack.c.l.b16 %v9525
  %v9824 = vunpack.c.l.b16 %v9526
  %v9825 = vunpack.c.h.b16 %v9526
  %v9826 = vunpack.c.l.b16 %v9527
  %v9827 = vunpack.c.l.b16 %v9528
  %v9828 = vunpack.c.h.b16 %v9528
  %v9829 = vunpack.c.l.b16 %v9529
  %v9830 = vunpack.c.l.b16 %v9530
  %v9831 = vunpack.c.h.b16 %v9530
  %v9832 = vunpack.c.l.b16 %v9531
  %v9833 = vunpack.c.l.b16 %v9532
  %v9834 = vunpack.c.h.b16 %v9532
  %v9835 = vunpack.c.l.b16 %v9533
  %v9836 = vunpack.c.l.b16 %v9534
  %v9837 = vunpack.c.h.b16 %v9534
  %v9838 = vunpack.c.l.b16 %v9535
  %v9839 = vunpack.c.l.b16 %v9536
  %v9840 = vunpack.c.h.b16 %v9536
  %v9841 = vunpack.c.l.b16 %v9537
  %v9842 = vunpack.c.l.b16 %v9538
  %v9843 = vunpack.c.h.b16 %v9538
  %v9844 = vunpack.c.l.b16 %v9539
  %v9845 = vunpack.c.l.b16 %v9540
  %v9846 = vunpack.c.h.b16 %v9540
  %v9847 = vunpack.c.l.b16 %v9541
  %v9848 = vunpack.c.l.b16 %v9542
  %v9849 = vunpack.c.h.b16 %v9542
  %v9850 = vunpack.c.l.b16 %v9543
  %v9851 = vunpack.c.l.b16 %v9544
  %v9852 = vunpack.c.h.b16 %v9544
  %v9853 = vunpack.c.l.b16 %v9545
  %v9854 = vunpack.c.l.b16 %v9546
  %v9855 = vunpack.c.h.b16 %v9546
  %v9856 = vunpack.c.l.b16 %v9547
  %v9857 = vunpack.c.l.b16 %v9548
  %v9858 = vunpack.c.h.b16 %v9548
  %v9859 = vunpack.c.l.b16 %v9549
  %v9860 = vunpack.c.l.b16 %v9550
  %v9861 = vunpack.c.h.b16 %v9550
  %v9862 = vunpack.c.l.b16 %v9551
  %v9863 = vunpack.c.l.b16 %v9552
  %v9864 = vunpack.c.h.b16 %v9552
  %v9865 = vunpack.c.l.b16 %v9553
  %v9866 = vunpack.c.l.b16 %v9554
  %v9867 = vunpack.c.h.b16 %v9554
  %v9868 = vunpack.c.l.b16 %v9555
  %v9869 = vunpack.c.l.b16 %v9556
  %v9870 = vunpack.c.h.b16 %v9556
  %v9871 = vunpack.c.l.b16 %v9557
  %v9872 = vunpack.c.l.b16 %v9558
  %v9873 = vunpack.c.h.b16 %v9558
  %v9874 = vunpack.c.l.b16 %v9559
  %v9875 = vunpack.c.l.b16 %v9560
  %v9876 = vunpack.c.h.b16 %v9560
  %v9877 = vunpack.c.l.b16 %v9561
  %v9878 = vunpack.c.l.b16 %v9562
  %v9879 = vunpack.c.h.b16 %v9562
  %v9880 = vunpack.c.l.b16 %v9563
  %v9881 = vunpack.c.l.b16 %v9564
  %v9882 = vunpack.c.h.b16 %v9564
  %v9883 = vunpack.c.l.b16 %v9565
  %v9884 = vunpack.c.l.b16 %v9566
  %v9885 = vunpack.c.h.b16 %v9566
  %v9886 = vunpack.c.l.b16 %v9567
  %v9887 = vunpack.c.l.b16 %v9568
  %v9888 = vunpack.c.h.b16 %v9568
  %v9889 = vunpack.c.l.b16 %v9569
  %v9890 = vunpack.c.l.b16 %v9570
  %v9891 = vunpack.c.h.b16 %v9570
  %v9892 = vunpack.c.l.b16 %v9571
  %v9893 = vunpack.c.l.b16 %v9572
  %v9894 = vunpack.c.h.b16 %v9572
  %v9895 = vunpack.c.l.b16 %v9573
  %v9896 = vunpack.c.l.b16 %v9574
  %v9897 = vunpack.c.h.b16 %v9574
  %v9898 = vunpack.c.l.b16 %v9575
  %v9899 = vunpack.c.l.b16 %v9576
  %v9900 = vunpack.c.h.b16 %v9576
  %v9901 = vunpack.c.l.b16 %v9577
  %v9902 = vunpack.c.l.b16 %v9578
  %v9903 = vunpack.c.h.b16 %v9578
  %v9904 = vunpack.c.l.b16 %v9579
  %v9905 = vunpack.c.l.b16 %v9580
  %v9906 = vunpack.c.h.b16 %v9580
  %v9907 = vunpack.c.l.b16 %v9581
  %v9908 = vunpack.c.l.b16 %v9582
  %v9909 = vunpack.c.h.b16 %v9582
  %v9910 = vunpack.c.l.b16 %v9583
  %v9911 = vunpack.c.l.b16 %v9584
  %v9912 = vunpack.c.h.b16 %v9584
  %v9913 = vunpack.c.l.b16 %v9585
  %v9914 = vunpack.c.l.b16 %v9586
  %v9915 = vunpack.c.h.b16 %v9586
  %v9916 = vunpack.c.l.b16 %v9587
  %v9917 = vunpack.c.l.b16 %v9588
  %v9918 = vunpack.c.h.b16 %v9588
  %v9919 = vunpack.c.l.b16 %v9589
  %v9920 = vunpack.c.l.b16 %v9590
  %v9921 = vunpack.c.h.b16 %v9590
  %v9922 = vunpack.c.l.b16 %v9591
  %v9923 = vunpack.c.l.b16 %v9592
  %v9924 = vunpack.c.h.b16 %v9592
  %v9925 = vunpack.c.l.b16 %v9593
  %v9926 = vunpack.c.l.b16 %v9594
  %v9927 = vunpack.c.h.b16 %v9594
  %v9928 = vunpack.c.l.b16 %v9595
  %v9929 = vunpack.c.l.b16 %v9596
  %v9930 = vunpack.c.h.b16 %v9596
  %v9931 = vunpack.c.l.b16 %v9597
  %v9932 = vunpack.c.l.b16 %v9598
  %v9933 = vunpack.c.h.b16 %v9598
  %v9934 = vunpack.c.l.b16 %v9599
  %v9935 = vunpack.c.l.b16 %v9600
  %v9936 = vunpack.c.h.b16 %v9600
  %v9937 = vunpack.c.l.b16 %v9601
  %v9938 = vunpack.c.l.b16 %v9602
  %v9939 = vunpack.c.h.b16 %v9602
  %v9940 = vunpack.c.l.b16 %v9603
  %v9941 = vunpack.c.l.b16 %v9604
  %v9942 = vunpack.c.h.b16 %v9604
  %v9943 = vunpack.c.l.b16 %v9605
  %v9944 = vunpack.c.l.b16 %v9606
  %v9945 = vunpack.c.h.b16 %v9606
  %v9946 = vunpack.c.l.b16 %v9607
  %v9947 = vunpack.c.l.b16 %v9608
  %v9948 = vunpack.c.h.b16 %v9608
  %v9949 = vunpack.c.l.b16 %v9609
  %v9950 = vunpack.c.l.b16 %v9610
  %v9951 = vunpack.c.h.b16 %v9610
  %v9952 = vunpack.c.l.b16 %v9611
  %v9953 = vunpack.c.l.b16 %v9612
  %v9954 = vunpack.c.h.b16 %v9612
  %v9955 = vunpack.c.l.b16 %v9613
  %v9956 = vunpack.c.l.b16 %v9614
  %v9957 = vunpack.c.h.b16 %v9614
  %v9958 = vunpack.c.l.b16 %v9615
  %v9959 = vunpack.c.l.b16 %v9616
  %v9960 = vunpack.c.h.b16 %v9616
  %v9961 = vunpack.c.l.b16 %v9617
  %v9962 = vunpack.c.l.b16 %v9618
  %v9963 = vunpack.c.h.b16 %v9618
  %v9964 = vunpack.c.l.b16 %v9619
  %v9965 = vunpack.c.l.b16 %v9620
  %v9966 = vunpack.c.h.b16 %v9620
  %v9967 = vunpack.c.l.b16 %v9621
  %v9968 = vunpack.c.l.b16 %v9622
  %v9969 = vunpack.c.h.b16 %v9622
  %v9970 = vunpack.c.l.b16 %v9623
  %v9971 = vunpack.c.l.b16 %v9624
  %v9972 = vunpack.c.h.b16 %v9624
  %v9973 = vunpack.c.l.b16 %v9625
  %v9974 = vunpack.c.l.b16 %v9626
  %v9975 = vunpack.c.h.b16 %v9626
  %v9976 = vunpack.c.l.b16 %v9627
  %v9977 = vunpack.c.l.b16 %v9628
  %v9978 = vunpack.c.h.b16 %v9628
  %v9979 = vunpack.c.l.b16 %v9629
  %v9980 = vunpack.c.l.b16 %v9630
  %v9981 = vunpack.c.h.b16 %v9630
  %v9982 = vunpack.c.l.b16 %v9631
  %v9983 = vunpack.c.l.b16 %v9632
  %v9984 = vunpack.c.h.b16 %v9632
  %v9985 = vunpack.c.l.b16 %v9633
  %v9986 = vunpack.c.l.b16 %v9634
  %v9987 = vunpack.c.h.b16 %v9634
  %v9988 = vunpack.c.l.b16 %v9635
  %v9989 = vunpack.c.l.b16 %v9636
  %v9990 = vunpack.c.h.b16 %v9636
  %v9991 = vunpack.c.l.b16 %v9637
  %v9992 = vunpack.c.l.b16 %v9638
  %v9993 = vunpack.c.h.b16 %v9638
  %v9994 = vunpack.c.l.b16 %v9639
  %v9995 = vunpack.c.l.b16 %v9640
  %v9996 = vunpack.c.h.b16 %v9640
  %v9997 = vunpack.c.l.b16 %v9641
  %v9998 = vpack.c.b16 %v9809, %v9806
  %v9999 = vpack.c.b16 %v9810, %v9807
  %v10000 = vpack.c.b16 %v9811, %v9808
  %v10001 = vpack.c.b16 %v9815, %v9812
  %v10002 = vpack.c.b16 %v9816, %v9813
  %v10003 = vpack.c.b16 %v9817, %v9814
  %v10004 = vpack.c.b16 %v9821, %v9818
  %v10005 = vpack.c.b16 %v9822, %v9819
  %v10006 = vpack.c.b16 %v9823, %v9820
  %v10007 = vpack.c.b16 %v9827, %v9824
  %v10008 = vpack.c.b16 %v9828, %v9825
  %v10009 = vpack.c.b16 %v9829, %v9826
  %v10010 = vpack.c.b16 %v9833, %v9830
  %v10011 = vpack.c.b16 %v9834, %v9831
  %v10012 = vpack.c.b16 %v9835, %v9832
  %v10013 = vpack.c.b16 %v9839, %v9836
  %v10014 = vpack.c.b16 %v9840, %v9837
  %v10015 = vpack.c.b16 %v9841, %v9838
  %v10016 = vpack.c.b16 %v9845, %v9842
  %v10017 = vpack.c.b16 %v9846, %v9843
  %v10018 = vpack.c.b16 %v9847, %v9844
  %v10019 = vpack.c.b16 %v9851, %v9848
  %v10020 = vpack.c.b16 %v9852, %v9849
  %v10021 = vpack.c.b16 %v9853, %v9850
  %v10022 = vpack.c.b16 %v9857, %v9854
  %v10023 = vpack.c.b16 %v9858, %v9855
  %v10024 = vpack.c.b16 %v9859, %v9856
  %v10025 = vpack.c.b16 %v9863, %v9860
  %v10026 = vpack.c.b16 %v9864, %v9861
  %v10027 = vpack.c.b16 %v9865, %v9862
  %v10028 = vpack.c.b16 %v9869, %v9866
  %v10029 = vpack.c.b16 %v9870, %v9867
  %v10030 = vpack.c.b16 %v9871, %v9868
  %v10031 = vpack.c.b16 %v9875, %v9872
  %v10032 = vpack.c.b16 %v9876, %v9873
  %v10033 = vpack.c.b16 %v9877, %v9874
  %v10034 = vpack.c.b16 %v9881, %v9878
  %v10035 = vpack.c.b16 %v9882, %v9879
  %v10036 = vpack.c.b16 %v9883, %v9880
  %v10037 = vpack.c.b16 %v9887, %v9884
  %v10038 = vpack.c.b16 %v9888, %v9885
  %v10039 = vpack.c.b16 %v9889, %v9886
  %v10040 = vpack.c.b16 %v9893, %v9890
  %v10041 = vpack.c.b16 %v9894, %v9891
  %v10042 = vpack.c.b16 %v9895, %v9892
  %v10043 = vpack.c.b16 %v9899, %v9896
  %v10044 = vpack.c.b16 %v9900, %v9897
  %v10045 = vpack.c.b16 %v9901, %v9898
  %v10046 = vpack.c.b16 %v9905, %v9902
  %v10047 = vpack.c.b16 %v9906, %v9903
  %v10048 = vpack.c.b16 %v9907, %v9904
  %v10049 = vpack.c.b16 %v9911, %v9908
  %v10050 = vpack.c.b16 %v9912, %v9909
  %v10051 = vpack.c.b16 %v9913, %v9910
  %v10052 = vpack.c.b16 %v9917, %v9914
  %v10053 = vpack.c.b16 %v9918, %v9915
  %v10054 = vpack.c.b16 %v9919, %v9916
  %v10055 = vpack.c.b16 %v9923, %v9920
  %v10056 = vpack.c.b16 %v9924, %v9921
  %v10057 = vpack.c.b16 %v9925, %v9922
  %v10058 = vpack.c.b16 %v9929, %v9926
  %v10059 = vpack.c.b16 %v9930, %v9927
  %v10060 = vpack.c.b16 %v9931, %v9928
  %v10061 = vpack.c.b16 %v9935, %v9932
  %v10062 = vpack.c.b16 %v9936, %v9933
  %v10063 = vpack.c.b16 %v9937, %v9934
  %v10064 = vpack.c.b16 %v9941, %v9938
  %v10065 = vpack.c.b16 %v9942, %v9939
  %v10066 = vpack.c.b16 %v9943, %v9940
  %v10067 = vpack.c.b16 %v9947, %v9944
  %v10068 = vpack.c.b16 %v9948, %v9945
  %v10069 = vpack.c.b16 %v9949, %v9946
  %v10070 = vpack.c.b16 %v9953, %v9950
  %v10071 = vpack.c.b16 %v9954, %v9951
  %v10072 = vpack.c.b16 %v9955, %v9952
  %v10073 = vpack.c.b16 %v9959, %v9956
  %v10074 = vpack.c.b16 %v9960, %v9957
  %v10075 = vpack.c.b16 %v9961, %v9958
  %v10076 = vpack.c.b16 %v9965, %v9962
  %v10077 = vpack.c.b16 %v9966, %v9963
  %v10078 = vpack.c.b16 %v9967, %v9964
  %v10079 = vpack.c.b16 %v9971, %v9968
  %v10080 = vpack.c.b16 %v9972, %v9969
  %v10081 = vpack.c.b16 %v9973, %v9970
  %v10082 = vpack.c.b16 %v9977, %v9974
  %v10083 = vpack.c.b16 %v9978, %v9975
  %v10084 = vpack.c.b16 %v9979, %v9976
  %v10085 = vpack.c.b16 %v9983, %v9980
  %v10086 = vpack.c.b16 %v9984, %v9981
  %v10087 = vpack.c.b16 %v9985, %v9982
  %v10088 = vpack.c.b16 %v9989, %v9986
  %v10089 = vpack.c.b16 %v9990, %v9987
  %v10090 = vpack.c.b16 %v9991, %v9988
  %v10091 = vpack.c.b16 %v9995, %v9992
  %v10092 = vpack.c.b16 %v9996, %v9993
  %v10093 = vpack.c.b16 %v9997, %v9994
  %v10194 = vunpack.c.l.b16 %v9642
  %v10195 = vunpack.c.l.b16 %v9643
  %v10196 = vunpack.c.l.b16 %v9644
  %v10197 = vunpack.c.l.b16 %v9645
  %v10198 = vunpack.c.l.b16 %v9646
  %v10199 = vunpack.c.l.b16 %v9647
  %v10200 = vunpack.c.l.b16 %v9648
  %v10201 = vunpack.c.l.b16 %v9649
  %v10202 = vunpack.c.l.b16 %v9650
  %v10203 = vunpack.c.l.b16 %v9651
  %v10204 = vunpack.c.l.b16 %v9652
  %v10205 = vunpack.c.l.b16 %v9653
  %v10206 = vunpack.c.l.b16 %v9654
  %v10207 = vunpack.c.l.b16 %v9655
  %v10208 = vunpack.c.l.b16 %v9656
  %v10209 = vunpack.c.l.b16 %v9657
  %v10210 = vunpack.c.l.b16 %v9658
  %v10211 = vunpack.c.l.b16 %v9659
  %v10212 = vunpack.c.l.b16 %v9660
  %v10213 = vunpack.c.l.b16 %v9661
  %v10214 = vunpack.c.l.b16 %v9662
  %v10215 = vunpack.c.l.b16 %v9663
  %v10216 = vunpack.c.l.b16 %v9664
  %v10217 = vunpack.c.l.b16 %v9665
  %v10218 = vunpack.c.l.b16 %v9666
  %v10219 = vunpack.c.l.b16 %v9667
  %v10220 = vunpack.c.l.b16 %v9668
  %v10221 = vunpack.c.l.b16 %v9669
  %v10222 = vunpack.c.l.b16 %v9670
  %v10223 = vunpack.c.l.b16 %v9671
  %v10224 = vunpack.c.l.b16 %v9672
  %v10225 = vunpack.c.l.b16 %v9673
  %v10226 = vunpack.c.l.b16 %v9674
  %v10227 = vunpack.c.l.b16 %v9675
  %v10228 = vunpack.c.l.b16 %v9676
  %v10229 = vunpack.c.l.b16 %v9677
  %v10230 = vpack.c.b16 %v10195, %v10194
  %v10231 = vpack.c.b16 %v10197, %v10196
  %v10232 = vpack.c.b16 %v10199, %v10198
  %v10233 = vpack.c.b16 %v10201, %v10200
  %v10234 = vpack.c.b16 %v10203, %v10202
  %v10235 = vpack.c.b16 %v10205, %v10204
  %v10236 = vpack.c.b16 %v10207, %v10206
  %v10237 = vpack.c.b16 %v10209, %v10208
  %v10238 = vpack.c.b16 %v10211, %v10210
  %v10239 = vpack.c.b16 %v10213, %v10212
  %v10240 = vpack.c.b16 %v10215, %v10214
  %v10241 = vpack.c.b16 %v10217, %v10216
  %v10242 = vpack.c.b16 %v10219, %v10218
  %v10243 = vpack.c.b16 %v10221, %v10220
  %v10244 = vpack.c.b16 %v10223, %v10222
  %v10245 = vpack.c.b16 %v10225, %v10224
  %v10246 = vpack.c.b16 %v10227, %v10226
  %v10247 = vpack.c.b16 %v10229, %v10228
  %vm10266 = vcmask 261120
  %v10268 = vsel %vm10266, %v10000, 0
  %v10271 = vsel %vm10266, %v10003, 0
  %v10274 = vsel %vm10266, %v10006, 0
  %v10277 = vsel %vm10266, %v10009, 0
  %v10280 = vsel %vm10266, %v10012, 0
  %v10283 = vsel %vm10266, %v10015, 0
  %v10286 = vsel %vm10266, %v10018, 0
  %v10289 = vsel %vm10266, %v10021, 0
  %v10292 = vsel %vm10266, %v10024, 0
  %v10295 = vsel %vm10266, %v10027, 0
  %v10298 = vsel %vm10266, %v10030, 0
  %v10301 = vsel %vm10266, %v10033, 0
  %v10304 = vsel %vm10266, %v10036, 0
  %v10307 = vsel %vm10266, %v10039, 0
  %v10310 = vsel %vm10266, %v10042, 0
  %v10313 = vsel %vm10266, %v10045, 0
  %v10316 = vsel %vm10266, %v10048, 0
  %v10319 = vsel %vm10266, %v10051, 0
  %v10322 = vsel %vm10266, %v10054, 0
  %v10325 = vsel %vm10266, %v10057, 0
  %v10328 = vsel %vm10266, %v10060, 0
  %v10331 = vsel %vm10266, %v10063, 0
  %v10334 = vsel %vm10266, %v10066, 0
  %v10337 = vsel %vm10266, %v10069, 0
  %v10340 = vsel %vm10266, %v10072, 0
  %v10343 = vsel %vm10266, %v10075, 0
  %v10346 = vsel %vm10266, %v10078, 0
  %v10349 = vsel %vm10266, %v10081, 0
  %v10352 = vsel %vm10266, %v10084, 0
  %v10355 = vsel %vm10266, %v10087, 0
  %v10358 = vsel %vm10266, %v10090, 0
  %v10361 = vsel %vm10266, %v10093, 0
  %10363 = vmatprep.subr.bf16.mxu0 0
  %10364 = vmatpush1.bf16.msra.mxu0 %v10237
  %10365 = vmatprep.subr.bf16.mxu0 0
  %10366 = vmatpush1.bf16.msra.mxu0 %v10236
  %10367 = vmatprep.subr.bf16.mxu0 0
  %10368 = vmatpush1.bf16.msra.mxu0 %v10235
  %10369 = vmatprep.subr.bf16.mxu0 0
  %10370 = vmatpush1.bf16.msra.mxu0 %v10234
  %10371 = vmatprep.subr.bf16.mxu0 0
  %10372 = vmatpush1.bf16.msra.mxu0 %v10233
  %10373 = vmatprep.subr.bf16.mxu0 0
  %10374 = vmatpush1.bf16.msra.mxu0 %v10232
  %10375 = vmatprep.subr.bf16.mxu0 0
  %10376 = vmatpush1.bf16.msra.mxu0 %v10231
  %10377 = vmatprep.subr.bf16.mxu0 0
  %10378 = vmatpush1.bf16.msra.mxu0 %v10230
  %10379 = vmatprep.subr.bf16.mxu0 0
  %10380 = vmatpush2.bf16.msra.mxu0 %v10245
  %10381 = vmatprep.subr.bf16.mxu0 0
  %10382 = vmatpush2.bf16.msra.mxu0 %v10244
  %10383 = vmatprep.subr.bf16.mxu0 0
  %10384 = vmatpush2.bf16.msra.mxu0 %v10243
  %10385 = vmatprep.subr.bf16.mxu0 0
  %10386 = vmatpush2.bf16.msra.mxu0 %v10242
  %10387 = vmatprep.subr.bf16.mxu0 0
  %10388 = vmatpush2.bf16.msra.mxu0 %v10241
  %10389 = vmatprep.subr.bf16.mxu0 0
  %10390 = vmatpush2.bf16.msra.mxu0 %v10240
  %10391 = vmatprep.subr.bf16.mxu0 0
  %10392 = vmatpush2.bf16.msra.mxu0 %v10239
  %10393 = vmatprep.subr.bf16.mxu0 0
  %10394 = vmatpush2.bf16.msra.mxu0 %v10238
  %10395 = vmatprep.mubr.bf16.mxu0 %v9999
  %10396 = vmatmul.mubr.bf16.gmra.mxu0 %v9998
  %v10397 = vpop.f32.mrf.mxu0
  %v10398 = vadd.f32 0.0, %v10397
  %v10399 = vpop.f32.mrf.mxu0
  %v10400 = vpop.f32.mrf.mxu0
  %v10401 = vadd.f32 0.0, %v10400
  %v10402 = vpop.f32.mrf.mxu0
  %10403 = vmatprep.mubr.bf16.mxu0 %v10002
  %10404 = vmatmul.mubr.bf16.gmra.mxu0 %v10001
  %v10405 = vpop.f32.mrf.mxu0
  %v10406 = vadd.f32 0.0, %v10405
  %v10407 = vpop.f32.mrf.mxu0
  %v10408 = vpop.f32.mrf.mxu0
  %v10409 = vadd.f32 0.0, %v10408
  %v10410 = vpop.f32.mrf.mxu0
  %10411 = vmatprep.mubr.bf16.mxu0 %v10005
  %10412 = vmatmul.mubr.bf16.gmra.mxu0 %v10004
  %v10413 = vpop.f32.mrf.mxu0
  %v10414 = vadd.f32 0.0, %v10413
  %v10415 = vpop.f32.mrf.mxu0
  %v10416 = vpop.f32.mrf.mxu0
  %v10417 = vadd.f32 0.0, %v10416
  %v10418 = vpop.f32.mrf.mxu0
  %10419 = vmatprep.mubr.bf16.mxu0 %v10008
  %10420 = vmatmul.mubr.bf16.gmra.mxu0 %v10007
  %v10421 = vpop.f32.mrf.mxu0
  %v10422 = vadd.f32 0.0, %v10421
  %v10423 = vpop.f32.mrf.mxu0
  %v10424 = vpop.f32.mrf.mxu0
  %v10425 = vpop.f32.mrf.mxu0
  %10426 = vmatprep.mubr.bf16.mxu0 %v10011
  %10427 = vmatmul.mubr.bf16.gmra.mxu0 %v10010
  %v10428 = vpop.f32.mrf.mxu0
  %v10429 = vadd.f32 0.0, %v10428
  %v10430 = vpop.f32.mrf.mxu0
  %v10431 = vpop.f32.mrf.mxu0
  %v10432 = vadd.f32 0.0, %v10431
  %v10433 = vpop.f32.mrf.mxu0
  %10434 = vmatprep.mubr.bf16.mxu0 %v10014
  %10435 = vmatmul.mubr.bf16.gmra.mxu0 %v10013
  %v10436 = vpop.f32.mrf.mxu0
  %v10437 = vadd.f32 0.0, %v10436
  %v10438 = vpop.f32.mrf.mxu0
  %v10439 = vpop.f32.mrf.mxu0
  %v10440 = vadd.f32 0.0, %v10439
  %v10441 = vpop.f32.mrf.mxu0
  %10442 = vmatprep.mubr.bf16.mxu0 %v10017
  %10443 = vmatmul.mubr.bf16.gmra.mxu0 %v10016
  %v10444 = vpop.f32.mrf.mxu0
  %v10445 = vadd.f32 0.0, %v10444
  %v10446 = vpop.f32.mrf.mxu0
  %v10447 = vpop.f32.mrf.mxu0
  %v10448 = vadd.f32 0.0, %v10447
  %v10449 = vpop.f32.mrf.mxu0
  %10450 = vmatprep.mubr.bf16.mxu0 %v10020
  %10451 = vmatmul.mubr.bf16.gmra.mxu0 %v10019
  %v10452 = vpop.f32.mrf.mxu0
  %v10453 = vadd.f32 0.0, %v10452
  %v10454 = vpop.f32.mrf.mxu0
  %v10455 = vpop.f32.mrf.mxu0
  %v10456 = vpop.f32.mrf.mxu0
  %10457 = vmatprep.mubr.bf16.mxu0 %v10023
  %10458 = vmatmul.mubr.bf16.gmra.mxu0 %v10022
  %v10459 = vpop.f32.mrf.mxu0
  %v10460 = vadd.f32 0.0, %v10459
  %v10461 = vpop.f32.mrf.mxu0
  %v10462 = vpop.f32.mrf.mxu0
  %v10463 = vadd.f32 0.0, %v10462
  %v10464 = vpop.f32.mrf.mxu0
  %10465 = vmatprep.mubr.bf16.mxu0 %v10026
  %10466 = vmatmul.mubr.bf16.gmra.mxu0 %v10025
  %v10467 = vpop.f32.mrf.mxu0
  %v10468 = vadd.f32 0.0, %v10467
  %v10469 = vpop.f32.mrf.mxu0
  %v10470 = vpop.f32.mrf.mxu0
  %v10471 = vadd.f32 0.0, %v10470
  %v10472 = vpop.f32.mrf.mxu0
  %10473 = vmatprep.mubr.bf16.mxu0 %v10029
  %10474 = vmatmul.mubr.bf16.gmra.mxu0 %v10028
  %v10475 = vpop.f32.mrf.mxu0
  %v10476 = vadd.f32 0.0, %v10475
  %v10477 = vpop.f32.mrf.mxu0
  %v10478 = vpop.f32.mrf.mxu0
  %v10479 = vadd.f32 0.0, %v10478
  %v10480 = vpop.f32.mrf.mxu0
  %10481 = vmatprep.mubr.bf16.mxu0 %v10032
  %10482 = vmatmul.mubr.bf16.gmra.mxu0 %v10031
  %v10483 = vpop.f32.mrf.mxu0
  %v10484 = vadd.f32 0.0, %v10483
  %v10485 = vpop.f32.mrf.mxu0
  %v10486 = vpop.f32.mrf.mxu0
  %v10487 = vpop.f32.mrf.mxu0
  %10488 = vmatprep.mubr.bf16.mxu0 %v10035
  %10489 = vmatmul.mubr.bf16.gmra.mxu0 %v10034
  %v10490 = vpop.f32.mrf.mxu0
  %v10491 = vadd.f32 0.0, %v10490
  %v10492 = vpop.f32.mrf.mxu0
  %v10493 = vpop.f32.mrf.mxu0
  %v10494 = vadd.f32 0.0, %v10493
  %v10495 = vpop.f32.mrf.mxu0
  %10496 = vmatprep.mubr.bf16.mxu0 %v10038
  %10497 = vmatmul.mubr.bf16.gmra.mxu0 %v10037
  %v10498 = vpop.f32.mrf.mxu0
  %v10499 = vadd.f32 0.0, %v10498
  %v10500 = vpop.f32.mrf.mxu0
  %v10501 = vpop.f32.mrf.mxu0
  %v10502 = vadd.f32 0.0, %v10501
  %v10503 = vpop.f32.mrf.mxu0
  %10504 = vmatprep.mubr.bf16.mxu0 %v10041
  %10505 = vmatmul.mubr.bf16.gmra.mxu0 %v10040
  %v10506 = vpop.f32.mrf.mxu0
  %v10507 = vadd.f32 0.0, %v10506
  %v10508 = vpop.f32.mrf.mxu0
  %v10509 = vpop.f32.mrf.mxu0
  %v10510 = vadd.f32 0.0, %v10509
  %v10511 = vpop.f32.mrf.mxu0
  %10512 = vmatprep.mubr.bf16.mxu0 %v10044
  %10513 = vmatmul.mubr.bf16.gmra.mxu0 %v10043
  %v10514 = vpop.f32.mrf.mxu0
  %v10515 = vadd.f32 0.0, %v10514
  %v10516 = vpop.f32.mrf.mxu0
  %v10517 = vpop.f32.mrf.mxu0
  %v10518 = vpop.f32.mrf.mxu0
  %10519 = vmatprep.mubr.bf16.mxu0 %v10047
  %10520 = vmatmul.mubr.bf16.gmra.mxu0 %v10046
  %v10521 = vpop.f32.mrf.mxu0
  %v10522 = vadd.f32 0.0, %v10521
  %v10523 = vpop.f32.mrf.mxu0
  %v10524 = vpop.f32.mrf.mxu0
  %v10525 = vadd.f32 0.0, %v10524
  %v10526 = vpop.f32.mrf.mxu0
  %10527 = vmatprep.mubr.bf16.mxu0 %v10050
  %10528 = vmatmul.mubr.bf16.gmra.mxu0 %v10049
  %v10529 = vpop.f32.mrf.mxu0
  %v10530 = vadd.f32 0.0, %v10529
  %v10531 = vpop.f32.mrf.mxu0
  %v10532 = vpop.f32.mrf.mxu0
  %v10533 = vadd.f32 0.0, %v10532
  %v10534 = vpop.f32.mrf.mxu0
  %10535 = vmatprep.mubr.bf16.mxu0 %v10053
  %10536 = vmatmul.mubr.bf16.gmra.mxu0 %v10052
  %v10537 = vpop.f32.mrf.mxu0
  %v10538 = vadd.f32 0.0, %v10537
  %v10539 = vpop.f32.mrf.mxu0
  %v10540 = vpop.f32.mrf.mxu0
  %v10541 = vadd.f32 0.0, %v10540
  %v10542 = vpop.f32.mrf.mxu0
  %10543 = vmatprep.mubr.bf16.mxu0 %v10056
  %10544 = vmatmul.mubr.bf16.gmra.mxu0 %v10055
  %v10545 = vpop.f32.mrf.mxu0
  %v10546 = vadd.f32 0.0, %v10545
  %v10547 = vpop.f32.mrf.mxu0
  %v10548 = vpop.f32.mrf.mxu0
  %v10549 = vpop.f32.mrf.mxu0
  %10550 = vmatprep.mubr.bf16.mxu0 %v10059
  %10551 = vmatmul.mubr.bf16.gmra.mxu0 %v10058
  %v10552 = vpop.f32.mrf.mxu0
  %v10553 = vadd.f32 0.0, %v10552
  %v10554 = vpop.f32.mrf.mxu0
  %v10555 = vpop.f32.mrf.mxu0
  %v10556 = vadd.f32 0.0, %v10555
  %v10557 = vpop.f32.mrf.mxu0
  %10558 = vmatprep.mubr.bf16.mxu0 %v10062
  %10559 = vmatmul.mubr.bf16.gmra.mxu0 %v10061
  %v10560 = vpop.f32.mrf.mxu0
  %v10561 = vadd.f32 0.0, %v10560
  %v10562 = vpop.f32.mrf.mxu0
  %v10563 = vpop.f32.mrf.mxu0
  %v10564 = vadd.f32 0.0, %v10563
  %v10565 = vpop.f32.mrf.mxu0
  %10566 = vmatprep.mubr.bf16.mxu0 %v10065
  %10567 = vmatmul.mubr.bf16.gmra.mxu0 %v10064
  %v10568 = vpop.f32.mrf.mxu0
  %v10569 = vadd.f32 0.0, %v10568
  %v10570 = vpop.f32.mrf.mxu0
  %v10571 = vpop.f32.mrf.mxu0
  %v10572 = vadd.f32 0.0, %v10571
  %v10573 = vpop.f32.mrf.mxu0
  %10574 = vmatprep.mubr.bf16.mxu0 %v10068
  %10575 = vmatmul.mubr.bf16.gmra.mxu0 %v10067
  %v10576 = vpop.f32.mrf.mxu0
  %v10577 = vadd.f32 0.0, %v10576
  %v10578 = vpop.f32.mrf.mxu0
  %v10579 = vpop.f32.mrf.mxu0
  %v10580 = vpop.f32.mrf.mxu0
  %10581 = vmatprep.mubr.bf16.mxu0 %v10071
  %10582 = vmatmul.mubr.bf16.gmra.mxu0 %v10070
  %v10583 = vpop.f32.mrf.mxu0
  %v10584 = vadd.f32 0.0, %v10583
  %v10585 = vpop.f32.mrf.mxu0
  %v10586 = vpop.f32.mrf.mxu0
  %v10587 = vadd.f32 0.0, %v10586
  %v10588 = vpop.f32.mrf.mxu0
  %10589 = vmatprep.mubr.bf16.mxu0 %v10074
  %10590 = vmatmul.mubr.bf16.gmra.mxu0 %v10073
  %v10591 = vpop.f32.mrf.mxu0
  %v10592 = vadd.f32 0.0, %v10591
  %v10593 = vpop.f32.mrf.mxu0
  %v10594 = vpop.f32.mrf.mxu0
  %v10595 = vadd.f32 0.0, %v10594
  %v10596 = vpop.f32.mrf.mxu0
  %10597 = vmatprep.mubr.bf16.mxu0 %v10077
  %10598 = vmatmul.mubr.bf16.gmra.mxu0 %v10076
  %v10599 = vpop.f32.mrf.mxu0
  %v10600 = vadd.f32 0.0, %v10599
  %v10601 = vpop.f32.mrf.mxu0
  %v10602 = vpop.f32.mrf.mxu0
  %v10603 = vadd.f32 0.0, %v10602
  %v10604 = vpop.f32.mrf.mxu0
  %10605 = vmatprep.mubr.bf16.mxu0 %v10080
  %10606 = vmatmul.mubr.bf16.gmra.mxu0 %v10079
  %v10607 = vpop.f32.mrf.mxu0
  %v10608 = vadd.f32 0.0, %v10607
  %v10609 = vpop.f32.mrf.mxu0
  %v10610 = vpop.f32.mrf.mxu0
  %v10611 = vpop.f32.mrf.mxu0
  %10612 = vmatprep.mubr.bf16.mxu0 %v10083
  %10613 = vmatmul.mubr.bf16.gmra.mxu0 %v10082
  %v10614 = vpop.f32.mrf.mxu0
  %v10615 = vadd.f32 0.0, %v10614
  %v10616 = vpop.f32.mrf.mxu0
  %v10617 = vpop.f32.mrf.mxu0
  %v10618 = vadd.f32 0.0, %v10617
  %v10619 = vpop.f32.mrf.mxu0
  %10620 = vmatprep.mubr.bf16.mxu0 %v10086
  %10621 = vmatmul.mubr.bf16.gmra.mxu0 %v10085
  %v10622 = vpop.f32.mrf.mxu0
  %v10623 = vadd.f32 0.0, %v10622
  %v10624 = vpop.f32.mrf.mxu0
  %v10625 = vpop.f32.mrf.mxu0
  %v10626 = vadd.f32 0.0, %v10625
  %v10627 = vpop.f32.mrf.mxu0
  %10628 = vmatprep.mubr.bf16.mxu0 %v10089
  %10629 = vmatmul.mubr.bf16.gmra.mxu0 %v10088
  %v10630 = vpop.f32.mrf.mxu0
  %v10631 = vadd.f32 0.0, %v10630
  %v10632 = vpop.f32.mrf.mxu0
  %v10633 = vpop.f32.mrf.mxu0
  %v10634 = vadd.f32 0.0, %v10633
  %v10635 = vpop.f32.mrf.mxu0
  %10636 = vmatprep.mubr.bf16.mxu0 %v10092
  %10637 = vmatmul.mubr.bf16.gmra.mxu0 %v10091
  %v10638 = vpop.f32.mrf.mxu0
  %v10639 = vadd.f32 0.0, %v10638
  %v10640 = vpop.f32.mrf.mxu0
  %v10641 = vpop.f32.mrf.mxu0
  %v10642 = vpop.f32.mrf.mxu0
  %10643 = vdwg.mxu0
  %10644 = vmatprep.subr.bf16.mxu0 0
  %10645 = vmatpush1.bf16.msra.mxu0 0
  %10646 = vmatprep.subr.bf16.mxu0 0
  %10647 = vmatpush1.bf16.msra.mxu0 0
  %10648 = vmatprep.subr.bf16.mxu0 0
  %10649 = vmatpush1.bf16.msra.mxu0 0
  %10650 = vmatprep.subr.bf16.mxu0 0
  %10651 = vmatpush1.bf16.msra.mxu0 0
  %10652 = vmatprep.subr.bf16.mxu0 0
  %10653 = vmatpush1.bf16.msra.mxu0 0
  %10654 = vmatprep.subr.bf16.mxu0 0
  %10655 = vmatpush1.bf16.msra.mxu0 0
  %10656 = vmatprep.subr.bf16.mxu0 0
  %10657 = vmatpush1.bf16.msra.mxu0 %v10247
  %10658 = vmatprep.subr.bf16.mxu0 0
  %10659 = vmatpush1.bf16.msra.mxu0 %v10246
  %10660 = vmatprep.subr.bf16.mxu0 0
  %10661 = vmatpush2.bf16.msra.mxu0 0
  %10662 = vmatprep.subr.bf16.mxu0 0
  %10663 = vmatpush2.bf16.msra.mxu0 0
  %10664 = vmatprep.subr.bf16.mxu0 0
  %10665 = vmatpush2.bf16.msra.mxu0 0
  %10666 = vmatprep.subr.bf16.mxu0 0
  %10667 = vmatpush2.bf16.msra.mxu0 0
  %10668 = vmatprep.subr.bf16.mxu0 0
  %10669 = vmatpush2.bf16.msra.mxu0 0
  %10670 = vmatprep.subr.bf16.mxu0 0
  %10671 = vmatpush2.bf16.msra.mxu0 0
  %10672 = vmatprep.subr.bf16.mxu0 0
  %10673 = vmatpush2.bf16.msra.mxu0 0
  %10674 = vmatprep.subr.bf16.mxu0 0
  %10675 = vmatpush2.bf16.msra.mxu0 0
  %10676 = vmatprep.mubr.bf16.mxu0 0
  %10677 = vmatmul.mubr.bf16.gmra.mxu0 %v10268
  %v10678 = vpop.f32.mrf.mxu0
  %v10679 = vadd.f32 %v10398, %v10678
  %v10680 = vpop.f32.mrf.mxu0
  %v10681 = vpop.f32.mrf.mxu0
  %v10682 = vadd.f32 %v10401, %v10681
  %v10683 = vpop.f32.mrf.mxu0
  %10684 = vmatprep.mubr.bf16.mxu0 0
  %10685 = vmatmul.mubr.bf16.gmra.mxu0 %v10271
  %v10686 = vpop.f32.mrf.mxu0
  %v10687 = vadd.f32 %v10406, %v10686
  %v10688 = vpop.f32.mrf.mxu0
  %v10689 = vpop.f32.mrf.mxu0
  %v10690 = vadd.f32 %v10409, %v10689
  %v10691 = vpop.f32.mrf.mxu0
  %10692 = vmatprep.mubr.bf16.mxu0 0
  %10693 = vmatmul.mubr.bf16.gmra.mxu0 %v10274
  %v10694 = vpop.f32.mrf.mxu0
  %v10695 = vadd.f32 %v10414, %v10694
  %v10696 = vpop.f32.mrf.mxu0
  %v10697 = vpop.f32.mrf.mxu0
  %v10698 = vadd.f32 %v10417, %v10697
  %v10699 = vpop.f32.mrf.mxu0
  %10700 = vmatprep.mubr.bf16.mxu0 0
  %10701 = vmatmul.mubr.bf16.gmra.mxu0 %v10277
  %v10702 = vpop.f32.mrf.mxu0
  %v10703 = vadd.f32 %v10422, %v10702
  %v10704 = vpop.f32.mrf.mxu0
  %v10705 = vpop.f32.mrf.mxu0
  %v10706 = vpop.f32.mrf.mxu0
  %10707 = vmatprep.mubr.bf16.mxu0 0
  %10708 = vmatmul.mubr.bf16.gmra.mxu0 %v10280
  %v10709 = vpop.f32.mrf.mxu0
  %v10710 = vadd.f32 %v10429, %v10709
  %v10711 = vpop.f32.mrf.mxu0
  %v10712 = vpop.f32.mrf.mxu0
  %v10713 = vadd.f32 %v10432, %v10712
  %v10714 = vpop.f32.mrf.mxu0
  %10715 = vmatprep.mubr.bf16.mxu0 0
  %10716 = vmatmul.mubr.bf16.gmra.mxu0 %v10283
  %v10717 = vpop.f32.mrf.mxu0
  %v10718 = vadd.f32 %v10437, %v10717
  %v10719 = vpop.f32.mrf.mxu0
  %v10720 = vpop.f32.mrf.mxu0
  %v10721 = vadd.f32 %v10440, %v10720
  %v10722 = vpop.f32.mrf.mxu0
  %10723 = vmatprep.mubr.bf16.mxu0 0
  %10724 = vmatmul.mubr.bf16.gmra.mxu0 %v10286
  %v10725 = vpop.f32.mrf.mxu0
  %v10726 = vadd.f32 %v10445, %v10725
  %v10727 = vpop.f32.mrf.mxu0
  %v10728 = vpop.f32.mrf.mxu0
  %v10729 = vadd.f32 %v10448, %v10728
  %v10730 = vpop.f32.mrf.mxu0
  %10731 = vmatprep.mubr.bf16.mxu0 0
  %10732 = vmatmul.mubr.bf16.gmra.mxu0 %v10289
  %v10733 = vpop.f32.mrf.mxu0
  %v10734 = vadd.f32 %v10453, %v10733
  %v10735 = vpop.f32.mrf.mxu0
  %v10736 = vpop.f32.mrf.mxu0
  %v10737 = vpop.f32.mrf.mxu0
  %10738 = vmatprep.mubr.bf16.mxu0 0
  %10739 = vmatmul.mubr.bf16.gmra.mxu0 %v10292
  %v10740 = vpop.f32.mrf.mxu0
  %v10741 = vadd.f32 %v10460, %v10740
  %v10742 = vpop.f32.mrf.mxu0
  %v10743 = vpop.f32.mrf.mxu0
  %v10744 = vadd.f32 %v10463, %v10743
  %v10745 = vpop.f32.mrf.mxu0
  %10746 = vmatprep.mubr.bf16.mxu0 0
  %10747 = vmatmul.mubr.bf16.gmra.mxu0 %v10295
  %v10748 = vpop.f32.mrf.mxu0
  %v10749 = vadd.f32 %v10468, %v10748
  %v10750 = vpop.f32.mrf.mxu0
  %v10751 = vpop.f32.mrf.mxu0
  %v10752 = vadd.f32 %v10471, %v10751
  %v10753 = vpop.f32.mrf.mxu0
  %10754 = vmatprep.mubr.bf16.mxu0 0
  %10755 = vmatmul.mubr.bf16.gmra.mxu0 %v10298
  %v10756 = vpop.f32.mrf.mxu0
  %v10757 = vadd.f32 %v10476, %v10756
  %v10758 = vpop.f32.mrf.mxu0
  %v10759 = vpop.f32.mrf.mxu0
  %v10760 = vadd.f32 %v10479, %v10759
  %v10761 = vpop.f32.mrf.mxu0
  %10762 = vmatprep.mubr.bf16.mxu0 0
  %10763 = vmatmul.mubr.bf16.gmra.mxu0 %v10301
  %v10764 = vpop.f32.mrf.mxu0
  %v10765 = vadd.f32 %v10484, %v10764
  %v10766 = vpop.f32.mrf.mxu0
  %v10767 = vpop.f32.mrf.mxu0
  %v10768 = vpop.f32.mrf.mxu0
  %10769 = vmatprep.mubr.bf16.mxu0 0
  %10770 = vmatmul.mubr.bf16.gmra.mxu0 %v10304
  %v10771 = vpop.f32.mrf.mxu0
  %v10772 = vadd.f32 %v10491, %v10771
  %v10773 = vpop.f32.mrf.mxu0
  %v10774 = vpop.f32.mrf.mxu0
  %v10775 = vadd.f32 %v10494, %v10774
  %v10776 = vpop.f32.mrf.mxu0
  %10777 = vmatprep.mubr.bf16.mxu0 0
  %10778 = vmatmul.mubr.bf16.gmra.mxu0 %v10307
  %v10779 = vpop.f32.mrf.mxu0
  %v10780 = vadd.f32 %v10499, %v10779
  %v10781 = vpop.f32.mrf.mxu0
  %v10782 = vpop.f32.mrf.mxu0
  %v10783 = vadd.f32 %v10502, %v10782
  %v10784 = vpop.f32.mrf.mxu0
  %10785 = vmatprep.mubr.bf16.mxu0 0
  %10786 = vmatmul.mubr.bf16.gmra.mxu0 %v10310
  %v10787 = vpop.f32.mrf.mxu0
  %v10788 = vadd.f32 %v10507, %v10787
  %v10789 = vpop.f32.mrf.mxu0
  %v10790 = vpop.f32.mrf.mxu0
  %v10791 = vadd.f32 %v10510, %v10790
  %v10792 = vpop.f32.mrf.mxu0
  %10793 = vmatprep.mubr.bf16.mxu0 0
  %10794 = vmatmul.mubr.bf16.gmra.mxu0 %v10313
  %v10795 = vpop.f32.mrf.mxu0
  %v10796 = vadd.f32 %v10515, %v10795
  %v10797 = vpop.f32.mrf.mxu0
  %v10798 = vpop.f32.mrf.mxu0
  %v10799 = vpop.f32.mrf.mxu0
  %10800 = vmatprep.mubr.bf16.mxu0 0
  %10801 = vmatmul.mubr.bf16.gmra.mxu0 %v10316
  %v10802 = vpop.f32.mrf.mxu0
  %v10803 = vadd.f32 %v10522, %v10802
  %v10804 = vpop.f32.mrf.mxu0
  %v10805 = vpop.f32.mrf.mxu0
  %v10806 = vadd.f32 %v10525, %v10805
  %v10807 = vpop.f32.mrf.mxu0
  %10808 = vmatprep.mubr.bf16.mxu0 0
  %10809 = vmatmul.mubr.bf16.gmra.mxu0 %v10319
  %v10810 = vpop.f32.mrf.mxu0
  %v10811 = vadd.f32 %v10530, %v10810
  %v10812 = vpop.f32.mrf.mxu0
  %v10813 = vpop.f32.mrf.mxu0
  %v10814 = vadd.f32 %v10533, %v10813
  %v10815 = vpop.f32.mrf.mxu0
  %10816 = vmatprep.mubr.bf16.mxu0 0
  %10817 = vmatmul.mubr.bf16.gmra.mxu0 %v10322
  %v10818 = vpop.f32.mrf.mxu0
  %v10819 = vadd.f32 %v10538, %v10818
  %v10820 = vpop.f32.mrf.mxu0
  %v10821 = vpop.f32.mrf.mxu0
  %v10822 = vadd.f32 %v10541, %v10821
  %v10823 = vpop.f32.mrf.mxu0
  %10824 = vmatprep.mubr.bf16.mxu0 0
  %10825 = vmatmul.mubr.bf16.gmra.mxu0 %v10325
  %v10826 = vpop.f32.mrf.mxu0
  %v10827 = vadd.f32 %v10546, %v10826
  %v10828 = vpop.f32.mrf.mxu0
  %v10829 = vpop.f32.mrf.mxu0
  %v10830 = vpop.f32.mrf.mxu0
  %10831 = vmatprep.mubr.bf16.mxu0 0
  %10832 = vmatmul.mubr.bf16.gmra.mxu0 %v10328
  %v10833 = vpop.f32.mrf.mxu0
  %v10834 = vadd.f32 %v10553, %v10833
  %v10835 = vpop.f32.mrf.mxu0
  %v10836 = vpop.f32.mrf.mxu0
  %v10837 = vadd.f32 %v10556, %v10836
  %v10838 = vpop.f32.mrf.mxu0
  %10839 = vmatprep.mubr.bf16.mxu0 0
  %10840 = vmatmul.mubr.bf16.gmra.mxu0 %v10331
  %v10841 = vpop.f32.mrf.mxu0
  %v10842 = vadd.f32 %v10561, %v10841
  %v10843 = vpop.f32.mrf.mxu0
  %v10844 = vpop.f32.mrf.mxu0
  %v10845 = vadd.f32 %v10564, %v10844
  %v10846 = vpop.f32.mrf.mxu0
  %10847 = vmatprep.mubr.bf16.mxu0 0
  %10848 = vmatmul.mubr.bf16.gmra.mxu0 %v10334
  %v10849 = vpop.f32.mrf.mxu0
  %v10850 = vadd.f32 %v10569, %v10849
  %v10851 = vpop.f32.mrf.mxu0
  %v10852 = vpop.f32.mrf.mxu0
  %v10853 = vadd.f32 %v10572, %v10852
  %v10854 = vpop.f32.mrf.mxu0
  %10855 = vmatprep.mubr.bf16.mxu0 0
  %10856 = vmatmul.mubr.bf16.gmra.mxu0 %v10337
  %v10857 = vpop.f32.mrf.mxu0
  %v10858 = vadd.f32 %v10577, %v10857
  %v10859 = vpop.f32.mrf.mxu0
  %v10860 = vpop.f32.mrf.mxu0
  %v10861 = vpop.f32.mrf.mxu0
  %10862 = vmatprep.mubr.bf16.mxu0 0
  %10863 = vmatmul.mubr.bf16.gmra.mxu0 %v10340
  %v10864 = vpop.f32.mrf.mxu0
  %v10865 = vadd.f32 %v10584, %v10864
  %v10866 = vpop.f32.mrf.mxu0
  %v10867 = vpop.f32.mrf.mxu0
  %v10868 = vadd.f32 %v10587, %v10867
  %v10869 = vpop.f32.mrf.mxu0
  %10870 = vmatprep.mubr.bf16.mxu0 0
  %10871 = vmatmul.mubr.bf16.gmra.mxu0 %v10343
  %v10872 = vpop.f32.mrf.mxu0
  %v10873 = vadd.f32 %v10592, %v10872
  %v10874 = vpop.f32.mrf.mxu0
  %v10875 = vpop.f32.mrf.mxu0
  %v10876 = vadd.f32 %v10595, %v10875
  %v10877 = vpop.f32.mrf.mxu0
  %10878 = vmatprep.mubr.bf16.mxu0 0
  %10879 = vmatmul.mubr.bf16.gmra.mxu0 %v10346
  %v10880 = vpop.f32.mrf.mxu0
  %v10881 = vadd.f32 %v10600, %v10880
  %v10882 = vpop.f32.mrf.mxu0
  %v10883 = vpop.f32.mrf.mxu0
  %v10884 = vadd.f32 %v10603, %v10883
  %v10885 = vpop.f32.mrf.mxu0
  %10886 = vmatprep.mubr.bf16.mxu0 0
  %10887 = vmatmul.mubr.bf16.gmra.mxu0 %v10349
  %v10888 = vpop.f32.mrf.mxu0
  %v10889 = vadd.f32 %v10608, %v10888
  %v10890 = vpop.f32.mrf.mxu0
  %v10891 = vpop.f32.mrf.mxu0
  %v10892 = vpop.f32.mrf.mxu0
  %10893 = vmatprep.mubr.bf16.mxu0 0
  %10894 = vmatmul.mubr.bf16.gmra.mxu0 %v10352
  %v10895 = vpop.f32.mrf.mxu0
  %v10896 = vadd.f32 %v10615, %v10895
  %v10897 = vpop.f32.mrf.mxu0
  %v10898 = vpop.f32.mrf.mxu0
  %v10899 = vadd.f32 %v10618, %v10898
  %v10900 = vpop.f32.mrf.mxu0
  %10901 = vmatprep.mubr.bf16.mxu0 0
  %10902 = vmatmul.mubr.bf16.gmra.mxu0 %v10355
  %v10903 = vpop.f32.mrf.mxu0
  %v10904 = vadd.f32 %v10623, %v10903
  %v10905 = vpop.f32.mrf.mxu0
  %v10906 = vpop.f32.mrf.mxu0
  %v10907 = vadd.f32 %v10626, %v10906
  %v10908 = vpop.f32.mrf.mxu0
  %10909 = vmatprep.mubr.bf16.mxu0 0
  %10910 = vmatmul.mubr.bf16.gmra.mxu0 %v10358
  %v10911 = vpop.f32.mrf.mxu0
  %v10912 = vadd.f32 %v10631, %v10911
  %v10913 = vpop.f32.mrf.mxu0
  %v10914 = vpop.f32.mrf.mxu0
  %v10915 = vadd.f32 %v10634, %v10914
  %v10916 = vpop.f32.mrf.mxu0
  %10917 = vmatprep.mubr.bf16.mxu0 0
  %10918 = vmatmul.mubr.bf16.gmra.mxu0 %v10361
  %v10919 = vpop.f32.mrf.mxu0
  %v10920 = vadd.f32 %v10639, %v10919
  %v10921 = vpop.f32.mrf.mxu0
  %v10922 = vpop.f32.mrf.mxu0
  %v10923 = vpop.f32.mrf.mxu0
  %10924 = vdwg.mxu0
  %v10925 = vmax.f32 %v10679, %v10741
  %v10926 = vmax.f32 %v10682, %v10744
  %v10927 = vmax.f32 %v10687, %v10749
  %v10928 = vmax.f32 %v10690, %v10752
  %v10929 = vmax.f32 %v10695, %v10757
  %v10930 = vmax.f32 %v10698, %v10760
  %v10931 = vmax.f32 %v10703, %v10765
  %v10932 = vmax.f32 %v10710, %v10772
  %v10933 = vmax.f32 %v10713, %v10775
  %v10934 = vmax.f32 %v10718, %v10780
  %v10935 = vmax.f32 %v10721, %v10783
  %v10936 = vmax.f32 %v10726, %v10788
  %v10937 = vmax.f32 %v10729, %v10791
  %v10938 = vmax.f32 %v10734, %v10796
  %v10939 = vmax.f32 %v10803, %v10865
  %v10940 = vmax.f32 %v10806, %v10868
  %v10941 = vmax.f32 %v10811, %v10873
  %v10942 = vmax.f32 %v10814, %v10876
  %v10943 = vmax.f32 %v10819, %v10881
  %v10944 = vmax.f32 %v10822, %v10884
  %v10945 = vmax.f32 %v10827, %v10889
  %v10946 = vmax.f32 %v10834, %v10896
  %v10947 = vmax.f32 %v10837, %v10899
  %v10948 = vmax.f32 %v10842, %v10904
  %v10949 = vmax.f32 %v10845, %v10907
  %v10950 = vmax.f32 %v10850, %v10912
  %v10951 = vmax.f32 %v10853, %v10915
  %v10952 = vmax.f32 %v10858, %v10920
  %v10953 = vmax.f32 %v10925, %v10939
  %v10954 = vmax.f32 %v10926, %v10940
  %v10955 = vmax.f32 %v10927, %v10941
  %v10956 = vmax.f32 %v10928, %v10942
  %v10957 = vmax.f32 %v10929, %v10943
  %v10958 = vmax.f32 %v10930, %v10944
  %v10959 = vmax.f32 %v10931, %v10945
  %v10960 = vmax.f32 %v10932, %v10946
  %v10961 = vmax.f32 %v10933, %v10947
  %v10962 = vmax.f32 %v10934, %v10948
  %v10963 = vmax.f32 %v10935, %v10949
  %v10964 = vmax.f32 %v10936, %v10950
  %v10965 = vmax.f32 %v10937, %v10951
  %v10966 = vmax.f32 %v10938, %v10952
  %v10967 = vld [vmem:[%s3] sm:$0x1]
  %v10969 = vlaneseq
  %v10970 = vshrl.u32 %v10969, 7
  %v10971 = vsub.s32 0, %v10970
  %v10972 = vrot.slane %v10967, %v10971
  %v10974 = vadd.f32 %v10953, %v10972
  %v10975 = vadd.f32 %v10954, %v10972
  %v10976 = vadd.f32 %v10955, %v10972
  %v10977 = vadd.f32 %v10956, %v10972
  %v10978 = vadd.f32 %v10957, %v10972
  %v10979 = vadd.f32 %v10958, %v10972
  %v10980 = vadd.f32 %v10959, %v10972
  %v10981 = vadd.f32 %v10960, %v10972
  %v10982 = vadd.f32 %v10961, %v10972
  %v10983 = vadd.f32 %v10962, %v10972
  %v10984 = vadd.f32 %v10963, %v10972
  %v10985 = vadd.f32 %v10964, %v10972
  %v10986 = vadd.f32 %v10965, %v10972
  %v10987 = vadd.f32 %v10966, %v10972
  %v10988 = vmax.f32 %v10974, 0.0
  %v10989 = vmax.f32 %v10975, 0.0
  %v10990 = vmax.f32 %v10976, 0.0
  %v10991 = vmax.f32 %v10977, 0.0
  %v10992 = vmax.f32 %v10978, 0.0
  %v10993 = vmax.f32 %v10979, 0.0
  %v10994 = vmax.f32 %v10980, 0.0
  %v10995 = vmax.f32 %v10981, 0.0
  %v10996 = vmax.f32 %v10982, 0.0
  %v10997 = vmax.f32 %v10983, 0.0
  %v10998 = vmax.f32 %v10984, 0.0
  %v10999 = vmax.f32 %v10985, 0.0
  %v11000 = vmax.f32 %v10986, 0.0
  %v11001 = vmax.f32 %v10987, 0.0
  %v11002 = vpack.c.bf16 %v10989, %v10988
  %v11003 = vpack.c.bf16 %v10991, %v10990
  %v11004 = vpack.c.bf16 %v10993, %v10992
  %v11005 = vpack.c.bf16 %v10994, %v10994
  %v11010 = vunpack.c.l.b16 %v11002
  %v11011 = vunpack.c.h.b16 %v11002
  %v11012 = vunpack.c.l.b16 %v11003
  %v11013 = vunpack.c.h.b16 %v11003
  %v11014 = vunpack.c.l.b16 %v11004
  %v11015 = vunpack.c.h.b16 %v11004
  %v11016 = vunpack.c.l.b16 %v11005
  %v11017 = vpack.c.b16 %v11010, %v11010
  %v11018 = vpack.c.b16 %v11011, %v11011
  %v11019 = vpack.c.b16 %v11012, %v11012
  %v11020 = vpack.c.b16 %v11013, %v11013
  %v11021 = vpack.c.b16 %v11014, %v11014
  %v11022 = vpack.c.b16 %v11015, %v11015
  %v11023 = vpack.c.b16 %v11016, %v11016
  %vm11031 = vcmask 519168
  %11032 = vst.msk [vmem:[%s5] sm:$0xf] %vm11031, %v11017
  %11033 = vst.msk [vmem:[%s5 + $0x4] sm:$0xf] %vm11031, %v11018
  %11034 = vst.msk [vmem:[%s5 + $0x8] sm:$0xf] %vm11031, %v11019
  %11035 = vst.msk [vmem:[%s5 + $0xc] sm:$0xf] %vm11031, %v11020
  %11036 = vst.msk [vmem:[%s5 + $0x10] sm:$0xf] %vm11031, %v11021
  %11037 = vst.msk [vmem:[%s5 + $0x14] sm:$0xf] %vm11031, %v11022
  %vm11038 = vcmask 516096
  %vm11039 = vmand %vm11038, %vm2416
  %v11040 = vld [vmem:[%s5 + $0x18] sm:$0x1]
  %v11041 = vsel %vm11039, %v11023, %v11040
  %11042 = vst [vmem:[%s5 + $0x18] sm:$0x1] %v11041
  %v11043 = vpack.c.bf16 %v10996, %v10995
  %v11044 = vpack.c.bf16 %v10998, %v10997
  %v11045 = vpack.c.bf16 %v11000, %v10999
  %v11046 = vpack.c.bf16 %v11001, %v11001
  %v11051 = vunpack.c.l.b16 %v11043
  %v11052 = vunpack.c.h.b16 %v11043
  %v11053 = vunpack.c.l.b16 %v11044
  %v11054 = vunpack.c.h.b16 %v11044
  %v11055 = vunpack.c.l.b16 %v11045
  %v11056 = vunpack.c.h.b16 %v11045
  %v11057 = vunpack.c.l.b16 %v11046
  %v11058 = vpack.c.b16 %v11051, %v11051
  %v11059 = vpack.c.b16 %v11052, %v11052
  %v11060 = vpack.c.b16 %v11053, %v11053
  %v11061 = vpack.c.b16 %v11054, %v11054
  %v11062 = vpack.c.b16 %v11055, %v11055
  %v11063 = vpack.c.b16 %v11056, %v11056
  %v11064 = vpack.c.b16 %v11057, %v11057
  %s11072 = scalar_lea.vmem %s5, 28
  %11073 = vst.msk [vmem:[%s11072] sm:$0xf] %vm11031, %v11058
  %11074 = vst.msk [vmem:[%s11072 + $0x4] sm:$0xf] %vm11031, %v11059
  %11075 = vst.msk [vmem:[%s11072 + $0x8] sm:$0xf] %vm11031, %v11060
  %11076 = vst.msk [vmem:[%s11072 + $0xc] sm:$0xf] %vm11031, %v11061
  %11077 = vst.msk [vmem:[%s11072 + $0x10] sm:$0xf] %vm11031, %v11062
  %11078 = vst.msk [vmem:[%s11072 + $0x14] sm:$0xf] %vm11031, %v11063
  %v11079 = vld [vmem:[%s11072 + $0x18] sm:$0x1]
  %v11080 = vsel %vm11039, %v11064, %v11079
  %11081 = vst [vmem:[%s11072 + $0x18] sm:$0x1] %v11080
  // Predicated region
  $region22: #{forward.2} parent=0 // pred_check
    _
  $region23: #{forward.2} parent=0 // pred_check_branch
    %11083 = sbr.rel (0) target = $region25
  $region24: #{forward.2} parent=0 // pred_region
    _
  $region25: #{forward.2} parent=0 // pred_fallthru
    _
  // Predicated region
  $region26: #{forward.2} parent=0 // pred_check
    _
  $region27: #{forward.2} parent=0 // pred_check_branch
    %11085 = sbr.rel (0) target = $region29
  $region28: #{forward.2} parent=0 // pred_region
    _
  $region29: #{forward.2} parent=0 // pred_fallthru
    _

</llo_original>
